<compile_context>
chip_gen: v5e
topology: v5e:2x2
jax: 0.10.0
libtpu: 0.0.40
codegen_flags: <defaults>
</compile_context>

<pallas_src>
import functools

import jax
import jax.numpy as jnp
from jax.experimental import pallas as pl
from jax.experimental.pallas import tpu as pltpu

_P = 4  # spatial zero-pad on each side; >= 4 lets both 3x3 convs of a block
        # be evaluated with in-bounds shifted row-slices on the flat plane.


def _round_up(x, m):
    return (x + m - 1) // m * m


# ----------------------------------------------------------------------------
# Fused ResBlock_SFT kernel: SFT0 -> conv3x3+ReLU -> SFT1 -> conv3x3 -> +skip
# ----------------------------------------------------------------------------

def _resblock_kernel(mask_ref, fea_ref, cond_ref,
                     s0w0_ref, s0b0_ref, s0ws_ref, s0bs_ref, s0wt_ref, s0bt_ref,
                     c0w_ref, c0b_ref,
                     s1w0_ref, s1b0_ref, s1ws_ref, s1bs_ref, s1wt_ref, s1bt_ref,
                     c1w_ref, c1b_ref,
                     out_ref,
                     *, H, Hp, Wp, CP, mm_dtype):
    Mp = Hp * Wp

    fea = fea_ref[...]            # (Mp, CP) f32, zero outside the valid region
    cond = cond_ref[...]          # (Mp, CP) f32, zero outside the valid region
    mask = mask_ref[...]          # (Mp, 1)  f32, 1.0 inside the valid region

    def sft(x, cnd, w0_ref, b0_ref, ws_ref, bs_ref, wt_ref, bt_ref):
        # packed stage 0: one (M, CP) @ (CP, 2*CP) matmul for scale|shift
        h = jnp.dot(cnd.astype(mm_dtype), w0_ref[...],
                    preferred_element_type=jnp.float32) + b0_ref[...]
        h = jnp.where(h >= 0.0, h, 0.1 * h)          # leaky_relu(0.1), f32
        h = h.astype(mm_dtype)
        scale = jnp.dot(h[:, :CP], ws_ref[...],
                        preferred_element_type=jnp.float32) + bs_ref[...]
        shift = jnp.dot(h[:, CP:], wt_ref[...],
                        preferred_element_type=jnp.float32) + bt_ref[...]
        return x * (scale + 1.0) + shift             # f32 epilogue

    def conv3x3(src, start_row, out_rows, w_ref, b_ref):
        # 3x3 conv on the flattened row-major padded plane as 9 shifted
        # matmuls; bias is hoisted into the accumulator init.
        acc = jnp.broadcast_to(b_ref[...], (out_rows, CP))
        for t in range(9):
            dy, dx = t // 3, t % 3
            off = start_row + (dy - 1) * Wp + (dx - 1)
            win = src[off:off + out_rows, :].astype(mm_dtype)
            acc = acc + jnp.dot(win, w_ref[t],
                                preferred_element_type=jnp.float32)
        return acc

    # ---- SFT0 over the whole padded plane; re-zero the pad ring so conv0
    #      sees true zero padding (SFT of a zero cond is not zero).
    s0 = sft(fea, cond, s0w0_ref, s0b0_ref, s0ws_ref, s0bs_ref, s0wt_ref, s0bt_ref)
    s0 = s0 * mask

    # ---- conv0 + ReLU over padded rows [2, Hp-2): one halo row beyond what
    #      conv1 reads, so every shifted slice below stays in-bounds.
    mid0 = 2 * Wp
    rows0 = (Hp - 4) * Wp
    h0 = conv3x3(s0, mid0, rows0, c0w_ref, c0b_ref)
    h0 = jnp.maximum(h0, 0.0)

    # ---- SFT1 on those rows, masked back to the valid region (this supplies
    #      the zero padding conv1 needs; out-of-image values are discarded).
    x1 = sft(h0, cond[mid0:mid0 + rows0, :],
             s1w0_ref, s1b0_ref, s1ws_ref, s1bs_ref, s1wt_ref, s1bt_ref)
    x1 = x1 * mask[mid0:mid0 + rows0, :]

    # ---- conv1 over the valid rows, residual add, mask out garbage columns.
    midv = _P * Wp
    rowsv = H * Wp
    y = conv3x3(x1, midv - mid0, rowsv, c1w_ref, c1b_ref)
    out_mid = (fea[midv:midv + rowsv, :] + y) * mask[midv:midv + rowsv, :]

    # ---- store: pad rows written as zeros (keeps the "zero outside valid"
    #      invariant for the next block), data rows in the middle.
    out_ref[pl.ds(0, midv), :] = jnp.zeros((midv, CP), out_ref.dtype)
    out_ref[pl.ds(midv, rowsv), :] = out_mid.astype(out_ref.dtype)
    tail = Mp - midv - rowsv
    out_ref[pl.ds(midv + rowsv, tail), :] = jnp.zeros((tail, CP), out_ref.dtype)


# ----------------------------------------------------------------------------
# pallas_call wrapper (one call per ResBlock_SFT)
# ----------------------------------------------------------------------------

def _resblock_call(fea, cond, mask, bp, *, H, Hp, Wp, CP, mm_dtype):
    N = fea.shape[0]
    Mp = Hp * Wp
    act_spec = pl.BlockSpec((None, Mp, CP), lambda b: (b, 0, 0))
    msk_spec = pl.BlockSpec((Mp, 1), lambda b: (0, 0))
    w1_spec = pl.BlockSpec((CP, CP), lambda b: (0, 0))
    b1_spec = pl.BlockSpec((1, CP), lambda b: (0, 0))
    w0_spec = pl.BlockSpec((CP, 2 * CP), lambda b: (0, 0))
    b0_spec = pl.BlockSpec((1, 2 * CP), lambda b: (0, 0))
    cw_spec = pl.BlockSpec((9, CP, CP), lambda b: (0, 0, 0))
    sft_specs = [w0_spec, b0_spec, w1_spec, b1_spec, w1_spec, b1_spec]

    kernel = functools.partial(_resblock_kernel, H=H, Hp=Hp, Wp=Wp, CP=CP,
                               mm_dtype=mm_dtype)
    return pl.pallas_call(
        kernel,
        out_shape=jax.ShapeDtypeStruct((N, Mp, CP), jnp.float32),
        grid=(N,),
        in_specs=[msk_spec, act_spec, act_spec,
                  *sft_specs, cw_spec, b1_spec,
                  *sft_specs, cw_spec, b1_spec],
        out_specs=act_spec,
        compiler_params=pltpu.CompilerParams(
            dimension_semantics=("parallel",),
            vmem_limit_bytes=48 * 1024 * 1024),
    )(mask, fea, cond,
      bp["s0_w0"], bp["s0_b0"], bp["s0_ws"], bp["s0_bs"], bp["s0_wt"], bp["s0_bt"],
      bp["c0_w"], bp["c0_b"],
      bp["s1_w0"], bp["s1_b0"], bp["s1_ws"], bp["s1_bs"], bp["s1_wt"], bp["s1_bt"],
      bp["c1_w"], bp["c1_b"])


# ----------------------------------------------------------------------------
# Parameter packing: channel-pad to CP lanes, pack scale|shift stage 0,
# reshape 3x3 weights to (9, CP, CP) tap-major, cast matmul weights to bf16.
# ----------------------------------------------------------------------------

def _pack_block_params(p, C, CP, mm_dtype):
    padc = CP - C

    def pad_w(w):   # (C, C) -> (CP, CP)
        return jnp.pad(w, ((0, padc), (0, padc)))

    def pad_b(b):   # (1, C) -> (1, CP), f32
        return jnp.pad(b, ((0, 0), (0, padc))).astype(jnp.float32)

    def pack_sft(s, tag):
        w0 = jnp.concatenate([pad_w(s["sw0"]), pad_w(s["tw0"])], axis=1)
        b0 = jnp.concatenate([pad_b(s["sb0"]), pad_b(s["tb0"])], axis=1)
        return {
            f"{tag}_w0": w0.astype(mm_dtype), f"{tag}_b0": b0,
            f"{tag}_ws": pad_w(s["sw1"]).astype(mm_dtype), f"{tag}_bs": pad_b(s["sb1"]),
            f"{tag}_wt": pad_w(s["tw1"]).astype(mm_dtype), f"{tag}_bt": pad_b(s["tb1"]),
        }

    def pack_conv(w, b, tag):  # w: (3, 3, C_in, C_out)
        wp = jnp.pad(w, ((0, 0), (0, 0), (0, padc), (0, padc)))
        return {f"{tag}_w": wp.reshape(9, CP, CP).astype(mm_dtype),
                f"{tag}_b": pad_b(b)}

    out = {}
    out.update(pack_sft(p["sft0"], "s0"))
    out.update(pack_conv(p["conv0_w"], p["conv0_b"], "c0"))
    out.update(pack_sft(p["sft1"], "s1"))
    out.update(pack_conv(p["conv1_w"], p["conv1_b"], "c1"))
    return out


# ----------------------------------------------------------------------------
# Forward pass (7 ResBlock_SFT blocks sharing the same side features)
# ----------------------------------------------------------------------------

def side_embeded_feature_extract_block(img_feas, side_feas, params,
                                       *, mm_dtype=jnp.bfloat16):
    """img_feas, side_feas: NCHW float32 (PyTorch layout).  Returns NCHW f32."""
    N, C, H, W = img_feas.shape
    CP = max(128, _round_up(C, 128))     # lane-dense channel dim
    Hp = H + 2 * _P
    Wp = _round_up(W + 2 * _P, 8)        # sublane-friendly padded width
    Mp = Hp * Wp

    def to_flat(x):
        x = jnp.transpose(x, (0, 2, 3, 1)).astype(jnp.float32)   # NHWC
        x = jnp.pad(x, ((0, 0), (_P, _P), (_P, Wp - W - _P), (0, CP - C)))
        return x.reshape(N, Mp, CP)

    fea = to_flat(img_feas)
    cond = to_flat(side_feas)

    # valid-region mask on the flattened padded plane (shared by all blocks)
    row = jnp.arange(Hp, dtype=jnp.int32)[:, None]
    col = jnp.arange(Wp, dtype=jnp.int32)[None, :]
    mask = ((row >= _P) & (row < _P + H) &
            (col >= _P) & (col < _P + W)).astype(jnp.float32).reshape(Mp, 1)

    for p in params:                      # 7 ResBlock_SFT blocks
        bp = _pack_block_params(p, C, CP, mm_dtype)
        fea = _resblock_call(fea, cond, mask, bp,
                             H=H, Hp=Hp, Wp=Wp, CP=CP, mm_dtype=mm_dtype)

    out = fea.reshape(N, Hp, Wp, CP)[:, _P:_P + H, _P:_P + W, :C]
    return jnp.transpose(out, (0, 3, 1, 2))          # -> NCHW


# ----------------------------------------------------------------------------
# Deterministic synthetic parameter init (shapes follow the PyTorch module)
# ----------------------------------------------------------------------------

def _init_params(key, nf):
    # TODO(synk): the original SFTGAN uses 32 condition channels vs 64 feature
    # channels, and PyTorch stores conv weights as (C_out, C_in, kh, kw); real
    # checkpoints need a transpose to the (kh, kw, C_in, C_out) / (C_in, C_out)
    # layouts used here.
    def conv1x1(k):
        kw, kb = jax.random.split(k)
        return (0.1 * jax.random.normal(kw, (nf, nf), jnp.float32),
                0.01 * jax.random.normal(kb, (1, nf), jnp.float32))

    def conv3x3(k):
        kw, kb = jax.random.split(k)
        return (0.05 * jax.random.normal(kw, (3, 3, nf, nf), jnp.float32),
                0.01 * jax.random.normal(kb, (1, nf), jnp.float32))

    def sft(k):
        k0, k1, k2, k3 = jax.random.split(k, 4)
        sw0, sb0 = conv1x1(k0)
        sw1, sb1 = conv1x1(k1)
        tw0, tb0 = conv1x1(k2)
        tw1, tb1 = conv1x1(k3)
        return dict(sw0=sw0, sb0=sb0, sw1=sw1, sb1=sb1,
                    tw0=tw0, tb0=tb0, tw1=tw1, tb1=tb1)

    params = []
    for bk in jax.random.split(key, 7):
        k1, k2, k3, k4 = jax.random.split(bk, 4)
        c0w, c0b = conv3x3(k2)
        c1w, c1b = conv3x3(k4)
        params.append(dict(sft0=sft(k1), conv0_w=c0w, conv0_b=c0b,
                           sft1=sft(k3), conv1_w=c1w, conv1_b=c1b))
    return params


# ----------------------------------------------------------------------------

if __name__ == "__main__":
    nf = 64                      # module default channel count
    N, H, W = 2, 16, 16          # small spatial size; grid=(N,)=2 keeps both
                                 # TensorCores busy on v7x
    key = jax.random.PRNGKey(0)
    k_img, k_side, k_par = jax.random.split(key, 3)
    img_feas = jax.random.normal(k_img, (N, nf, H, W), jnp.float32)   # NCHW
    side_feas = jax.random.normal(k_side, (N, nf, H, W), jnp.float32)  # NCHW
    params = _init_params(k_par, nf)

    fwd = jax.jit(side_embeded_feature_extract_block)
    out = jax.block_until_ready(fwd(img_feas, side_feas, params))

    assert out.shape == img_feas.shape, out.shape
    assert bool(jnp.all(jnp.isfinite(out)))
    print("KERNEL_OK")
</pallas_src>

<mosaic_0001>
module attributes {stable_mosaic.version = 11 : i64} {
  func.func @_resblock_kernel(%arg0: i32, %arg1: memref<576x1xf32, #tpu.memory_space<vmem>>, %arg2: memref<1x576x128xf32, #tpu.memory_space<vmem>>, %arg3: memref<1x576x128xf32, #tpu.memory_space<vmem>>, %arg4: memref<128x256xbf16, #tpu.memory_space<vmem>>, %arg5: memref<1x256xf32, #tpu.memory_space<vmem>>, %arg6: memref<128x128xbf16, #tpu.memory_space<vmem>>, %arg7: memref<1x128xf32, #tpu.memory_space<vmem>>, %arg8: memref<128x128xbf16, #tpu.memory_space<vmem>>, %arg9: memref<1x128xf32, #tpu.memory_space<vmem>>, %arg10: memref<9x128x128xbf16, #tpu.memory_space<vmem>>, %arg11: memref<1x128xf32, #tpu.memory_space<vmem>>, %arg12: memref<128x256xbf16, #tpu.memory_space<vmem>>, %arg13: memref<1x256xf32, #tpu.memory_space<vmem>>, %arg14: memref<128x128xbf16, #tpu.memory_space<vmem>>, %arg15: memref<1x128xf32, #tpu.memory_space<vmem>>, %arg16: memref<128x128xbf16, #tpu.memory_space<vmem>>, %arg17: memref<1x128xf32, #tpu.memory_space<vmem>>, %arg18: memref<9x128x128xbf16, #tpu.memory_space<vmem>>, %arg19: memref<1x128xf32, #tpu.memory_space<vmem>>, %arg20: memref<1x576x128xf32, #tpu.memory_space<vmem>>) attributes {dimension_semantics = [#tpu.dimension_semantics<parallel>], iteration_bounds = array<i64: 2>, scalar_prefetch = 0 : i64, scratch_operands = 0 : i64, tpu.core_type = #tpu.core_type<tc>, window_params = [{pipeline_mode = #tpu.pipeline_mode<synchronous>, transform_indices = @transform_0, window_bounds = array<i64: 576, 1>}, {transform_indices = @transform_1, window_bounds = array<i64: 1, 576, 128>}, {transform_indices = @transform_2, window_bounds = array<i64: 1, 576, 128>}, {pipeline_mode = #tpu.pipeline_mode<synchronous>, transform_indices = @transform_3, window_bounds = array<i64: 128, 256>}, {pipeline_mode = #tpu.pipeline_mode<synchronous>, transform_indices = @transform_4, window_bounds = array<i64: 1, 256>}, {pipeline_mode = #tpu.pipeline_mode<synchronous>, transform_indices = @transform_5, window_bounds = array<i64: 128, 128>}, {pipeline_mode = #tpu.pipeline_mode<synchronous>, transform_indices = @transform_6, window_bounds = array<i64: 1, 128>}, {pipeline_mode = #tpu.pipeline_mode<synchronous>, transform_indices = @transform_7, window_bounds = array<i64: 128, 128>}, {pipeline_mode = #tpu.pipeline_mode<synchronous>, transform_indices = @transform_8, window_bounds = array<i64: 1, 128>}, {pipeline_mode = #tpu.pipeline_mode<synchronous>, transform_indices = @transform_9, window_bounds = array<i64: 9, 128, 128>}, {pipeline_mode = #tpu.pipeline_mode<synchronous>, transform_indices = @transform_10, window_bounds = array<i64: 1, 128>}, {pipeline_mode = #tpu.pipeline_mode<synchronous>, transform_indices = @transform_11, window_bounds = array<i64: 128, 256>}, {pipeline_mode = #tpu.pipeline_mode<synchronous>, transform_indices = @transform_12, window_bounds = array<i64: 1, 256>}, {pipeline_mode = #tpu.pipeline_mode<synchronous>, transform_indices = @transform_13, window_bounds = array<i64: 128, 128>}, {pipeline_mode = #tpu.pipeline_mode<synchronous>, transform_indices = @transform_14, window_bounds = array<i64: 1, 128>}, {pipeline_mode = #tpu.pipeline_mode<synchronous>, transform_indices = @transform_15, window_bounds = array<i64: 128, 128>}, {pipeline_mode = #tpu.pipeline_mode<synchronous>, transform_indices = @transform_16, window_bounds = array<i64: 1, 128>}, {pipeline_mode = #tpu.pipeline_mode<synchronous>, transform_indices = @transform_17, window_bounds = array<i64: 9, 128, 128>}, {pipeline_mode = #tpu.pipeline_mode<synchronous>, transform_indices = @transform_18, window_bounds = array<i64: 1, 128>}, {transform_indices = @transform_19, window_bounds = array<i64: 1, 576, 128>}]} {
    %c0 = arith.constant 0 : index
    %c0_0 = arith.constant 0 : index
    %c0_1 = arith.constant 0 : index
    %0 = vector.load %arg2[%c0, %c0_0, %c0_1] : memref<1x576x128xf32, #tpu.memory_space<vmem>>, vector<1x576x128xf32>
    %1 = vector.shape_cast %0 : vector<1x576x128xf32> to vector<576x128xf32>
    %c0_2 = arith.constant 0 : index
    %c0_3 = arith.constant 0 : index
    %c0_4 = arith.constant 0 : index
    %2 = vector.load %arg3[%c0_2, %c0_3, %c0_4] : memref<1x576x128xf32, #tpu.memory_space<vmem>>, vector<1x576x128xf32>
    %3 = vector.shape_cast %2 : vector<1x576x128xf32> to vector<576x128xf32>
    %c0_5 = arith.constant 0 : index
    %c0_6 = arith.constant 0 : index
    %4 = vector.load %arg1[%c0_5, %c0_6] : memref<576x1xf32, #tpu.memory_space<vmem>>, vector<576x1xf32>
    %5 = arith.truncf %3 : vector<576x128xf32> to vector<576x128xbf16>
    %c0_7 = arith.constant 0 : index
    %c0_8 = arith.constant 0 : index
    %6 = vector.load %arg4[%c0_7, %c0_8] : memref<128x256xbf16, #tpu.memory_space<vmem>>, vector<128x256xbf16>
    %cst = arith.constant dense<0.000000e+00> : vector<576x256xf32>
    %7 = tpu.matmul %5, %6, %cst {dimension_numbers = #tpu.dot_dimension_numbers<[1], [0], [0], [1], [0, 0, 1, 1], [], []>} : vector<576x128xbf16>, vector<128x256xbf16>, vector<576x256xf32> -> vector<576x256xf32>
    %c0_9 = arith.constant 0 : index
    %c0_10 = arith.constant 0 : index
    %8 = vector.load %arg5[%c0_9, %c0_10] : memref<1x256xf32, #tpu.memory_space<vmem>>, vector<1x256xf32>
    %9 = vector.broadcast %8 : vector<1x256xf32> to vector<576x256xf32>
    %10 = arith.addf %7, %9 : vector<576x256xf32>
    %cst_11 = arith.constant 0.000000e+00 : f32
    %11 = vector.broadcast %cst_11 : f32 to vector<576x256xf32>
    %12 = arith.cmpf oge, %10, %11 : vector<576x256xf32>
    %cst_12 = arith.constant 1.000000e-01 : f32
    %13 = vector.broadcast %cst_12 : f32 to vector<576x256xf32>
    %14 = arith.mulf %13, %10 : vector<576x256xf32>
    %15 = arith.select %12, %10, %14 : vector<576x256xi1>, vector<576x256xf32>
    %16 = arith.truncf %15 : vector<576x256xf32> to vector<576x256xbf16>
    %17 = vector.extract_strided_slice %16 {offsets = [0, 0], sizes = [576, 128], strides = [1, 1]} : vector<576x256xbf16> to vector<576x128xbf16>
    %c0_13 = arith.constant 0 : index
    %c0_14 = arith.constant 0 : index
    %18 = vector.load %arg6[%c0_13, %c0_14] : memref<128x128xbf16, #tpu.memory_space<vmem>>, vector<128x128xbf16>
    %cst_15 = arith.constant dense<0.000000e+00> : vector<576x128xf32>
    %19 = tpu.matmul %17, %18, %cst_15 {dimension_numbers = #tpu.dot_dimension_numbers<[1], [0], [0], [1], [0, 0, 1, 1], [], []>} : vector<576x128xbf16>, vector<128x128xbf16>, vector<576x128xf32> -> vector<576x128xf32>
    %c0_16 = arith.constant 0 : index
    %c0_17 = arith.constant 0 : index
    %20 = vector.load %arg7[%c0_16, %c0_17] : memref<1x128xf32, #tpu.memory_space<vmem>>, vector<1x128xf32>
    %21 = vector.broadcast %20 : vector<1x128xf32> to vector<576x128xf32>
    %22 = arith.addf %19, %21 : vector<576x128xf32>
    %23 = vector.extract_strided_slice %16 {offsets = [0, 128], sizes = [576, 128], strides = [1, 1]} : vector<576x256xbf16> to vector<576x128xbf16>
    %c0_18 = arith.constant 0 : index
    %c0_19 = arith.constant 0 : index
    %24 = vector.load %arg8[%c0_18, %c0_19] : memref<128x128xbf16, #tpu.memory_space<vmem>>, vector<128x128xbf16>
    %cst_20 = arith.constant dense<0.000000e+00> : vector<576x128xf32>
    %25 = tpu.matmul %23, %24, %cst_20 {dimension_numbers = #tpu.dot_dimension_numbers<[1], [0], [0], [1], [0, 0, 1, 1], [], []>} : vector<576x128xbf16>, vector<128x128xbf16>, vector<576x128xf32> -> vector<576x128xf32>
    %c0_21 = arith.constant 0 : index
    %c0_22 = arith.constant 0 : index
    %26 = vector.load %arg9[%c0_21, %c0_22] : memref<1x128xf32, #tpu.memory_space<vmem>>, vector<1x128xf32>
    %27 = vector.broadcast %26 : vector<1x128xf32> to vector<576x128xf32>
    %28 = arith.addf %25, %27 : vector<576x128xf32>
    %cst_23 = arith.constant 1.000000e+00 : f32
    %29 = vector.broadcast %cst_23 : f32 to vector<576x128xf32>
    %30 = arith.addf %22, %29 : vector<576x128xf32>
    %31 = arith.mulf %1, %30 : vector<576x128xf32>
    %32 = arith.addf %31, %28 : vector<576x128xf32>
    %33 = vector.broadcast %4 : vector<576x1xf32> to vector<576x128xf32>
    %34 = arith.mulf %32, %33 : vector<576x128xf32>
    %c0_24 = arith.constant 0 : index
    %c0_25 = arith.constant 0 : index
    %35 = vector.load %arg11[%c0_24, %c0_25] : memref<1x128xf32, #tpu.memory_space<vmem>>, vector<1x128xf32>
    %36 = vector.shape_cast %35 : vector<1x128xf32> to vector<1x128xf32>
    %37 = vector.broadcast %36 : vector<1x128xf32> to vector<480x128xf32>
    %38 = vector.extract_strided_slice %34 {offsets = [23, 0], sizes = [480, 128], strides = [1, 1]} : vector<576x128xf32> to vector<480x128xf32>
    %39 = arith.truncf %38 : vector<480x128xf32> to vector<480x128xbf16>
    %c0_26 = arith.constant 0 : index
    %c0_27 = arith.constant 0 : index
    %c0_28 = arith.constant 0 : index
    %40 = vector.load %arg10[%c0_26, %c0_27, %c0_28] : memref<9x128x128xbf16, #tpu.memory_space<vmem>>, vector<1x128x128xbf16>
    %41 = vector.shape_cast %40 : vector<1x128x128xbf16> to vector<128x128xbf16>
    %cst_29 = arith.constant dense<0.000000e+00> : vector<480x128xf32>
    %42 = tpu.matmul %39, %41, %cst_29 {dimension_numbers = #tpu.dot_dimension_numbers<[1], [0], [0], [1], [0, 0, 1, 1], [], []>} : vector<480x128xbf16>, vector<128x128xbf16>, vector<480x128xf32> -> vector<480x128xf32>
    %43 = arith.addf %37, %42 : vector<480x128xf32>
    %44 = vector.extract_strided_slice %34 {offsets = [24, 0], sizes = [480, 128], strides = [1, 1]} : vector<576x128xf32> to vector<480x128xf32>
    %45 = arith.truncf %44 : vector<480x128xf32> to vector<480x128xbf16>
    %c1 = arith.constant 1 : index
    %c0_30 = arith.constant 0 : index
    %c0_31 = arith.constant 0 : index
    %46 = vector.load %arg10[%c1, %c0_30, %c0_31] : memref<9x128x128xbf16, #tpu.memory_space<vmem>>, vector<1x128x128xbf16>
    %47 = vector.shape_cast %46 : vector<1x128x128xbf16> to vector<128x128xbf16>
    %cst_32 = arith.constant dense<0.000000e+00> : vector<480x128xf32>
    %48 = tpu.matmul %45, %47, %cst_32 {dimension_numbers = #tpu.dot_dimension_numbers<[1], [0], [0], [1], [0, 0, 1, 1], [], []>} : vector<480x128xbf16>, vector<128x128xbf16>, vector<480x128xf32> -> vector<480x128xf32>
    %49 = arith.addf %43, %48 : vector<480x128xf32>
    %50 = vector.extract_strided_slice %34 {offsets = [25, 0], sizes = [480, 128], strides = [1, 1]} : vector<576x128xf32> to vector<480x128xf32>
    %51 = arith.truncf %50 : vector<480x128xf32> to vector<480x128xbf16>
    %c2 = arith.constant 2 : index
    %c0_33 = arith.constant 0 : index
    %c0_34 = arith.constant 0 : index
    %52 = vector.load %arg10[%c2, %c0_33, %c0_34] : memref<9x128x128xbf16, #tpu.memory_space<vmem>>, vector<1x128x128xbf16>
    %53 = vector.shape_cast %52 : vector<1x128x128xbf16> to vector<128x128xbf16>
    %cst_35 = arith.constant dense<0.000000e+00> : vector<480x128xf32>
    %54 = tpu.matmul %51, %53, %cst_35 {dimension_numbers = #tpu.dot_dimension_numbers<[1], [0], [0], [1], [0, 0, 1, 1], [], []>} : vector<480x128xbf16>, vector<128x128xbf16>, vector<480x128xf32> -> vector<480x128xf32>
    %55 = arith.addf %49, %54 : vector<480x128xf32>
    %56 = vector.extract_strided_slice %34 {offsets = [47, 0], sizes = [480, 128], strides = [1, 1]} : vector<576x128xf32> to vector<480x128xf32>
    %57 = arith.truncf %56 : vector<480x128xf32> to vector<480x128xbf16>
    %c3 = arith.constant 3 : index
    %c0_36 = arith.constant 0 : index
    %c0_37 = arith.constant 0 : index
    %58 = vector.load %arg10[%c3, %c0_36, %c0_37] : memref<9x128x128xbf16, #tpu.memory_space<vmem>>, vector<1x128x128xbf16>
    %59 = vector.shape_cast %58 : vector<1x128x128xbf16> to vector<128x128xbf16>
    %cst_38 = arith.constant dense<0.000000e+00> : vector<480x128xf32>
    %60 = tpu.matmul %57, %59, %cst_38 {dimension_numbers = #tpu.dot_dimension_numbers<[1], [0], [0], [1], [0, 0, 1, 1], [], []>} : vector<480x128xbf16>, vector<128x128xbf16>, vector<480x128xf32> -> vector<480x128xf32>
    %61 = arith.addf %55, %60 : vector<480x128xf32>
    %62 = vector.extract_strided_slice %34 {offsets = [48, 0], sizes = [480, 128], strides = [1, 1]} : vector<576x128xf32> to vector<480x128xf32>
    %63 = arith.truncf %62 : vector<480x128xf32> to vector<480x128xbf16>
    %c4 = arith.constant 4 : index
    %c0_39 = arith.constant 0 : index
    %c0_40 = arith.constant 0 : index
    %64 = vector.load %arg10[%c4, %c0_39, %c0_40] : memref<9x128x128xbf16, #tpu.memory_space<vmem>>, vector<1x128x128xbf16>
    %65 = vector.shape_cast %64 : vector<1x128x128xbf16> to vector<128x128xbf16>
    %cst_41 = arith.constant dense<0.000000e+00> : vector<480x128xf32>
    %66 = tpu.matmul %63, %65, %cst_41 {dimension_numbers = #tpu.dot_dimension_numbers<[1], [0], [0], [1], [0, 0, 1, 1], [], []>} : vector<480x128xbf16>, vector<128x128xbf16>, vector<480x128xf32> -> vector<480x128xf32>
    %67 = arith.addf %61, %66 : vector<480x128xf32>
    %68 = vector.extract_strided_slice %34 {offsets = [49, 0], sizes = [480, 128], strides = [1, 1]} : vector<576x128xf32> to vector<480x128xf32>
    %69 = arith.truncf %68 : vector<480x128xf32> to vector<480x128xbf16>
    %c5 = arith.constant 5 : index
    %c0_42 = arith.constant 0 : index
    %c0_43 = arith.constant 0 : index
    %70 = vector.load %arg10[%c5, %c0_42, %c0_43] : memref<9x128x128xbf16, #tpu.memory_space<vmem>>, vector<1x128x128xbf16>
    %71 = vector.shape_cast %70 : vector<1x128x128xbf16> to vector<128x128xbf16>
    %cst_44 = arith.constant dense<0.000000e+00> : vector<480x128xf32>
    %72 = tpu.matmul %69, %71, %cst_44 {dimension_numbers = #tpu.dot_dimension_numbers<[1], [0], [0], [1], [0, 0, 1, 1], [], []>} : vector<480x128xbf16>, vector<128x128xbf16>, vector<480x128xf32> -> vector<480x128xf32>
    %73 = arith.addf %67, %72 : vector<480x128xf32>
    %74 = vector.extract_strided_slice %34 {offsets = [71, 0], sizes = [480, 128], strides = [1, 1]} : vector<576x128xf32> to vector<480x128xf32>
    %75 = arith.truncf %74 : vector<480x128xf32> to vector<480x128xbf16>
    %c6 = arith.constant 6 : index
    %c0_45 = arith.constant 0 : index
    %c0_46 = arith.constant 0 : index
    %76 = vector.load %arg10[%c6, %c0_45, %c0_46] : memref<9x128x128xbf16, #tpu.memory_space<vmem>>, vector<1x128x128xbf16>
    %77 = vector.shape_cast %76 : vector<1x128x128xbf16> to vector<128x128xbf16>
    %cst_47 = arith.constant dense<0.000000e+00> : vector<480x128xf32>
    %78 = tpu.matmul %75, %77, %cst_47 {dimension_numbers = #tpu.dot_dimension_numbers<[1], [0], [0], [1], [0, 0, 1, 1], [], []>} : vector<480x128xbf16>, vector<128x128xbf16>, vector<480x128xf32> -> vector<480x128xf32>
    %79 = arith.addf %73, %78 : vector<480x128xf32>
    %80 = vector.extract_strided_slice %34 {offsets = [72, 0], sizes = [480, 128], strides = [1, 1]} : vector<576x128xf32> to vector<480x128xf32>
    %81 = arith.truncf %80 : vector<480x128xf32> to vector<480x128xbf16>
    %c7 = arith.constant 7 : index
    %c0_48 = arith.constant 0 : index
    %c0_49 = arith.constant 0 : index
    %82 = vector.load %arg10[%c7, %c0_48, %c0_49] : memref<9x128x128xbf16, #tpu.memory_space<vmem>>, vector<1x128x128xbf16>
    %83 = vector.shape_cast %82 : vector<1x128x128xbf16> to vector<128x128xbf16>
    %cst_50 = arith.constant dense<0.000000e+00> : vector<480x128xf32>
    %84 = tpu.matmul %81, %83, %cst_50 {dimension_numbers = #tpu.dot_dimension_numbers<[1], [0], [0], [1], [0, 0, 1, 1], [], []>} : vector<480x128xbf16>, vector<128x128xbf16>, vector<480x128xf32> -> vector<480x128xf32>
    %85 = arith.addf %79, %84 : vector<480x128xf32>
    %86 = vector.extract_strided_slice %34 {offsets = [73, 0], sizes = [480, 128], strides = [1, 1]} : vector<576x128xf32> to vector<480x128xf32>
    %87 = arith.truncf %86 : vector<480x128xf32> to vector<480x128xbf16>
    %c8 = arith.constant 8 : index
    %c0_51 = arith.constant 0 : index
    %c0_52 = arith.constant 0 : index
    %88 = vector.load %arg10[%c8, %c0_51, %c0_52] : memref<9x128x128xbf16, #tpu.memory_space<vmem>>, vector<1x128x128xbf16>
    %89 = vector.shape_cast %88 : vector<1x128x128xbf16> to vector<128x128xbf16>
    %cst_53 = arith.constant dense<0.000000e+00> : vector<480x128xf32>
    %90 = tpu.matmul %87, %89, %cst_53 {dimension_numbers = #tpu.dot_dimension_numbers<[1], [0], [0], [1], [0, 0, 1, 1], [], []>} : vector<480x128xbf16>, vector<128x128xbf16>, vector<480x128xf32> -> vector<480x128xf32>
    %91 = arith.addf %85, %90 : vector<480x128xf32>
    %cst_54 = arith.constant 0.000000e+00 : f32
    %92 = vector.broadcast %cst_54 : f32 to vector<480x128xf32>
    %93 = arith.maximumf %91, %92 : vector<480x128xf32>
    %94 = vector.extract_strided_slice %3 {offsets = [48, 0], sizes = [480, 128], strides = [1, 1]} : vector<576x128xf32> to vector<480x128xf32>
    %95 = arith.truncf %94 : vector<480x128xf32> to vector<480x128xbf16>
    %c0_55 = arith.constant 0 : index
    %c0_56 = arith.constant 0 : index
    %96 = vector.load %arg12[%c0_55, %c0_56] : memref<128x256xbf16, #tpu.memory_space<vmem>>, vector<128x256xbf16>
    %cst_57 = arith.constant dense<0.000000e+00> : vector<480x256xf32>
    %97 = tpu.matmul %95, %96, %cst_57 {dimension_numbers = #tpu.dot_dimension_numbers<[1], [0], [0], [1], [0, 0, 1, 1], [], []>} : vector<480x128xbf16>, vector<128x256xbf16>, vector<480x256xf32> -> vector<480x256xf32>
    %c0_58 = arith.constant 0 : index
    %c0_59 = arith.constant 0 : index
    %98 = vector.load %arg13[%c0_58, %c0_59] : memref<1x256xf32, #tpu.memory_space<vmem>>, vector<1x256xf32>
    %99 = vector.broadcast %98 : vector<1x256xf32> to vector<480x256xf32>
    %100 = arith.addf %97, %99 : vector<480x256xf32>
    %cst_60 = arith.constant 0.000000e+00 : f32
    %101 = vector.broadcast %cst_60 : f32 to vector<480x256xf32>
    %102 = arith.cmpf oge, %100, %101 : vector<480x256xf32>
    %cst_61 = arith.constant 1.000000e-01 : f32
    %103 = vector.broadcast %cst_61 : f32 to vector<480x256xf32>
    %104 = arith.mulf %103, %100 : vector<480x256xf32>
    %105 = arith.select %102, %100, %104 : vector<480x256xi1>, vector<480x256xf32>
    %106 = arith.truncf %105 : vector<480x256xf32> to vector<480x256xbf16>
    %107 = vector.extract_strided_slice %106 {offsets = [0, 0], sizes = [480, 128], strides = [1, 1]} : vector<480x256xbf16> to vector<480x128xbf16>
    %c0_62 = arith.constant 0 : index
    %c0_63 = arith.constant 0 : index
    %108 = vector.load %arg14[%c0_62, %c0_63] : memref<128x128xbf16, #tpu.memory_space<vmem>>, vector<128x128xbf16>
    %cst_64 = arith.constant dense<0.000000e+00> : vector<480x128xf32>
    %109 = tpu.matmul %107, %108, %cst_64 {dimension_numbers = #tpu.dot_dimension_numbers<[1], [0], [0], [1], [0, 0, 1, 1], [], []>} : vector<480x128xbf16>, vector<128x128xbf16>, vector<480x128xf32> -> vector<480x128xf32>
    %c0_65 = arith.constant 0 : index
    %c0_66 = arith.constant 0 : index
    %110 = vector.load %arg15[%c0_65, %c0_66] : memref<1x128xf32, #tpu.memory_space<vmem>>, vector<1x128xf32>
    %111 = vector.broadcast %110 : vector<1x128xf32> to vector<480x128xf32>
    %112 = arith.addf %109, %111 : vector<480x128xf32>
    %113 = vector.extract_strided_slice %106 {offsets = [0, 128], sizes = [480, 128], strides = [1, 1]} : vector<480x256xbf16> to vector<480x128xbf16>
    %c0_67 = arith.constant 0 : index
    %c0_68 = arith.constant 0 : index
    %114 = vector.load %arg16[%c0_67, %c0_68] : memref<128x128xbf16, #tpu.memory_space<vmem>>, vector<128x128xbf16>
    %cst_69 = arith.constant dense<0.000000e+00> : vector<480x128xf32>
    %115 = tpu.matmul %113, %114, %cst_69 {dimension_numbers = #tpu.dot_dimension_numbers<[1], [0], [0], [1], [0, 0, 1, 1], [], []>} : vector<480x128xbf16>, vector<128x128xbf16>, vector<480x128xf32> -> vector<480x128xf32>
    %c0_70 = arith.constant 0 : index
    %c0_71 = arith.constant 0 : index
    %116 = vector.load %arg17[%c0_70, %c0_71] : memref<1x128xf32, #tpu.memory_space<vmem>>, vector<1x128xf32>
    %117 = vector.broadcast %116 : vector<1x128xf32> to vector<480x128xf32>
    %118 = arith.addf %115, %117 : vector<480x128xf32>
    %cst_72 = arith.constant 1.000000e+00 : f32
    %119 = vector.broadcast %cst_72 : f32 to vector<480x128xf32>
    %120 = arith.addf %112, %119 : vector<480x128xf32>
    %121 = arith.mulf %93, %120 : vector<480x128xf32>
    %122 = arith.addf %121, %118 : vector<480x128xf32>
    %123 = vector.extract_strided_slice %4 {offsets = [48, 0], sizes = [480, 1], strides = [1, 1]} : vector<576x1xf32> to vector<480x1xf32>
    %124 = vector.broadcast %123 : vector<480x1xf32> to vector<480x128xf32>
    %125 = arith.mulf %122, %124 : vector<480x128xf32>
    %c0_73 = arith.constant 0 : index
    %c0_74 = arith.constant 0 : index
    %126 = vector.load %arg19[%c0_73, %c0_74] : memref<1x128xf32, #tpu.memory_space<vmem>>, vector<1x128xf32>
    %127 = vector.shape_cast %126 : vector<1x128xf32> to vector<1x128xf32>
    %128 = vector.broadcast %127 : vector<1x128xf32> to vector<384x128xf32>
    %129 = vector.extract_strided_slice %125 {offsets = [23, 0], sizes = [384, 128], strides = [1, 1]} : vector<480x128xf32> to vector<384x128xf32>
    %130 = arith.truncf %129 : vector<384x128xf32> to vector<384x128xbf16>
    %c0_75 = arith.constant 0 : index
    %c0_76 = arith.constant 0 : index
    %c0_77 = arith.constant 0 : index
    %131 = vector.load %arg18[%c0_75, %c0_76, %c0_77] : memref<9x128x128xbf16, #tpu.memory_space<vmem>>, vector<1x128x128xbf16>
    %132 = vector.shape_cast %131 : vector<1x128x128xbf16> to vector<128x128xbf16>
    %cst_78 = arith.constant dense<0.000000e+00> : vector<384x128xf32>
    %133 = tpu.matmul %130, %132, %cst_78 {dimension_numbers = #tpu.dot_dimension_numbers<[1], [0], [0], [1], [0, 0, 1, 1], [], []>} : vector<384x128xbf16>, vector<128x128xbf16>, vector<384x128xf32> -> vector<384x128xf32>
    %134 = arith.addf %128, %133 : vector<384x128xf32>
    %135 = vector.extract_strided_slice %125 {offsets = [24, 0], sizes = [384, 128], strides = [1, 1]} : vector<480x128xf32> to vector<384x128xf32>
    %136 = arith.truncf %135 : vector<384x128xf32> to vector<384x128xbf16>
    %c1_79 = arith.constant 1 : index
    %c0_80 = arith.constant 0 : index
    %c0_81 = arith.constant 0 : index
    %137 = vector.load %arg18[%c1_79, %c0_80, %c0_81] : memref<9x128x128xbf16, #tpu.memory_space<vmem>>, vector<1x128x128xbf16>
    %138 = vector.shape_cast %137 : vector<1x128x128xbf16> to vector<128x128xbf16>
    %cst_82 = arith.constant dense<0.000000e+00> : vector<384x128xf32>
    %139 = tpu.matmul %136, %138, %cst_82 {dimension_numbers = #tpu.dot_dimension_numbers<[1], [0], [0], [1], [0, 0, 1, 1], [], []>} : vector<384x128xbf16>, vector<128x128xbf16>, vector<384x128xf32> -> vector<384x128xf32>
    %140 = arith.addf %134, %139 : vector<384x128xf32>
    %141 = vector.extract_strided_slice %125 {offsets = [25, 0], sizes = [384, 128], strides = [1, 1]} : vector<480x128xf32> to vector<384x128xf32>
    %142 = arith.truncf %141 : vector<384x128xf32> to vector<384x128xbf16>
    %c2_83 = arith.constant 2 : index
    %c0_84 = arith.constant 0 : index
    %c0_85 = arith.constant 0 : index
    %143 = vector.load %arg18[%c2_83, %c0_84, %c0_85] : memref<9x128x128xbf16, #tpu.memory_space<vmem>>, vector<1x128x128xbf16>
    %144 = vector.shape_cast %143 : vector<1x128x128xbf16> to vector<128x128xbf16>
    %cst_86 = arith.constant dense<0.000000e+00> : vector<384x128xf32>
    %145 = tpu.matmul %142, %144, %cst_86 {dimension_numbers = #tpu.dot_dimension_numbers<[1], [0], [0], [1], [0, 0, 1, 1], [], []>} : vector<384x128xbf16>, vector<128x128xbf16>, vector<384x128xf32> -> vector<384x128xf32>
    %146 = arith.addf %140, %145 : vector<384x128xf32>
    %147 = vector.extract_strided_slice %125 {offsets = [47, 0], sizes = [384, 128], strides = [1, 1]} : vector<480x128xf32> to vector<384x128xf32>
    %148 = arith.truncf %147 : vector<384x128xf32> to vector<384x128xbf16>
    %c3_87 = arith.constant 3 : index
    %c0_88 = arith.constant 0 : index
    %c0_89 = arith.constant 0 : index
    %149 = vector.load %arg18[%c3_87, %c0_88, %c0_89] : memref<9x128x128xbf16, #tpu.memory_space<vmem>>, vector<1x128x128xbf16>
    %150 = vector.shape_cast %149 : vector<1x128x128xbf16> to vector<128x128xbf16>
    %cst_90 = arith.constant dense<0.000000e+00> : vector<384x128xf32>
    %151 = tpu.matmul %148, %150, %cst_90 {dimension_numbers = #tpu.dot_dimension_numbers<[1], [0], [0], [1], [0, 0, 1, 1], [], []>} : vector<384x128xbf16>, vector<128x128xbf16>, vector<384x128xf32> -> vector<384x128xf32>
    %152 = arith.addf %146, %151 : vector<384x128xf32>
    %153 = vector.extract_strided_slice %125 {offsets = [48, 0], sizes = [384, 128], strides = [1, 1]} : vector<480x128xf32> to vector<384x128xf32>
    %154 = arith.truncf %153 : vector<384x128xf32> to vector<384x128xbf16>
    %c4_91 = arith.constant 4 : index
    %c0_92 = arith.constant 0 : index
    %c0_93 = arith.constant 0 : index
    %155 = vector.load %arg18[%c4_91, %c0_92, %c0_93] : memref<9x128x128xbf16, #tpu.memory_space<vmem>>, vector<1x128x128xbf16>
    %156 = vector.shape_cast %155 : vector<1x128x128xbf16> to vector<128x128xbf16>
    %cst_94 = arith.constant dense<0.000000e+00> : vector<384x128xf32>
    %157 = tpu.matmul %154, %156, %cst_94 {dimension_numbers = #tpu.dot_dimension_numbers<[1], [0], [0], [1], [0, 0, 1, 1], [], []>} : vector<384x128xbf16>, vector<128x128xbf16>, vector<384x128xf32> -> vector<384x128xf32>
    %158 = arith.addf %152, %157 : vector<384x128xf32>
    %159 = vector.extract_strided_slice %125 {offsets = [49, 0], sizes = [384, 128], strides = [1, 1]} : vector<480x128xf32> to vector<384x128xf32>
    %160 = arith.truncf %159 : vector<384x128xf32> to vector<384x128xbf16>
    %c5_95 = arith.constant 5 : index
    %c0_96 = arith.constant 0 : index
    %c0_97 = arith.constant 0 : index
    %161 = vector.load %arg18[%c5_95, %c0_96, %c0_97] : memref<9x128x128xbf16, #tpu.memory_space<vmem>>, vector<1x128x128xbf16>
    %162 = vector.shape_cast %161 : vector<1x128x128xbf16> to vector<128x128xbf16>
    %cst_98 = arith.constant dense<0.000000e+00> : vector<384x128xf32>
    %163 = tpu.matmul %160, %162, %cst_98 {dimension_numbers = #tpu.dot_dimension_numbers<[1], [0], [0], [1], [0, 0, 1, 1], [], []>} : vector<384x128xbf16>, vector<128x128xbf16>, vector<384x128xf32> -> vector<384x128xf32>
    %164 = arith.addf %158, %163 : vector<384x128xf32>
    %165 = vector.extract_strided_slice %125 {offsets = [71, 0], sizes = [384, 128], strides = [1, 1]} : vector<480x128xf32> to vector<384x128xf32>
    %166 = arith.truncf %165 : vector<384x128xf32> to vector<384x128xbf16>
    %c6_99 = arith.constant 6 : index
    %c0_100 = arith.constant 0 : index
    %c0_101 = arith.constant 0 : index
    %167 = vector.load %arg18[%c6_99, %c0_100, %c0_101] : memref<9x128x128xbf16, #tpu.memory_space<vmem>>, vector<1x128x128xbf16>
    %168 = vector.shape_cast %167 : vector<1x128x128xbf16> to vector<128x128xbf16>
    %cst_102 = arith.constant dense<0.000000e+00> : vector<384x128xf32>
    %169 = tpu.matmul %166, %168, %cst_102 {dimension_numbers = #tpu.dot_dimension_numbers<[1], [0], [0], [1], [0, 0, 1, 1], [], []>} : vector<384x128xbf16>, vector<128x128xbf16>, vector<384x128xf32> -> vector<384x128xf32>
    %170 = arith.addf %164, %169 : vector<384x128xf32>
    %171 = vector.extract_strided_slice %125 {offsets = [72, 0], sizes = [384, 128], strides = [1, 1]} : vector<480x128xf32> to vector<384x128xf32>
    %172 = arith.truncf %171 : vector<384x128xf32> to vector<384x128xbf16>
    %c7_103 = arith.constant 7 : index
    %c0_104 = arith.constant 0 : index
    %c0_105 = arith.constant 0 : index
    %173 = vector.load %arg18[%c7_103, %c0_104, %c0_105] : memref<9x128x128xbf16, #tpu.memory_space<vmem>>, vector<1x128x128xbf16>
    %174 = vector.shape_cast %173 : vector<1x128x128xbf16> to vector<128x128xbf16>
    %cst_106 = arith.constant dense<0.000000e+00> : vector<384x128xf32>
    %175 = tpu.matmul %172, %174, %cst_106 {dimension_numbers = #tpu.dot_dimension_numbers<[1], [0], [0], [1], [0, 0, 1, 1], [], []>} : vector<384x128xbf16>, vector<128x128xbf16>, vector<384x128xf32> -> vector<384x128xf32>
    %176 = arith.addf %170, %175 : vector<384x128xf32>
    %177 = vector.extract_strided_slice %125 {offsets = [73, 0], sizes = [384, 128], strides = [1, 1]} : vector<480x128xf32> to vector<384x128xf32>
    %178 = arith.truncf %177 : vector<384x128xf32> to vector<384x128xbf16>
    %c8_107 = arith.constant 8 : index
    %c0_108 = arith.constant 0 : index
    %c0_109 = arith.constant 0 : index
    %179 = vector.load %arg18[%c8_107, %c0_108, %c0_109] : memref<9x128x128xbf16, #tpu.memory_space<vmem>>, vector<1x128x128xbf16>
    %180 = vector.shape_cast %179 : vector<1x128x128xbf16> to vector<128x128xbf16>
    %cst_110 = arith.constant dense<0.000000e+00> : vector<384x128xf32>
    %181 = tpu.matmul %178, %180, %cst_110 {dimension_numbers = #tpu.dot_dimension_numbers<[1], [0], [0], [1], [0, 0, 1, 1], [], []>} : vector<384x128xbf16>, vector<128x128xbf16>, vector<384x128xf32> -> vector<384x128xf32>
    %182 = arith.addf %176, %181 : vector<384x128xf32>
    %183 = vector.extract_strided_slice %1 {offsets = [96, 0], sizes = [384, 128], strides = [1, 1]} : vector<576x128xf32> to vector<384x128xf32>
    %184 = arith.addf %183, %182 : vector<384x128xf32>
    %185 = vector.extract_strided_slice %4 {offsets = [96, 0], sizes = [384, 1], strides = [1, 1]} : vector<576x1xf32> to vector<384x1xf32>
    %186 = vector.broadcast %185 : vector<384x1xf32> to vector<384x128xf32>
    %187 = arith.mulf %184, %186 : vector<384x128xf32>
    %cst_111 = arith.constant 0.000000e+00 : f32
    %188 = vector.broadcast %cst_111 : f32 to vector<96x128xf32>
    %c0_112 = arith.constant 0 : index
    %c0_113 = arith.constant 0 : index
    %c0_114 = arith.constant 0 : index
    %189 = vector.load %arg20[%c0_112, %c0_113, %c0_114] : memref<1x576x128xf32, #tpu.memory_space<vmem>>, vector<1x96x128xf32>
    %190 = vector.shape_cast %189 : vector<1x96x128xf32> to vector<96x128xf32>
    %191 = vector.shape_cast %188 : vector<96x128xf32> to vector<1x96x128xf32>
    tpu.vector_store %arg20[%c0_112, %c0_113, %c0_114], %191 {strides = array<i32>} : memref<1x576x128xf32, #tpu.memory_space<vmem>>, vector<1x96x128xf32>,
    %c0_115 = arith.constant 0 : index
    %c96 = arith.constant 96 : index
    %c0_116 = arith.constant 0 : index
    %192 = vector.load %arg20[%c0_115, %c96, %c0_116] : memref<1x576x128xf32, #tpu.memory_space<vmem>>, vector<1x384x128xf32>
    %193 = vector.shape_cast %192 : vector<1x384x128xf32> to vector<384x128xf32>
    %194 = vector.shape_cast %187 : vector<384x128xf32> to vector<1x384x128xf32>
    tpu.vector_store %arg20[%c0_115, %c96, %c0_116], %194 {strides = array<i32>} : memref<1x576x128xf32, #tpu.memory_space<vmem>>, vector<1x384x128xf32>,
    %cst_117 = arith.constant 0.000000e+00 : f32
    %195 = vector.broadcast %cst_117 : f32 to vector<96x128xf32>
    %c0_118 = arith.constant 0 : index
    %c480 = arith.constant 480 : index
    %c0_119 = arith.constant 0 : index
    %196 = vector.load %arg20[%c0_118, %c480, %c0_119] : memref<1x576x128xf32, #tpu.memory_space<vmem>>, vector<1x96x128xf32>
    %197 = vector.shape_cast %196 : vector<1x96x128xf32> to vector<96x128xf32>
    %198 = vector.shape_cast %195 : vector<96x128xf32> to vector<1x96x128xf32>
    tpu.vector_store %arg20[%c0_118, %c480, %c0_119], %198 {strides = array<i32>} : memref<1x576x128xf32, #tpu.memory_space<vmem>>, vector<1x96x128xf32>,
    return
  }
  func.func @transform_0(%arg0: i32) -> (i32, i32) {
    %c0_i32 = arith.constant 0 : i32
    %c0_i32_0 = arith.constant 0 : i32
    %c0_i32_1 = arith.constant 0 : i32
    return %c0_i32, %c0_i32_0 : i32, i32
  }
  func.func @transform_1(%arg0: i32) -> (i32, i32, i32) {
    %c0_i32 = arith.constant 0 : i32
    %c0_i32_0 = arith.constant 0 : i32
    %c0_i32_1 = arith.constant 0 : i32
    return %arg0, %c0_i32, %c0_i32_0 : i32, i32, i32
  }
  func.func @transform_2(%arg0: i32) -> (i32, i32, i32) {
    %c0_i32 = arith.constant 0 : i32
    %c0_i32_0 = arith.constant 0 : i32
    %c0_i32_1 = arith.constant 0 : i32
    return %arg0, %c0_i32, %c0_i32_0 : i32, i32, i32
  }
  func.func @transform_3(%arg0: i32) -> (i32, i32) {
    %c0_i32 = arith.constant 0 : i32
    %c0_i32_0 = arith.constant 0 : i32
    %c0_i32_1 = arith.constant 0 : i32
    return %c0_i32, %c0_i32_0 : i32, i32
  }
  func.func @transform_4(%arg0: i32) -> (i32, i32) {
    %c0_i32 = arith.constant 0 : i32
    %c0_i32_0 = arith.constant 0 : i32
    %c0_i32_1 = arith.constant 0 : i32
    return %c0_i32, %c0_i32_0 : i32, i32
  }
  func.func @transform_5(%arg0: i32) -> (i32, i32) {
    %c0_i32 = arith.constant 0 : i32
    %c0_i32_0 = arith.constant 0 : i32
    %c0_i32_1 = arith.constant 0 : i32
    return %c0_i32, %c0_i32_0 : i32, i32
  }
  func.func @transform_6(%arg0: i32) -> (i32, i32) {
    %c0_i32 = arith.constant 0 : i32
    %c0_i32_0 = arith.constant 0 : i32
    %c0_i32_1 = arith.constant 0 : i32
    return %c0_i32, %c0_i32_0 : i32, i32
  }
  func.func @transform_7(%arg0: i32) -> (i32, i32) {
    %c0_i32 = arith.constant 0 : i32
    %c0_i32_0 = arith.constant 0 : i32
    %c0_i32_1 = arith.constant 0 : i32
    return %c0_i32, %c0_i32_0 : i32, i32
  }
  func.func @transform_8(%arg0: i32) -> (i32, i32) {
    %c0_i32 = arith.constant 0 : i32
    %c0_i32_0 = arith.constant 0 : i32
    %c0_i32_1 = arith.constant 0 : i32
    return %c0_i32, %c0_i32_0 : i32, i32
  }
  func.func @transform_9(%arg0: i32) -> (i32, i32, i32) {
    %c0_i32 = arith.constant 0 : i32
    %c0_i32_0 = arith.constant 0 : i32
    %c0_i32_1 = arith.constant 0 : i32
    %c0_i32_2 = arith.constant 0 : i32
    return %c0_i32, %c0_i32_0, %c0_i32_1 : i32, i32, i32
  }
  func.func @transform_10(%arg0: i32) -> (i32, i32) {
    %c0_i32 = arith.constant 0 : i32
    %c0_i32_0 = arith.constant 0 : i32
    %c0_i32_1 = arith.constant 0 : i32
    return %c0_i32, %c0_i32_0 : i32, i32
  }
  func.func @transform_11(%arg0: i32) -> (i32, i32) {
    %c0_i32 = arith.constant 0 : i32
    %c0_i32_0 = arith.constant 0 : i32
    %c0_i32_1 = arith.constant 0 : i32
    return %c0_i32, %c0_i32_0 : i32, i32
  }
  func.func @transform_12(%arg0: i32) -> (i32, i32) {
    %c0_i32 = arith.constant 0 : i32
    %c0_i32_0 = arith.constant 0 : i32
    %c0_i32_1 = arith.constant 0 : i32
    return %c0_i32, %c0_i32_0 : i32, i32
  }
  func.func @transform_13(%arg0: i32) -> (i32, i32) {
    %c0_i32 = arith.constant 0 : i32
    %c0_i32_0 = arith.constant 0 : i32
    %c0_i32_1 = arith.constant 0 : i32
    return %c0_i32, %c0_i32_0 : i32, i32
  }
  func.func @transform_14(%arg0: i32) -> (i32, i32) {
    %c0_i32 = arith.constant 0 : i32
    %c0_i32_0 = arith.constant 0 : i32
    %c0_i32_1 = arith.constant 0 : i32
    return %c0_i32, %c0_i32_0 : i32, i32
  }
  func.func @transform_15(%arg0: i32) -> (i32, i32) {
    %c0_i32 = arith.constant 0 : i32
    %c0_i32_0 = arith.constant 0 : i32
    %c0_i32_1 = arith.constant 0 : i32
    return %c0_i32, %c0_i32_0 : i32, i32
  }
  func.func @transform_16(%arg0: i32) -> (i32, i32) {
    %c0_i32 = arith.constant 0 : i32
    %c0_i32_0 = arith.constant 0 : i32
    %c0_i32_1 = arith.constant 0 : i32
    return %c0_i32, %c0_i32_0 : i32, i32
  }
  func.func @transform_17(%arg0: i32) -> (i32, i32, i32) {
    %c0_i32 = arith.constant 0 : i32
    %c0_i32_0 = arith.constant 0 : i32
    %c0_i32_1 = arith.constant 0 : i32
    %c0_i32_2 = arith.constant 0 : i32
    return %c0_i32, %c0_i32_0, %c0_i32_1 : i32, i32, i32
  }
  func.func @transform_18(%arg0: i32) -> (i32, i32) {
    %c0_i32 = arith.constant 0 : i32
    %c0_i32_0 = arith.constant 0 : i32
    %c0_i32_1 = arith.constant 0 : i32
    return %c0_i32, %c0_i32_0 : i32, i32
  }
  func.func @transform_19(%arg0: i32) -> (i32, i32, i32) {
    %c0_i32 = arith.constant 0 : i32
    %c0_i32_0 = arith.constant 0 : i32
    %c0_i32_1 = arith.constant 0 : i32
    return %arg0, %c0_i32, %c0_i32_0 : i32, i32, i32
  }
}

</mosaic_0001>

<llo_original>
// kernel: side_embeded_feature_extract_block.7
$region0: #{side_embeded_feature_extract_block.7}
  #allocation0 [shape = 'u32[]', space=smem, size = 0x4, offset = 0x4, fixed_abs, tag = 'smem constant byte address 0x4 - core index']
  #allocation1 [shape = 'u32[72,128]{1,0:T(1,128)}', space=vmem, size = 0x9000, scoped, tag = 'internal scratch']
  %s0 = inlined_call_operand.vmem [shape: f32[576,1], index: 0, kind: input, shape index: {}]
  %s1 = inlined_call_operand.vmem [shape: f32[2,576,128], index: 1, kind: input, shape index: {}]
  %s2 = inlined_call_operand.vmem [shape: f32[2,576,128], index: 2, kind: input, shape index: {}]
  %s3 = inlined_call_operand.vmem [shape: bf16[128,256], index: 3, kind: input, shape index: {}]
  %s4 = inlined_call_operand.vmem [shape: f32[1,256], index: 4, kind: input, shape index: {}]
  %s5 = inlined_call_operand.vmem [shape: bf16[128,128], index: 5, kind: input, shape index: {}]
  %s6 = inlined_call_operand.vmem [shape: f32[1,128], index: 6, kind: input, shape index: {}]
  %s7 = inlined_call_operand.vmem [shape: bf16[128,128], index: 7, kind: input, shape index: {}]
  %s8 = inlined_call_operand.vmem [shape: f32[1,128], index: 8, kind: input, shape index: {}]
  %s9 = inlined_call_operand.vmem [shape: bf16[9,128,128], index: 9, kind: input, shape index: {}]
  %s10 = inlined_call_operand.vmem [shape: f32[1,128], index: 10, kind: input, shape index: {}]
  %s11 = inlined_call_operand.vmem [shape: bf16[128,256], index: 11, kind: input, shape index: {}]
  %s12 = inlined_call_operand.vmem [shape: f32[1,256], index: 12, kind: input, shape index: {}]
  %s13 = inlined_call_operand.vmem [shape: bf16[128,128], index: 13, kind: input, shape index: {}]
  %s14 = inlined_call_operand.vmem [shape: f32[1,128], index: 14, kind: input, shape index: {}]
  %s15 = inlined_call_operand.vmem [shape: bf16[128,128], index: 15, kind: input, shape index: {}]
  %s16 = inlined_call_operand.vmem [shape: f32[1,128], index: 16, kind: input, shape index: {}]
  %s17 = inlined_call_operand.vmem [shape: bf16[9,128,128], index: 17, kind: input, shape index: {}]
  %s18 = inlined_call_operand.vmem [shape: f32[1,128], index: 18, kind: input, shape index: {}]
  %s19 = inlined_call_operand.vmem [shape: f32[2,576,128], index: 19, kind: output, shape index: {}]
  %s20 = sld [smem:[#allocation0]]
  $region109: #{side_embeded_feature_extract_block.7} parent=0
    _
  %s22 = ssub.s32 1, %s20
  %s23 = scalar_select 0, %s22, %s20
  loop: start=0, step=1, limit=4
  $region2: #{side_embeded_feature_extract_block.7} parent=0 // loop_pre_header
    _
  $region3: #{side_embeded_feature_extract_block.7} parent=0 // loop_header
    %s25 = sphi 0, %s29
    %p26 = scmp.ge.s32.totalorder %s25, 4
    %s33 = sphi 0, %s33
    %s35 = sphi 0, %s33
    %s36 = sphi 0, %s35
    %s50 = sphi 0, %s36
    %s56 = sphi 0, %s58
    %s59 = sphi 0, %s56
    %s60 = sphi 0, %s59
    %s76 = sphi 0, %s60
    %s82 = sphi 0, %s84
    %s85 = sphi 0, %s82
    %s86 = sphi 0, %s85
    %s102 = sphi 0, %s86
    %s106 = sphi 0, %s106
    %s108 = sphi 0, %s106
    %s109 = sphi 0, %s108
    %s123 = sphi 0, %s109
    %s127 = sphi 0, %s127
    %s129 = sphi 0, %s127
    %s130 = sphi 0, %s129
    %s144 = sphi 0, %s130
    %s148 = sphi 0, %s148
    %s150 = sphi 0, %s148
    %s151 = sphi 0, %s150
    %s165 = sphi 0, %s151
    %s169 = sphi 0, %s169
    %s171 = sphi 0, %s169
    %s172 = sphi 0, %s171
    %s186 = sphi 0, %s172
    %s190 = sphi 0, %s190
    %s192 = sphi 0, %s190
    %s193 = sphi 0, %s192
    %s207 = sphi 0, %s193
    %s211 = sphi 0, %s211
    %s213 = sphi 0, %s211
    %s214 = sphi 0, %s213
    %s228 = sphi 0, %s214
    %s232 = sphi 0, %s232
    %s234 = sphi 0, %s232
    %s235 = sphi 0, %s234
    %s249 = sphi 0, %s235
    %s253 = sphi 0, %s253
    %s255 = sphi 0, %s253
    %s256 = sphi 0, %s255
    %s270 = sphi 0, %s256
    %s274 = sphi 0, %s274
    %s276 = sphi 0, %s274
    %s277 = sphi 0, %s276
    %s291 = sphi 0, %s277
    %s295 = sphi 0, %s295
    %s297 = sphi 0, %s295
    %s298 = sphi 0, %s297
    %s312 = sphi 0, %s298
    %s316 = sphi 0, %s316
    %s318 = sphi 0, %s316
    %s319 = sphi 0, %s318
    %s333 = sphi 0, %s319
    %s337 = sphi 0, %s337
    %s339 = sphi 0, %s337
    %s340 = sphi 0, %s339
    %s354 = sphi 0, %s340
    %s358 = sphi 0, %s358
    %s360 = sphi 0, %s358
    %s361 = sphi 0, %s360
    %s375 = sphi 0, %s361
    %s379 = sphi 0, %s379
    %s381 = sphi 0, %s379
    %s382 = sphi 0, %s381
    %s396 = sphi 0, %s382
    %s400 = sphi 0, %s400
    %s402 = sphi 0, %s400
    %s403 = sphi 0, %s402
    %s417 = sphi 0, %s403
    %s421 = sphi 0, %s421
    %s423 = sphi 0, %s421
    %s424 = sphi 0, %s423
    %s438 = sphi 0, %s424
    %s444 = sphi 0, %s446
    %s447 = sphi 0, %s444
    %s448 = sphi 0, %s447
    %s464 = sphi 0, %s448
  $region4: #{side_embeded_feature_extract_block.7} parent=0 // loop_header_branch
    %28 = sbr.rel (%p26) target = $region8
  $region5: #{side_embeded_feature_extract_block.7} parent=0 // loop_body
    %s30 = ssub.s32 %s25, 1
    %s31 = ssub.s32 %s25, 2
    %s32 = sadd.s32 %s25, 1
    %s34 = sadd.s32 %s33, 1
    %p37 = scmp.eq.s32.totalorder %s25, 1
    %p38 = scmp.ne.s32.totalorder %s33, %s35
    %p39 = scmp.eq.s32.totalorder %s25, 0
    %p40 = por %p38, %p39
    %p41 = scmp.ne.s32.totalorder %s33, %s35
    %p42 = scmp.eq.s32.totalorder %s30, 1
    %p43 = por %p41, %p42
    %p44 = scmp.ne.s32.totalorder %s35, %s36
    %p45 = scmp.eq.s32.totalorder %s30, 0
    %p46 = por %p44, %p45
    %p47 = scmp.ne.s32.totalorder %s35, %s36
    %p48 = scmp.eq.s32.totalorder %s31, 1
    %p49 = por %p47, %p48
    %p51 = scmp.ne.s32.totalorder %s36, %s50
    %p52 = scmp.eq.s32.totalorder %s31, 0
    %p53 = por %p51, %p52
    %s54 = ssub.s32 %s25, %s32
    %p55 = scmp.eq.s32.totalorder %s54, 0
    %s57 = sadd.s32 %s56, 1
    %s58 = scalar_select %p55, %s56, %s57
    %p61 = pneg %p55
    %p62 = scmp.eq.s32.totalorder %s25, 1
    %p63 = por %p61, %p62
    %p64 = scmp.ne.s32.totalorder %s56, %s59
    %p65 = scmp.eq.s32.totalorder %s25, 0
    %p66 = por %p64, %p65
    %p67 = scmp.ne.s32.totalorder %s56, %s59
    %p68 = scmp.eq.s32.totalorder %s30, 1
    %p69 = por %p67, %p68
    %p70 = scmp.ne.s32.totalorder %s59, %s60
    %p71 = scmp.eq.s32.totalorder %s30, 0
    %p72 = por %p70, %p71
    %p73 = scmp.ne.s32.totalorder %s59, %s60
    %p74 = scmp.eq.s32.totalorder %s31, 1
    %p75 = por %p73, %p74
    %p77 = scmp.ne.s32.totalorder %s60, %s76
    %p78 = scmp.eq.s32.totalorder %s31, 0
    %p79 = por %p77, %p78
    %s80 = ssub.s32 %s25, %s32
    %p81 = scmp.eq.s32.totalorder %s80, 0
    %s83 = sadd.s32 %s82, 1
    %s84 = scalar_select %p81, %s82, %s83
    %p87 = pneg %p81
    %p88 = scmp.eq.s32.totalorder %s25, 1
    %p89 = por %p87, %p88
    %p90 = scmp.ne.s32.totalorder %s82, %s85
    %p91 = scmp.eq.s32.totalorder %s25, 0
    %p92 = por %p90, %p91
    %p93 = scmp.ne.s32.totalorder %s82, %s85
    %p94 = scmp.eq.s32.totalorder %s30, 1
    %p95 = por %p93, %p94
    %p96 = scmp.ne.s32.totalorder %s85, %s86
    %p97 = scmp.eq.s32.totalorder %s30, 0
    %p98 = por %p96, %p97
    %p99 = scmp.ne.s32.totalorder %s85, %s86
    %p100 = scmp.eq.s32.totalorder %s31, 1
    %p101 = por %p99, %p100
    %p103 = scmp.ne.s32.totalorder %s86, %s102
    %p104 = scmp.eq.s32.totalorder %s31, 0
    %p105 = por %p103, %p104
    %s107 = sadd.s32 %s106, 1
    %p110 = scmp.eq.s32.totalorder %s25, 1
    %p111 = scmp.ne.s32.totalorder %s106, %s108
    %p112 = scmp.eq.s32.totalorder %s25, 0
    %p113 = por %p111, %p112
    %p114 = scmp.ne.s32.totalorder %s106, %s108
    %p115 = scmp.eq.s32.totalorder %s30, 1
    %p116 = por %p114, %p115
    %p117 = scmp.ne.s32.totalorder %s108, %s109
    %p118 = scmp.eq.s32.totalorder %s30, 0
    %p119 = por %p117, %p118
    %p120 = scmp.ne.s32.totalorder %s108, %s109
    %p121 = scmp.eq.s32.totalorder %s31, 1
    %p122 = por %p120, %p121
    %p124 = scmp.ne.s32.totalorder %s109, %s123
    %p125 = scmp.eq.s32.totalorder %s31, 0
    %p126 = por %p124, %p125
    %s128 = sadd.s32 %s127, 1
    %p131 = scmp.eq.s32.totalorder %s25, 1
    %p132 = scmp.ne.s32.totalorder %s127, %s129
    %p133 = scmp.eq.s32.totalorder %s25, 0
    %p134 = por %p132, %p133
    %p135 = scmp.ne.s32.totalorder %s127, %s129
    %p136 = scmp.eq.s32.totalorder %s30, 1
    %p137 = por %p135, %p136
    %p138 = scmp.ne.s32.totalorder %s129, %s130
    %p139 = scmp.eq.s32.totalorder %s30, 0
    %p140 = por %p138, %p139
    %p141 = scmp.ne.s32.totalorder %s129, %s130
    %p142 = scmp.eq.s32.totalorder %s31, 1
    %p143 = por %p141, %p142
    %p145 = scmp.ne.s32.totalorder %s130, %s144
    %p146 = scmp.eq.s32.totalorder %s31, 0
    %p147 = por %p145, %p146
    %s149 = sadd.s32 %s148, 1
    %p152 = scmp.eq.s32.totalorder %s25, 1
    %p153 = scmp.ne.s32.totalorder %s148, %s150
    %p154 = scmp.eq.s32.totalorder %s25, 0
    %p155 = por %p153, %p154
    %p156 = scmp.ne.s32.totalorder %s148, %s150
    %p157 = scmp.eq.s32.totalorder %s30, 1
    %p158 = por %p156, %p157
    %p159 = scmp.ne.s32.totalorder %s150, %s151
    %p160 = scmp.eq.s32.totalorder %s30, 0
    %p161 = por %p159, %p160
    %p162 = scmp.ne.s32.totalorder %s150, %s151
    %p163 = scmp.eq.s32.totalorder %s31, 1
    %p164 = por %p162, %p163
    %p166 = scmp.ne.s32.totalorder %s151, %s165
    %p167 = scmp.eq.s32.totalorder %s31, 0
    %p168 = por %p166, %p167
    %s170 = sadd.s32 %s169, 1
    %p173 = scmp.eq.s32.totalorder %s25, 1
    %p174 = scmp.ne.s32.totalorder %s169, %s171
    %p175 = scmp.eq.s32.totalorder %s25, 0
    %p176 = por %p174, %p175
    %p177 = scmp.ne.s32.totalorder %s169, %s171
    %p178 = scmp.eq.s32.totalorder %s30, 1
    %p179 = por %p177, %p178
    %p180 = scmp.ne.s32.totalorder %s171, %s172
    %p181 = scmp.eq.s32.totalorder %s30, 0
    %p182 = por %p180, %p181
    %p183 = scmp.ne.s32.totalorder %s171, %s172
    %p184 = scmp.eq.s32.totalorder %s31, 1
    %p185 = por %p183, %p184
    %p187 = scmp.ne.s32.totalorder %s172, %s186
    %p188 = scmp.eq.s32.totalorder %s31, 0
    %p189 = por %p187, %p188
    %s191 = sadd.s32 %s190, 1
    %p194 = scmp.eq.s32.totalorder %s25, 1
    %p195 = scmp.ne.s32.totalorder %s190, %s192
    %p196 = scmp.eq.s32.totalorder %s25, 0
    %p197 = por %p195, %p196
    %p198 = scmp.ne.s32.totalorder %s190, %s192
    %p199 = scmp.eq.s32.totalorder %s30, 1
    %p200 = por %p198, %p199
    %p201 = scmp.ne.s32.totalorder %s192, %s193
    %p202 = scmp.eq.s32.totalorder %s30, 0
    %p203 = por %p201, %p202
    %p204 = scmp.ne.s32.totalorder %s192, %s193
    %p205 = scmp.eq.s32.totalorder %s31, 1
    %p206 = por %p204, %p205
    %p208 = scmp.ne.s32.totalorder %s193, %s207
    %p209 = scmp.eq.s32.totalorder %s31, 0
    %p210 = por %p208, %p209
    %s212 = sadd.s32 %s211, 1
    %p215 = scmp.eq.s32.totalorder %s25, 1
    %p216 = scmp.ne.s32.totalorder %s211, %s213
    %p217 = scmp.eq.s32.totalorder %s25, 0
    %p218 = por %p216, %p217
    %p219 = scmp.ne.s32.totalorder %s211, %s213
    %p220 = scmp.eq.s32.totalorder %s30, 1
    %p221 = por %p219, %p220
    %p222 = scmp.ne.s32.totalorder %s213, %s214
    %p223 = scmp.eq.s32.totalorder %s30, 0
    %p224 = por %p222, %p223
    %p225 = scmp.ne.s32.totalorder %s213, %s214
    %p226 = scmp.eq.s32.totalorder %s31, 1
    %p227 = por %p225, %p226
    %p229 = scmp.ne.s32.totalorder %s214, %s228
    %p230 = scmp.eq.s32.totalorder %s31, 0
    %p231 = por %p229, %p230
    %s233 = sadd.s32 %s232, 1
    %p236 = scmp.eq.s32.totalorder %s25, 1
    %p237 = scmp.ne.s32.totalorder %s232, %s234
    %p238 = scmp.eq.s32.totalorder %s25, 0
    %p239 = por %p237, %p238
    %p240 = scmp.ne.s32.totalorder %s232, %s234
    %p241 = scmp.eq.s32.totalorder %s30, 1
    %p242 = por %p240, %p241
    %p243 = scmp.ne.s32.totalorder %s234, %s235
    %p244 = scmp.eq.s32.totalorder %s30, 0
    %p245 = por %p243, %p244
    %p246 = scmp.ne.s32.totalorder %s234, %s235
    %p247 = scmp.eq.s32.totalorder %s31, 1
    %p248 = por %p246, %p247
    %p250 = scmp.ne.s32.totalorder %s235, %s249
    %p251 = scmp.eq.s32.totalorder %s31, 0
    %p252 = por %p250, %p251
    %s254 = sadd.s32 %s253, 1
    %p257 = scmp.eq.s32.totalorder %s25, 1
    %p258 = scmp.ne.s32.totalorder %s253, %s255
    %p259 = scmp.eq.s32.totalorder %s25, 0
    %p260 = por %p258, %p259
    %p261 = scmp.ne.s32.totalorder %s253, %s255
    %p262 = scmp.eq.s32.totalorder %s30, 1
    %p263 = por %p261, %p262
    %p264 = scmp.ne.s32.totalorder %s255, %s256
    %p265 = scmp.eq.s32.totalorder %s30, 0
    %p266 = por %p264, %p265
    %p267 = scmp.ne.s32.totalorder %s255, %s256
    %p268 = scmp.eq.s32.totalorder %s31, 1
    %p269 = por %p267, %p268
    %p271 = scmp.ne.s32.totalorder %s256, %s270
    %p272 = scmp.eq.s32.totalorder %s31, 0
    %p273 = por %p271, %p272
    %s275 = sadd.s32 %s274, 1
    %p278 = scmp.eq.s32.totalorder %s25, 1
    %p279 = scmp.ne.s32.totalorder %s274, %s276
    %p280 = scmp.eq.s32.totalorder %s25, 0
    %p281 = por %p279, %p280
    %p282 = scmp.ne.s32.totalorder %s274, %s276
    %p283 = scmp.eq.s32.totalorder %s30, 1
    %p284 = por %p282, %p283
    %p285 = scmp.ne.s32.totalorder %s276, %s277
    %p286 = scmp.eq.s32.totalorder %s30, 0
    %p287 = por %p285, %p286
    %p288 = scmp.ne.s32.totalorder %s276, %s277
    %p289 = scmp.eq.s32.totalorder %s31, 1
    %p290 = por %p288, %p289
    %p292 = scmp.ne.s32.totalorder %s277, %s291
    %p293 = scmp.eq.s32.totalorder %s31, 0
    %p294 = por %p292, %p293
    %s296 = sadd.s32 %s295, 1
    %p299 = scmp.eq.s32.totalorder %s25, 1
    %p300 = scmp.ne.s32.totalorder %s295, %s297
    %p301 = scmp.eq.s32.totalorder %s25, 0
    %p302 = por %p300, %p301
    %p303 = scmp.ne.s32.totalorder %s295, %s297
    %p304 = scmp.eq.s32.totalorder %s30, 1
    %p305 = por %p303, %p304
    %p306 = scmp.ne.s32.totalorder %s297, %s298
    %p307 = scmp.eq.s32.totalorder %s30, 0
    %p308 = por %p306, %p307
    %p309 = scmp.ne.s32.totalorder %s297, %s298
    %p310 = scmp.eq.s32.totalorder %s31, 1
    %p311 = por %p309, %p310
    %p313 = scmp.ne.s32.totalorder %s298, %s312
    %p314 = scmp.eq.s32.totalorder %s31, 0
    %p315 = por %p313, %p314
    %s317 = sadd.s32 %s316, 1
    %p320 = scmp.eq.s32.totalorder %s25, 1
    %p321 = scmp.ne.s32.totalorder %s316, %s318
    %p322 = scmp.eq.s32.totalorder %s25, 0
    %p323 = por %p321, %p322
    %p324 = scmp.ne.s32.totalorder %s316, %s318
    %p325 = scmp.eq.s32.totalorder %s30, 1
    %p326 = por %p324, %p325
    %p327 = scmp.ne.s32.totalorder %s318, %s319
    %p328 = scmp.eq.s32.totalorder %s30, 0
    %p329 = por %p327, %p328
    %p330 = scmp.ne.s32.totalorder %s318, %s319
    %p331 = scmp.eq.s32.totalorder %s31, 1
    %p332 = por %p330, %p331
    %p334 = scmp.ne.s32.totalorder %s319, %s333
    %p335 = scmp.eq.s32.totalorder %s31, 0
    %p336 = por %p334, %p335
    %s338 = sadd.s32 %s337, 1
    %p341 = scmp.eq.s32.totalorder %s25, 1
    %p342 = scmp.ne.s32.totalorder %s337, %s339
    %p343 = scmp.eq.s32.totalorder %s25, 0
    %p344 = por %p342, %p343
    %p345 = scmp.ne.s32.totalorder %s337, %s339
    %p346 = scmp.eq.s32.totalorder %s30, 1
    %p347 = por %p345, %p346
    %p348 = scmp.ne.s32.totalorder %s339, %s340
    %p349 = scmp.eq.s32.totalorder %s30, 0
    %p350 = por %p348, %p349
    %p351 = scmp.ne.s32.totalorder %s339, %s340
    %p352 = scmp.eq.s32.totalorder %s31, 1
    %p353 = por %p351, %p352
    %p355 = scmp.ne.s32.totalorder %s340, %s354
    %p356 = scmp.eq.s32.totalorder %s31, 0
    %p357 = por %p355, %p356
    %s359 = sadd.s32 %s358, 1
    %p362 = scmp.eq.s32.totalorder %s25, 1
    %p363 = scmp.ne.s32.totalorder %s358, %s360
    %p364 = scmp.eq.s32.totalorder %s25, 0
    %p365 = por %p363, %p364
    %p366 = scmp.ne.s32.totalorder %s358, %s360
    %p367 = scmp.eq.s32.totalorder %s30, 1
    %p368 = por %p366, %p367
    %p369 = scmp.ne.s32.totalorder %s360, %s361
    %p370 = scmp.eq.s32.totalorder %s30, 0
    %p371 = por %p369, %p370
    %p372 = scmp.ne.s32.totalorder %s360, %s361
    %p373 = scmp.eq.s32.totalorder %s31, 1
    %p374 = por %p372, %p373
    %p376 = scmp.ne.s32.totalorder %s361, %s375
    %p377 = scmp.eq.s32.totalorder %s31, 0
    %p378 = por %p376, %p377
    %s380 = sadd.s32 %s379, 1
    %p383 = scmp.eq.s32.totalorder %s25, 1
    %p384 = scmp.ne.s32.totalorder %s379, %s381
    %p385 = scmp.eq.s32.totalorder %s25, 0
    %p386 = por %p384, %p385
    %p387 = scmp.ne.s32.totalorder %s379, %s381
    %p388 = scmp.eq.s32.totalorder %s30, 1
    %p389 = por %p387, %p388
    %p390 = scmp.ne.s32.totalorder %s381, %s382
    %p391 = scmp.eq.s32.totalorder %s30, 0
    %p392 = por %p390, %p391
    %p393 = scmp.ne.s32.totalorder %s381, %s382
    %p394 = scmp.eq.s32.totalorder %s31, 1
    %p395 = por %p393, %p394
    %p397 = scmp.ne.s32.totalorder %s382, %s396
    %p398 = scmp.eq.s32.totalorder %s31, 0
    %p399 = por %p397, %p398
    %s401 = sadd.s32 %s400, 1
    %p404 = scmp.eq.s32.totalorder %s25, 1
    %p405 = scmp.ne.s32.totalorder %s400, %s402
    %p406 = scmp.eq.s32.totalorder %s25, 0
    %p407 = por %p405, %p406
    %p408 = scmp.ne.s32.totalorder %s400, %s402
    %p409 = scmp.eq.s32.totalorder %s30, 1
    %p410 = por %p408, %p409
    %p411 = scmp.ne.s32.totalorder %s402, %s403
    %p412 = scmp.eq.s32.totalorder %s30, 0
    %p413 = por %p411, %p412
    %p414 = scmp.ne.s32.totalorder %s402, %s403
    %p415 = scmp.eq.s32.totalorder %s31, 1
    %p416 = por %p414, %p415
    %p418 = scmp.ne.s32.totalorder %s403, %s417
    %p419 = scmp.eq.s32.totalorder %s31, 0
    %p420 = por %p418, %p419
    %s422 = sadd.s32 %s421, 1
    %p425 = scmp.eq.s32.totalorder %s25, 1
    %p426 = scmp.ne.s32.totalorder %s421, %s423
    %p427 = scmp.eq.s32.totalorder %s25, 0
    %p428 = por %p426, %p427
    %p429 = scmp.ne.s32.totalorder %s421, %s423
    %p430 = scmp.eq.s32.totalorder %s30, 1
    %p431 = por %p429, %p430
    %p432 = scmp.ne.s32.totalorder %s423, %s424
    %p433 = scmp.eq.s32.totalorder %s30, 0
    %p434 = por %p432, %p433
    %p435 = scmp.ne.s32.totalorder %s423, %s424
    %p436 = scmp.eq.s32.totalorder %s31, 1
    %p437 = por %p435, %p436
    %p439 = scmp.ne.s32.totalorder %s424, %s438
    %p440 = scmp.eq.s32.totalorder %s31, 0
    %p441 = por %p439, %p440
    %s442 = ssub.s32 %s25, %s32
    %p443 = scmp.eq.s32.totalorder %s442, 0
    %s445 = sadd.s32 %s444, 1
    %s446 = scalar_select %p443, %s444, %s445
    %p449 = pneg %p443
    %p450 = scmp.eq.s32.totalorder %s25, 1
    %p451 = por %p449, %p450
    %p452 = scmp.ne.s32.totalorder %s444, %s447
    %p453 = scmp.eq.s32.totalorder %s25, 0
    %p454 = por %p452, %p453
    %p455 = scmp.ne.s32.totalorder %s444, %s447
    %p456 = scmp.eq.s32.totalorder %s30, 1
    %p457 = por %p455, %p456
    %p458 = scmp.ne.s32.totalorder %s447, %s448
    %p459 = scmp.eq.s32.totalorder %s30, 0
    %p460 = por %p458, %p459
    %p461 = scmp.ne.s32.totalorder %s447, %s448
    %p462 = scmp.eq.s32.totalorder %s31, 1
    %p463 = por %p461, %p462
    %p465 = scmp.ne.s32.totalorder %s448, %s464
    %p466 = scmp.eq.s32.totalorder %s31, 0
    %p467 = por %p465, %p466
    %p468 = scmp.le.s32.totalorder 1, %s25
    %p469 = scmp.lt.s32.totalorder %s25, 3
    %p470 = pnand %p468, %p469
    %p471 = pneg %p470
    // Predicated region
    $region9: #{side_embeded_feature_extract_block.7} parent=5 // pred_check
      _
    $region10: #{side_embeded_feature_extract_block.7} parent=5 // pred_check_branch
      %473 = sbr.rel (%p470) target = $region12
    $region11: #{side_embeded_feature_extract_block.7} parent=5 // pred_region
      %s474 = ssub.s32 %s25, 1
      // Predicated region
      $region13: #{side_embeded_feature_extract_block.7} parent=11 // pred_check
        %p475 = pneg %p46
      $region14: #{side_embeded_feature_extract_block.7} parent=11 // pred_check_branch
        %477 = sbr.rel (%p475) target = $region16
      $region15: #{side_embeded_feature_extract_block.7} parent=11 // pred_region
        _
      $region16: #{side_embeded_feature_extract_block.7} parent=11 // pred_fallthru
        _
      // Predicated region
      $region17: #{side_embeded_feature_extract_block.7} parent=11 // pred_check
        %p478 = pneg %p119
      $region18: #{side_embeded_feature_extract_block.7} parent=11 // pred_check_branch
        %480 = sbr.rel (%p478) target = $region20
      $region19: #{side_embeded_feature_extract_block.7} parent=11 // pred_region
        _
      $region20: #{side_embeded_feature_extract_block.7} parent=11 // pred_fallthru
        _
      // Predicated region
      $region21: #{side_embeded_feature_extract_block.7} parent=11 // pred_check
        %p481 = pneg %p140
      $region22: #{side_embeded_feature_extract_block.7} parent=11 // pred_check_branch
        %483 = sbr.rel (%p481) target = $region24
      $region23: #{side_embeded_feature_extract_block.7} parent=11 // pred_region
        _
      $region24: #{side_embeded_feature_extract_block.7} parent=11 // pred_fallthru
        _
      // Predicated region
      $region25: #{side_embeded_feature_extract_block.7} parent=11 // pred_check
        %p484 = pneg %p161
      $region26: #{side_embeded_feature_extract_block.7} parent=11 // pred_check_branch
        %486 = sbr.rel (%p484) target = $region28
      $region27: #{side_embeded_feature_extract_block.7} parent=11 // pred_region
        _
      $region28: #{side_embeded_feature_extract_block.7} parent=11 // pred_fallthru
        _
      // Predicated region
      $region29: #{side_embeded_feature_extract_block.7} parent=11 // pred_check
        %p487 = pneg %p182
      $region30: #{side_embeded_feature_extract_block.7} parent=11 // pred_check_branch
        %489 = sbr.rel (%p487) target = $region32
      $region31: #{side_embeded_feature_extract_block.7} parent=11 // pred_region
        _
      $region32: #{side_embeded_feature_extract_block.7} parent=11 // pred_fallthru
        _
      // Predicated region
      $region33: #{side_embeded_feature_extract_block.7} parent=11 // pred_check
        %p490 = pneg %p203
      $region34: #{side_embeded_feature_extract_block.7} parent=11 // pred_check_branch
        %492 = sbr.rel (%p490) target = $region36
      $region35: #{side_embeded_feature_extract_block.7} parent=11 // pred_region
        _
      $region36: #{side_embeded_feature_extract_block.7} parent=11 // pred_fallthru
        _
      // Predicated region
      $region37: #{side_embeded_feature_extract_block.7} parent=11 // pred_check
        %p493 = pneg %p224
      $region38: #{side_embeded_feature_extract_block.7} parent=11 // pred_check_branch
        %495 = sbr.rel (%p493) target = $region40
      $region39: #{side_embeded_feature_extract_block.7} parent=11 // pred_region
        _
      $region40: #{side_embeded_feature_extract_block.7} parent=11 // pred_fallthru
        _
      // Predicated region
      $region41: #{side_embeded_feature_extract_block.7} parent=11 // pred_check
        %p496 = pneg %p245
      $region42: #{side_embeded_feature_extract_block.7} parent=11 // pred_check_branch
        %498 = sbr.rel (%p496) target = $region44
      $region43: #{side_embeded_feature_extract_block.7} parent=11 // pred_region
        _
      $region44: #{side_embeded_feature_extract_block.7} parent=11 // pred_fallthru
        _
      // Predicated region
      $region45: #{side_embeded_feature_extract_block.7} parent=11 // pred_check
        %p499 = pneg %p266
      $region46: #{side_embeded_feature_extract_block.7} parent=11 // pred_check_branch
        %501 = sbr.rel (%p499) target = $region48
      $region47: #{side_embeded_feature_extract_block.7} parent=11 // pred_region
        _
      $region48: #{side_embeded_feature_extract_block.7} parent=11 // pred_fallthru
        _
      // Predicated region
      $region49: #{side_embeded_feature_extract_block.7} parent=11 // pred_check
        %p502 = pneg %p287
      $region50: #{side_embeded_feature_extract_block.7} parent=11 // pred_check_branch
        %504 = sbr.rel (%p502) target = $region52
      $region51: #{side_embeded_feature_extract_block.7} parent=11 // pred_region
        _
      $region52: #{side_embeded_feature_extract_block.7} parent=11 // pred_fallthru
        _
      // Predicated region
      $region53: #{side_embeded_feature_extract_block.7} parent=11 // pred_check
        %p505 = pneg %p308
      $region54: #{side_embeded_feature_extract_block.7} parent=11 // pred_check_branch
        %507 = sbr.rel (%p505) target = $region56
      $region55: #{side_embeded_feature_extract_block.7} parent=11 // pred_region
        _
      $region56: #{side_embeded_feature_extract_block.7} parent=11 // pred_fallthru
        _
      // Predicated region
      $region57: #{side_embeded_feature_extract_block.7} parent=11 // pred_check
        %p508 = pneg %p329
      $region58: #{side_embeded_feature_extract_block.7} parent=11 // pred_check_branch
        %510 = sbr.rel (%p508) target = $region60
      $region59: #{side_embeded_feature_extract_block.7} parent=11 // pred_region
        _
      $region60: #{side_embeded_feature_extract_block.7} parent=11 // pred_fallthru
        _
      // Predicated region
      $region61: #{side_embeded_feature_extract_block.7} parent=11 // pred_check
        %p511 = pneg %p350
      $region62: #{side_embeded_feature_extract_block.7} parent=11 // pred_check_branch
        %513 = sbr.rel (%p511) target = $region64
      $region63: #{side_embeded_feature_extract_block.7} parent=11 // pred_region
        _
      $region64: #{side_embeded_feature_extract_block.7} parent=11 // pred_fallthru
        _
      // Predicated region
      $region65: #{side_embeded_feature_extract_block.7} parent=11 // pred_check
        %p514 = pneg %p371
      $region66: #{side_embeded_feature_extract_block.7} parent=11 // pred_check_branch
        %516 = sbr.rel (%p514) target = $region68
      $region67: #{side_embeded_feature_extract_block.7} parent=11 // pred_region
        _
      $region68: #{side_embeded_feature_extract_block.7} parent=11 // pred_fallthru
        _
      // Predicated region
      $region69: #{side_embeded_feature_extract_block.7} parent=11 // pred_check
        %p517 = pneg %p392
      $region70: #{side_embeded_feature_extract_block.7} parent=11 // pred_check_branch
        %519 = sbr.rel (%p517) target = $region72
      $region71: #{side_embeded_feature_extract_block.7} parent=11 // pred_region
        _
      $region72: #{side_embeded_feature_extract_block.7} parent=11 // pred_fallthru
        _
      // Predicated region
      $region73: #{side_embeded_feature_extract_block.7} parent=11 // pred_check
        %p520 = pneg %p413
      $region74: #{side_embeded_feature_extract_block.7} parent=11 // pred_check_branch
        %522 = sbr.rel (%p520) target = $region76
      $region75: #{side_embeded_feature_extract_block.7} parent=11 // pred_region
        _
      $region76: #{side_embeded_feature_extract_block.7} parent=11 // pred_fallthru
        _
      // Predicated region
      $region77: #{side_embeded_feature_extract_block.7} parent=11 // pred_check
        %p523 = pneg %p434
      $region78: #{side_embeded_feature_extract_block.7} parent=11 // pred_check_branch
        %525 = sbr.rel (%p523) target = $region80
      $region79: #{side_embeded_feature_extract_block.7} parent=11 // pred_region
        _
      $region80: #{side_embeded_feature_extract_block.7} parent=11 // pred_fallthru
        _
    $region12: #{side_embeded_feature_extract_block.7} parent=5 // pred_fallthru
      _
    %p526 = scmp.lt.s32.totalorder %s25, 2
    // Predicated region
    $region81: #{side_embeded_feature_extract_block.7} parent=5 // pred_check
      %p527 = pneg %p526
    $region82: #{side_embeded_feature_extract_block.7} parent=5 // pred_check_branch
      %529 = sbr.rel (%p527) target = $region84
    $region83: #{side_embeded_feature_extract_block.7} parent=5 // pred_region
      // Predicated region
      $region85: #{side_embeded_feature_extract_block.7} parent=83 // pred_check
        %p530 = pneg %p66
      $region86: #{side_embeded_feature_extract_block.7} parent=83 // pred_check_branch
        %532 = sbr.rel (%p530) target = $region88
      $region87: #{side_embeded_feature_extract_block.7} parent=83 // pred_region
        %p533 = scmp.lt.s32.totalorder %s25, 1
        %s534 = scalar_select %p533, %s25, 1
        %s535 = smul.addr %s534, 72
        %s536 = smul.addr %s535, 8
        %s537 = scalar_lea.vmem %s1, %s536
      $region88: #{side_embeded_feature_extract_block.7} parent=83 // pred_fallthru
        _
      // Predicated region
      $region89: #{side_embeded_feature_extract_block.7} parent=83 // pred_check
        %p538 = pneg %p92
      $region90: #{side_embeded_feature_extract_block.7} parent=83 // pred_check_branch
        %540 = sbr.rel (%p538) target = $region92
      $region91: #{side_embeded_feature_extract_block.7} parent=83 // pred_region
        %p541 = scmp.lt.s32.totalorder %s25, 1
        %s542 = scalar_select %p541, %s25, 1
        %s543 = smul.addr %s542, 72
        %s544 = smul.addr %s543, 8
        %s545 = scalar_lea.vmem %s2, %s544
      $region92: #{side_embeded_feature_extract_block.7} parent=83 // pred_fallthru
        _
    $region84: #{side_embeded_feature_extract_block.7} parent=5 // pred_fallthru
      _
    %p546 = scmp.le.s32.totalorder 1, %s25
    %p547 = scmp.lt.s32.totalorder %s25, 3
    %p548 = pnand %p546, %p547
    %p549 = pneg %p548
    // Predicated region
    $region93: #{side_embeded_feature_extract_block.7} parent=5 // pred_check
      _
    $region94: #{side_embeded_feature_extract_block.7} parent=5 // pred_check_branch
      %551 = sbr.rel (%p548) target = $region96
    $region95: #{side_embeded_feature_extract_block.7} parent=5 // pred_region
      %s552 = ssub.s32 %s25, 1
      %p553 = pneg %p46
      %p554 = pneg %p43
      %p555 = scmp.lt.s32.totalorder %s30, 1
      %s556 = scalar_select %p555, %s30, 1
      %s557 = smul.addr %s556, 72
      %s558 = smul.addr %s557, 8
      %s559 = scalar_lea.vmem %s1, %s558
      %p560 = pneg %p72
      %p561 = pneg %p69
      %p562 = scmp.lt.s32.totalorder %s30, 1
      %s563 = scalar_select %p562, %s30, 1
      %s564 = smul.addr %s563, 72
      %s565 = smul.addr %s564, 8
      %s566 = scalar_lea.vmem %s2, %s565
      %p567 = pneg %p98
      %p568 = pneg %p95
      %p569 = pneg %p119
      %p570 = pneg %p116
      %p571 = pneg %p140
      %p572 = pneg %p137
      %p573 = pneg %p161
      %p574 = pneg %p158
      %p575 = pneg %p182
      %p576 = pneg %p179
      %p577 = pneg %p203
      %p578 = pneg %p200
      %p579 = pneg %p224
      %p580 = pneg %p221
      %p581 = pneg %p245
      %p582 = pneg %p242
      %p583 = pneg %p266
      %p584 = pneg %p263
      %p585 = pneg %p287
      %p586 = pneg %p284
      %p587 = pneg %p308
      %p588 = pneg %p305
      %p589 = pneg %p329
      %p590 = pneg %p326
      %p591 = pneg %p350
      %p592 = pneg %p347
      %p593 = pneg %p371
      %p594 = pneg %p368
      %p595 = pneg %p392
      %p596 = pneg %p389
      %p597 = pneg %p413
      %p598 = pneg %p410
      %p599 = pneg %p434
      %p600 = pneg %p431
      %p601 = pneg %p460
      %p602 = pneg %p457
      %p603 = scmp.lt.s32.totalorder %s30, 1
      %s604 = scalar_select %p603, %s30, 1
      %s605 = smul.addr %s604, 72
      %s606 = smul.addr %s605, 8
      %s607 = scalar_lea.vmem %s19, %s606
      %p608 = scmp.lt.s32.totalorder %s30, 1
      %s609 = scalar_select %p608, %s30, 1
      %s610 = smul.addr %s609, 72
      %s611 = smul.addr %s610, 8
      %s612 = scalar_lea.vmem %s1, %s611
      %p613 = scmp.lt.s32.totalorder %s30, 1
      %s614 = scalar_select %p613, %s30, 1
      %s615 = smul.addr %s614, 72
      %s616 = smul.addr %s615, 8
      %s617 = scalar_lea.vmem %s2, %s616
      %p618 = scmp.lt.s32.totalorder %s30, 1
      %s619 = scalar_select %p618, %s30, 1
      %s620 = smul.addr %s619, 72
      %s621 = smul.addr %s620, 8
      %s622 = scalar_lea.vmem %s19, %s621
      %v623 = vld [vmem:[%s612 + $0x10] sm:$0xff]
      %v624 = vld [vmem:[%s612 + $0x18] sm:$0xff]
      %v625 = vld [vmem:[%s612 + $0x20] sm:$0xff]
      %v626 = vld [vmem:[%s612 + $0x28] sm:$0xff]
      %v627 = vld [vmem:[%s612 + $0x30] sm:$0xff]
      %v628 = vld [vmem:[%s612 + $0x38] sm:$0xff]
      %v629 = vld [vmem:[%s612 + $0x40] sm:$0xff]
      %v630 = vld [vmem:[%s612 + $0x48] sm:$0xff]
      %v631 = vld [vmem:[%s612 + $0x50] sm:$0xff]
      %v632 = vld [vmem:[%s612 + $0x58] sm:$0xff]
      %v633 = vld [vmem:[%s612 + $0x60] sm:$0xff]
      %v634 = vld [vmem:[%s612 + $0x68] sm:$0xff]
      %v635 = vld [vmem:[%s612 + $0x70] sm:$0xff]
      %v636 = vld [vmem:[%s612 + $0x78] sm:$0xff]
      %v637 = vld [vmem:[%s612 + $0x80] sm:$0xff]
      %v638 = vld [vmem:[%s612 + $0x88] sm:$0xff]
      %v639 = vld [vmem:[%s612 + $0x90] sm:$0xff]
      %v640 = vld [vmem:[%s612 + $0x98] sm:$0xff]
      %v641 = vld [vmem:[%s612 + $0xa0] sm:$0xff]
      %v642 = vld [vmem:[%s612 + $0xa8] sm:$0xff]
      %v643 = vld [vmem:[%s612 + $0xb0] sm:$0xff]
      %v644 = vld [vmem:[%s612 + $0xb8] sm:$0xff]
      %v645 = vld [vmem:[%s612 + $0xc0] sm:$0xff]
      %v646 = vld [vmem:[%s612 + $0xc8] sm:$0xff]
      %v647 = vld [vmem:[%s612 + $0xd0] sm:$0xff]
      %v648 = vld [vmem:[%s612 + $0xd8] sm:$0xff]
      %v649 = vld [vmem:[%s612 + $0xe0] sm:$0xff]
      %v650 = vld [vmem:[%s612 + $0xe8] sm:$0xff]
      %v651 = vld [vmem:[%s612 + $0xf0] sm:$0xff]
      %v652 = vld [vmem:[%s612 + $0xf8] sm:$0xff]
      %v653 = vld [vmem:[%s612 + $0x100] sm:$0xff]
      %v654 = vld [vmem:[%s612 + $0x108] sm:$0xff]
      %v655 = vld [vmem:[%s612 + $0x110] sm:$0xff]
      %v656 = vld [vmem:[%s612 + $0x118] sm:$0xff]
      %v657 = vld [vmem:[%s612 + $0x120] sm:$0xff]
      %v658 = vld [vmem:[%s612 + $0x128] sm:$0xff]
      %v659 = vld [vmem:[%s612 + $0x130] sm:$0xff]
      %v660 = vld [vmem:[%s612 + $0x138] sm:$0xff]
      %v661 = vld [vmem:[%s612 + $0x140] sm:$0xff]
      %v662 = vld [vmem:[%s612 + $0x148] sm:$0xff]
      %v663 = vld [vmem:[%s612 + $0x150] sm:$0xff]
      %v664 = vld [vmem:[%s612 + $0x158] sm:$0xff]
      %v665 = vld [vmem:[%s612 + $0x160] sm:$0xff]
      %v666 = vld [vmem:[%s612 + $0x168] sm:$0xff]
      %v667 = vld [vmem:[%s612 + $0x170] sm:$0xff]
      %v668 = vld [vmem:[%s612 + $0x178] sm:$0xff]
      %v669 = vld [vmem:[%s612 + $0x180] sm:$0xff]
      %v670 = vld [vmem:[%s612 + $0x188] sm:$0xff]
      %v671 = vld [vmem:[%s612 + $0x190] sm:$0xff]
      %v672 = vld [vmem:[%s612 + $0x198] sm:$0xff]
      %v673 = vld [vmem:[%s612 + $0x1a0] sm:$0xff]
      %v674 = vld [vmem:[%s612 + $0x1a8] sm:$0xff]
      %v675 = vld [vmem:[%s612 + $0x1b0] sm:$0xff]
      %v676 = vld [vmem:[%s612 + $0x1b8] sm:$0xff]
      %v677 = vld [vmem:[%s612 + $0x1c0] sm:$0xff]
      %v678 = vld [vmem:[%s612 + $0x1c8] sm:$0xff]
      %v679 = vld [vmem:[%s612 + $0x1d0] sm:$0xff]
      %v680 = vld [vmem:[%s612 + $0x1d8] sm:$0xff]
      %v681 = vld [vmem:[%s612 + $0x1e0] sm:$0xff]
      %v682 = vld [vmem:[%s612 + $0x1e8] sm:$0xff]
      %v683 = vld [vmem:[%s612 + $0x1f0] sm:$0xff]
      %v684 = vld [vmem:[%s612 + $0x1f8] sm:$0xff]
      %v685 = vld [vmem:[%s612 + $0x200] sm:$0xff]
      %v686 = vld [vmem:[%s612 + $0x208] sm:$0xff]
      %v687 = vld [vmem:[%s612 + $0x210] sm:$0xff]
      %v688 = vld [vmem:[%s612 + $0x218] sm:$0xff]
      %v689 = vld [vmem:[%s612 + $0x220] sm:$0xff]
      %v690 = vld [vmem:[%s612 + $0x228] sm:$0xff]
      %v691 = vld [vmem:[%s617] sm:$0xff]
      %v692 = vld [vmem:[%s617 + $0x8] sm:$0xff]
      %v693 = vld [vmem:[%s617 + $0x10] sm:$0xff]
      %v694 = vld [vmem:[%s617 + $0x18] sm:$0xff]
      %v695 = vld [vmem:[%s617 + $0x20] sm:$0xff]
      %v696 = vld [vmem:[%s617 + $0x28] sm:$0xff]
      %v697 = vld [vmem:[%s617 + $0x30] sm:$0xff]
      %v698 = vld [vmem:[%s617 + $0x38] sm:$0xff]
      %v699 = vld [vmem:[%s617 + $0x40] sm:$0xff]
      %v700 = vld [vmem:[%s617 + $0x48] sm:$0xff]
      %v701 = vld [vmem:[%s617 + $0x50] sm:$0xff]
      %v702 = vld [vmem:[%s617 + $0x58] sm:$0xff]
      %v703 = vld [vmem:[%s617 + $0x60] sm:$0xff]
      %v704 = vld [vmem:[%s617 + $0x68] sm:$0xff]
      %v705 = vld [vmem:[%s617 + $0x70] sm:$0xff]
      %v706 = vld [vmem:[%s617 + $0x78] sm:$0xff]
      %v707 = vld [vmem:[%s617 + $0x80] sm:$0xff]
      %v708 = vld [vmem:[%s617 + $0x88] sm:$0xff]
      %v709 = vld [vmem:[%s617 + $0x90] sm:$0xff]
      %v710 = vld [vmem:[%s617 + $0x98] sm:$0xff]
      %v711 = vld [vmem:[%s617 + $0xa0] sm:$0xff]
      %v712 = vld [vmem:[%s617 + $0xa8] sm:$0xff]
      %v713 = vld [vmem:[%s617 + $0xb0] sm:$0xff]
      %v714 = vld [vmem:[%s617 + $0xb8] sm:$0xff]
      %v715 = vld [vmem:[%s617 + $0xc0] sm:$0xff]
      %v716 = vld [vmem:[%s617 + $0xc8] sm:$0xff]
      %v717 = vld [vmem:[%s617 + $0xd0] sm:$0xff]
      %v718 = vld [vmem:[%s617 + $0xd8] sm:$0xff]
      %v719 = vld [vmem:[%s617 + $0xe0] sm:$0xff]
      %v720 = vld [vmem:[%s617 + $0xe8] sm:$0xff]
      %v721 = vld [vmem:[%s617 + $0xf0] sm:$0xff]
      %v722 = vld [vmem:[%s617 + $0xf8] sm:$0xff]
      %v723 = vld [vmem:[%s617 + $0x100] sm:$0xff]
      %v724 = vld [vmem:[%s617 + $0x108] sm:$0xff]
      %v725 = vld [vmem:[%s617 + $0x110] sm:$0xff]
      %v726 = vld [vmem:[%s617 + $0x118] sm:$0xff]
      %v727 = vld [vmem:[%s617 + $0x120] sm:$0xff]
      %v728 = vld [vmem:[%s617 + $0x128] sm:$0xff]
      %v729 = vld [vmem:[%s617 + $0x130] sm:$0xff]
      %v730 = vld [vmem:[%s617 + $0x138] sm:$0xff]
      %v731 = vld [vmem:[%s617 + $0x140] sm:$0xff]
      %v732 = vld [vmem:[%s617 + $0x148] sm:$0xff]
      %v733 = vld [vmem:[%s617 + $0x150] sm:$0xff]
      %v734 = vld [vmem:[%s617 + $0x158] sm:$0xff]
      %v735 = vld [vmem:[%s617 + $0x160] sm:$0xff]
      %v736 = vld [vmem:[%s617 + $0x168] sm:$0xff]
      %v737 = vld [vmem:[%s617 + $0x170] sm:$0xff]
      %v738 = vld [vmem:[%s617 + $0x178] sm:$0xff]
      %v739 = vld [vmem:[%s617 + $0x180] sm:$0xff]
      %v740 = vld [vmem:[%s617 + $0x188] sm:$0xff]
      %v741 = vld [vmem:[%s617 + $0x190] sm:$0xff]
      %v742 = vld [vmem:[%s617 + $0x198] sm:$0xff]
      %v743 = vld [vmem:[%s617 + $0x1a0] sm:$0xff]
      %v744 = vld [vmem:[%s617 + $0x1a8] sm:$0xff]
      %v745 = vld [vmem:[%s617 + $0x1b0] sm:$0xff]
      %v746 = vld [vmem:[%s617 + $0x1b8] sm:$0xff]
      %v747 = vld [vmem:[%s617 + $0x1c0] sm:$0xff]
      %v748 = vld [vmem:[%s617 + $0x1c8] sm:$0xff]
      %v749 = vld [vmem:[%s617 + $0x1d0] sm:$0xff]
      %v750 = vld [vmem:[%s617 + $0x1d8] sm:$0xff]
      %v751 = vld [vmem:[%s617 + $0x1e0] sm:$0xff]
      %v752 = vld [vmem:[%s617 + $0x1e8] sm:$0xff]
      %v753 = vld [vmem:[%s617 + $0x1f0] sm:$0xff]
      %v754 = vld [vmem:[%s617 + $0x1f8] sm:$0xff]
      %v755 = vld [vmem:[%s617 + $0x200] sm:$0xff]
      %v756 = vld [vmem:[%s617 + $0x208] sm:$0xff]
      %v757 = vld [vmem:[%s617 + $0x210] sm:$0xff]
      %v758 = vld [vmem:[%s617 + $0x218] sm:$0xff]
      %v759 = vld [vmem:[%s617 + $0x220] sm:$0xff]
      %v760 = vld [vmem:[%s617 + $0x228] sm:$0xff]
      %v761 = vld [vmem:[%s617 + $0x230] sm:$0xff]
      %v762 = vld [vmem:[%s617 + $0x238] sm:$0xff]
      %v763 = vld [vmem:[%s0 + $0x10] sm:$0xff]
      %v764 = vld [vmem:[%s0 + $0x18] sm:$0xff]
      %v765 = vld [vmem:[%s0 + $0x20] sm:$0xff]
      %v766 = vld [vmem:[%s0 + $0x28] sm:$0xff]
      %v767 = vld [vmem:[%s0 + $0x30] sm:$0xff]
      %v768 = vld [vmem:[%s0 + $0x38] sm:$0xff]
      %v769 = vld [vmem:[%s0 + $0x40] sm:$0xff]
      %v770 = vld [vmem:[%s0 + $0x48] sm:$0xff]
      %v771 = vld [vmem:[%s0 + $0x50] sm:$0xff]
      %v772 = vld [vmem:[%s0 + $0x58] sm:$0xff]
      %v773 = vld [vmem:[%s0 + $0x60] sm:$0xff]
      %v774 = vld [vmem:[%s0 + $0x68] sm:$0xff]
      %v775 = vld [vmem:[%s0 + $0x70] sm:$0xff]
      %v776 = vld [vmem:[%s0 + $0x78] sm:$0xff]
      %v777 = vld [vmem:[%s0 + $0x80] sm:$0xff]
      %v778 = vld [vmem:[%s0 + $0x88] sm:$0xff]
      %v779 = vld [vmem:[%s0 + $0x90] sm:$0xff]
      %v780 = vld [vmem:[%s0 + $0x98] sm:$0xff]
      %v781 = vld [vmem:[%s0 + $0xa0] sm:$0xff]
      %v782 = vld [vmem:[%s0 + $0xa8] sm:$0xff]
      %v783 = vld [vmem:[%s0 + $0xb0] sm:$0xff]
      %v784 = vld [vmem:[%s0 + $0xb8] sm:$0xff]
      %v785 = vld [vmem:[%s0 + $0xc0] sm:$0xff]
      %v786 = vld [vmem:[%s0 + $0xc8] sm:$0xff]
      %v787 = vld [vmem:[%s0 + $0xd0] sm:$0xff]
      %v788 = vld [vmem:[%s0 + $0xd8] sm:$0xff]
      %v789 = vld [vmem:[%s0 + $0xe0] sm:$0xff]
      %v790 = vld [vmem:[%s0 + $0xe8] sm:$0xff]
      %v791 = vld [vmem:[%s0 + $0xf0] sm:$0xff]
      %v792 = vld [vmem:[%s0 + $0xf8] sm:$0xff]
      %v793 = vld [vmem:[%s0 + $0x100] sm:$0xff]
      %v794 = vld [vmem:[%s0 + $0x108] sm:$0xff]
      %v795 = vld [vmem:[%s0 + $0x110] sm:$0xff]
      %v796 = vld [vmem:[%s0 + $0x118] sm:$0xff]
      %v797 = vld [vmem:[%s0 + $0x120] sm:$0xff]
      %v798 = vld [vmem:[%s0 + $0x128] sm:$0xff]
      %v799 = vld [vmem:[%s0 + $0x130] sm:$0xff]
      %v800 = vld [vmem:[%s0 + $0x138] sm:$0xff]
      %v801 = vld [vmem:[%s0 + $0x140] sm:$0xff]
      %v802 = vld [vmem:[%s0 + $0x148] sm:$0xff]
      %v803 = vld [vmem:[%s0 + $0x150] sm:$0xff]
      %v804 = vld [vmem:[%s0 + $0x158] sm:$0xff]
      %v805 = vld [vmem:[%s0 + $0x160] sm:$0xff]
      %v806 = vld [vmem:[%s0 + $0x168] sm:$0xff]
      %v807 = vld [vmem:[%s0 + $0x170] sm:$0xff]
      %v808 = vld [vmem:[%s0 + $0x178] sm:$0xff]
      %v809 = vld [vmem:[%s0 + $0x180] sm:$0xff]
      %v810 = vld [vmem:[%s0 + $0x188] sm:$0xff]
      %v811 = vld [vmem:[%s0 + $0x190] sm:$0xff]
      %v812 = vld [vmem:[%s0 + $0x198] sm:$0xff]
      %v813 = vld [vmem:[%s0 + $0x1a0] sm:$0xff]
      %v814 = vld [vmem:[%s0 + $0x1a8] sm:$0xff]
      %v815 = vld [vmem:[%s0 + $0x1b0] sm:$0xff]
      %v816 = vld [vmem:[%s0 + $0x1b8] sm:$0xff]
      %v817 = vld [vmem:[%s0 + $0x1c0] sm:$0xff]
      %v818 = vld [vmem:[%s0 + $0x1c8] sm:$0xff]
      %v819 = vld [vmem:[%s0 + $0x1d0] sm:$0xff]
      %v820 = vld [vmem:[%s0 + $0x1d8] sm:$0xff]
      %v821 = vld [vmem:[%s0 + $0x1e0] sm:$0xff]
      %v822 = vld [vmem:[%s0 + $0x1e8] sm:$0xff]
      %v823 = vld [vmem:[%s0 + $0x1f0] sm:$0xff]
      %v824 = vld [vmem:[%s0 + $0x1f8] sm:$0xff]
      %v825 = vld [vmem:[%s0 + $0x200] sm:$0xff]
      %v826 = vld [vmem:[%s0 + $0x208] sm:$0xff]
      %v827 = vld [vmem:[%s0 + $0x210] sm:$0xff]
      %v828 = vld [vmem:[%s0 + $0x218] sm:$0xff]
      %v829 = vld [vmem:[%s0 + $0x220] sm:$0xff]
      %v830 = vld [vmem:[%s0 + $0x228] sm:$0xff]
      %v831 = vpack.c.bf16 %v692, %v691
      %v832 = vpack.c.bf16 %v694, %v693
      %v833 = vpack.c.bf16 %v696, %v695
      %v834 = vpack.c.bf16 %v698, %v697
      %v835 = vpack.c.bf16 %v700, %v699
      %v836 = vpack.c.bf16 %v702, %v701
      %v837 = vpack.c.bf16 %v704, %v703
      %v838 = vpack.c.bf16 %v706, %v705
      %v839 = vpack.c.bf16 %v708, %v707
      %v840 = vpack.c.bf16 %v710, %v709
      %v841 = vpack.c.bf16 %v712, %v711
      %v842 = vpack.c.bf16 %v714, %v713
      %v843 = vpack.c.bf16 %v716, %v715
      %v844 = vpack.c.bf16 %v718, %v717
      %v845 = vpack.c.bf16 %v720, %v719
      %v846 = vpack.c.bf16 %v722, %v721
      %v847 = vpack.c.bf16 %v724, %v723
      %v848 = vpack.c.bf16 %v726, %v725
      %v849 = vpack.c.bf16 %v728, %v727
      %v850 = vpack.c.bf16 %v730, %v729
      %v851 = vpack.c.bf16 %v732, %v731
      %v852 = vpack.c.bf16 %v734, %v733
      %v853 = vpack.c.bf16 %v736, %v735
      %v854 = vpack.c.bf16 %v738, %v737
      %v855 = vpack.c.bf16 %v740, %v739
      %v856 = vpack.c.bf16 %v742, %v741
      %v857 = vpack.c.bf16 %v744, %v743
      %v858 = vpack.c.bf16 %v746, %v745
      %v859 = vpack.c.bf16 %v748, %v747
      %v860 = vpack.c.bf16 %v750, %v749
      %v861 = vpack.c.bf16 %v752, %v751
      %v862 = vpack.c.bf16 %v754, %v753
      %v863 = vpack.c.bf16 %v756, %v755
      %v864 = vpack.c.bf16 %v758, %v757
      %v865 = vpack.c.bf16 %v760, %v759
      %v866 = vpack.c.bf16 %v762, %v761
      %v867 = vld [vmem:[%s3] sm:$0xff]
      %v868 = vld [vmem:[%s3 + $0x8] sm:$0xff]
      %v869 = vld [vmem:[%s3 + $0x10] sm:$0xff]
      %v870 = vld [vmem:[%s3 + $0x18] sm:$0xff]
      %v871 = vld [vmem:[%s3 + $0x20] sm:$0xff]
      %v872 = vld [vmem:[%s3 + $0x28] sm:$0xff]
      %v873 = vld [vmem:[%s3 + $0x30] sm:$0xff]
      %v874 = vld [vmem:[%s3 + $0x38] sm:$0xff]
      %v875 = vld [vmem:[%s3 + $0x40] sm:$0xff]
      %v876 = vld [vmem:[%s3 + $0x48] sm:$0xff]
      %v877 = vld [vmem:[%s3 + $0x50] sm:$0xff]
      %v878 = vld [vmem:[%s3 + $0x58] sm:$0xff]
      %v879 = vld [vmem:[%s3 + $0x60] sm:$0xff]
      %v880 = vld [vmem:[%s3 + $0x68] sm:$0xff]
      %v881 = vld [vmem:[%s3 + $0x70] sm:$0xff]
      %v882 = vld [vmem:[%s3 + $0x78] sm:$0xff]
      %v883 = vld [vmem:[%s4] sm:$0x3]
      %v885 = vperm.slane %v883, 0
      %v886 = vperm.slane %v883, 1
      %v905 = vunpack.c.l.b16 %v867
      %v906 = vunpack.c.h.b16 %v867
      %v907 = vunpack.c.l.b16 %v868
      %v908 = vunpack.c.h.b16 %v868
      %v909 = vunpack.c.l.b16 %v869
      %v910 = vunpack.c.h.b16 %v869
      %v911 = vunpack.c.l.b16 %v870
      %v912 = vunpack.c.h.b16 %v870
      %v913 = vunpack.c.l.b16 %v871
      %v914 = vunpack.c.h.b16 %v871
      %v915 = vunpack.c.l.b16 %v872
      %v916 = vunpack.c.h.b16 %v872
      %v917 = vunpack.c.l.b16 %v873
      %v918 = vunpack.c.h.b16 %v873
      %v919 = vunpack.c.l.b16 %v874
      %v920 = vunpack.c.h.b16 %v874
      %v921 = vunpack.c.l.b16 %v875
      %v922 = vunpack.c.h.b16 %v875
      %v923 = vunpack.c.l.b16 %v876
      %v924 = vunpack.c.h.b16 %v876
      %v925 = vunpack.c.l.b16 %v877
      %v926 = vunpack.c.h.b16 %v877
      %v927 = vunpack.c.l.b16 %v878
      %v928 = vunpack.c.h.b16 %v878
      %v929 = vunpack.c.l.b16 %v879
      %v930 = vunpack.c.h.b16 %v879
      %v931 = vunpack.c.l.b16 %v880
      %v932 = vunpack.c.h.b16 %v880
      %v933 = vunpack.c.l.b16 %v881
      %v934 = vunpack.c.h.b16 %v881
      %v935 = vunpack.c.l.b16 %v882
      %v936 = vunpack.c.h.b16 %v882
      %v937 = vpack.c.b16 %v907, %v905
      %v938 = vpack.c.b16 %v908, %v906
      %v939 = vpack.c.b16 %v911, %v909
      %v940 = vpack.c.b16 %v912, %v910
      %v941 = vpack.c.b16 %v915, %v913
      %v942 = vpack.c.b16 %v916, %v914
      %v943 = vpack.c.b16 %v919, %v917
      %v944 = vpack.c.b16 %v920, %v918
      %v945 = vpack.c.b16 %v923, %v921
      %v946 = vpack.c.b16 %v924, %v922
      %v947 = vpack.c.b16 %v927, %v925
      %v948 = vpack.c.b16 %v928, %v926
      %v949 = vpack.c.b16 %v931, %v929
      %v950 = vpack.c.b16 %v932, %v930
      %v951 = vpack.c.b16 %v935, %v933
      %v952 = vpack.c.b16 %v936, %v934
      %969 = vmatpush.bf16.msra.mxu0 %v951
      %970 = vmatpush.bf16.msra.mxu0 %v949
      %971 = vmatpush.bf16.msra.mxu0 %v947
      %972 = vmatpush.bf16.msra.mxu0 %v945
      %973 = vmatpush.bf16.msra.mxu0 %v943
      %974 = vmatpush.bf16.msra.mxu0 %v941
      %975 = vmatpush.bf16.msra.mxu0 %v939
      %976 = vmatpush.bf16.msra.mxu0 %v937
      %977 = vmatmul.bf16.gmra.mxu0 %v831
      %v978 = vpop.f32.mrf.mxu0
      %v979 = vadd.f32 %v885, %v978
      %v980 = vpop.f32.mrf.mxu0
      %v981 = vadd.f32 %v885, %v980
      %982 = vmatmul.bf16.gmra.mxu0 %v832
      %v983 = vpop.f32.mrf.mxu0
      %v984 = vadd.f32 %v885, %v983
      %v985 = vpop.f32.mrf.mxu0
      %v986 = vadd.f32 %v885, %v985
      %987 = vmatmul.bf16.gmra.mxu0 %v833
      %v988 = vpop.f32.mrf.mxu0
      %v989 = vadd.f32 %v885, %v988
      %v990 = vpop.f32.mrf.mxu0
      %v991 = vadd.f32 %v885, %v990
      %992 = vmatmul.bf16.gmra.mxu0 %v834
      %v993 = vpop.f32.mrf.mxu0
      %v994 = vadd.f32 %v885, %v993
      %v995 = vpop.f32.mrf.mxu0
      %v996 = vadd.f32 %v885, %v995
      %997 = vmatmul.bf16.gmra.mxu0 %v835
      %v998 = vpop.f32.mrf.mxu0
      %v999 = vadd.f32 %v885, %v998
      %v1000 = vpop.f32.mrf.mxu0
      %v1001 = vadd.f32 %v885, %v1000
      %1002 = vmatmul.bf16.gmra.mxu0 %v836
      %v1003 = vpop.f32.mrf.mxu0
      %v1004 = vadd.f32 %v885, %v1003
      %v1005 = vpop.f32.mrf.mxu0
      %v1006 = vadd.f32 %v885, %v1005
      %1007 = vmatmul.bf16.gmra.mxu0 %v837
      %v1008 = vpop.f32.mrf.mxu0
      %v1009 = vadd.f32 %v885, %v1008
      %v1010 = vpop.f32.mrf.mxu0
      %v1011 = vadd.f32 %v885, %v1010
      %1012 = vmatmul.bf16.gmra.mxu0 %v838
      %v1013 = vpop.f32.mrf.mxu0
      %v1014 = vadd.f32 %v885, %v1013
      %v1015 = vpop.f32.mrf.mxu0
      %v1016 = vadd.f32 %v885, %v1015
      %1017 = vmatmul.bf16.gmra.mxu0 %v839
      %v1018 = vpop.f32.mrf.mxu0
      %v1019 = vadd.f32 %v885, %v1018
      %v1020 = vpop.f32.mrf.mxu0
      %v1021 = vadd.f32 %v885, %v1020
      %1022 = vmatmul.bf16.gmra.mxu0 %v840
      %v1023 = vpop.f32.mrf.mxu0
      %v1024 = vadd.f32 %v885, %v1023
      %v1025 = vpop.f32.mrf.mxu0
      %v1026 = vadd.f32 %v885, %v1025
      %1027 = vmatmul.bf16.gmra.mxu0 %v841
      %v1028 = vpop.f32.mrf.mxu0
      %v1029 = vadd.f32 %v885, %v1028
      %v1030 = vpop.f32.mrf.mxu0
      %v1031 = vadd.f32 %v885, %v1030
      %1032 = vmatmul.bf16.gmra.mxu0 %v842
      %v1033 = vpop.f32.mrf.mxu0
      %v1034 = vadd.f32 %v885, %v1033
      %v1035 = vpop.f32.mrf.mxu0
      %v1036 = vadd.f32 %v885, %v1035
      %1037 = vmatmul.bf16.gmra.mxu0 %v843
      %v1038 = vpop.f32.mrf.mxu0
      %v1039 = vadd.f32 %v885, %v1038
      %v1040 = vpop.f32.mrf.mxu0
      %v1041 = vadd.f32 %v885, %v1040
      %1042 = vmatmul.bf16.gmra.mxu0 %v844
      %v1043 = vpop.f32.mrf.mxu0
      %v1044 = vadd.f32 %v885, %v1043
      %v1045 = vpop.f32.mrf.mxu0
      %v1046 = vadd.f32 %v885, %v1045
      %1047 = vmatmul.bf16.gmra.mxu0 %v845
      %v1048 = vpop.f32.mrf.mxu0
      %v1049 = vadd.f32 %v885, %v1048
      %v1050 = vpop.f32.mrf.mxu0
      %v1051 = vadd.f32 %v885, %v1050
      %1052 = vmatmul.bf16.gmra.mxu0 %v846
      %v1053 = vpop.f32.mrf.mxu0
      %v1054 = vadd.f32 %v885, %v1053
      %v1055 = vpop.f32.mrf.mxu0
      %v1056 = vadd.f32 %v885, %v1055
      %1057 = vmatmul.bf16.gmra.mxu0 %v847
      %v1058 = vpop.f32.mrf.mxu0
      %v1059 = vadd.f32 %v885, %v1058
      %v1060 = vpop.f32.mrf.mxu0
      %v1061 = vadd.f32 %v885, %v1060
      %1062 = vmatmul.bf16.gmra.mxu0 %v848
      %v1063 = vpop.f32.mrf.mxu0
      %v1064 = vadd.f32 %v885, %v1063
      %v1065 = vpop.f32.mrf.mxu0
      %v1066 = vadd.f32 %v885, %v1065
      %1067 = vmatmul.bf16.gmra.mxu0 %v849
      %v1068 = vpop.f32.mrf.mxu0
      %v1069 = vadd.f32 %v885, %v1068
      %v1070 = vpop.f32.mrf.mxu0
      %v1071 = vadd.f32 %v885, %v1070
      %1072 = vmatmul.bf16.gmra.mxu0 %v850
      %v1073 = vpop.f32.mrf.mxu0
      %v1074 = vadd.f32 %v885, %v1073
      %v1075 = vpop.f32.mrf.mxu0
      %v1076 = vadd.f32 %v885, %v1075
      %1077 = vmatmul.bf16.gmra.mxu0 %v851
      %v1078 = vpop.f32.mrf.mxu0
      %v1079 = vadd.f32 %v885, %v1078
      %v1080 = vpop.f32.mrf.mxu0
      %v1081 = vadd.f32 %v885, %v1080
      %1082 = vmatmul.bf16.gmra.mxu0 %v852
      %v1083 = vpop.f32.mrf.mxu0
      %v1084 = vadd.f32 %v885, %v1083
      %v1085 = vpop.f32.mrf.mxu0
      %v1086 = vadd.f32 %v885, %v1085
      %1087 = vmatmul.bf16.gmra.mxu0 %v853
      %v1088 = vpop.f32.mrf.mxu0
      %v1089 = vadd.f32 %v885, %v1088
      %v1090 = vpop.f32.mrf.mxu0
      %v1091 = vadd.f32 %v885, %v1090
      %1092 = vmatmul.bf16.gmra.mxu0 %v854
      %v1093 = vpop.f32.mrf.mxu0
      %v1094 = vadd.f32 %v885, %v1093
      %v1095 = vpop.f32.mrf.mxu0
      %v1096 = vadd.f32 %v885, %v1095
      %1097 = vmatmul.bf16.gmra.mxu0 %v855
      %v1098 = vpop.f32.mrf.mxu0
      %v1099 = vadd.f32 %v885, %v1098
      %v1100 = vpop.f32.mrf.mxu0
      %v1101 = vadd.f32 %v885, %v1100
      %1102 = vmatmul.bf16.gmra.mxu0 %v856
      %v1103 = vpop.f32.mrf.mxu0
      %v1104 = vadd.f32 %v885, %v1103
      %v1105 = vpop.f32.mrf.mxu0
      %v1106 = vadd.f32 %v885, %v1105
      %1107 = vmatmul.bf16.gmra.mxu0 %v857
      %v1108 = vpop.f32.mrf.mxu0
      %v1109 = vadd.f32 %v885, %v1108
      %v1110 = vpop.f32.mrf.mxu0
      %v1111 = vadd.f32 %v885, %v1110
      %1112 = vmatmul.bf16.gmra.mxu0 %v858
      %v1113 = vpop.f32.mrf.mxu0
      %v1114 = vadd.f32 %v885, %v1113
      %v1115 = vpop.f32.mrf.mxu0
      %v1116 = vadd.f32 %v885, %v1115
      %1117 = vmatmul.bf16.gmra.mxu0 %v859
      %v1118 = vpop.f32.mrf.mxu0
      %v1119 = vadd.f32 %v885, %v1118
      %v1120 = vpop.f32.mrf.mxu0
      %v1121 = vadd.f32 %v885, %v1120
      %1122 = vmatmul.bf16.gmra.mxu0 %v860
      %v1123 = vpop.f32.mrf.mxu0
      %v1124 = vadd.f32 %v885, %v1123
      %v1125 = vpop.f32.mrf.mxu0
      %v1126 = vadd.f32 %v885, %v1125
      %1127 = vmatmul.bf16.gmra.mxu0 %v861
      %v1128 = vpop.f32.mrf.mxu0
      %v1129 = vadd.f32 %v885, %v1128
      %v1130 = vpop.f32.mrf.mxu0
      %v1131 = vadd.f32 %v885, %v1130
      %1132 = vmatmul.bf16.gmra.mxu0 %v862
      %v1133 = vpop.f32.mrf.mxu0
      %v1134 = vadd.f32 %v885, %v1133
      %v1135 = vpop.f32.mrf.mxu0
      %v1136 = vadd.f32 %v885, %v1135
      %1137 = vmatmul.bf16.gmra.mxu0 %v863
      %v1138 = vpop.f32.mrf.mxu0
      %v1139 = vadd.f32 %v885, %v1138
      %v1140 = vpop.f32.mrf.mxu0
      %v1141 = vadd.f32 %v885, %v1140
      %1142 = vmatmul.bf16.gmra.mxu0 %v864
      %v1143 = vpop.f32.mrf.mxu0
      %v1144 = vadd.f32 %v885, %v1143
      %v1145 = vpop.f32.mrf.mxu0
      %v1146 = vadd.f32 %v885, %v1145
      %1147 = vmatmul.bf16.gmra.mxu0 %v865
      %v1148 = vpop.f32.mrf.mxu0
      %v1149 = vadd.f32 %v885, %v1148
      %v1150 = vpop.f32.mrf.mxu0
      %v1151 = vadd.f32 %v885, %v1150
      %1152 = vmatmul.bf16.gmra.mxu0 %v866
      %v1153 = vpop.f32.mrf.mxu0
      %v1154 = vadd.f32 %v885, %v1153
      %v1155 = vpop.f32.mrf.mxu0
      %v1156 = vadd.f32 %v885, %v1155
      %1157 = vdwg.mxu0
      %1158 = vmatpush.bf16.msra.mxu0 %v952
      %1159 = vmatpush.bf16.msra.mxu0 %v950
      %1160 = vmatpush.bf16.msra.mxu0 %v948
      %1161 = vmatpush.bf16.msra.mxu0 %v946
      %1162 = vmatpush.bf16.msra.mxu0 %v944
      %1163 = vmatpush.bf16.msra.mxu0 %v942
      %1164 = vmatpush.bf16.msra.mxu0 %v940
      %1165 = vmatpush.bf16.msra.mxu0 %v938
      %1166 = vmatmul.bf16.gmra.mxu0 %v831
      %v1167 = vpop.f32.mrf.mxu0
      %v1168 = vadd.f32 %v886, %v1167
      %v1169 = vpop.f32.mrf.mxu0
      %v1170 = vadd.f32 %v886, %v1169
      %1171 = vmatmul.bf16.gmra.mxu0 %v832
      %v1172 = vpop.f32.mrf.mxu0
      %v1173 = vadd.f32 %v886, %v1172
      %v1174 = vpop.f32.mrf.mxu0
      %v1175 = vadd.f32 %v886, %v1174
      %1176 = vmatmul.bf16.gmra.mxu0 %v833
      %v1177 = vpop.f32.mrf.mxu0
      %v1178 = vadd.f32 %v886, %v1177
      %v1179 = vpop.f32.mrf.mxu0
      %v1180 = vadd.f32 %v886, %v1179
      %1181 = vmatmul.bf16.gmra.mxu0 %v834
      %v1182 = vpop.f32.mrf.mxu0
      %v1183 = vadd.f32 %v886, %v1182
      %v1184 = vpop.f32.mrf.mxu0
      %v1185 = vadd.f32 %v886, %v1184
      %1186 = vmatmul.bf16.gmra.mxu0 %v835
      %v1187 = vpop.f32.mrf.mxu0
      %v1188 = vadd.f32 %v886, %v1187
      %v1189 = vpop.f32.mrf.mxu0
      %v1190 = vadd.f32 %v886, %v1189
      %1191 = vmatmul.bf16.gmra.mxu0 %v836
      %v1192 = vpop.f32.mrf.mxu0
      %v1193 = vadd.f32 %v886, %v1192
      %v1194 = vpop.f32.mrf.mxu0
      %v1195 = vadd.f32 %v886, %v1194
      %1196 = vmatmul.bf16.gmra.mxu0 %v837
      %v1197 = vpop.f32.mrf.mxu0
      %v1198 = vadd.f32 %v886, %v1197
      %v1199 = vpop.f32.mrf.mxu0
      %v1200 = vadd.f32 %v886, %v1199
      %1201 = vmatmul.bf16.gmra.mxu0 %v838
      %v1202 = vpop.f32.mrf.mxu0
      %v1203 = vadd.f32 %v886, %v1202
      %v1204 = vpop.f32.mrf.mxu0
      %v1205 = vadd.f32 %v886, %v1204
      %1206 = vmatmul.bf16.gmra.mxu0 %v839
      %v1207 = vpop.f32.mrf.mxu0
      %v1208 = vadd.f32 %v886, %v1207
      %v1209 = vpop.f32.mrf.mxu0
      %v1210 = vadd.f32 %v886, %v1209
      %1211 = vmatmul.bf16.gmra.mxu0 %v840
      %v1212 = vpop.f32.mrf.mxu0
      %v1213 = vadd.f32 %v886, %v1212
      %v1214 = vpop.f32.mrf.mxu0
      %v1215 = vadd.f32 %v886, %v1214
      %1216 = vmatmul.bf16.gmra.mxu0 %v841
      %v1217 = vpop.f32.mrf.mxu0
      %v1218 = vadd.f32 %v886, %v1217
      %v1219 = vpop.f32.mrf.mxu0
      %v1220 = vadd.f32 %v886, %v1219
      %1221 = vmatmul.bf16.gmra.mxu0 %v842
      %v1222 = vpop.f32.mrf.mxu0
      %v1223 = vadd.f32 %v886, %v1222
      %v1224 = vpop.f32.mrf.mxu0
      %v1225 = vadd.f32 %v886, %v1224
      %1226 = vmatmul.bf16.gmra.mxu0 %v843
      %v1227 = vpop.f32.mrf.mxu0
      %v1228 = vadd.f32 %v886, %v1227
      %v1229 = vpop.f32.mrf.mxu0
      %v1230 = vadd.f32 %v886, %v1229
      %1231 = vmatmul.bf16.gmra.mxu0 %v844
      %v1232 = vpop.f32.mrf.mxu0
      %v1233 = vadd.f32 %v886, %v1232
      %v1234 = vpop.f32.mrf.mxu0
      %v1235 = vadd.f32 %v886, %v1234
      %1236 = vmatmul.bf16.gmra.mxu0 %v845
      %v1237 = vpop.f32.mrf.mxu0
      %v1238 = vadd.f32 %v886, %v1237
      %v1239 = vpop.f32.mrf.mxu0
      %v1240 = vadd.f32 %v886, %v1239
      %1241 = vmatmul.bf16.gmra.mxu0 %v846
      %v1242 = vpop.f32.mrf.mxu0
      %v1243 = vadd.f32 %v886, %v1242
      %v1244 = vpop.f32.mrf.mxu0
      %v1245 = vadd.f32 %v886, %v1244
      %1246 = vmatmul.bf16.gmra.mxu0 %v847
      %v1247 = vpop.f32.mrf.mxu0
      %v1248 = vadd.f32 %v886, %v1247
      %v1249 = vpop.f32.mrf.mxu0
      %v1250 = vadd.f32 %v886, %v1249
      %1251 = vmatmul.bf16.gmra.mxu0 %v848
      %v1252 = vpop.f32.mrf.mxu0
      %v1253 = vadd.f32 %v886, %v1252
      %v1254 = vpop.f32.mrf.mxu0
      %v1255 = vadd.f32 %v886, %v1254
      %1256 = vmatmul.bf16.gmra.mxu0 %v849
      %v1257 = vpop.f32.mrf.mxu0
      %v1258 = vadd.f32 %v886, %v1257
      %v1259 = vpop.f32.mrf.mxu0
      %v1260 = vadd.f32 %v886, %v1259
      %1261 = vmatmul.bf16.gmra.mxu0 %v850
      %v1262 = vpop.f32.mrf.mxu0
      %v1263 = vadd.f32 %v886, %v1262
      %v1264 = vpop.f32.mrf.mxu0
      %v1265 = vadd.f32 %v886, %v1264
      %1266 = vmatmul.bf16.gmra.mxu0 %v851
      %v1267 = vpop.f32.mrf.mxu0
      %v1268 = vadd.f32 %v886, %v1267
      %v1269 = vpop.f32.mrf.mxu0
      %v1270 = vadd.f32 %v886, %v1269
      %1271 = vmatmul.bf16.gmra.mxu0 %v852
      %v1272 = vpop.f32.mrf.mxu0
      %v1273 = vadd.f32 %v886, %v1272
      %v1274 = vpop.f32.mrf.mxu0
      %v1275 = vadd.f32 %v886, %v1274
      %1276 = vmatmul.bf16.gmra.mxu0 %v853
      %v1277 = vpop.f32.mrf.mxu0
      %v1278 = vadd.f32 %v886, %v1277
      %v1279 = vpop.f32.mrf.mxu0
      %v1280 = vadd.f32 %v886, %v1279
      %1281 = vmatmul.bf16.gmra.mxu0 %v854
      %v1282 = vpop.f32.mrf.mxu0
      %v1283 = vadd.f32 %v886, %v1282
      %v1284 = vpop.f32.mrf.mxu0
      %v1285 = vadd.f32 %v886, %v1284
      %1286 = vmatmul.bf16.gmra.mxu0 %v855
      %v1287 = vpop.f32.mrf.mxu0
      %v1288 = vadd.f32 %v886, %v1287
      %v1289 = vpop.f32.mrf.mxu0
      %v1290 = vadd.f32 %v886, %v1289
      %1291 = vmatmul.bf16.gmra.mxu0 %v856
      %v1292 = vpop.f32.mrf.mxu0
      %v1293 = vadd.f32 %v886, %v1292
      %v1294 = vpop.f32.mrf.mxu0
      %v1295 = vadd.f32 %v886, %v1294
      %1296 = vmatmul.bf16.gmra.mxu0 %v857
      %v1297 = vpop.f32.mrf.mxu0
      %v1298 = vadd.f32 %v886, %v1297
      %v1299 = vpop.f32.mrf.mxu0
      %v1300 = vadd.f32 %v886, %v1299
      %1301 = vmatmul.bf16.gmra.mxu0 %v858
      %v1302 = vpop.f32.mrf.mxu0
      %v1303 = vadd.f32 %v886, %v1302
      %v1304 = vpop.f32.mrf.mxu0
      %v1305 = vadd.f32 %v886, %v1304
      %1306 = vmatmul.bf16.gmra.mxu0 %v859
      %v1307 = vpop.f32.mrf.mxu0
      %v1308 = vadd.f32 %v886, %v1307
      %v1309 = vpop.f32.mrf.mxu0
      %v1310 = vadd.f32 %v886, %v1309
      %1311 = vmatmul.bf16.gmra.mxu0 %v860
      %v1312 = vpop.f32.mrf.mxu0
      %v1313 = vadd.f32 %v886, %v1312
      %v1314 = vpop.f32.mrf.mxu0
      %v1315 = vadd.f32 %v886, %v1314
      %1316 = vmatmul.bf16.gmra.mxu0 %v861
      %v1317 = vpop.f32.mrf.mxu0
      %v1318 = vadd.f32 %v886, %v1317
      %v1319 = vpop.f32.mrf.mxu0
      %v1320 = vadd.f32 %v886, %v1319
      %1321 = vmatmul.bf16.gmra.mxu0 %v862
      %v1322 = vpop.f32.mrf.mxu0
      %v1323 = vadd.f32 %v886, %v1322
      %v1324 = vpop.f32.mrf.mxu0
      %v1325 = vadd.f32 %v886, %v1324
      %1326 = vmatmul.bf16.gmra.mxu0 %v863
      %v1327 = vpop.f32.mrf.mxu0
      %v1328 = vadd.f32 %v886, %v1327
      %v1329 = vpop.f32.mrf.mxu0
      %v1330 = vadd.f32 %v886, %v1329
      %1331 = vmatmul.bf16.gmra.mxu0 %v864
      %v1332 = vpop.f32.mrf.mxu0
      %v1333 = vadd.f32 %v886, %v1332
      %v1334 = vpop.f32.mrf.mxu0
      %v1335 = vadd.f32 %v886, %v1334
      %1336 = vmatmul.bf16.gmra.mxu0 %v865
      %v1337 = vpop.f32.mrf.mxu0
      %v1338 = vadd.f32 %v886, %v1337
      %v1339 = vpop.f32.mrf.mxu0
      %v1340 = vadd.f32 %v886, %v1339
      %1341 = vmatmul.bf16.gmra.mxu0 %v866
      %v1342 = vpop.f32.mrf.mxu0
      %v1343 = vadd.f32 %v886, %v1342
      %v1344 = vpop.f32.mrf.mxu0
      %v1345 = vadd.f32 %v886, %v1344
      %1346 = vdwg.mxu0
      %vm1347 = vcmp.ge.f32.partialorder %v979, 0.0
      %vm1348 = vcmp.ge.f32.partialorder %v1168, 0.0
      %vm1349 = vcmp.ge.f32.partialorder %v981, 0.0
      %vm1350 = vcmp.ge.f32.partialorder %v1170, 0.0
      %vm1351 = vcmp.ge.f32.partialorder %v984, 0.0
      %vm1352 = vcmp.ge.f32.partialorder %v1173, 0.0
      %vm1353 = vcmp.ge.f32.partialorder %v986, 0.0
      %vm1354 = vcmp.ge.f32.partialorder %v1175, 0.0
      %vm1355 = vcmp.ge.f32.partialorder %v989, 0.0
      %vm1356 = vcmp.ge.f32.partialorder %v1178, 0.0
      %vm1357 = vcmp.ge.f32.partialorder %v991, 0.0
      %vm1358 = vcmp.ge.f32.partialorder %v1180, 0.0
      %vm1359 = vcmp.ge.f32.partialorder %v994, 0.0
      %vm1360 = vcmp.ge.f32.partialorder %v1183, 0.0
      %vm1361 = vcmp.ge.f32.partialorder %v996, 0.0
      %vm1362 = vcmp.ge.f32.partialorder %v1185, 0.0
      %vm1363 = vcmp.ge.f32.partialorder %v999, 0.0
      %vm1364 = vcmp.ge.f32.partialorder %v1188, 0.0
      %vm1365 = vcmp.ge.f32.partialorder %v1001, 0.0
      %vm1366 = vcmp.ge.f32.partialorder %v1190, 0.0
      %vm1367 = vcmp.ge.f32.partialorder %v1004, 0.0
      %vm1368 = vcmp.ge.f32.partialorder %v1193, 0.0
      %vm1369 = vcmp.ge.f32.partialorder %v1006, 0.0
      %vm1370 = vcmp.ge.f32.partialorder %v1195, 0.0
      %vm1371 = vcmp.ge.f32.partialorder %v1009, 0.0
      %vm1372 = vcmp.ge.f32.partialorder %v1198, 0.0
      %vm1373 = vcmp.ge.f32.partialorder %v1011, 0.0
      %vm1374 = vcmp.ge.f32.partialorder %v1200, 0.0
      %vm1375 = vcmp.ge.f32.partialorder %v1014, 0.0
      %vm1376 = vcmp.ge.f32.partialorder %v1203, 0.0
      %vm1377 = vcmp.ge.f32.partialorder %v1016, 0.0
      %vm1378 = vcmp.ge.f32.partialorder %v1205, 0.0
      %vm1379 = vcmp.ge.f32.partialorder %v1019, 0.0
      %vm1380 = vcmp.ge.f32.partialorder %v1208, 0.0
      %vm1381 = vcmp.ge.f32.partialorder %v1021, 0.0
      %vm1382 = vcmp.ge.f32.partialorder %v1210, 0.0
      %vm1383 = vcmp.ge.f32.partialorder %v1024, 0.0
      %vm1384 = vcmp.ge.f32.partialorder %v1213, 0.0
      %vm1385 = vcmp.ge.f32.partialorder %v1026, 0.0
      %vm1386 = vcmp.ge.f32.partialorder %v1215, 0.0
      %vm1387 = vcmp.ge.f32.partialorder %v1029, 0.0
      %vm1388 = vcmp.ge.f32.partialorder %v1218, 0.0
      %vm1389 = vcmp.ge.f32.partialorder %v1031, 0.0
      %vm1390 = vcmp.ge.f32.partialorder %v1220, 0.0
      %vm1391 = vcmp.ge.f32.partialorder %v1034, 0.0
      %vm1392 = vcmp.ge.f32.partialorder %v1223, 0.0
      %vm1393 = vcmp.ge.f32.partialorder %v1036, 0.0
      %vm1394 = vcmp.ge.f32.partialorder %v1225, 0.0
      %vm1395 = vcmp.ge.f32.partialorder %v1039, 0.0
      %vm1396 = vcmp.ge.f32.partialorder %v1228, 0.0
      %vm1397 = vcmp.ge.f32.partialorder %v1041, 0.0
      %vm1398 = vcmp.ge.f32.partialorder %v1230, 0.0
      %vm1399 = vcmp.ge.f32.partialorder %v1044, 0.0
      %vm1400 = vcmp.ge.f32.partialorder %v1233, 0.0
      %vm1401 = vcmp.ge.f32.partialorder %v1046, 0.0
      %vm1402 = vcmp.ge.f32.partialorder %v1235, 0.0
      %vm1403 = vcmp.ge.f32.partialorder %v1049, 0.0
      %vm1404 = vcmp.ge.f32.partialorder %v1238, 0.0
      %vm1405 = vcmp.ge.f32.partialorder %v1051, 0.0
      %vm1406 = vcmp.ge.f32.partialorder %v1240, 0.0
      %vm1407 = vcmp.ge.f32.partialorder %v1054, 0.0
      %vm1408 = vcmp.ge.f32.partialorder %v1243, 0.0
      %vm1409 = vcmp.ge.f32.partialorder %v1056, 0.0
      %vm1410 = vcmp.ge.f32.partialorder %v1245, 0.0
      %vm1411 = vcmp.ge.f32.partialorder %v1059, 0.0
      %vm1412 = vcmp.ge.f32.partialorder %v1248, 0.0
      %vm1413 = vcmp.ge.f32.partialorder %v1061, 0.0
      %vm1414 = vcmp.ge.f32.partialorder %v1250, 0.0
      %vm1415 = vcmp.ge.f32.partialorder %v1064, 0.0
      %vm1416 = vcmp.ge.f32.partialorder %v1253, 0.0
      %vm1417 = vcmp.ge.f32.partialorder %v1066, 0.0
      %vm1418 = vcmp.ge.f32.partialorder %v1255, 0.0
      %vm1419 = vcmp.ge.f32.partialorder %v1069, 0.0
      %vm1420 = vcmp.ge.f32.partialorder %v1258, 0.0
      %vm1421 = vcmp.ge.f32.partialorder %v1071, 0.0
      %vm1422 = vcmp.ge.f32.partialorder %v1260, 0.0
      %vm1423 = vcmp.ge.f32.partialorder %v1074, 0.0
      %vm1424 = vcmp.ge.f32.partialorder %v1263, 0.0
      %vm1425 = vcmp.ge.f32.partialorder %v1076, 0.0
      %vm1426 = vcmp.ge.f32.partialorder %v1265, 0.0
      %vm1427 = vcmp.ge.f32.partialorder %v1079, 0.0
      %vm1428 = vcmp.ge.f32.partialorder %v1268, 0.0
      %vm1429 = vcmp.ge.f32.partialorder %v1081, 0.0
      %vm1430 = vcmp.ge.f32.partialorder %v1270, 0.0
      %vm1431 = vcmp.ge.f32.partialorder %v1084, 0.0
      %vm1432 = vcmp.ge.f32.partialorder %v1273, 0.0
      %vm1433 = vcmp.ge.f32.partialorder %v1086, 0.0
      %vm1434 = vcmp.ge.f32.partialorder %v1275, 0.0
      %vm1435 = vcmp.ge.f32.partialorder %v1089, 0.0
      %vm1436 = vcmp.ge.f32.partialorder %v1278, 0.0
      %vm1437 = vcmp.ge.f32.partialorder %v1091, 0.0
      %vm1438 = vcmp.ge.f32.partialorder %v1280, 0.0
      %vm1439 = vcmp.ge.f32.partialorder %v1094, 0.0
      %vm1440 = vcmp.ge.f32.partialorder %v1283, 0.0
      %vm1441 = vcmp.ge.f32.partialorder %v1096, 0.0
      %vm1442 = vcmp.ge.f32.partialorder %v1285, 0.0
      %vm1443 = vcmp.ge.f32.partialorder %v1099, 0.0
      %vm1444 = vcmp.ge.f32.partialorder %v1288, 0.0
      %vm1445 = vcmp.ge.f32.partialorder %v1101, 0.0
      %vm1446 = vcmp.ge.f32.partialorder %v1290, 0.0
      %vm1447 = vcmp.ge.f32.partialorder %v1104, 0.0
      %vm1448 = vcmp.ge.f32.partialorder %v1293, 0.0
      %vm1449 = vcmp.ge.f32.partialorder %v1106, 0.0
      %vm1450 = vcmp.ge.f32.partialorder %v1295, 0.0
      %vm1451 = vcmp.ge.f32.partialorder %v1109, 0.0
      %vm1452 = vcmp.ge.f32.partialorder %v1298, 0.0
      %vm1453 = vcmp.ge.f32.partialorder %v1111, 0.0
      %vm1454 = vcmp.ge.f32.partialorder %v1300, 0.0
      %vm1455 = vcmp.ge.f32.partialorder %v1114, 0.0
      %vm1456 = vcmp.ge.f32.partialorder %v1303, 0.0
      %vm1457 = vcmp.ge.f32.partialorder %v1116, 0.0
      %vm1458 = vcmp.ge.f32.partialorder %v1305, 0.0
      %vm1459 = vcmp.ge.f32.partialorder %v1119, 0.0
      %vm1460 = vcmp.ge.f32.partialorder %v1308, 0.0
      %vm1461 = vcmp.ge.f32.partialorder %v1121, 0.0
      %vm1462 = vcmp.ge.f32.partialorder %v1310, 0.0
      %vm1463 = vcmp.ge.f32.partialorder %v1124, 0.0
      %vm1464 = vcmp.ge.f32.partialorder %v1313, 0.0
      %vm1465 = vcmp.ge.f32.partialorder %v1126, 0.0
      %vm1466 = vcmp.ge.f32.partialorder %v1315, 0.0
      %vm1467 = vcmp.ge.f32.partialorder %v1129, 0.0
      %vm1468 = vcmp.ge.f32.partialorder %v1318, 0.0
      %vm1469 = vcmp.ge.f32.partialorder %v1131, 0.0
      %vm1470 = vcmp.ge.f32.partialorder %v1320, 0.0
      %vm1471 = vcmp.ge.f32.partialorder %v1134, 0.0
      %vm1472 = vcmp.ge.f32.partialorder %v1323, 0.0
      %vm1473 = vcmp.ge.f32.partialorder %v1136, 0.0
      %vm1474 = vcmp.ge.f32.partialorder %v1325, 0.0
      %vm1475 = vcmp.ge.f32.partialorder %v1139, 0.0
      %vm1476 = vcmp.ge.f32.partialorder %v1328, 0.0
      %vm1477 = vcmp.ge.f32.partialorder %v1141, 0.0
      %vm1478 = vcmp.ge.f32.partialorder %v1330, 0.0
      %vm1479 = vcmp.ge.f32.partialorder %v1144, 0.0
      %vm1480 = vcmp.ge.f32.partialorder %v1333, 0.0
      %vm1481 = vcmp.ge.f32.partialorder %v1146, 0.0
      %vm1482 = vcmp.ge.f32.partialorder %v1335, 0.0
      %vm1483 = vcmp.ge.f32.partialorder %v1149, 0.0
      %vm1484 = vcmp.ge.f32.partialorder %v1338, 0.0
      %vm1485 = vcmp.ge.f32.partialorder %v1151, 0.0
      %vm1486 = vcmp.ge.f32.partialorder %v1340, 0.0
      %vm1487 = vcmp.ge.f32.partialorder %v1154, 0.0
      %vm1488 = vcmp.ge.f32.partialorder %v1343, 0.0
      %vm1489 = vcmp.ge.f32.partialorder %v1156, 0.0
      %vm1490 = vcmp.ge.f32.partialorder %v1345, 0.0
      %v1491 = vmul.f32 %v979, 0.1
      %v1492 = vmul.f32 %v1168, 0.1
      %v1493 = vmul.f32 %v981, 0.1
      %v1494 = vmul.f32 %v1170, 0.1
      %v1495 = vmul.f32 %v984, 0.1
      %v1496 = vmul.f32 %v1173, 0.1
      %v1497 = vmul.f32 %v986, 0.1
      %v1498 = vmul.f32 %v1175, 0.1
      %v1499 = vmul.f32 %v989, 0.1
      %v1500 = vmul.f32 %v1178, 0.1
      %v1501 = vmul.f32 %v991, 0.1
      %v1502 = vmul.f32 %v1180, 0.1
      %v1503 = vmul.f32 %v994, 0.1
      %v1504 = vmul.f32 %v1183, 0.1
      %v1505 = vmul.f32 %v996, 0.1
      %v1506 = vmul.f32 %v1185, 0.1
      %v1507 = vmul.f32 %v999, 0.1
      %v1508 = vmul.f32 %v1188, 0.1
      %v1509 = vmul.f32 %v1001, 0.1
      %v1510 = vmul.f32 %v1190, 0.1
      %v1511 = vmul.f32 %v1004, 0.1
      %v1512 = vmul.f32 %v1193, 0.1
      %v1513 = vmul.f32 %v1006, 0.1
      %v1514 = vmul.f32 %v1195, 0.1
      %v1515 = vmul.f32 %v1009, 0.1
      %v1516 = vmul.f32 %v1198, 0.1
      %v1517 = vmul.f32 %v1011, 0.1
      %v1518 = vmul.f32 %v1200, 0.1
      %v1519 = vmul.f32 %v1014, 0.1
      %v1520 = vmul.f32 %v1203, 0.1
      %v1521 = vmul.f32 %v1016, 0.1
      %v1522 = vmul.f32 %v1205, 0.1
      %v1523 = vmul.f32 %v1019, 0.1
      %v1524 = vmul.f32 %v1208, 0.1
      %v1525 = vmul.f32 %v1021, 0.1
      %v1526 = vmul.f32 %v1210, 0.1
      %v1527 = vmul.f32 %v1024, 0.1
      %v1528 = vmul.f32 %v1213, 0.1
      %v1529 = vmul.f32 %v1026, 0.1
      %v1530 = vmul.f32 %v1215, 0.1
      %v1531 = vmul.f32 %v1029, 0.1
      %v1532 = vmul.f32 %v1218, 0.1
      %v1533 = vmul.f32 %v1031, 0.1
      %v1534 = vmul.f32 %v1220, 0.1
      %v1535 = vmul.f32 %v1034, 0.1
      %v1536 = vmul.f32 %v1223, 0.1
      %v1537 = vmul.f32 %v1036, 0.1
      %v1538 = vmul.f32 %v1225, 0.1
      %v1539 = vmul.f32 %v1039, 0.1
      %v1540 = vmul.f32 %v1228, 0.1
      %v1541 = vmul.f32 %v1041, 0.1
      %v1542 = vmul.f32 %v1230, 0.1
      %v1543 = vmul.f32 %v1044, 0.1
      %v1544 = vmul.f32 %v1233, 0.1
      %v1545 = vmul.f32 %v1046, 0.1
      %v1546 = vmul.f32 %v1235, 0.1
      %v1547 = vmul.f32 %v1049, 0.1
      %v1548 = vmul.f32 %v1238, 0.1
      %v1549 = vmul.f32 %v1051, 0.1
      %v1550 = vmul.f32 %v1240, 0.1
      %v1551 = vmul.f32 %v1054, 0.1
      %v1552 = vmul.f32 %v1243, 0.1
      %v1553 = vmul.f32 %v1056, 0.1
      %v1554 = vmul.f32 %v1245, 0.1
      %v1555 = vmul.f32 %v1059, 0.1
      %v1556 = vmul.f32 %v1248, 0.1
      %v1557 = vmul.f32 %v1061, 0.1
      %v1558 = vmul.f32 %v1250, 0.1
      %v1559 = vmul.f32 %v1064, 0.1
      %v1560 = vmul.f32 %v1253, 0.1
      %v1561 = vmul.f32 %v1066, 0.1
      %v1562 = vmul.f32 %v1255, 0.1
      %v1563 = vmul.f32 %v1069, 0.1
      %v1564 = vmul.f32 %v1258, 0.1
      %v1565 = vmul.f32 %v1071, 0.1
      %v1566 = vmul.f32 %v1260, 0.1
      %v1567 = vmul.f32 %v1074, 0.1
      %v1568 = vmul.f32 %v1263, 0.1
      %v1569 = vmul.f32 %v1076, 0.1
      %v1570 = vmul.f32 %v1265, 0.1
      %v1571 = vmul.f32 %v1079, 0.1
      %v1572 = vmul.f32 %v1268, 0.1
      %v1573 = vmul.f32 %v1081, 0.1
      %v1574 = vmul.f32 %v1270, 0.1
      %v1575 = vmul.f32 %v1084, 0.1
      %v1576 = vmul.f32 %v1273, 0.1
      %v1577 = vmul.f32 %v1086, 0.1
      %v1578 = vmul.f32 %v1275, 0.1
      %v1579 = vmul.f32 %v1089, 0.1
      %v1580 = vmul.f32 %v1278, 0.1
      %v1581 = vmul.f32 %v1091, 0.1
      %v1582 = vmul.f32 %v1280, 0.1
      %v1583 = vmul.f32 %v1094, 0.1
      %v1584 = vmul.f32 %v1283, 0.1
      %v1585 = vmul.f32 %v1096, 0.1
      %v1586 = vmul.f32 %v1285, 0.1
      %v1587 = vmul.f32 %v1099, 0.1
      %v1588 = vmul.f32 %v1288, 0.1
      %v1589 = vmul.f32 %v1101, 0.1
      %v1590 = vmul.f32 %v1290, 0.1
      %v1591 = vmul.f32 %v1104, 0.1
      %v1592 = vmul.f32 %v1293, 0.1
      %v1593 = vmul.f32 %v1106, 0.1
      %v1594 = vmul.f32 %v1295, 0.1
      %v1595 = vmul.f32 %v1109, 0.1
      %v1596 = vmul.f32 %v1298, 0.1
      %v1597 = vmul.f32 %v1111, 0.1
      %v1598 = vmul.f32 %v1300, 0.1
      %v1599 = vmul.f32 %v1114, 0.1
      %v1600 = vmul.f32 %v1303, 0.1
      %v1601 = vmul.f32 %v1116, 0.1
      %v1602 = vmul.f32 %v1305, 0.1
      %v1603 = vmul.f32 %v1119, 0.1
      %v1604 = vmul.f32 %v1308, 0.1
      %v1605 = vmul.f32 %v1121, 0.1
      %v1606 = vmul.f32 %v1310, 0.1
      %v1607 = vmul.f32 %v1124, 0.1
      %v1608 = vmul.f32 %v1313, 0.1
      %v1609 = vmul.f32 %v1126, 0.1
      %v1610 = vmul.f32 %v1315, 0.1
      %v1611 = vmul.f32 %v1129, 0.1
      %v1612 = vmul.f32 %v1318, 0.1
      %v1613 = vmul.f32 %v1131, 0.1
      %v1614 = vmul.f32 %v1320, 0.1
      %v1615 = vmul.f32 %v1134, 0.1
      %v1616 = vmul.f32 %v1323, 0.1
      %v1617 = vmul.f32 %v1136, 0.1
      %v1618 = vmul.f32 %v1325, 0.1
      %v1619 = vmul.f32 %v1139, 0.1
      %v1620 = vmul.f32 %v1328, 0.1
      %v1621 = vmul.f32 %v1141, 0.1
      %v1622 = vmul.f32 %v1330, 0.1
      %v1623 = vmul.f32 %v1144, 0.1
      %v1624 = vmul.f32 %v1333, 0.1
      %v1625 = vmul.f32 %v1146, 0.1
      %v1626 = vmul.f32 %v1335, 0.1
      %v1627 = vmul.f32 %v1149, 0.1
      %v1628 = vmul.f32 %v1338, 0.1
      %v1629 = vmul.f32 %v1151, 0.1
      %v1630 = vmul.f32 %v1340, 0.1
      %v1631 = vmul.f32 %v1154, 0.1
      %v1632 = vmul.f32 %v1343, 0.1
      %v1633 = vmul.f32 %v1156, 0.1
      %v1634 = vmul.f32 %v1345, 0.1
      %v1635 = vsel %vm1347, %v979, %v1491
      %v1636 = vsel %vm1348, %v1168, %v1492
      %v1637 = vsel %vm1349, %v981, %v1493
      %v1638 = vsel %vm1350, %v1170, %v1494
      %v1639 = vsel %vm1351, %v984, %v1495
      %v1640 = vsel %vm1352, %v1173, %v1496
      %v1641 = vsel %vm1353, %v986, %v1497
      %v1642 = vsel %vm1354, %v1175, %v1498
      %v1643 = vsel %vm1355, %v989, %v1499
      %v1644 = vsel %vm1356, %v1178, %v1500
      %v1645 = vsel %vm1357, %v991, %v1501
      %v1646 = vsel %vm1358, %v1180, %v1502
      %v1647 = vsel %vm1359, %v994, %v1503
      %v1648 = vsel %vm1360, %v1183, %v1504
      %v1649 = vsel %vm1361, %v996, %v1505
      %v1650 = vsel %vm1362, %v1185, %v1506
      %v1651 = vsel %vm1363, %v999, %v1507
      %v1652 = vsel %vm1364, %v1188, %v1508
      %v1653 = vsel %vm1365, %v1001, %v1509
      %v1654 = vsel %vm1366, %v1190, %v1510
      %v1655 = vsel %vm1367, %v1004, %v1511
      %v1656 = vsel %vm1368, %v1193, %v1512
      %v1657 = vsel %vm1369, %v1006, %v1513
      %v1658 = vsel %vm1370, %v1195, %v1514
      %v1659 = vsel %vm1371, %v1009, %v1515
      %v1660 = vsel %vm1372, %v1198, %v1516
      %v1661 = vsel %vm1373, %v1011, %v1517
      %v1662 = vsel %vm1374, %v1200, %v1518
      %v1663 = vsel %vm1375, %v1014, %v1519
      %v1664 = vsel %vm1376, %v1203, %v1520
      %v1665 = vsel %vm1377, %v1016, %v1521
      %v1666 = vsel %vm1378, %v1205, %v1522
      %v1667 = vsel %vm1379, %v1019, %v1523
      %v1668 = vsel %vm1380, %v1208, %v1524
      %v1669 = vsel %vm1381, %v1021, %v1525
      %v1670 = vsel %vm1382, %v1210, %v1526
      %v1671 = vsel %vm1383, %v1024, %v1527
      %v1672 = vsel %vm1384, %v1213, %v1528
      %v1673 = vsel %vm1385, %v1026, %v1529
      %v1674 = vsel %vm1386, %v1215, %v1530
      %v1675 = vsel %vm1387, %v1029, %v1531
      %v1676 = vsel %vm1388, %v1218, %v1532
      %v1677 = vsel %vm1389, %v1031, %v1533
      %v1678 = vsel %vm1390, %v1220, %v1534
      %v1679 = vsel %vm1391, %v1034, %v1535
      %v1680 = vsel %vm1392, %v1223, %v1536
      %v1681 = vsel %vm1393, %v1036, %v1537
      %v1682 = vsel %vm1394, %v1225, %v1538
      %v1683 = vsel %vm1395, %v1039, %v1539
      %v1684 = vsel %vm1396, %v1228, %v1540
      %v1685 = vsel %vm1397, %v1041, %v1541
      %v1686 = vsel %vm1398, %v1230, %v1542
      %v1687 = vsel %vm1399, %v1044, %v1543
      %v1688 = vsel %vm1400, %v1233, %v1544
      %v1689 = vsel %vm1401, %v1046, %v1545
      %v1690 = vsel %vm1402, %v1235, %v1546
      %v1691 = vsel %vm1403, %v1049, %v1547
      %v1692 = vsel %vm1404, %v1238, %v1548
      %v1693 = vsel %vm1405, %v1051, %v1549
      %v1694 = vsel %vm1406, %v1240, %v1550
      %v1695 = vsel %vm1407, %v1054, %v1551
      %v1696 = vsel %vm1408, %v1243, %v1552
      %v1697 = vsel %vm1409, %v1056, %v1553
      %v1698 = vsel %vm1410, %v1245, %v1554
      %v1699 = vsel %vm1411, %v1059, %v1555
      %v1700 = vsel %vm1412, %v1248, %v1556
      %v1701 = vsel %vm1413, %v1061, %v1557
      %v1702 = vsel %vm1414, %v1250, %v1558
      %v1703 = vsel %vm1415, %v1064, %v1559
      %v1704 = vsel %vm1416, %v1253, %v1560
      %v1705 = vsel %vm1417, %v1066, %v1561
      %v1706 = vsel %vm1418, %v1255, %v1562
      %v1707 = vsel %vm1419, %v1069, %v1563
      %v1708 = vsel %vm1420, %v1258, %v1564
      %v1709 = vsel %vm1421, %v1071, %v1565
      %v1710 = vsel %vm1422, %v1260, %v1566
      %v1711 = vsel %vm1423, %v1074, %v1567
      %v1712 = vsel %vm1424, %v1263, %v1568
      %v1713 = vsel %vm1425, %v1076, %v1569
      %v1714 = vsel %vm1426, %v1265, %v1570
      %v1715 = vsel %vm1427, %v1079, %v1571
      %v1716 = vsel %vm1428, %v1268, %v1572
      %v1717 = vsel %vm1429, %v1081, %v1573
      %v1718 = vsel %vm1430, %v1270, %v1574
      %v1719 = vsel %vm1431, %v1084, %v1575
      %v1720 = vsel %vm1432, %v1273, %v1576
      %v1721 = vsel %vm1433, %v1086, %v1577
      %v1722 = vsel %vm1434, %v1275, %v1578
      %v1723 = vsel %vm1435, %v1089, %v1579
      %v1724 = vsel %vm1436, %v1278, %v1580
      %v1725 = vsel %vm1437, %v1091, %v1581
      %v1726 = vsel %vm1438, %v1280, %v1582
      %v1727 = vsel %vm1439, %v1094, %v1583
      %v1728 = vsel %vm1440, %v1283, %v1584
      %v1729 = vsel %vm1441, %v1096, %v1585
      %v1730 = vsel %vm1442, %v1285, %v1586
      %v1731 = vsel %vm1443, %v1099, %v1587
      %v1732 = vsel %vm1444, %v1288, %v1588
      %v1733 = vsel %vm1445, %v1101, %v1589
      %v1734 = vsel %vm1446, %v1290, %v1590
      %v1735 = vsel %vm1447, %v1104, %v1591
      %v1736 = vsel %vm1448, %v1293, %v1592
      %v1737 = vsel %vm1449, %v1106, %v1593
      %v1738 = vsel %vm1450, %v1295, %v1594
      %v1739 = vsel %vm1451, %v1109, %v1595
      %v1740 = vsel %vm1452, %v1298, %v1596
      %v1741 = vsel %vm1453, %v1111, %v1597
      %v1742 = vsel %vm1454, %v1300, %v1598
      %v1743 = vsel %vm1455, %v1114, %v1599
      %v1744 = vsel %vm1456, %v1303, %v1600
      %v1745 = vsel %vm1457, %v1116, %v1601
      %v1746 = vsel %vm1458, %v1305, %v1602
      %v1747 = vsel %vm1459, %v1119, %v1603
      %v1748 = vsel %vm1460, %v1308, %v1604
      %v1749 = vsel %vm1461, %v1121, %v1605
      %v1750 = vsel %vm1462, %v1310, %v1606
      %v1751 = vsel %vm1463, %v1124, %v1607
      %v1752 = vsel %vm1464, %v1313, %v1608
      %v1753 = vsel %vm1465, %v1126, %v1609
      %v1754 = vsel %vm1466, %v1315, %v1610
      %v1755 = vsel %vm1467, %v1129, %v1611
      %v1756 = vsel %vm1468, %v1318, %v1612
      %v1757 = vsel %vm1469, %v1131, %v1613
      %v1758 = vsel %vm1470, %v1320, %v1614
      %v1759 = vsel %vm1471, %v1134, %v1615
      %v1760 = vsel %vm1472, %v1323, %v1616
      %v1761 = vsel %vm1473, %v1136, %v1617
      %v1762 = vsel %vm1474, %v1325, %v1618
      %v1763 = vsel %vm1475, %v1139, %v1619
      %v1764 = vsel %vm1476, %v1328, %v1620
      %v1765 = vsel %vm1477, %v1141, %v1621
      %v1766 = vsel %vm1478, %v1330, %v1622
      %v1767 = vsel %vm1479, %v1144, %v1623
      %v1768 = vsel %vm1480, %v1333, %v1624
      %v1769 = vsel %vm1481, %v1146, %v1625
      %v1770 = vsel %vm1482, %v1335, %v1626
      %v1771 = vsel %vm1483, %v1149, %v1627
      %v1772 = vsel %vm1484, %v1338, %v1628
      %v1773 = vsel %vm1485, %v1151, %v1629
      %v1774 = vsel %vm1486, %v1340, %v1630
      %v1775 = vsel %vm1487, %v1154, %v1631
      %v1776 = vsel %vm1488, %v1343, %v1632
      %v1777 = vsel %vm1489, %v1156, %v1633
      %v1778 = vsel %vm1490, %v1345, %v1634
      %v1779 = vpack.c.bf16 %v1636, %v1635
      %v1780 = vpack.c.bf16 %v1638, %v1637
      %v1781 = vpack.c.bf16 %v1640, %v1639
      %v1782 = vpack.c.bf16 %v1642, %v1641
      %v1783 = vpack.c.bf16 %v1644, %v1643
      %v1784 = vpack.c.bf16 %v1646, %v1645
      %v1785 = vpack.c.bf16 %v1648, %v1647
      %v1786 = vpack.c.bf16 %v1650, %v1649
      %v1787 = vpack.c.bf16 %v1652, %v1651
      %v1788 = vpack.c.bf16 %v1654, %v1653
      %v1789 = vpack.c.bf16 %v1656, %v1655
      %v1790 = vpack.c.bf16 %v1658, %v1657
      %v1791 = vpack.c.bf16 %v1660, %v1659
      %v1792 = vpack.c.bf16 %v1662, %v1661
      %v1793 = vpack.c.bf16 %v1664, %v1663
      %v1794 = vpack.c.bf16 %v1666, %v1665
      %v1795 = vpack.c.bf16 %v1668, %v1667
      %v1796 = vpack.c.bf16 %v1670, %v1669
      %v1797 = vpack.c.bf16 %v1672, %v1671
      %v1798 = vpack.c.bf16 %v1674, %v1673
      %v1799 = vpack.c.bf16 %v1676, %v1675
      %v1800 = vpack.c.bf16 %v1678, %v1677
      %v1801 = vpack.c.bf16 %v1680, %v1679
      %v1802 = vpack.c.bf16 %v1682, %v1681
      %v1803 = vpack.c.bf16 %v1684, %v1683
      %v1804 = vpack.c.bf16 %v1686, %v1685
      %v1805 = vpack.c.bf16 %v1688, %v1687
      %v1806 = vpack.c.bf16 %v1690, %v1689
      %v1807 = vpack.c.bf16 %v1692, %v1691
      %v1808 = vpack.c.bf16 %v1694, %v1693
      %v1809 = vpack.c.bf16 %v1696, %v1695
      %v1810 = vpack.c.bf16 %v1698, %v1697
      %v1811 = vpack.c.bf16 %v1700, %v1699
      %v1812 = vpack.c.bf16 %v1702, %v1701
      %v1813 = vpack.c.bf16 %v1704, %v1703
      %v1814 = vpack.c.bf16 %v1706, %v1705
      %v1815 = vpack.c.bf16 %v1708, %v1707
      %v1816 = vpack.c.bf16 %v1710, %v1709
      %v1817 = vpack.c.bf16 %v1712, %v1711
      %v1818 = vpack.c.bf16 %v1714, %v1713
      %v1819 = vpack.c.bf16 %v1716, %v1715
      %v1820 = vpack.c.bf16 %v1718, %v1717
      %v1821 = vpack.c.bf16 %v1720, %v1719
      %v1822 = vpack.c.bf16 %v1722, %v1721
      %v1823 = vpack.c.bf16 %v1724, %v1723
      %v1824 = vpack.c.bf16 %v1726, %v1725
      %v1825 = vpack.c.bf16 %v1728, %v1727
      %v1826 = vpack.c.bf16 %v1730, %v1729
      %v1827 = vpack.c.bf16 %v1732, %v1731
      %v1828 = vpack.c.bf16 %v1734, %v1733
      %v1829 = vpack.c.bf16 %v1736, %v1735
      %v1830 = vpack.c.bf16 %v1738, %v1737
      %v1831 = vpack.c.bf16 %v1740, %v1739
      %v1832 = vpack.c.bf16 %v1742, %v1741
      %v1833 = vpack.c.bf16 %v1744, %v1743
      %v1834 = vpack.c.bf16 %v1746, %v1745
      %v1835 = vpack.c.bf16 %v1748, %v1747
      %v1836 = vpack.c.bf16 %v1750, %v1749
      %v1837 = vpack.c.bf16 %v1752, %v1751
      %v1838 = vpack.c.bf16 %v1754, %v1753
      %v1839 = vpack.c.bf16 %v1756, %v1755
      %v1840 = vpack.c.bf16 %v1758, %v1757
      %v1841 = vpack.c.bf16 %v1760, %v1759
      %v1842 = vpack.c.bf16 %v1762, %v1761
      %v1843 = vpack.c.bf16 %v1764, %v1763
      %v1844 = vpack.c.bf16 %v1766, %v1765
      %v1845 = vpack.c.bf16 %v1768, %v1767
      %v1846 = vpack.c.bf16 %v1770, %v1769
      %v1847 = vpack.c.bf16 %v1772, %v1771
      %v1848 = vpack.c.bf16 %v1774, %v1773
      %v1849 = vpack.c.bf16 %v1776, %v1775
      %v1850 = vpack.c.bf16 %v1778, %v1777
      %v1851 = vld [vmem:[%s5] sm:$0xf]
      %v1852 = vld [vmem:[%s5 + $0x4] sm:$0xf]
      %v1853 = vld [vmem:[%s5 + $0x8] sm:$0xf]
      %v1854 = vld [vmem:[%s5 + $0xc] sm:$0xf]
      %v1855 = vld [vmem:[%s5 + $0x10] sm:$0xf]
      %v1856 = vld [vmem:[%s5 + $0x14] sm:$0xf]
      %v1857 = vld [vmem:[%s5 + $0x18] sm:$0xf]
      %v1858 = vld [vmem:[%s5 + $0x1c] sm:$0xf]
      %v1859 = vld [vmem:[%s5 + $0x20] sm:$0xf]
      %v1860 = vld [vmem:[%s5 + $0x24] sm:$0xf]
      %v1861 = vld [vmem:[%s5 + $0x28] sm:$0xf]
      %v1862 = vld [vmem:[%s5 + $0x2c] sm:$0xf]
      %v1863 = vld [vmem:[%s5 + $0x30] sm:$0xf]
      %v1864 = vld [vmem:[%s5 + $0x34] sm:$0xf]
      %v1865 = vld [vmem:[%s5 + $0x38] sm:$0xf]
      %v1866 = vld [vmem:[%s5 + $0x3c] sm:$0xf]
      %v1867 = vld [vmem:[%s6] sm:$0x1]
      %v1869 = vperm.slane %v1867, 0
      %v1943 = vunpack.c.l.b16 %v1779
      %v1944 = vunpack.c.l.b16 %v1780
      %v1945 = vunpack.c.l.b16 %v1781
      %v1946 = vunpack.c.l.b16 %v1782
      %v1947 = vunpack.c.l.b16 %v1783
      %v1948 = vunpack.c.l.b16 %v1784
      %v1949 = vunpack.c.l.b16 %v1785
      %v1950 = vunpack.c.l.b16 %v1786
      %v1951 = vunpack.c.l.b16 %v1787
      %v1952 = vunpack.c.l.b16 %v1788
      %v1953 = vunpack.c.l.b16 %v1789
      %v1954 = vunpack.c.l.b16 %v1790
      %v1955 = vunpack.c.l.b16 %v1791
      %v1956 = vunpack.c.l.b16 %v1792
      %v1957 = vunpack.c.l.b16 %v1793
      %v1958 = vunpack.c.l.b16 %v1794
      %v1959 = vunpack.c.l.b16 %v1795
      %v1960 = vunpack.c.l.b16 %v1796
      %v1961 = vunpack.c.l.b16 %v1797
      %v1962 = vunpack.c.l.b16 %v1798
      %v1963 = vunpack.c.l.b16 %v1799
      %v1964 = vunpack.c.l.b16 %v1800
      %v1965 = vunpack.c.l.b16 %v1801
      %v1966 = vunpack.c.l.b16 %v1802
      %v1967 = vunpack.c.l.b16 %v1803
      %v1968 = vunpack.c.l.b16 %v1804
      %v1969 = vunpack.c.l.b16 %v1805
      %v1970 = vunpack.c.l.b16 %v1806
      %v1971 = vunpack.c.l.b16 %v1807
      %v1972 = vunpack.c.l.b16 %v1808
      %v1973 = vunpack.c.l.b16 %v1809
      %v1974 = vunpack.c.l.b16 %v1810
      %v1975 = vunpack.c.l.b16 %v1811
      %v1976 = vunpack.c.l.b16 %v1812
      %v1977 = vunpack.c.l.b16 %v1813
      %v1978 = vunpack.c.l.b16 %v1814
      %v1979 = vunpack.c.l.b16 %v1815
      %v1980 = vunpack.c.l.b16 %v1816
      %v1981 = vunpack.c.l.b16 %v1817
      %v1982 = vunpack.c.l.b16 %v1818
      %v1983 = vunpack.c.l.b16 %v1819
      %v1984 = vunpack.c.l.b16 %v1820
      %v1985 = vunpack.c.l.b16 %v1821
      %v1986 = vunpack.c.l.b16 %v1822
      %v1987 = vunpack.c.l.b16 %v1823
      %v1988 = vunpack.c.l.b16 %v1824
      %v1989 = vunpack.c.l.b16 %v1825
      %v1990 = vunpack.c.l.b16 %v1826
      %v1991 = vunpack.c.l.b16 %v1827
      %v1992 = vunpack.c.l.b16 %v1828
      %v1993 = vunpack.c.l.b16 %v1829
      %v1994 = vunpack.c.l.b16 %v1830
      %v1995 = vunpack.c.l.b16 %v1831
      %v1996 = vunpack.c.l.b16 %v1832
      %v1997 = vunpack.c.l.b16 %v1833
      %v1998 = vunpack.c.l.b16 %v1834
      %v1999 = vunpack.c.l.b16 %v1835
      %v2000 = vunpack.c.l.b16 %v1836
      %v2001 = vunpack.c.l.b16 %v1837
      %v2002 = vunpack.c.l.b16 %v1838
      %v2003 = vunpack.c.l.b16 %v1839
      %v2004 = vunpack.c.l.b16 %v1840
      %v2005 = vunpack.c.l.b16 %v1841
      %v2006 = vunpack.c.l.b16 %v1842
      %v2007 = vunpack.c.l.b16 %v1843
      %v2008 = vunpack.c.l.b16 %v1844
      %v2009 = vunpack.c.l.b16 %v1845
      %v2010 = vunpack.c.l.b16 %v1846
      %v2011 = vunpack.c.l.b16 %v1847
      %v2012 = vunpack.c.l.b16 %v1848
      %v2013 = vunpack.c.l.b16 %v1849
      %v2014 = vunpack.c.l.b16 %v1850
      %v2015 = vpack.c.b16 %v1944, %v1943
      %v2016 = vpack.c.b16 %v1946, %v1945
      %v2017 = vpack.c.b16 %v1948, %v1947
      %v2018 = vpack.c.b16 %v1950, %v1949
      %v2019 = vpack.c.b16 %v1952, %v1951
      %v2020 = vpack.c.b16 %v1954, %v1953
      %v2021 = vpack.c.b16 %v1956, %v1955
      %v2022 = vpack.c.b16 %v1958, %v1957
      %v2023 = vpack.c.b16 %v1960, %v1959
      %v2024 = vpack.c.b16 %v1962, %v1961
      %v2025 = vpack.c.b16 %v1964, %v1963
      %v2026 = vpack.c.b16 %v1966, %v1965
      %v2027 = vpack.c.b16 %v1968, %v1967
      %v2028 = vpack.c.b16 %v1970, %v1969
      %v2029 = vpack.c.b16 %v1972, %v1971
      %v2030 = vpack.c.b16 %v1974, %v1973
      %v2031 = vpack.c.b16 %v1976, %v1975
      %v2032 = vpack.c.b16 %v1978, %v1977
      %v2033 = vpack.c.b16 %v1980, %v1979
      %v2034 = vpack.c.b16 %v1982, %v1981
      %v2035 = vpack.c.b16 %v1984, %v1983
      %v2036 = vpack.c.b16 %v1986, %v1985
      %v2037 = vpack.c.b16 %v1988, %v1987
      %v2038 = vpack.c.b16 %v1990, %v1989
      %v2039 = vpack.c.b16 %v1992, %v1991
      %v2040 = vpack.c.b16 %v1994, %v1993
      %v2041 = vpack.c.b16 %v1996, %v1995
      %v2042 = vpack.c.b16 %v1998, %v1997
      %v2043 = vpack.c.b16 %v2000, %v1999
      %v2044 = vpack.c.b16 %v2002, %v2001
      %v2045 = vpack.c.b16 %v2004, %v2003
      %v2046 = vpack.c.b16 %v2006, %v2005
      %v2047 = vpack.c.b16 %v2008, %v2007
      %v2048 = vpack.c.b16 %v2010, %v2009
      %v2049 = vpack.c.b16 %v2012, %v2011
      %v2050 = vpack.c.b16 %v2014, %v2013
      %v2103 = vunpack.c.l.b16 %v1851
      %v2104 = vunpack.c.l.b16 %v1852
      %v2105 = vunpack.c.l.b16 %v1853
      %v2106 = vunpack.c.l.b16 %v1854
      %v2107 = vunpack.c.l.b16 %v1855
      %v2108 = vunpack.c.l.b16 %v1856
      %v2109 = vunpack.c.l.b16 %v1857
      %v2110 = vunpack.c.l.b16 %v1858
      %v2111 = vunpack.c.l.b16 %v1859
      %v2112 = vunpack.c.l.b16 %v1860
      %v2113 = vunpack.c.l.b16 %v1861
      %v2114 = vunpack.c.l.b16 %v1862
      %v2115 = vunpack.c.l.b16 %v1863
      %v2116 = vunpack.c.l.b16 %v1864
      %v2117 = vunpack.c.l.b16 %v1865
      %v2118 = vunpack.c.l.b16 %v1866
      %v2119 = vpack.c.b16 %v2104, %v2103
      %v2120 = vpack.c.b16 %v2106, %v2105
      %v2121 = vpack.c.b16 %v2108, %v2107
      %v2122 = vpack.c.b16 %v2110, %v2109
      %v2123 = vpack.c.b16 %v2112, %v2111
      %v2124 = vpack.c.b16 %v2114, %v2113
      %v2125 = vpack.c.b16 %v2116, %v2115
      %v2126 = vpack.c.b16 %v2118, %v2117
      %2135 = vmatpush.bf16.msra.mxu0 %v2126
      %2136 = vmatpush.bf16.msra.mxu0 %v2125
      %2137 = vmatpush.bf16.msra.mxu0 %v2124
      %2138 = vmatpush.bf16.msra.mxu0 %v2123
      %2139 = vmatpush.bf16.msra.mxu0 %v2122
      %2140 = vmatpush.bf16.msra.mxu0 %v2121
      %2141 = vmatpush.bf16.msra.mxu0 %v2120
      %2142 = vmatpush.bf16.msra.mxu0 %v2119
      %2143 = vmatmul.bf16.gmra.mxu0 %v2015
      %v2144 = vpop.f32.mrf.mxu0
      %v2145 = vpop.f32.mrf.mxu0
      %2146 = vmatmul.bf16.gmra.mxu0 %v2016
      %v2147 = vpop.f32.mrf.mxu0
      %v2148 = vadd.f32 %v1869, %v2147
      %v2149 = vpop.f32.mrf.mxu0
      %v2150 = vadd.f32 %v1869, %v2149
      %2151 = vmatmul.bf16.gmra.mxu0 %v2017
      %v2152 = vpop.f32.mrf.mxu0
      %v2153 = vadd.f32 %v1869, %v2152
      %v2154 = vpop.f32.mrf.mxu0
      %v2155 = vadd.f32 %v1869, %v2154
      %2156 = vmatmul.bf16.gmra.mxu0 %v2018
      %v2157 = vpop.f32.mrf.mxu0
      %v2158 = vadd.f32 %v1869, %v2157
      %v2159 = vpop.f32.mrf.mxu0
      %v2160 = vadd.f32 %v1869, %v2159
      %2161 = vmatmul.bf16.gmra.mxu0 %v2019
      %v2162 = vpop.f32.mrf.mxu0
      %v2163 = vadd.f32 %v1869, %v2162
      %v2164 = vpop.f32.mrf.mxu0
      %v2165 = vadd.f32 %v1869, %v2164
      %2166 = vmatmul.bf16.gmra.mxu0 %v2020
      %v2167 = vpop.f32.mrf.mxu0
      %v2168 = vadd.f32 %v1869, %v2167
      %v2169 = vpop.f32.mrf.mxu0
      %v2170 = vadd.f32 %v1869, %v2169
      %2171 = vmatmul.bf16.gmra.mxu0 %v2021
      %v2172 = vpop.f32.mrf.mxu0
      %v2173 = vadd.f32 %v1869, %v2172
      %v2174 = vpop.f32.mrf.mxu0
      %v2175 = vadd.f32 %v1869, %v2174
      %2176 = vmatmul.bf16.gmra.mxu0 %v2022
      %v2177 = vpop.f32.mrf.mxu0
      %v2178 = vadd.f32 %v1869, %v2177
      %v2179 = vpop.f32.mrf.mxu0
      %v2180 = vadd.f32 %v1869, %v2179
      %2181 = vmatmul.bf16.gmra.mxu0 %v2023
      %v2182 = vpop.f32.mrf.mxu0
      %v2183 = vadd.f32 %v1869, %v2182
      %v2184 = vpop.f32.mrf.mxu0
      %v2185 = vadd.f32 %v1869, %v2184
      %2186 = vmatmul.bf16.gmra.mxu0 %v2024
      %v2187 = vpop.f32.mrf.mxu0
      %v2188 = vadd.f32 %v1869, %v2187
      %v2189 = vpop.f32.mrf.mxu0
      %v2190 = vadd.f32 %v1869, %v2189
      %2191 = vmatmul.bf16.gmra.mxu0 %v2025
      %v2192 = vpop.f32.mrf.mxu0
      %v2193 = vadd.f32 %v1869, %v2192
      %v2194 = vpop.f32.mrf.mxu0
      %v2195 = vadd.f32 %v1869, %v2194
      %2196 = vmatmul.bf16.gmra.mxu0 %v2026
      %v2197 = vpop.f32.mrf.mxu0
      %v2198 = vadd.f32 %v1869, %v2197
      %v2199 = vpop.f32.mrf.mxu0
      %v2200 = vadd.f32 %v1869, %v2199
      %2201 = vmatmul.bf16.gmra.mxu0 %v2027
      %v2202 = vpop.f32.mrf.mxu0
      %v2203 = vadd.f32 %v1869, %v2202
      %v2204 = vpop.f32.mrf.mxu0
      %v2205 = vadd.f32 %v1869, %v2204
      %2206 = vmatmul.bf16.gmra.mxu0 %v2028
      %v2207 = vpop.f32.mrf.mxu0
      %v2208 = vadd.f32 %v1869, %v2207
      %v2209 = vpop.f32.mrf.mxu0
      %v2210 = vadd.f32 %v1869, %v2209
      %2211 = vmatmul.bf16.gmra.mxu0 %v2029
      %v2212 = vpop.f32.mrf.mxu0
      %v2213 = vadd.f32 %v1869, %v2212
      %v2214 = vpop.f32.mrf.mxu0
      %v2215 = vadd.f32 %v1869, %v2214
      %2216 = vmatmul.bf16.gmra.mxu0 %v2030
      %v2217 = vpop.f32.mrf.mxu0
      %v2218 = vadd.f32 %v1869, %v2217
      %v2219 = vpop.f32.mrf.mxu0
      %v2220 = vadd.f32 %v1869, %v2219
      %2221 = vmatmul.bf16.gmra.mxu0 %v2031
      %v2222 = vpop.f32.mrf.mxu0
      %v2223 = vadd.f32 %v1869, %v2222
      %v2224 = vpop.f32.mrf.mxu0
      %v2225 = vadd.f32 %v1869, %v2224
      %2226 = vmatmul.bf16.gmra.mxu0 %v2032
      %v2227 = vpop.f32.mrf.mxu0
      %v2228 = vadd.f32 %v1869, %v2227
      %v2229 = vpop.f32.mrf.mxu0
      %v2230 = vadd.f32 %v1869, %v2229
      %2231 = vmatmul.bf16.gmra.mxu0 %v2033
      %v2232 = vpop.f32.mrf.mxu0
      %v2233 = vadd.f32 %v1869, %v2232
      %v2234 = vpop.f32.mrf.mxu0
      %v2235 = vadd.f32 %v1869, %v2234
      %2236 = vmatmul.bf16.gmra.mxu0 %v2034
      %v2237 = vpop.f32.mrf.mxu0
      %v2238 = vadd.f32 %v1869, %v2237
      %v2239 = vpop.f32.mrf.mxu0
      %v2240 = vadd.f32 %v1869, %v2239
      %2241 = vmatmul.bf16.gmra.mxu0 %v2035
      %v2242 = vpop.f32.mrf.mxu0
      %v2243 = vadd.f32 %v1869, %v2242
      %v2244 = vpop.f32.mrf.mxu0
      %v2245 = vadd.f32 %v1869, %v2244
      %2246 = vmatmul.bf16.gmra.mxu0 %v2036
      %v2247 = vpop.f32.mrf.mxu0
      %v2248 = vadd.f32 %v1869, %v2247
      %v2249 = vpop.f32.mrf.mxu0
      %v2250 = vadd.f32 %v1869, %v2249
      %2251 = vmatmul.bf16.gmra.mxu0 %v2037
      %v2252 = vpop.f32.mrf.mxu0
      %v2253 = vadd.f32 %v1869, %v2252
      %v2254 = vpop.f32.mrf.mxu0
      %v2255 = vadd.f32 %v1869, %v2254
      %2256 = vmatmul.bf16.gmra.mxu0 %v2038
      %v2257 = vpop.f32.mrf.mxu0
      %v2258 = vadd.f32 %v1869, %v2257
      %v2259 = vpop.f32.mrf.mxu0
      %v2260 = vadd.f32 %v1869, %v2259
      %2261 = vmatmul.bf16.gmra.mxu0 %v2039
      %v2262 = vpop.f32.mrf.mxu0
      %v2263 = vadd.f32 %v1869, %v2262
      %v2264 = vpop.f32.mrf.mxu0
      %v2265 = vadd.f32 %v1869, %v2264
      %2266 = vmatmul.bf16.gmra.mxu0 %v2040
      %v2267 = vpop.f32.mrf.mxu0
      %v2268 = vadd.f32 %v1869, %v2267
      %v2269 = vpop.f32.mrf.mxu0
      %v2270 = vadd.f32 %v1869, %v2269
      %2271 = vmatmul.bf16.gmra.mxu0 %v2041
      %v2272 = vpop.f32.mrf.mxu0
      %v2273 = vadd.f32 %v1869, %v2272
      %v2274 = vpop.f32.mrf.mxu0
      %v2275 = vadd.f32 %v1869, %v2274
      %2276 = vmatmul.bf16.gmra.mxu0 %v2042
      %v2277 = vpop.f32.mrf.mxu0
      %v2278 = vadd.f32 %v1869, %v2277
      %v2279 = vpop.f32.mrf.mxu0
      %v2280 = vadd.f32 %v1869, %v2279
      %2281 = vmatmul.bf16.gmra.mxu0 %v2043
      %v2282 = vpop.f32.mrf.mxu0
      %v2283 = vadd.f32 %v1869, %v2282
      %v2284 = vpop.f32.mrf.mxu0
      %v2285 = vadd.f32 %v1869, %v2284
      %2286 = vmatmul.bf16.gmra.mxu0 %v2044
      %v2287 = vpop.f32.mrf.mxu0
      %v2288 = vadd.f32 %v1869, %v2287
      %v2289 = vpop.f32.mrf.mxu0
      %v2290 = vadd.f32 %v1869, %v2289
      %2291 = vmatmul.bf16.gmra.mxu0 %v2045
      %v2292 = vpop.f32.mrf.mxu0
      %v2293 = vadd.f32 %v1869, %v2292
      %v2294 = vpop.f32.mrf.mxu0
      %v2295 = vadd.f32 %v1869, %v2294
      %2296 = vmatmul.bf16.gmra.mxu0 %v2046
      %v2297 = vpop.f32.mrf.mxu0
      %v2298 = vadd.f32 %v1869, %v2297
      %v2299 = vpop.f32.mrf.mxu0
      %v2300 = vadd.f32 %v1869, %v2299
      %2301 = vmatmul.bf16.gmra.mxu0 %v2047
      %v2302 = vpop.f32.mrf.mxu0
      %v2303 = vadd.f32 %v1869, %v2302
      %v2304 = vpop.f32.mrf.mxu0
      %v2305 = vadd.f32 %v1869, %v2304
      %2306 = vmatmul.bf16.gmra.mxu0 %v2048
      %v2307 = vpop.f32.mrf.mxu0
      %v2308 = vadd.f32 %v1869, %v2307
      %v2309 = vpop.f32.mrf.mxu0
      %v2310 = vadd.f32 %v1869, %v2309
      %2311 = vmatmul.bf16.gmra.mxu0 %v2049
      %v2312 = vpop.f32.mrf.mxu0
      %v2313 = vadd.f32 %v1869, %v2312
      %v2314 = vpop.f32.mrf.mxu0
      %v2315 = vadd.f32 %v1869, %v2314
      %2316 = vmatmul.bf16.gmra.mxu0 %v2050
      %v2317 = vpop.f32.mrf.mxu0
      %v2318 = vpop.f32.mrf.mxu0
      %2319 = vdwg.mxu0
      %v2320 = vld [vmem:[%s7] sm:$0xf]
      %v2321 = vld [vmem:[%s7 + $0x4] sm:$0xf]
      %v2322 = vld [vmem:[%s7 + $0x8] sm:$0xf]
      %v2323 = vld [vmem:[%s7 + $0xc] sm:$0xf]
      %v2324 = vld [vmem:[%s7 + $0x10] sm:$0xf]
      %v2325 = vld [vmem:[%s7 + $0x14] sm:$0xf]
      %v2326 = vld [vmem:[%s7 + $0x18] sm:$0xf]
      %v2327 = vld [vmem:[%s7 + $0x1c] sm:$0xf]
      %v2328 = vld [vmem:[%s7 + $0x20] sm:$0xf]
      %v2329 = vld [vmem:[%s7 + $0x24] sm:$0xf]
      %v2330 = vld [vmem:[%s7 + $0x28] sm:$0xf]
      %v2331 = vld [vmem:[%s7 + $0x2c] sm:$0xf]
      %v2332 = vld [vmem:[%s7 + $0x30] sm:$0xf]
      %v2333 = vld [vmem:[%s7 + $0x34] sm:$0xf]
      %v2334 = vld [vmem:[%s7 + $0x38] sm:$0xf]
      %v2335 = vld [vmem:[%s7 + $0x3c] sm:$0xf]
      %v2336 = vld [vmem:[%s8] sm:$0x1]
      %v2338 = vperm.slane %v2336, 0
      %v2340 = vunpack.c.h.b16 %v1779
      %v2341 = vunpack.c.h.b16 %v1780
      %v2342 = vunpack.c.h.b16 %v1781
      %v2343 = vunpack.c.h.b16 %v1782
      %v2344 = vunpack.c.h.b16 %v1783
      %v2345 = vunpack.c.h.b16 %v1784
      %v2346 = vunpack.c.h.b16 %v1785
      %v2347 = vunpack.c.h.b16 %v1786
      %v2348 = vunpack.c.h.b16 %v1787
      %v2349 = vunpack.c.h.b16 %v1788
      %v2350 = vunpack.c.h.b16 %v1789
      %v2351 = vunpack.c.h.b16 %v1790
      %v2352 = vunpack.c.h.b16 %v1791
      %v2353 = vunpack.c.h.b16 %v1792
      %v2354 = vunpack.c.h.b16 %v1793
      %v2355 = vunpack.c.h.b16 %v1794
      %v2356 = vunpack.c.h.b16 %v1795
      %v2357 = vunpack.c.h.b16 %v1796
      %v2358 = vunpack.c.h.b16 %v1797
      %v2359 = vunpack.c.h.b16 %v1798
      %v2360 = vunpack.c.h.b16 %v1799
      %v2361 = vunpack.c.h.b16 %v1800
      %v2362 = vunpack.c.h.b16 %v1801
      %v2363 = vunpack.c.h.b16 %v1802
      %v2364 = vunpack.c.h.b16 %v1803
      %v2365 = vunpack.c.h.b16 %v1804
      %v2366 = vunpack.c.h.b16 %v1805
      %v2367 = vunpack.c.h.b16 %v1806
      %v2368 = vunpack.c.h.b16 %v1807
      %v2369 = vunpack.c.h.b16 %v1808
      %v2370 = vunpack.c.h.b16 %v1809
      %v2371 = vunpack.c.h.b16 %v1810
      %v2372 = vunpack.c.h.b16 %v1811
      %v2373 = vunpack.c.h.b16 %v1812
      %v2374 = vunpack.c.h.b16 %v1813
      %v2375 = vunpack.c.h.b16 %v1814
      %v2376 = vunpack.c.h.b16 %v1815
      %v2377 = vunpack.c.h.b16 %v1816
      %v2378 = vunpack.c.h.b16 %v1817
      %v2379 = vunpack.c.h.b16 %v1818
      %v2380 = vunpack.c.h.b16 %v1819
      %v2381 = vunpack.c.h.b16 %v1820
      %v2382 = vunpack.c.h.b16 %v1821
      %v2383 = vunpack.c.h.b16 %v1822
      %v2384 = vunpack.c.h.b16 %v1823
      %v2385 = vunpack.c.h.b16 %v1824
      %v2386 = vunpack.c.h.b16 %v1825
      %v2387 = vunpack.c.h.b16 %v1826
      %v2388 = vunpack.c.h.b16 %v1827
      %v2389 = vunpack.c.h.b16 %v1828
      %v2390 = vunpack.c.h.b16 %v1829
      %v2391 = vunpack.c.h.b16 %v1830
      %v2392 = vunpack.c.h.b16 %v1831
      %v2393 = vunpack.c.h.b16 %v1832
      %v2394 = vunpack.c.h.b16 %v1833
      %v2395 = vunpack.c.h.b16 %v1834
      %v2396 = vunpack.c.h.b16 %v1835
      %v2397 = vunpack.c.h.b16 %v1836
      %v2398 = vunpack.c.h.b16 %v1837
      %v2399 = vunpack.c.h.b16 %v1838
      %v2400 = vunpack.c.h.b16 %v1839
      %v2401 = vunpack.c.h.b16 %v1840
      %v2402 = vunpack.c.h.b16 %v1841
      %v2403 = vunpack.c.h.b16 %v1842
      %v2404 = vunpack.c.h.b16 %v1843
      %v2405 = vunpack.c.h.b16 %v1844
      %v2406 = vunpack.c.h.b16 %v1845
      %v2407 = vunpack.c.h.b16 %v1846
      %v2408 = vunpack.c.h.b16 %v1847
      %v2409 = vunpack.c.h.b16 %v1848
      %v2410 = vunpack.c.h.b16 %v1849
      %v2411 = vunpack.c.h.b16 %v1850
      %v2412 = vpack.c.b16 %v2341, %v2340
      %v2413 = vpack.c.b16 %v2343, %v2342
      %v2414 = vpack.c.b16 %v2345, %v2344
      %v2415 = vpack.c.b16 %v2347, %v2346
      %v2416 = vpack.c.b16 %v2349, %v2348
      %v2417 = vpack.c.b16 %v2351, %v2350
      %v2418 = vpack.c.b16 %v2353, %v2352
      %v2419 = vpack.c.b16 %v2355, %v2354
      %v2420 = vpack.c.b16 %v2357, %v2356
      %v2421 = vpack.c.b16 %v2359, %v2358
      %v2422 = vpack.c.b16 %v2361, %v2360
      %v2423 = vpack.c.b16 %v2363, %v2362
      %v2424 = vpack.c.b16 %v2365, %v2364
      %v2425 = vpack.c.b16 %v2367, %v2366
      %v2426 = vpack.c.b16 %v2369, %v2368
      %v2427 = vpack.c.b16 %v2371, %v2370
      %v2428 = vpack.c.b16 %v2373, %v2372
      %v2429 = vpack.c.b16 %v2375, %v2374
      %v2430 = vpack.c.b16 %v2377, %v2376
      %v2431 = vpack.c.b16 %v2379, %v2378
      %v2432 = vpack.c.b16 %v2381, %v2380
      %v2433 = vpack.c.b16 %v2383, %v2382
      %v2434 = vpack.c.b16 %v2385, %v2384
      %v2435 = vpack.c.b16 %v2387, %v2386
      %v2436 = vpack.c.b16 %v2389, %v2388
      %v2437 = vpack.c.b16 %v2391, %v2390
      %v2438 = vpack.c.b16 %v2393, %v2392
      %v2439 = vpack.c.b16 %v2395, %v2394
      %v2440 = vpack.c.b16 %v2397, %v2396
      %v2441 = vpack.c.b16 %v2399, %v2398
      %v2442 = vpack.c.b16 %v2401, %v2400
      %v2443 = vpack.c.b16 %v2403, %v2402
      %v2444 = vpack.c.b16 %v2405, %v2404
      %v2445 = vpack.c.b16 %v2407, %v2406
      %v2446 = vpack.c.b16 %v2409, %v2408
      %v2447 = vpack.c.b16 %v2411, %v2410
      %v2500 = vunpack.c.l.b16 %v2320
      %v2501 = vunpack.c.l.b16 %v2321
      %v2502 = vunpack.c.l.b16 %v2322
      %v2503 = vunpack.c.l.b16 %v2323
      %v2504 = vunpack.c.l.b16 %v2324
      %v2505 = vunpack.c.l.b16 %v2325
      %v2506 = vunpack.c.l.b16 %v2326
      %v2507 = vunpack.c.l.b16 %v2327
      %v2508 = vunpack.c.l.b16 %v2328
      %v2509 = vunpack.c.l.b16 %v2329
      %v2510 = vunpack.c.l.b16 %v2330
      %v2511 = vunpack.c.l.b16 %v2331
      %v2512 = vunpack.c.l.b16 %v2332
      %v2513 = vunpack.c.l.b16 %v2333
      %v2514 = vunpack.c.l.b16 %v2334
      %v2515 = vunpack.c.l.b16 %v2335
      %v2516 = vpack.c.b16 %v2501, %v2500
      %v2517 = vpack.c.b16 %v2503, %v2502
      %v2518 = vpack.c.b16 %v2505, %v2504
      %v2519 = vpack.c.b16 %v2507, %v2506
      %v2520 = vpack.c.b16 %v2509, %v2508
      %v2521 = vpack.c.b16 %v2511, %v2510
      %v2522 = vpack.c.b16 %v2513, %v2512
      %v2523 = vpack.c.b16 %v2515, %v2514
      %2532 = vmatpush.bf16.msra.mxu0 %v2523
      %2533 = vmatpush.bf16.msra.mxu0 %v2522
      %2534 = vmatpush.bf16.msra.mxu0 %v2521
      %2535 = vmatpush.bf16.msra.mxu0 %v2520
      %2536 = vmatpush.bf16.msra.mxu0 %v2519
      %2537 = vmatpush.bf16.msra.mxu0 %v2518
      %2538 = vmatpush.bf16.msra.mxu0 %v2517
      %2539 = vmatpush.bf16.msra.mxu0 %v2516
      %2540 = vmatmul.bf16.gmra.mxu0 %v2412
      %v2541 = vpop.f32.mrf.mxu0
      %v2542 = vpop.f32.mrf.mxu0
      %2543 = vmatmul.bf16.gmra.mxu0 %v2413
      %v2544 = vpop.f32.mrf.mxu0
      %v2545 = vadd.f32 %v2338, %v2544
      %v2546 = vpop.f32.mrf.mxu0
      %v2547 = vadd.f32 %v2338, %v2546
      %2548 = vmatmul.bf16.gmra.mxu0 %v2414
      %v2549 = vpop.f32.mrf.mxu0
      %v2550 = vadd.f32 %v2338, %v2549
      %v2551 = vpop.f32.mrf.mxu0
      %v2552 = vadd.f32 %v2338, %v2551
      %2553 = vmatmul.bf16.gmra.mxu0 %v2415
      %v2554 = vpop.f32.mrf.mxu0
      %v2555 = vadd.f32 %v2338, %v2554
      %v2556 = vpop.f32.mrf.mxu0
      %v2557 = vadd.f32 %v2338, %v2556
      %2558 = vmatmul.bf16.gmra.mxu0 %v2416
      %v2559 = vpop.f32.mrf.mxu0
      %v2560 = vadd.f32 %v2338, %v2559
      %v2561 = vpop.f32.mrf.mxu0
      %v2562 = vadd.f32 %v2338, %v2561
      %2563 = vmatmul.bf16.gmra.mxu0 %v2417
      %v2564 = vpop.f32.mrf.mxu0
      %v2565 = vadd.f32 %v2338, %v2564
      %v2566 = vpop.f32.mrf.mxu0
      %v2567 = vadd.f32 %v2338, %v2566
      %2568 = vmatmul.bf16.gmra.mxu0 %v2418
      %v2569 = vpop.f32.mrf.mxu0
      %v2570 = vadd.f32 %v2338, %v2569
      %v2571 = vpop.f32.mrf.mxu0
      %v2572 = vadd.f32 %v2338, %v2571
      %2573 = vmatmul.bf16.gmra.mxu0 %v2419
      %v2574 = vpop.f32.mrf.mxu0
      %v2575 = vadd.f32 %v2338, %v2574
      %v2576 = vpop.f32.mrf.mxu0
      %v2577 = vadd.f32 %v2338, %v2576
      %2578 = vmatmul.bf16.gmra.mxu0 %v2420
      %v2579 = vpop.f32.mrf.mxu0
      %v2580 = vadd.f32 %v2338, %v2579
      %v2581 = vpop.f32.mrf.mxu0
      %v2582 = vadd.f32 %v2338, %v2581
      %2583 = vmatmul.bf16.gmra.mxu0 %v2421
      %v2584 = vpop.f32.mrf.mxu0
      %v2585 = vadd.f32 %v2338, %v2584
      %v2586 = vpop.f32.mrf.mxu0
      %v2587 = vadd.f32 %v2338, %v2586
      %2588 = vmatmul.bf16.gmra.mxu0 %v2422
      %v2589 = vpop.f32.mrf.mxu0
      %v2590 = vadd.f32 %v2338, %v2589
      %v2591 = vpop.f32.mrf.mxu0
      %v2592 = vadd.f32 %v2338, %v2591
      %2593 = vmatmul.bf16.gmra.mxu0 %v2423
      %v2594 = vpop.f32.mrf.mxu0
      %v2595 = vadd.f32 %v2338, %v2594
      %v2596 = vpop.f32.mrf.mxu0
      %v2597 = vadd.f32 %v2338, %v2596
      %2598 = vmatmul.bf16.gmra.mxu0 %v2424
      %v2599 = vpop.f32.mrf.mxu0
      %v2600 = vadd.f32 %v2338, %v2599
      %v2601 = vpop.f32.mrf.mxu0
      %v2602 = vadd.f32 %v2338, %v2601
      %2603 = vmatmul.bf16.gmra.mxu0 %v2425
      %v2604 = vpop.f32.mrf.mxu0
      %v2605 = vadd.f32 %v2338, %v2604
      %v2606 = vpop.f32.mrf.mxu0
      %v2607 = vadd.f32 %v2338, %v2606
      %2608 = vmatmul.bf16.gmra.mxu0 %v2426
      %v2609 = vpop.f32.mrf.mxu0
      %v2610 = vadd.f32 %v2338, %v2609
      %v2611 = vpop.f32.mrf.mxu0
      %v2612 = vadd.f32 %v2338, %v2611
      %2613 = vmatmul.bf16.gmra.mxu0 %v2427
      %v2614 = vpop.f32.mrf.mxu0
      %v2615 = vadd.f32 %v2338, %v2614
      %v2616 = vpop.f32.mrf.mxu0
      %v2617 = vadd.f32 %v2338, %v2616
      %2618 = vmatmul.bf16.gmra.mxu0 %v2428
      %v2619 = vpop.f32.mrf.mxu0
      %v2620 = vadd.f32 %v2338, %v2619
      %v2621 = vpop.f32.mrf.mxu0
      %v2622 = vadd.f32 %v2338, %v2621
      %2623 = vmatmul.bf16.gmra.mxu0 %v2429
      %v2624 = vpop.f32.mrf.mxu0
      %v2625 = vadd.f32 %v2338, %v2624
      %v2626 = vpop.f32.mrf.mxu0
      %v2627 = vadd.f32 %v2338, %v2626
      %2628 = vmatmul.bf16.gmra.mxu0 %v2430
      %v2629 = vpop.f32.mrf.mxu0
      %v2630 = vadd.f32 %v2338, %v2629
      %v2631 = vpop.f32.mrf.mxu0
      %v2632 = vadd.f32 %v2338, %v2631
      %2633 = vmatmul.bf16.gmra.mxu0 %v2431
      %v2634 = vpop.f32.mrf.mxu0
      %v2635 = vadd.f32 %v2338, %v2634
      %v2636 = vpop.f32.mrf.mxu0
      %v2637 = vadd.f32 %v2338, %v2636
      %2638 = vmatmul.bf16.gmra.mxu0 %v2432
      %v2639 = vpop.f32.mrf.mxu0
      %v2640 = vadd.f32 %v2338, %v2639
      %v2641 = vpop.f32.mrf.mxu0
      %v2642 = vadd.f32 %v2338, %v2641
      %2643 = vmatmul.bf16.gmra.mxu0 %v2433
      %v2644 = vpop.f32.mrf.mxu0
      %v2645 = vadd.f32 %v2338, %v2644
      %v2646 = vpop.f32.mrf.mxu0
      %v2647 = vadd.f32 %v2338, %v2646
      %2648 = vmatmul.bf16.gmra.mxu0 %v2434
      %v2649 = vpop.f32.mrf.mxu0
      %v2650 = vadd.f32 %v2338, %v2649
      %v2651 = vpop.f32.mrf.mxu0
      %v2652 = vadd.f32 %v2338, %v2651
      %2653 = vmatmul.bf16.gmra.mxu0 %v2435
      %v2654 = vpop.f32.mrf.mxu0
      %v2655 = vadd.f32 %v2338, %v2654
      %v2656 = vpop.f32.mrf.mxu0
      %v2657 = vadd.f32 %v2338, %v2656
      %2658 = vmatmul.bf16.gmra.mxu0 %v2436
      %v2659 = vpop.f32.mrf.mxu0
      %v2660 = vadd.f32 %v2338, %v2659
      %v2661 = vpop.f32.mrf.mxu0
      %v2662 = vadd.f32 %v2338, %v2661
      %2663 = vmatmul.bf16.gmra.mxu0 %v2437
      %v2664 = vpop.f32.mrf.mxu0
      %v2665 = vadd.f32 %v2338, %v2664
      %v2666 = vpop.f32.mrf.mxu0
      %v2667 = vadd.f32 %v2338, %v2666
      %2668 = vmatmul.bf16.gmra.mxu0 %v2438
      %v2669 = vpop.f32.mrf.mxu0
      %v2670 = vadd.f32 %v2338, %v2669
      %v2671 = vpop.f32.mrf.mxu0
      %v2672 = vadd.f32 %v2338, %v2671
      %2673 = vmatmul.bf16.gmra.mxu0 %v2439
      %v2674 = vpop.f32.mrf.mxu0
      %v2675 = vadd.f32 %v2338, %v2674
      %v2676 = vpop.f32.mrf.mxu0
      %v2677 = vadd.f32 %v2338, %v2676
      %2678 = vmatmul.bf16.gmra.mxu0 %v2440
      %v2679 = vpop.f32.mrf.mxu0
      %v2680 = vadd.f32 %v2338, %v2679
      %v2681 = vpop.f32.mrf.mxu0
      %v2682 = vadd.f32 %v2338, %v2681
      %2683 = vmatmul.bf16.gmra.mxu0 %v2441
      %v2684 = vpop.f32.mrf.mxu0
      %v2685 = vadd.f32 %v2338, %v2684
      %v2686 = vpop.f32.mrf.mxu0
      %v2687 = vadd.f32 %v2338, %v2686
      %2688 = vmatmul.bf16.gmra.mxu0 %v2442
      %v2689 = vpop.f32.mrf.mxu0
      %v2690 = vadd.f32 %v2338, %v2689
      %v2691 = vpop.f32.mrf.mxu0
      %v2692 = vadd.f32 %v2338, %v2691
      %2693 = vmatmul.bf16.gmra.mxu0 %v2443
      %v2694 = vpop.f32.mrf.mxu0
      %v2695 = vadd.f32 %v2338, %v2694
      %v2696 = vpop.f32.mrf.mxu0
      %v2697 = vadd.f32 %v2338, %v2696
      %2698 = vmatmul.bf16.gmra.mxu0 %v2444
      %v2699 = vpop.f32.mrf.mxu0
      %v2700 = vadd.f32 %v2338, %v2699
      %v2701 = vpop.f32.mrf.mxu0
      %v2702 = vadd.f32 %v2338, %v2701
      %2703 = vmatmul.bf16.gmra.mxu0 %v2445
      %v2704 = vpop.f32.mrf.mxu0
      %v2705 = vadd.f32 %v2338, %v2704
      %v2706 = vpop.f32.mrf.mxu0
      %v2707 = vadd.f32 %v2338, %v2706
      %2708 = vmatmul.bf16.gmra.mxu0 %v2446
      %v2709 = vpop.f32.mrf.mxu0
      %v2710 = vadd.f32 %v2338, %v2709
      %v2711 = vpop.f32.mrf.mxu0
      %v2712 = vadd.f32 %v2338, %v2711
      %2713 = vmatmul.bf16.gmra.mxu0 %v2447
      %v2714 = vpop.f32.mrf.mxu0
      %v2715 = vpop.f32.mrf.mxu0
      %2716 = vdwg.mxu0
      %v2717 = vadd.f32 %v2148, 1.0
      %v2718 = vadd.f32 %v2150, 1.0
      %v2719 = vadd.f32 %v2153, 1.0
      %v2720 = vadd.f32 %v2155, 1.0
      %v2721 = vadd.f32 %v2158, 1.0
      %v2722 = vadd.f32 %v2160, 1.0
      %v2723 = vadd.f32 %v2163, 1.0
      %v2724 = vadd.f32 %v2165, 1.0
      %v2725 = vadd.f32 %v2168, 1.0
      %v2726 = vadd.f32 %v2170, 1.0
      %v2727 = vadd.f32 %v2173, 1.0
      %v2728 = vadd.f32 %v2175, 1.0
      %v2729 = vadd.f32 %v2178, 1.0
      %v2730 = vadd.f32 %v2180, 1.0
      %v2731 = vadd.f32 %v2183, 1.0
      %v2732 = vadd.f32 %v2185, 1.0
      %v2733 = vadd.f32 %v2188, 1.0
      %v2734 = vadd.f32 %v2190, 1.0
      %v2735 = vadd.f32 %v2193, 1.0
      %v2736 = vadd.f32 %v2195, 1.0
      %v2737 = vadd.f32 %v2198, 1.0
      %v2738 = vadd.f32 %v2200, 1.0
      %v2739 = vadd.f32 %v2203, 1.0
      %v2740 = vadd.f32 %v2205, 1.0
      %v2741 = vadd.f32 %v2208, 1.0
      %v2742 = vadd.f32 %v2210, 1.0
      %v2743 = vadd.f32 %v2213, 1.0
      %v2744 = vadd.f32 %v2215, 1.0
      %v2745 = vadd.f32 %v2218, 1.0
      %v2746 = vadd.f32 %v2220, 1.0
      %v2747 = vadd.f32 %v2223, 1.0
      %v2748 = vadd.f32 %v2225, 1.0
      %v2749 = vadd.f32 %v2228, 1.0
      %v2750 = vadd.f32 %v2230, 1.0
      %v2751 = vadd.f32 %v2233, 1.0
      %v2752 = vadd.f32 %v2235, 1.0
      %v2753 = vadd.f32 %v2238, 1.0
      %v2754 = vadd.f32 %v2240, 1.0
      %v2755 = vadd.f32 %v2243, 1.0
      %v2756 = vadd.f32 %v2245, 1.0
      %v2757 = vadd.f32 %v2248, 1.0
      %v2758 = vadd.f32 %v2250, 1.0
      %v2759 = vadd.f32 %v2253, 1.0
      %v2760 = vadd.f32 %v2255, 1.0
      %v2761 = vadd.f32 %v2258, 1.0
      %v2762 = vadd.f32 %v2260, 1.0
      %v2763 = vadd.f32 %v2263, 1.0
      %v2764 = vadd.f32 %v2265, 1.0
      %v2765 = vadd.f32 %v2268, 1.0
      %v2766 = vadd.f32 %v2270, 1.0
      %v2767 = vadd.f32 %v2273, 1.0
      %v2768 = vadd.f32 %v2275, 1.0
      %v2769 = vadd.f32 %v2278, 1.0
      %v2770 = vadd.f32 %v2280, 1.0
      %v2771 = vadd.f32 %v2283, 1.0
      %v2772 = vadd.f32 %v2285, 1.0
      %v2773 = vadd.f32 %v2288, 1.0
      %v2774 = vadd.f32 %v2290, 1.0
      %v2775 = vadd.f32 %v2293, 1.0
      %v2776 = vadd.f32 %v2295, 1.0
      %v2777 = vadd.f32 %v2298, 1.0
      %v2778 = vadd.f32 %v2300, 1.0
      %v2779 = vadd.f32 %v2303, 1.0
      %v2780 = vadd.f32 %v2305, 1.0
      %v2781 = vadd.f32 %v2308, 1.0
      %v2782 = vadd.f32 %v2310, 1.0
      %v2783 = vadd.f32 %v2313, 1.0
      %v2784 = vadd.f32 %v2315, 1.0
      %v2785 = vmul.f32 %v623, %v2717
      %v2786 = vmul.f32 %v624, %v2718
      %v2787 = vmul.f32 %v625, %v2719
      %v2788 = vmul.f32 %v626, %v2720
      %v2789 = vmul.f32 %v627, %v2721
      %v2790 = vmul.f32 %v628, %v2722
      %v2791 = vmul.f32 %v629, %v2723
      %v2792 = vmul.f32 %v630, %v2724
      %v2793 = vmul.f32 %v631, %v2725
      %v2794 = vmul.f32 %v632, %v2726
      %v2795 = vmul.f32 %v633, %v2727
      %v2796 = vmul.f32 %v634, %v2728
      %v2797 = vmul.f32 %v635, %v2729
      %v2798 = vmul.f32 %v636, %v2730
      %v2799 = vmul.f32 %v637, %v2731
      %v2800 = vmul.f32 %v638, %v2732
      %v2801 = vmul.f32 %v639, %v2733
      %v2802 = vmul.f32 %v640, %v2734
      %v2803 = vmul.f32 %v641, %v2735
      %v2804 = vmul.f32 %v642, %v2736
      %v2805 = vmul.f32 %v643, %v2737
      %v2806 = vmul.f32 %v644, %v2738
      %v2807 = vmul.f32 %v645, %v2739
      %v2808 = vmul.f32 %v646, %v2740
      %v2809 = vmul.f32 %v647, %v2741
      %v2810 = vmul.f32 %v648, %v2742
      %v2811 = vmul.f32 %v649, %v2743
      %v2812 = vmul.f32 %v650, %v2744
      %v2813 = vmul.f32 %v651, %v2745
      %v2814 = vmul.f32 %v652, %v2746
      %v2815 = vmul.f32 %v653, %v2747
      %v2816 = vmul.f32 %v654, %v2748
      %v2817 = vmul.f32 %v655, %v2749
      %v2818 = vmul.f32 %v656, %v2750
      %v2819 = vmul.f32 %v657, %v2751
      %v2820 = vmul.f32 %v658, %v2752
      %v2821 = vmul.f32 %v659, %v2753
      %v2822 = vmul.f32 %v660, %v2754
      %v2823 = vmul.f32 %v661, %v2755
      %v2824 = vmul.f32 %v662, %v2756
      %v2825 = vmul.f32 %v663, %v2757
      %v2826 = vmul.f32 %v664, %v2758
      %v2827 = vmul.f32 %v665, %v2759
      %v2828 = vmul.f32 %v666, %v2760
      %v2829 = vmul.f32 %v667, %v2761
      %v2830 = vmul.f32 %v668, %v2762
      %v2831 = vmul.f32 %v669, %v2763
      %v2832 = vmul.f32 %v670, %v2764
      %v2833 = vmul.f32 %v671, %v2765
      %v2834 = vmul.f32 %v672, %v2766
      %v2835 = vmul.f32 %v673, %v2767
      %v2836 = vmul.f32 %v674, %v2768
      %v2837 = vmul.f32 %v675, %v2769
      %v2838 = vmul.f32 %v676, %v2770
      %v2839 = vmul.f32 %v677, %v2771
      %v2840 = vmul.f32 %v678, %v2772
      %v2841 = vmul.f32 %v679, %v2773
      %v2842 = vmul.f32 %v680, %v2774
      %v2843 = vmul.f32 %v681, %v2775
      %v2844 = vmul.f32 %v682, %v2776
      %v2845 = vmul.f32 %v683, %v2777
      %v2846 = vmul.f32 %v684, %v2778
      %v2847 = vmul.f32 %v685, %v2779
      %v2848 = vmul.f32 %v686, %v2780
      %v2849 = vmul.f32 %v687, %v2781
      %v2850 = vmul.f32 %v688, %v2782
      %v2851 = vmul.f32 %v689, %v2783
      %v2852 = vmul.f32 %v690, %v2784
      %v2853 = vadd.f32 %v2785, %v2545
      %v2854 = vadd.f32 %v2786, %v2547
      %v2855 = vadd.f32 %v2787, %v2550
      %v2856 = vadd.f32 %v2788, %v2552
      %v2857 = vadd.f32 %v2789, %v2555
      %v2858 = vadd.f32 %v2790, %v2557
      %v2859 = vadd.f32 %v2791, %v2560
      %v2860 = vadd.f32 %v2792, %v2562
      %v2861 = vadd.f32 %v2793, %v2565
      %v2862 = vadd.f32 %v2794, %v2567
      %v2863 = vadd.f32 %v2795, %v2570
      %v2864 = vadd.f32 %v2796, %v2572
      %v2865 = vadd.f32 %v2797, %v2575
      %v2866 = vadd.f32 %v2798, %v2577
      %v2867 = vadd.f32 %v2799, %v2580
      %v2868 = vadd.f32 %v2800, %v2582
      %v2869 = vadd.f32 %v2801, %v2585
      %v2870 = vadd.f32 %v2802, %v2587
      %v2871 = vadd.f32 %v2803, %v2590
      %v2872 = vadd.f32 %v2804, %v2592
      %v2873 = vadd.f32 %v2805, %v2595
      %v2874 = vadd.f32 %v2806, %v2597
      %v2875 = vadd.f32 %v2807, %v2600
      %v2876 = vadd.f32 %v2808, %v2602
      %v2877 = vadd.f32 %v2809, %v2605
      %v2878 = vadd.f32 %v2810, %v2607
      %v2879 = vadd.f32 %v2811, %v2610
      %v2880 = vadd.f32 %v2812, %v2612
      %v2881 = vadd.f32 %v2813, %v2615
      %v2882 = vadd.f32 %v2814, %v2617
      %v2883 = vadd.f32 %v2815, %v2620
      %v2884 = vadd.f32 %v2816, %v2622
      %v2885 = vadd.f32 %v2817, %v2625
      %v2886 = vadd.f32 %v2818, %v2627
      %v2887 = vadd.f32 %v2819, %v2630
      %v2888 = vadd.f32 %v2820, %v2632
      %v2889 = vadd.f32 %v2821, %v2635
      %v2890 = vadd.f32 %v2822, %v2637
      %v2891 = vadd.f32 %v2823, %v2640
      %v2892 = vadd.f32 %v2824, %v2642
      %v2893 = vadd.f32 %v2825, %v2645
      %v2894 = vadd.f32 %v2826, %v2647
      %v2895 = vadd.f32 %v2827, %v2650
      %v2896 = vadd.f32 %v2828, %v2652
      %v2897 = vadd.f32 %v2829, %v2655
      %v2898 = vadd.f32 %v2830, %v2657
      %v2899 = vadd.f32 %v2831, %v2660
      %v2900 = vadd.f32 %v2832, %v2662
      %v2901 = vadd.f32 %v2833, %v2665
      %v2902 = vadd.f32 %v2834, %v2667
      %v2903 = vadd.f32 %v2835, %v2670
      %v2904 = vadd.f32 %v2836, %v2672
      %v2905 = vadd.f32 %v2837, %v2675
      %v2906 = vadd.f32 %v2838, %v2677
      %v2907 = vadd.f32 %v2839, %v2680
      %v2908 = vadd.f32 %v2840, %v2682
      %v2909 = vadd.f32 %v2841, %v2685
      %v2910 = vadd.f32 %v2842, %v2687
      %v2911 = vadd.f32 %v2843, %v2690
      %v2912 = vadd.f32 %v2844, %v2692
      %v2913 = vadd.f32 %v2845, %v2695
      %v2914 = vadd.f32 %v2846, %v2697
      %v2915 = vadd.f32 %v2847, %v2700
      %v2916 = vadd.f32 %v2848, %v2702
      %v2917 = vadd.f32 %v2849, %v2705
      %v2918 = vadd.f32 %v2850, %v2707
      %v2919 = vadd.f32 %v2851, %v2710
      %v2920 = vadd.f32 %v2852, %v2712
      %2922 = vset.pattern.permute.xlu0 0
      %2923 = vperm.xlu0 %2922, %v763
      %v2924 = vpop.permute.xlu0 %2923
      %2927 = vset.pattern.permute.xlu0 0
      %2928 = vperm.xlu0 %2927, %v764
      %v2929 = vpop.permute.xlu0 %2928
      %2932 = vset.pattern.permute.xlu0 0
      %2933 = vperm.xlu0 %2932, %v765
      %v2934 = vpop.permute.xlu0 %2933
      %2937 = vset.pattern.permute.xlu0 0
      %2938 = vperm.xlu0 %2937, %v766
      %v2939 = vpop.permute.xlu0 %2938
      %2942 = vset.pattern.permute.xlu0 0
      %2943 = vperm.xlu0 %2942, %v767
      %v2944 = vpop.permute.xlu0 %2943
      %2947 = vset.pattern.permute.xlu0 0
      %2948 = vperm.xlu0 %2947, %v768
      %v2949 = vpop.permute.xlu0 %2948
      %2952 = vset.pattern.permute.xlu0 0
      %2953 = vperm.xlu0 %2952, %v769
      %v2954 = vpop.permute.xlu0 %2953
      %2957 = vset.pattern.permute.xlu0 0
      %2958 = vperm.xlu0 %2957, %v770
      %v2959 = vpop.permute.xlu0 %2958
      %2962 = vset.pattern.permute.xlu0 0
      %2963 = vperm.xlu0 %2962, %v771
      %v2964 = vpop.permute.xlu0 %2963
      %2967 = vset.pattern.permute.xlu0 0
      %2968 = vperm.xlu0 %2967, %v772
      %v2969 = vpop.permute.xlu0 %2968
      %2972 = vset.pattern.permute.xlu0 0
      %2973 = vperm.xlu0 %2972, %v773
      %v2974 = vpop.permute.xlu0 %2973
      %2977 = vset.pattern.permute.xlu0 0
      %2978 = vperm.xlu0 %2977, %v774
      %v2979 = vpop.permute.xlu0 %2978
      %2982 = vset.pattern.permute.xlu0 0
      %2983 = vperm.xlu0 %2982, %v775
      %v2984 = vpop.permute.xlu0 %2983
      %2987 = vset.pattern.permute.xlu0 0
      %2988 = vperm.xlu0 %2987, %v776
      %v2989 = vpop.permute.xlu0 %2988
      %2992 = vset.pattern.permute.xlu0 0
      %2993 = vperm.xlu0 %2992, %v777
      %v2994 = vpop.permute.xlu0 %2993
      %2997 = vset.pattern.permute.xlu0 0
      %2998 = vperm.xlu0 %2997, %v778
      %v2999 = vpop.permute.xlu0 %2998
      %3002 = vset.pattern.permute.xlu0 0
      %3003 = vperm.xlu0 %3002, %v779
      %v3004 = vpop.permute.xlu0 %3003
      %3007 = vset.pattern.permute.xlu0 0
      %3008 = vperm.xlu0 %3007, %v780
      %v3009 = vpop.permute.xlu0 %3008
      %3012 = vset.pattern.permute.xlu0 0
      %3013 = vperm.xlu0 %3012, %v781
      %v3014 = vpop.permute.xlu0 %3013
      %3017 = vset.pattern.permute.xlu0 0
      %3018 = vperm.xlu0 %3017, %v782
      %v3019 = vpop.permute.xlu0 %3018
      %3022 = vset.pattern.permute.xlu0 0
      %3023 = vperm.xlu0 %3022, %v783
      %v3024 = vpop.permute.xlu0 %3023
      %3027 = vset.pattern.permute.xlu0 0
      %3028 = vperm.xlu0 %3027, %v784
      %v3029 = vpop.permute.xlu0 %3028
      %3032 = vset.pattern.permute.xlu0 0
      %3033 = vperm.xlu0 %3032, %v785
      %v3034 = vpop.permute.xlu0 %3033
      %3037 = vset.pattern.permute.xlu0 0
      %3038 = vperm.xlu0 %3037, %v786
      %v3039 = vpop.permute.xlu0 %3038
      %3042 = vset.pattern.permute.xlu0 0
      %3043 = vperm.xlu0 %3042, %v787
      %v3044 = vpop.permute.xlu0 %3043
      %3047 = vset.pattern.permute.xlu0 0
      %3048 = vperm.xlu0 %3047, %v788
      %v3049 = vpop.permute.xlu0 %3048
      %3052 = vset.pattern.permute.xlu0 0
      %3053 = vperm.xlu0 %3052, %v789
      %v3054 = vpop.permute.xlu0 %3053
      %3057 = vset.pattern.permute.xlu0 0
      %3058 = vperm.xlu0 %3057, %v790
      %v3059 = vpop.permute.xlu0 %3058
      %3062 = vset.pattern.permute.xlu0 0
      %3063 = vperm.xlu0 %3062, %v791
      %v3064 = vpop.permute.xlu0 %3063
      %3067 = vset.pattern.permute.xlu0 0
      %3068 = vperm.xlu0 %3067, %v792
      %v3069 = vpop.permute.xlu0 %3068
      %3072 = vset.pattern.permute.xlu0 0
      %3073 = vperm.xlu0 %3072, %v793
      %v3074 = vpop.permute.xlu0 %3073
      %3077 = vset.pattern.permute.xlu0 0
      %3078 = vperm.xlu0 %3077, %v794
      %v3079 = vpop.permute.xlu0 %3078
      %3082 = vset.pattern.permute.xlu0 0
      %3083 = vperm.xlu0 %3082, %v795
      %v3084 = vpop.permute.xlu0 %3083
      %3087 = vset.pattern.permute.xlu0 0
      %3088 = vperm.xlu0 %3087, %v796
      %v3089 = vpop.permute.xlu0 %3088
      %3092 = vset.pattern.permute.xlu0 0
      %3093 = vperm.xlu0 %3092, %v797
      %v3094 = vpop.permute.xlu0 %3093
      %3097 = vset.pattern.permute.xlu0 0
      %3098 = vperm.xlu0 %3097, %v798
      %v3099 = vpop.permute.xlu0 %3098
      %3102 = vset.pattern.permute.xlu0 0
      %3103 = vperm.xlu0 %3102, %v799
      %v3104 = vpop.permute.xlu0 %3103
      %3107 = vset.pattern.permute.xlu0 0
      %3108 = vperm.xlu0 %3107, %v800
      %v3109 = vpop.permute.xlu0 %3108
      %3112 = vset.pattern.permute.xlu0 0
      %3113 = vperm.xlu0 %3112, %v801
      %v3114 = vpop.permute.xlu0 %3113
      %3117 = vset.pattern.permute.xlu0 0
      %3118 = vperm.xlu0 %3117, %v802
      %v3119 = vpop.permute.xlu0 %3118
      %3122 = vset.pattern.permute.xlu0 0
      %3123 = vperm.xlu0 %3122, %v803
      %v3124 = vpop.permute.xlu0 %3123
      %3127 = vset.pattern.permute.xlu0 0
      %3128 = vperm.xlu0 %3127, %v804
      %v3129 = vpop.permute.xlu0 %3128
      %3132 = vset.pattern.permute.xlu0 0
      %3133 = vperm.xlu0 %3132, %v805
      %v3134 = vpop.permute.xlu0 %3133
      %3137 = vset.pattern.permute.xlu0 0
      %3138 = vperm.xlu0 %3137, %v806
      %v3139 = vpop.permute.xlu0 %3138
      %3142 = vset.pattern.permute.xlu0 0
      %3143 = vperm.xlu0 %3142, %v807
      %v3144 = vpop.permute.xlu0 %3143
      %3147 = vset.pattern.permute.xlu0 0
      %3148 = vperm.xlu0 %3147, %v808
      %v3149 = vpop.permute.xlu0 %3148
      %3152 = vset.pattern.permute.xlu0 0
      %3153 = vperm.xlu0 %3152, %v809
      %v3154 = vpop.permute.xlu0 %3153
      %3157 = vset.pattern.permute.xlu0 0
      %3158 = vperm.xlu0 %3157, %v810
      %v3159 = vpop.permute.xlu0 %3158
      %3162 = vset.pattern.permute.xlu0 0
      %3163 = vperm.xlu0 %3162, %v811
      %v3164 = vpop.permute.xlu0 %3163
      %3167 = vset.pattern.permute.xlu0 0
      %3168 = vperm.xlu0 %3167, %v812
      %v3169 = vpop.permute.xlu0 %3168
      %3172 = vset.pattern.permute.xlu0 0
      %3173 = vperm.xlu0 %3172, %v813
      %v3174 = vpop.permute.xlu0 %3173
      %3177 = vset.pattern.permute.xlu0 0
      %3178 = vperm.xlu0 %3177, %v814
      %v3179 = vpop.permute.xlu0 %3178
      %3182 = vset.pattern.permute.xlu0 0
      %3183 = vperm.xlu0 %3182, %v815
      %v3184 = vpop.permute.xlu0 %3183
      %3187 = vset.pattern.permute.xlu0 0
      %3188 = vperm.xlu0 %3187, %v816
      %v3189 = vpop.permute.xlu0 %3188
      %3192 = vset.pattern.permute.xlu0 0
      %3193 = vperm.xlu0 %3192, %v817
      %v3194 = vpop.permute.xlu0 %3193
      %3197 = vset.pattern.permute.xlu0 0
      %3198 = vperm.xlu0 %3197, %v818
      %v3199 = vpop.permute.xlu0 %3198
      %3202 = vset.pattern.permute.xlu0 0
      %3203 = vperm.xlu0 %3202, %v819
      %v3204 = vpop.permute.xlu0 %3203
      %3207 = vset.pattern.permute.xlu0 0
      %3208 = vperm.xlu0 %3207, %v820
      %v3209 = vpop.permute.xlu0 %3208
      %3212 = vset.pattern.permute.xlu0 0
      %3213 = vperm.xlu0 %3212, %v821
      %v3214 = vpop.permute.xlu0 %3213
      %3217 = vset.pattern.permute.xlu0 0
      %3218 = vperm.xlu0 %3217, %v822
      %v3219 = vpop.permute.xlu0 %3218
      %3222 = vset.pattern.permute.xlu0 0
      %3223 = vperm.xlu0 %3222, %v823
      %v3224 = vpop.permute.xlu0 %3223
      %3227 = vset.pattern.permute.xlu0 0
      %3228 = vperm.xlu0 %3227, %v824
      %v3229 = vpop.permute.xlu0 %3228
      %3232 = vset.pattern.permute.xlu0 0
      %3233 = vperm.xlu0 %3232, %v825
      %v3234 = vpop.permute.xlu0 %3233
      %3237 = vset.pattern.permute.xlu0 0
      %3238 = vperm.xlu0 %3237, %v826
      %v3239 = vpop.permute.xlu0 %3238
      %3242 = vset.pattern.permute.xlu0 0
      %3243 = vperm.xlu0 %3242, %v827
      %v3244 = vpop.permute.xlu0 %3243
      %3247 = vset.pattern.permute.xlu0 0
      %3248 = vperm.xlu0 %3247, %v828
      %v3249 = vpop.permute.xlu0 %3248
      %3252 = vset.pattern.permute.xlu0 0
      %3253 = vperm.xlu0 %3252, %v829
      %v3254 = vpop.permute.xlu0 %3253
      %3257 = vset.pattern.permute.xlu0 0
      %3258 = vperm.xlu0 %3257, %v830
      %v3259 = vpop.permute.xlu0 %3258
      %v3261 = vmul.f32 %v2853, %v2924
      %v3262 = vmul.f32 %v2854, %v2929
      %v3263 = vmul.f32 %v2855, %v2934
      %v3264 = vmul.f32 %v2856, %v2939
      %v3265 = vmul.f32 %v2857, %v2944
      %v3266 = vmul.f32 %v2858, %v2949
      %v3267 = vmul.f32 %v2859, %v2954
      %v3268 = vmul.f32 %v2860, %v2959
      %v3269 = vmul.f32 %v2861, %v2964
      %v3270 = vmul.f32 %v2862, %v2969
      %v3271 = vmul.f32 %v2863, %v2974
      %v3272 = vmul.f32 %v2864, %v2979
      %v3273 = vmul.f32 %v2865, %v2984
      %v3274 = vmul.f32 %v2866, %v2989
      %v3275 = vmul.f32 %v2867, %v2994
      %v3276 = vmul.f32 %v2868, %v2999
      %v3277 = vmul.f32 %v2869, %v3004
      %v3278 = vmul.f32 %v2870, %v3009
      %v3279 = vmul.f32 %v2871, %v3014
      %v3280 = vmul.f32 %v2872, %v3019
      %v3281 = vmul.f32 %v2873, %v3024
      %v3282 = vmul.f32 %v2874, %v3029
      %v3283 = vmul.f32 %v2875, %v3034
      %v3284 = vmul.f32 %v2876, %v3039
      %v3285 = vmul.f32 %v2877, %v3044
      %v3286 = vmul.f32 %v2878, %v3049
      %v3287 = vmul.f32 %v2879, %v3054
      %v3288 = vmul.f32 %v2880, %v3059
      %v3289 = vmul.f32 %v2881, %v3064
      %v3290 = vmul.f32 %v2882, %v3069
      %v3291 = vmul.f32 %v2883, %v3074
      %v3292 = vmul.f32 %v2884, %v3079
      %v3293 = vmul.f32 %v2885, %v3084
      %v3294 = vmul.f32 %v2886, %v3089
      %v3295 = vmul.f32 %v2887, %v3094
      %v3296 = vmul.f32 %v2888, %v3099
      %v3297 = vmul.f32 %v2889, %v3104
      %v3298 = vmul.f32 %v2890, %v3109
      %v3299 = vmul.f32 %v2891, %v3114
      %v3300 = vmul.f32 %v2892, %v3119
      %v3301 = vmul.f32 %v2893, %v3124
      %v3302 = vmul.f32 %v2894, %v3129
      %v3303 = vmul.f32 %v2895, %v3134
      %v3304 = vmul.f32 %v2896, %v3139
      %v3305 = vmul.f32 %v2897, %v3144
      %v3306 = vmul.f32 %v2898, %v3149
      %v3307 = vmul.f32 %v2899, %v3154
      %v3308 = vmul.f32 %v2900, %v3159
      %v3309 = vmul.f32 %v2901, %v3164
      %v3310 = vmul.f32 %v2902, %v3169
      %v3311 = vmul.f32 %v2903, %v3174
      %v3312 = vmul.f32 %v2904, %v3179
      %v3313 = vmul.f32 %v2905, %v3184
      %v3314 = vmul.f32 %v2906, %v3189
      %v3315 = vmul.f32 %v2907, %v3194
      %v3316 = vmul.f32 %v2908, %v3199
      %v3317 = vmul.f32 %v2909, %v3204
      %v3318 = vmul.f32 %v2910, %v3209
      %v3319 = vmul.f32 %v2911, %v3214
      %v3320 = vmul.f32 %v2912, %v3219
      %v3321 = vmul.f32 %v2913, %v3224
      %v3322 = vmul.f32 %v2914, %v3229
      %v3323 = vmul.f32 %v2915, %v3234
      %v3324 = vmul.f32 %v2916, %v3239
      %v3325 = vmul.f32 %v2917, %v3244
      %v3326 = vmul.f32 %v2918, %v3249
      %v3327 = vmul.f32 %v2919, %v3254
      %v3328 = vmul.f32 %v2920, %v3259
      %v3329 = vld [vmem:[%s10] sm:$0x1]
      %v3331 = vperm.slane %v3329, 0
      %v3333 = vpack.c.bf16 %v3262, %v3261
      %v3334 = vpack.c.bf16 %v3264, %v3263
      %v3335 = vpack.c.bf16 %v3266, %v3265
      %v3336 = vpack.c.bf16 %v3268, %v3267
      %v3337 = vpack.c.bf16 %v3270, %v3269
      %v3338 = vpack.c.bf16 %v3272, %v3271
      %v3339 = vpack.c.bf16 %v3274, %v3273
      %v3340 = vpack.c.bf16 %v3276, %v3275
      %v3341 = vpack.c.bf16 %v3278, %v3277
      %v3342 = vpack.c.bf16 %v3280, %v3279
      %v3343 = vpack.c.bf16 %v3282, %v3281
      %v3344 = vpack.c.bf16 %v3284, %v3283
      %v3345 = vpack.c.bf16 %v3286, %v3285
      %v3346 = vpack.c.bf16 %v3288, %v3287
      %v3347 = vpack.c.bf16 %v3290, %v3289
      %v3348 = vpack.c.bf16 %v3292, %v3291
      %v3349 = vpack.c.bf16 %v3294, %v3293
      %v3350 = vpack.c.bf16 %v3296, %v3295
      %v3351 = vpack.c.bf16 %v3298, %v3297
      %v3352 = vpack.c.bf16 %v3300, %v3299
      %v3353 = vpack.c.bf16 %v3302, %v3301
      %v3354 = vpack.c.bf16 %v3304, %v3303
      %v3355 = vpack.c.bf16 %v3306, %v3305
      %v3356 = vpack.c.bf16 %v3308, %v3307
      %v3357 = vpack.c.bf16 %v3310, %v3309
      %v3358 = vpack.c.bf16 %v3312, %v3311
      %v3359 = vpack.c.bf16 %v3314, %v3313
      %v3360 = vpack.c.bf16 %v3316, %v3315
      %v3361 = vpack.c.bf16 %v3318, %v3317
      %v3362 = vpack.c.bf16 %v3320, %v3319
      %v3363 = vpack.c.bf16 %v3321, %v3321
      %v3364 = vld [vmem:[%s9] sm:$0xf]
      %v3365 = vld [vmem:[%s9 + $0x4] sm:$0xf]
      %v3366 = vld [vmem:[%s9 + $0x8] sm:$0xf]
      %v3367 = vld [vmem:[%s9 + $0xc] sm:$0xf]
      %v3368 = vld [vmem:[%s9 + $0x10] sm:$0xf]
      %v3369 = vld [vmem:[%s9 + $0x14] sm:$0xf]
      %v3370 = vld [vmem:[%s9 + $0x18] sm:$0xf]
      %v3371 = vld [vmem:[%s9 + $0x1c] sm:$0xf]
      %v3372 = vld [vmem:[%s9 + $0x20] sm:$0xf]
      %v3373 = vld [vmem:[%s9 + $0x24] sm:$0xf]
      %v3374 = vld [vmem:[%s9 + $0x28] sm:$0xf]
      %v3375 = vld [vmem:[%s9 + $0x2c] sm:$0xf]
      %v3376 = vld [vmem:[%s9 + $0x30] sm:$0xf]
      %v3377 = vld [vmem:[%s9 + $0x34] sm:$0xf]
      %v3378 = vld [vmem:[%s9 + $0x38] sm:$0xf]
      %v3379 = vld [vmem:[%s9 + $0x3c] sm:$0xf]
      %vm3380 = vsmask.f32 4352
      %v3382 = vshrl.u32 %v3333, 16
      %v3384 = vrot.slane %v3382, 3
      %v3385 = vshll.u32 %v3333, 16
      %v3387 = vrot.slane %v3385, 4
      %v3388 = vor.u32 %v3384, %v3387
      %v3390 = vshrl.u32 %v3334, 16
      %v3392 = vrot.slane %v3390, 3
      %v3393 = vshll.u32 %v3334, 16
      %v3395 = vrot.slane %v3393, 4
      %v3396 = vor.u32 %v3392, %v3395
      %v3397 = vsel %vm3380, %v3388, %v3396
      %v3399 = vshrl.u32 %v3335, 16
      %v3401 = vrot.slane %v3399, 3
      %v3402 = vshll.u32 %v3335, 16
      %v3404 = vrot.slane %v3402, 4
      %v3405 = vor.u32 %v3401, %v3404
      %v3406 = vsel %vm3380, %v3396, %v3405
      %v3408 = vshrl.u32 %v3336, 16
      %v3410 = vrot.slane %v3408, 3
      %v3411 = vshll.u32 %v3336, 16
      %v3413 = vrot.slane %v3411, 4
      %v3414 = vor.u32 %v3410, %v3413
      %v3415 = vsel %vm3380, %v3405, %v3414
      %v3417 = vshrl.u32 %v3337, 16
      %v3419 = vrot.slane %v3417, 3
      %v3420 = vshll.u32 %v3337, 16
      %v3422 = vrot.slane %v3420, 4
      %v3423 = vor.u32 %v3419, %v3422
      %v3424 = vsel %vm3380, %v3414, %v3423
      %v3426 = vshrl.u32 %v3338, 16
      %v3428 = vrot.slane %v3426, 3
      %v3429 = vshll.u32 %v3338, 16
      %v3431 = vrot.slane %v3429, 4
      %v3432 = vor.u32 %v3428, %v3431
      %v3433 = vsel %vm3380, %v3423, %v3432
      %v3435 = vshrl.u32 %v3339, 16
      %v3437 = vrot.slane %v3435, 3
      %v3438 = vshll.u32 %v3339, 16
      %v3440 = vrot.slane %v3438, 4
      %v3441 = vor.u32 %v3437, %v3440
      %v3442 = vsel %vm3380, %v3432, %v3441
      %v3444 = vshrl.u32 %v3340, 16
      %v3446 = vrot.slane %v3444, 3
      %v3447 = vshll.u32 %v3340, 16
      %v3449 = vrot.slane %v3447, 4
      %v3450 = vor.u32 %v3446, %v3449
      %v3451 = vsel %vm3380, %v3441, %v3450
      %v3453 = vshrl.u32 %v3341, 16
      %v3455 = vrot.slane %v3453, 3
      %v3456 = vshll.u32 %v3341, 16
      %v3458 = vrot.slane %v3456, 4
      %v3459 = vor.u32 %v3455, %v3458
      %v3460 = vsel %vm3380, %v3450, %v3459
      %v3462 = vshrl.u32 %v3342, 16
      %v3464 = vrot.slane %v3462, 3
      %v3465 = vshll.u32 %v3342, 16
      %v3467 = vrot.slane %v3465, 4
      %v3468 = vor.u32 %v3464, %v3467
      %v3469 = vsel %vm3380, %v3459, %v3468
      %v3471 = vshrl.u32 %v3343, 16
      %v3473 = vrot.slane %v3471, 3
      %v3474 = vshll.u32 %v3343, 16
      %v3476 = vrot.slane %v3474, 4
      %v3477 = vor.u32 %v3473, %v3476
      %v3478 = vsel %vm3380, %v3468, %v3477
      %v3480 = vshrl.u32 %v3344, 16
      %v3482 = vrot.slane %v3480, 3
      %v3483 = vshll.u32 %v3344, 16
      %v3485 = vrot.slane %v3483, 4
      %v3486 = vor.u32 %v3482, %v3485
      %v3487 = vsel %vm3380, %v3477, %v3486
      %v3489 = vshrl.u32 %v3345, 16
      %v3491 = vrot.slane %v3489, 3
      %v3492 = vshll.u32 %v3345, 16
      %v3494 = vrot.slane %v3492, 4
      %v3495 = vor.u32 %v3491, %v3494
      %v3496 = vsel %vm3380, %v3486, %v3495
      %v3498 = vshrl.u32 %v3346, 16
      %v3500 = vrot.slane %v3498, 3
      %v3501 = vshll.u32 %v3346, 16
      %v3503 = vrot.slane %v3501, 4
      %v3504 = vor.u32 %v3500, %v3503
      %v3505 = vsel %vm3380, %v3495, %v3504
      %v3507 = vshrl.u32 %v3347, 16
      %v3509 = vrot.slane %v3507, 3
      %v3510 = vshll.u32 %v3347, 16
      %v3512 = vrot.slane %v3510, 4
      %v3513 = vor.u32 %v3509, %v3512
      %v3514 = vsel %vm3380, %v3504, %v3513
      %v3516 = vshrl.u32 %v3348, 16
      %v3518 = vrot.slane %v3516, 3
      %v3519 = vshll.u32 %v3348, 16
      %v3521 = vrot.slane %v3519, 4
      %v3522 = vor.u32 %v3518, %v3521
      %v3523 = vsel %vm3380, %v3513, %v3522
      %v3525 = vshrl.u32 %v3349, 16
      %v3527 = vrot.slane %v3525, 3
      %v3528 = vshll.u32 %v3349, 16
      %v3530 = vrot.slane %v3528, 4
      %v3531 = vor.u32 %v3527, %v3530
      %v3532 = vsel %vm3380, %v3522, %v3531
      %v3534 = vshrl.u32 %v3350, 16
      %v3536 = vrot.slane %v3534, 3
      %v3537 = vshll.u32 %v3350, 16
      %v3539 = vrot.slane %v3537, 4
      %v3540 = vor.u32 %v3536, %v3539
      %v3541 = vsel %vm3380, %v3531, %v3540
      %v3543 = vshrl.u32 %v3351, 16
      %v3545 = vrot.slane %v3543, 3
      %v3546 = vshll.u32 %v3351, 16
      %v3548 = vrot.slane %v3546, 4
      %v3549 = vor.u32 %v3545, %v3548
      %v3550 = vsel %vm3380, %v3540, %v3549
      %v3552 = vshrl.u32 %v3352, 16
      %v3554 = vrot.slane %v3552, 3
      %v3555 = vshll.u32 %v3352, 16
      %v3557 = vrot.slane %v3555, 4
      %v3558 = vor.u32 %v3554, %v3557
      %v3559 = vsel %vm3380, %v3549, %v3558
      %v3561 = vshrl.u32 %v3353, 16
      %v3563 = vrot.slane %v3561, 3
      %v3564 = vshll.u32 %v3353, 16
      %v3566 = vrot.slane %v3564, 4
      %v3567 = vor.u32 %v3563, %v3566
      %v3568 = vsel %vm3380, %v3558, %v3567
      %v3570 = vshrl.u32 %v3354, 16
      %v3572 = vrot.slane %v3570, 3
      %v3573 = vshll.u32 %v3354, 16
      %v3575 = vrot.slane %v3573, 4
      %v3576 = vor.u32 %v3572, %v3575
      %v3577 = vsel %vm3380, %v3567, %v3576
      %v3579 = vshrl.u32 %v3355, 16
      %v3581 = vrot.slane %v3579, 3
      %v3582 = vshll.u32 %v3355, 16
      %v3584 = vrot.slane %v3582, 4
      %v3585 = vor.u32 %v3581, %v3584
      %v3586 = vsel %vm3380, %v3576, %v3585
      %v3588 = vshrl.u32 %v3356, 16
      %v3590 = vrot.slane %v3588, 3
      %v3591 = vshll.u32 %v3356, 16
      %v3593 = vrot.slane %v3591, 4
      %v3594 = vor.u32 %v3590, %v3593
      %v3595 = vsel %vm3380, %v3585, %v3594
      %v3597 = vshrl.u32 %v3357, 16
      %v3599 = vrot.slane %v3597, 3
      %v3600 = vshll.u32 %v3357, 16
      %v3602 = vrot.slane %v3600, 4
      %v3603 = vor.u32 %v3599, %v3602
      %v3604 = vsel %vm3380, %v3594, %v3603
      %v3606 = vshrl.u32 %v3358, 16
      %v3608 = vrot.slane %v3606, 3
      %v3609 = vshll.u32 %v3358, 16
      %v3611 = vrot.slane %v3609, 4
      %v3612 = vor.u32 %v3608, %v3611
      %v3613 = vsel %vm3380, %v3603, %v3612
      %v3615 = vshrl.u32 %v3359, 16
      %v3617 = vrot.slane %v3615, 3
      %v3618 = vshll.u32 %v3359, 16
      %v3620 = vrot.slane %v3618, 4
      %v3621 = vor.u32 %v3617, %v3620
      %v3622 = vsel %vm3380, %v3612, %v3621
      %v3624 = vshrl.u32 %v3360, 16
      %v3626 = vrot.slane %v3624, 3
      %v3627 = vshll.u32 %v3360, 16
      %v3629 = vrot.slane %v3627, 4
      %v3630 = vor.u32 %v3626, %v3629
      %v3631 = vsel %vm3380, %v3621, %v3630
      %v3633 = vshrl.u32 %v3361, 16
      %v3635 = vrot.slane %v3633, 3
      %v3636 = vshll.u32 %v3361, 16
      %v3638 = vrot.slane %v3636, 4
      %v3639 = vor.u32 %v3635, %v3638
      %v3640 = vsel %vm3380, %v3630, %v3639
      %v3642 = vshrl.u32 %v3362, 16
      %v3644 = vrot.slane %v3642, 3
      %v3645 = vshll.u32 %v3362, 16
      %v3647 = vrot.slane %v3645, 4
      %v3648 = vor.u32 %v3644, %v3647
      %v3649 = vsel %vm3380, %v3639, %v3648
      %v3651 = vshrl.u32 %v3363, 16
      %v3653 = vrot.slane %v3651, 3
      %v3654 = vshll.u32 %v3363, 16
      %v3656 = vrot.slane %v3654, 4
      %v3657 = vor.u32 %v3653, %v3656
      %v3658 = vsel %vm3380, %v3648, %v3657
      %v3705 = vunpack.c.l.b16 %v3364
      %v3706 = vunpack.c.l.b16 %v3365
      %v3707 = vunpack.c.l.b16 %v3366
      %v3708 = vunpack.c.l.b16 %v3367
      %v3709 = vunpack.c.l.b16 %v3368
      %v3710 = vunpack.c.l.b16 %v3369
      %v3711 = vunpack.c.l.b16 %v3370
      %v3712 = vunpack.c.l.b16 %v3371
      %v3713 = vunpack.c.l.b16 %v3372
      %v3714 = vunpack.c.l.b16 %v3373
      %v3715 = vunpack.c.l.b16 %v3374
      %v3716 = vunpack.c.l.b16 %v3375
      %v3717 = vunpack.c.l.b16 %v3376
      %v3718 = vunpack.c.l.b16 %v3377
      %v3719 = vunpack.c.l.b16 %v3378
      %v3720 = vunpack.c.l.b16 %v3379
      %v3721 = vpack.c.b16 %v3706, %v3705
      %v3722 = vpack.c.b16 %v3708, %v3707
      %v3723 = vpack.c.b16 %v3710, %v3709
      %v3724 = vpack.c.b16 %v3712, %v3711
      %v3725 = vpack.c.b16 %v3714, %v3713
      %v3726 = vpack.c.b16 %v3716, %v3715
      %v3727 = vpack.c.b16 %v3718, %v3717
      %v3728 = vpack.c.b16 %v3720, %v3719
      %3737 = vmatpush.bf16.msra.mxu0 %v3728
      %3738 = vmatpush.bf16.msra.mxu0 %v3727
      %3739 = vmatpush.bf16.msra.mxu0 %v3726
      %3740 = vmatpush.bf16.msra.mxu0 %v3725
      %3741 = vmatpush.bf16.msra.mxu0 %v3724
      %3742 = vmatpush.bf16.msra.mxu0 %v3723
      %3743 = vmatpush.bf16.msra.mxu0 %v3722
      %3744 = vmatpush.bf16.msra.mxu0 %v3721
      %3745 = vmatmul.bf16.gmra.mxu0 %v3397
      %v3746 = vpop.f32.mrf.mxu0
      %v3747 = vpop.f32.mrf.mxu0
      %3748 = vmatmul.bf16.gmra.mxu0 %v3406
      %v3749 = vpop.f32.mrf.mxu0
      %v3750 = vadd.f32 0.0, %v3749
      %v3751 = vpop.f32.mrf.mxu0
      %v3752 = vadd.f32 0.0, %v3751
      %3753 = vmatmul.bf16.gmra.mxu0 %v3415
      %v3754 = vpop.f32.mrf.mxu0
      %v3755 = vadd.f32 0.0, %v3754
      %v3756 = vpop.f32.mrf.mxu0
      %v3757 = vadd.f32 0.0, %v3756
      %3758 = vmatmul.bf16.gmra.mxu0 %v3424
      %v3759 = vpop.f32.mrf.mxu0
      %v3760 = vadd.f32 0.0, %v3759
      %v3761 = vpop.f32.mrf.mxu0
      %v3762 = vadd.f32 0.0, %v3761
      %3763 = vmatmul.bf16.gmra.mxu0 %v3433
      %v3764 = vpop.f32.mrf.mxu0
      %v3765 = vadd.f32 0.0, %v3764
      %v3766 = vpop.f32.mrf.mxu0
      %v3767 = vadd.f32 0.0, %v3766
      %3768 = vmatmul.bf16.gmra.mxu0 %v3442
      %v3769 = vpop.f32.mrf.mxu0
      %v3770 = vadd.f32 0.0, %v3769
      %v3771 = vpop.f32.mrf.mxu0
      %v3772 = vadd.f32 0.0, %v3771
      %3773 = vmatmul.bf16.gmra.mxu0 %v3451
      %v3774 = vpop.f32.mrf.mxu0
      %v3775 = vadd.f32 0.0, %v3774
      %v3776 = vpop.f32.mrf.mxu0
      %v3777 = vadd.f32 0.0, %v3776
      %3778 = vmatmul.bf16.gmra.mxu0 %v3460
      %v3779 = vpop.f32.mrf.mxu0
      %v3780 = vadd.f32 0.0, %v3779
      %v3781 = vpop.f32.mrf.mxu0
      %v3782 = vadd.f32 0.0, %v3781
      %3783 = vmatmul.bf16.gmra.mxu0 %v3469
      %v3784 = vpop.f32.mrf.mxu0
      %v3785 = vadd.f32 0.0, %v3784
      %v3786 = vpop.f32.mrf.mxu0
      %v3787 = vadd.f32 0.0, %v3786
      %3788 = vmatmul.bf16.gmra.mxu0 %v3478
      %v3789 = vpop.f32.mrf.mxu0
      %v3790 = vadd.f32 0.0, %v3789
      %v3791 = vpop.f32.mrf.mxu0
      %v3792 = vadd.f32 0.0, %v3791
      %3793 = vmatmul.bf16.gmra.mxu0 %v3487
      %v3794 = vpop.f32.mrf.mxu0
      %v3795 = vadd.f32 0.0, %v3794
      %v3796 = vpop.f32.mrf.mxu0
      %v3797 = vadd.f32 0.0, %v3796
      %3798 = vmatmul.bf16.gmra.mxu0 %v3496
      %v3799 = vpop.f32.mrf.mxu0
      %v3800 = vadd.f32 0.0, %v3799
      %v3801 = vpop.f32.mrf.mxu0
      %v3802 = vadd.f32 0.0, %v3801
      %3803 = vmatmul.bf16.gmra.mxu0 %v3505
      %v3804 = vpop.f32.mrf.mxu0
      %v3805 = vadd.f32 0.0, %v3804
      %v3806 = vpop.f32.mrf.mxu0
      %v3807 = vadd.f32 0.0, %v3806
      %3808 = vmatmul.bf16.gmra.mxu0 %v3514
      %v3809 = vpop.f32.mrf.mxu0
      %v3810 = vadd.f32 0.0, %v3809
      %v3811 = vpop.f32.mrf.mxu0
      %v3812 = vadd.f32 0.0, %v3811
      %3813 = vmatmul.bf16.gmra.mxu0 %v3523
      %v3814 = vpop.f32.mrf.mxu0
      %v3815 = vadd.f32 0.0, %v3814
      %v3816 = vpop.f32.mrf.mxu0
      %v3817 = vadd.f32 0.0, %v3816
      %3818 = vmatmul.bf16.gmra.mxu0 %v3532
      %v3819 = vpop.f32.mrf.mxu0
      %v3820 = vadd.f32 0.0, %v3819
      %v3821 = vpop.f32.mrf.mxu0
      %v3822 = vadd.f32 0.0, %v3821
      %3823 = vmatmul.bf16.gmra.mxu0 %v3541
      %v3824 = vpop.f32.mrf.mxu0
      %v3825 = vadd.f32 0.0, %v3824
      %v3826 = vpop.f32.mrf.mxu0
      %v3827 = vadd.f32 0.0, %v3826
      %3828 = vmatmul.bf16.gmra.mxu0 %v3550
      %v3829 = vpop.f32.mrf.mxu0
      %v3830 = vadd.f32 0.0, %v3829
      %v3831 = vpop.f32.mrf.mxu0
      %v3832 = vadd.f32 0.0, %v3831
      %3833 = vmatmul.bf16.gmra.mxu0 %v3559
      %v3834 = vpop.f32.mrf.mxu0
      %v3835 = vadd.f32 0.0, %v3834
      %v3836 = vpop.f32.mrf.mxu0
      %v3837 = vadd.f32 0.0, %v3836
      %3838 = vmatmul.bf16.gmra.mxu0 %v3568
      %v3839 = vpop.f32.mrf.mxu0
      %v3840 = vadd.f32 0.0, %v3839
      %v3841 = vpop.f32.mrf.mxu0
      %v3842 = vadd.f32 0.0, %v3841
      %3843 = vmatmul.bf16.gmra.mxu0 %v3577
      %v3844 = vpop.f32.mrf.mxu0
      %v3845 = vadd.f32 0.0, %v3844
      %v3846 = vpop.f32.mrf.mxu0
      %v3847 = vadd.f32 0.0, %v3846
      %3848 = vmatmul.bf16.gmra.mxu0 %v3586
      %v3849 = vpop.f32.mrf.mxu0
      %v3850 = vadd.f32 0.0, %v3849
      %v3851 = vpop.f32.mrf.mxu0
      %v3852 = vadd.f32 0.0, %v3851
      %3853 = vmatmul.bf16.gmra.mxu0 %v3595
      %v3854 = vpop.f32.mrf.mxu0
      %v3855 = vadd.f32 0.0, %v3854
      %v3856 = vpop.f32.mrf.mxu0
      %v3857 = vadd.f32 0.0, %v3856
      %3858 = vmatmul.bf16.gmra.mxu0 %v3604
      %v3859 = vpop.f32.mrf.mxu0
      %v3860 = vadd.f32 0.0, %v3859
      %v3861 = vpop.f32.mrf.mxu0
      %v3862 = vadd.f32 0.0, %v3861
      %3863 = vmatmul.bf16.gmra.mxu0 %v3613
      %v3864 = vpop.f32.mrf.mxu0
      %v3865 = vadd.f32 0.0, %v3864
      %v3866 = vpop.f32.mrf.mxu0
      %v3867 = vadd.f32 0.0, %v3866
      %3868 = vmatmul.bf16.gmra.mxu0 %v3622
      %v3869 = vpop.f32.mrf.mxu0
      %v3870 = vadd.f32 0.0, %v3869
      %v3871 = vpop.f32.mrf.mxu0
      %v3872 = vadd.f32 0.0, %v3871
      %3873 = vmatmul.bf16.gmra.mxu0 %v3631
      %v3874 = vpop.f32.mrf.mxu0
      %v3875 = vadd.f32 0.0, %v3874
      %v3876 = vpop.f32.mrf.mxu0
      %v3877 = vadd.f32 0.0, %v3876
      %3878 = vmatmul.bf16.gmra.mxu0 %v3640
      %v3879 = vpop.f32.mrf.mxu0
      %v3880 = vadd.f32 0.0, %v3879
      %v3881 = vpop.f32.mrf.mxu0
      %v3882 = vadd.f32 0.0, %v3881
      %3883 = vmatmul.bf16.gmra.mxu0 %v3649
      %v3884 = vpop.f32.mrf.mxu0
      %v3885 = vadd.f32 0.0, %v3884
      %v3886 = vpop.f32.mrf.mxu0
      %v3887 = vadd.f32 0.0, %v3886
      %3888 = vmatmul.bf16.gmra.mxu0 %v3658
      %v3889 = vpop.f32.mrf.mxu0
      %v3890 = vpop.f32.mrf.mxu0
      %3891 = vdwg.mxu0
      %v3892 = vadd.f32 %v3331, %v3750
      %v3893 = vadd.f32 %v3331, %v3752
      %v3894 = vadd.f32 %v3331, %v3755
      %v3895 = vadd.f32 %v3331, %v3757
      %v3896 = vadd.f32 %v3331, %v3760
      %v3897 = vadd.f32 %v3331, %v3762
      %v3898 = vadd.f32 %v3331, %v3765
      %v3899 = vadd.f32 %v3331, %v3767
      %v3900 = vadd.f32 %v3331, %v3770
      %v3901 = vadd.f32 %v3331, %v3772
      %v3902 = vadd.f32 %v3331, %v3775
      %v3903 = vadd.f32 %v3331, %v3777
      %v3904 = vadd.f32 %v3331, %v3780
      %v3905 = vadd.f32 %v3331, %v3782
      %v3906 = vadd.f32 %v3331, %v3785
      %v3907 = vadd.f32 %v3331, %v3787
      %v3908 = vadd.f32 %v3331, %v3790
      %v3909 = vadd.f32 %v3331, %v3792
      %v3910 = vadd.f32 %v3331, %v3795
      %v3911 = vadd.f32 %v3331, %v3797
      %v3912 = vadd.f32 %v3331, %v3800
      %v3913 = vadd.f32 %v3331, %v3802
      %v3914 = vadd.f32 %v3331, %v3805
      %v3915 = vadd.f32 %v3331, %v3807
      %v3916 = vadd.f32 %v3331, %v3810
      %v3917 = vadd.f32 %v3331, %v3812
      %v3918 = vadd.f32 %v3331, %v3815
      %v3919 = vadd.f32 %v3331, %v3817
      %v3920 = vadd.f32 %v3331, %v3820
      %v3921 = vadd.f32 %v3331, %v3822
      %v3922 = vadd.f32 %v3331, %v3825
      %v3923 = vadd.f32 %v3331, %v3827
      %v3924 = vadd.f32 %v3331, %v3830
      %v3925 = vadd.f32 %v3331, %v3832
      %v3926 = vadd.f32 %v3331, %v3835
      %v3927 = vadd.f32 %v3331, %v3837
      %v3928 = vadd.f32 %v3331, %v3840
      %v3929 = vadd.f32 %v3331, %v3842
      %v3930 = vadd.f32 %v3331, %v3845
      %v3931 = vadd.f32 %v3331, %v3847
      %v3932 = vadd.f32 %v3331, %v3850
      %v3933 = vadd.f32 %v3331, %v3852
      %v3934 = vadd.f32 %v3331, %v3855
      %v3935 = vadd.f32 %v3331, %v3857
      %v3936 = vadd.f32 %v3331, %v3860
      %v3937 = vadd.f32 %v3331, %v3862
      %v3938 = vadd.f32 %v3331, %v3865
      %v3939 = vadd.f32 %v3331, %v3867
      %v3940 = vadd.f32 %v3331, %v3870
      %v3941 = vadd.f32 %v3331, %v3872
      %v3942 = vadd.f32 %v3331, %v3875
      %v3943 = vadd.f32 %v3331, %v3877
      %v3944 = vadd.f32 %v3331, %v3880
      %v3945 = vadd.f32 %v3331, %v3882
      %v3946 = vadd.f32 %v3331, %v3885
      %v3947 = vadd.f32 %v3331, %v3887
      %v3948 = vpack.c.bf16 %v3263, %v3262
      %v3949 = vpack.c.bf16 %v3265, %v3264
      %v3950 = vpack.c.bf16 %v3267, %v3266
      %v3951 = vpack.c.bf16 %v3269, %v3268
      %v3952 = vpack.c.bf16 %v3271, %v3270
      %v3953 = vpack.c.bf16 %v3273, %v3272
      %v3954 = vpack.c.bf16 %v3275, %v3274
      %v3955 = vpack.c.bf16 %v3277, %v3276
      %v3956 = vpack.c.bf16 %v3279, %v3278
      %v3957 = vpack.c.bf16 %v3281, %v3280
      %v3958 = vpack.c.bf16 %v3283, %v3282
      %v3959 = vpack.c.bf16 %v3285, %v3284
      %v3960 = vpack.c.bf16 %v3287, %v3286
      %v3961 = vpack.c.bf16 %v3289, %v3288
      %v3962 = vpack.c.bf16 %v3291, %v3290
      %v3963 = vpack.c.bf16 %v3293, %v3292
      %v3964 = vpack.c.bf16 %v3295, %v3294
      %v3965 = vpack.c.bf16 %v3297, %v3296
      %v3966 = vpack.c.bf16 %v3299, %v3298
      %v3967 = vpack.c.bf16 %v3301, %v3300
      %v3968 = vpack.c.bf16 %v3303, %v3302
      %v3969 = vpack.c.bf16 %v3305, %v3304
      %v3970 = vpack.c.bf16 %v3307, %v3306
      %v3971 = vpack.c.bf16 %v3309, %v3308
      %v3972 = vpack.c.bf16 %v3311, %v3310
      %v3973 = vpack.c.bf16 %v3313, %v3312
      %v3974 = vpack.c.bf16 %v3315, %v3314
      %v3975 = vpack.c.bf16 %v3317, %v3316
      %v3976 = vpack.c.bf16 %v3319, %v3318
      %v3977 = vpack.c.bf16 %v3321, %v3320
      %s3978 = scalar_lea.vmem %s9, 64
      %v3979 = vld [vmem:[%s3978] sm:$0xf]
      %v3980 = vld [vmem:[%s3978 + $0x4] sm:$0xf]
      %v3981 = vld [vmem:[%s3978 + $0x8] sm:$0xf]
      %v3982 = vld [vmem:[%s3978 + $0xc] sm:$0xf]
      %v3983 = vld [vmem:[%s3978 + $0x10] sm:$0xf]
      %v3984 = vld [vmem:[%s3978 + $0x14] sm:$0xf]
      %v3985 = vld [vmem:[%s3978 + $0x18] sm:$0xf]
      %v3986 = vld [vmem:[%s3978 + $0x1c] sm:$0xf]
      %v3987 = vld [vmem:[%s3978 + $0x20] sm:$0xf]
      %v3988 = vld [vmem:[%s3978 + $0x24] sm:$0xf]
      %v3989 = vld [vmem:[%s3978 + $0x28] sm:$0xf]
      %v3990 = vld [vmem:[%s3978 + $0x2c] sm:$0xf]
      %v3991 = vld [vmem:[%s3978 + $0x30] sm:$0xf]
      %v3992 = vld [vmem:[%s3978 + $0x34] sm:$0xf]
      %v3993 = vld [vmem:[%s3978 + $0x38] sm:$0xf]
      %v3994 = vld [vmem:[%s3978 + $0x3c] sm:$0xf]
      %v4011 = vunpack.c.l.b16 %v3979
      %v4012 = vunpack.c.l.b16 %v3980
      %v4013 = vunpack.c.l.b16 %v3981
      %v4014 = vunpack.c.l.b16 %v3982
      %v4015 = vunpack.c.l.b16 %v3983
      %v4016 = vunpack.c.l.b16 %v3984
      %v4017 = vunpack.c.l.b16 %v3985
      %v4018 = vunpack.c.l.b16 %v3986
      %v4019 = vunpack.c.l.b16 %v3987
      %v4020 = vunpack.c.l.b16 %v3988
      %v4021 = vunpack.c.l.b16 %v3989
      %v4022 = vunpack.c.l.b16 %v3990
      %v4023 = vunpack.c.l.b16 %v3991
      %v4024 = vunpack.c.l.b16 %v3992
      %v4025 = vunpack.c.l.b16 %v3993
      %v4026 = vunpack.c.l.b16 %v3994
      %v4027 = vpack.c.b16 %v4012, %v4011
      %v4028 = vpack.c.b16 %v4014, %v4013
      %v4029 = vpack.c.b16 %v4016, %v4015
      %v4030 = vpack.c.b16 %v4018, %v4017
      %v4031 = vpack.c.b16 %v4020, %v4019
      %v4032 = vpack.c.b16 %v4022, %v4021
      %v4033 = vpack.c.b16 %v4024, %v4023
      %v4034 = vpack.c.b16 %v4026, %v4025
      %4043 = vmatpush.bf16.msra.mxu0 %v4034
      %4044 = vmatpush.bf16.msra.mxu0 %v4033
      %4045 = vmatpush.bf16.msra.mxu0 %v4032
      %4046 = vmatpush.bf16.msra.mxu0 %v4031
      %4047 = vmatpush.bf16.msra.mxu0 %v4030
      %4048 = vmatpush.bf16.msra.mxu0 %v4029
      %4049 = vmatpush.bf16.msra.mxu0 %v4028
      %4050 = vmatpush.bf16.msra.mxu0 %v4027
      %4051 = vmatmul.bf16.gmra.mxu0 %v3948
      %v4052 = vpop.f32.mrf.mxu0
      %v4053 = vpop.f32.mrf.mxu0
      %4054 = vmatmul.bf16.gmra.mxu0 %v3949
      %v4055 = vpop.f32.mrf.mxu0
      %v4056 = vadd.f32 0.0, %v4055
      %v4057 = vpop.f32.mrf.mxu0
      %v4058 = vadd.f32 0.0, %v4057
      %4059 = vmatmul.bf16.gmra.mxu0 %v3950
      %v4060 = vpop.f32.mrf.mxu0
      %v4061 = vadd.f32 0.0, %v4060
      %v4062 = vpop.f32.mrf.mxu0
      %v4063 = vadd.f32 0.0, %v4062
      %4064 = vmatmul.bf16.gmra.mxu0 %v3951
      %v4065 = vpop.f32.mrf.mxu0
      %v4066 = vadd.f32 0.0, %v4065
      %v4067 = vpop.f32.mrf.mxu0
      %v4068 = vadd.f32 0.0, %v4067
      %4069 = vmatmul.bf16.gmra.mxu0 %v3952
      %v4070 = vpop.f32.mrf.mxu0
      %v4071 = vadd.f32 0.0, %v4070
      %v4072 = vpop.f32.mrf.mxu0
      %v4073 = vadd.f32 0.0, %v4072
      %4074 = vmatmul.bf16.gmra.mxu0 %v3953
      %v4075 = vpop.f32.mrf.mxu0
      %v4076 = vadd.f32 0.0, %v4075
      %v4077 = vpop.f32.mrf.mxu0
      %v4078 = vadd.f32 0.0, %v4077
      %4079 = vmatmul.bf16.gmra.mxu0 %v3954
      %v4080 = vpop.f32.mrf.mxu0
      %v4081 = vadd.f32 0.0, %v4080
      %v4082 = vpop.f32.mrf.mxu0
      %v4083 = vadd.f32 0.0, %v4082
      %4084 = vmatmul.bf16.gmra.mxu0 %v3955
      %v4085 = vpop.f32.mrf.mxu0
      %v4086 = vadd.f32 0.0, %v4085
      %v4087 = vpop.f32.mrf.mxu0
      %v4088 = vadd.f32 0.0, %v4087
      %4089 = vmatmul.bf16.gmra.mxu0 %v3956
      %v4090 = vpop.f32.mrf.mxu0
      %v4091 = vadd.f32 0.0, %v4090
      %v4092 = vpop.f32.mrf.mxu0
      %v4093 = vadd.f32 0.0, %v4092
      %4094 = vmatmul.bf16.gmra.mxu0 %v3957
      %v4095 = vpop.f32.mrf.mxu0
      %v4096 = vadd.f32 0.0, %v4095
      %v4097 = vpop.f32.mrf.mxu0
      %v4098 = vadd.f32 0.0, %v4097
      %4099 = vmatmul.bf16.gmra.mxu0 %v3958
      %v4100 = vpop.f32.mrf.mxu0
      %v4101 = vadd.f32 0.0, %v4100
      %v4102 = vpop.f32.mrf.mxu0
      %v4103 = vadd.f32 0.0, %v4102
      %4104 = vmatmul.bf16.gmra.mxu0 %v3959
      %v4105 = vpop.f32.mrf.mxu0
      %v4106 = vadd.f32 0.0, %v4105
      %v4107 = vpop.f32.mrf.mxu0
      %v4108 = vadd.f32 0.0, %v4107
      %4109 = vmatmul.bf16.gmra.mxu0 %v3960
      %v4110 = vpop.f32.mrf.mxu0
      %v4111 = vadd.f32 0.0, %v4110
      %v4112 = vpop.f32.mrf.mxu0
      %v4113 = vadd.f32 0.0, %v4112
      %4114 = vmatmul.bf16.gmra.mxu0 %v3961
      %v4115 = vpop.f32.mrf.mxu0
      %v4116 = vadd.f32 0.0, %v4115
      %v4117 = vpop.f32.mrf.mxu0
      %v4118 = vadd.f32 0.0, %v4117
      %4119 = vmatmul.bf16.gmra.mxu0 %v3962
      %v4120 = vpop.f32.mrf.mxu0
      %v4121 = vadd.f32 0.0, %v4120
      %v4122 = vpop.f32.mrf.mxu0
      %v4123 = vadd.f32 0.0, %v4122
      %4124 = vmatmul.bf16.gmra.mxu0 %v3963
      %v4125 = vpop.f32.mrf.mxu0
      %v4126 = vadd.f32 0.0, %v4125
      %v4127 = vpop.f32.mrf.mxu0
      %v4128 = vadd.f32 0.0, %v4127
      %4129 = vmatmul.bf16.gmra.mxu0 %v3964
      %v4130 = vpop.f32.mrf.mxu0
      %v4131 = vadd.f32 0.0, %v4130
      %v4132 = vpop.f32.mrf.mxu0
      %v4133 = vadd.f32 0.0, %v4132
      %4134 = vmatmul.bf16.gmra.mxu0 %v3965
      %v4135 = vpop.f32.mrf.mxu0
      %v4136 = vadd.f32 0.0, %v4135
      %v4137 = vpop.f32.mrf.mxu0
      %v4138 = vadd.f32 0.0, %v4137
      %4139 = vmatmul.bf16.gmra.mxu0 %v3966
      %v4140 = vpop.f32.mrf.mxu0
      %v4141 = vadd.f32 0.0, %v4140
      %v4142 = vpop.f32.mrf.mxu0
      %v4143 = vadd.f32 0.0, %v4142
      %4144 = vmatmul.bf16.gmra.mxu0 %v3967
      %v4145 = vpop.f32.mrf.mxu0
      %v4146 = vadd.f32 0.0, %v4145
      %v4147 = vpop.f32.mrf.mxu0
      %v4148 = vadd.f32 0.0, %v4147
      %4149 = vmatmul.bf16.gmra.mxu0 %v3968
      %v4150 = vpop.f32.mrf.mxu0
      %v4151 = vadd.f32 0.0, %v4150
      %v4152 = vpop.f32.mrf.mxu0
      %v4153 = vadd.f32 0.0, %v4152
      %4154 = vmatmul.bf16.gmra.mxu0 %v3969
      %v4155 = vpop.f32.mrf.mxu0
      %v4156 = vadd.f32 0.0, %v4155
      %v4157 = vpop.f32.mrf.mxu0
      %v4158 = vadd.f32 0.0, %v4157
      %4159 = vmatmul.bf16.gmra.mxu0 %v3970
      %v4160 = vpop.f32.mrf.mxu0
      %v4161 = vadd.f32 0.0, %v4160
      %v4162 = vpop.f32.mrf.mxu0
      %v4163 = vadd.f32 0.0, %v4162
      %4164 = vmatmul.bf16.gmra.mxu0 %v3971
      %v4165 = vpop.f32.mrf.mxu0
      %v4166 = vadd.f32 0.0, %v4165
      %v4167 = vpop.f32.mrf.mxu0
      %v4168 = vadd.f32 0.0, %v4167
      %4169 = vmatmul.bf16.gmra.mxu0 %v3972
      %v4170 = vpop.f32.mrf.mxu0
      %v4171 = vadd.f32 0.0, %v4170
      %v4172 = vpop.f32.mrf.mxu0
      %v4173 = vadd.f32 0.0, %v4172
      %4174 = vmatmul.bf16.gmra.mxu0 %v3973
      %v4175 = vpop.f32.mrf.mxu0
      %v4176 = vadd.f32 0.0, %v4175
      %v4177 = vpop.f32.mrf.mxu0
      %v4178 = vadd.f32 0.0, %v4177
      %4179 = vmatmul.bf16.gmra.mxu0 %v3974
      %v4180 = vpop.f32.mrf.mxu0
      %v4181 = vadd.f32 0.0, %v4180
      %v4182 = vpop.f32.mrf.mxu0
      %v4183 = vadd.f32 0.0, %v4182
      %4184 = vmatmul.bf16.gmra.mxu0 %v3975
      %v4185 = vpop.f32.mrf.mxu0
      %v4186 = vadd.f32 0.0, %v4185
      %v4187 = vpop.f32.mrf.mxu0
      %v4188 = vadd.f32 0.0, %v4187
      %4189 = vmatmul.bf16.gmra.mxu0 %v3976
      %v4190 = vpop.f32.mrf.mxu0
      %v4191 = vadd.f32 0.0, %v4190
      %v4192 = vpop.f32.mrf.mxu0
      %v4193 = vadd.f32 0.0, %v4192
      %4194 = vmatmul.bf16.gmra.mxu0 %v3977
      %v4195 = vpop.f32.mrf.mxu0
      %v4196 = vpop.f32.mrf.mxu0
      %4197 = vdwg.mxu0
      %v4198 = vadd.f32 %v3892, %v4056
      %v4199 = vadd.f32 %v3893, %v4058
      %v4200 = vadd.f32 %v3894, %v4061
      %v4201 = vadd.f32 %v3895, %v4063
      %v4202 = vadd.f32 %v3896, %v4066
      %v4203 = vadd.f32 %v3897, %v4068
      %v4204 = vadd.f32 %v3898, %v4071
      %v4205 = vadd.f32 %v3899, %v4073
      %v4206 = vadd.f32 %v3900, %v4076
      %v4207 = vadd.f32 %v3901, %v4078
      %v4208 = vadd.f32 %v3902, %v4081
      %v4209 = vadd.f32 %v3903, %v4083
      %v4210 = vadd.f32 %v3904, %v4086
      %v4211 = vadd.f32 %v3905, %v4088
      %v4212 = vadd.f32 %v3906, %v4091
      %v4213 = vadd.f32 %v3907, %v4093
      %v4214 = vadd.f32 %v3908, %v4096
      %v4215 = vadd.f32 %v3909, %v4098
      %v4216 = vadd.f32 %v3910, %v4101
      %v4217 = vadd.f32 %v3911, %v4103
      %v4218 = vadd.f32 %v3912, %v4106
      %v4219 = vadd.f32 %v3913, %v4108
      %v4220 = vadd.f32 %v3914, %v4111
      %v4221 = vadd.f32 %v3915, %v4113
      %v4222 = vadd.f32 %v3916, %v4116
      %v4223 = vadd.f32 %v3917, %v4118
      %v4224 = vadd.f32 %v3918, %v4121
      %v4225 = vadd.f32 %v3919, %v4123
      %v4226 = vadd.f32 %v3920, %v4126
      %v4227 = vadd.f32 %v3921, %v4128
      %v4228 = vadd.f32 %v3922, %v4131
      %v4229 = vadd.f32 %v3923, %v4133
      %v4230 = vadd.f32 %v3924, %v4136
      %v4231 = vadd.f32 %v3925, %v4138
      %v4232 = vadd.f32 %v3926, %v4141
      %v4233 = vadd.f32 %v3927, %v4143
      %v4234 = vadd.f32 %v3928, %v4146
      %v4235 = vadd.f32 %v3929, %v4148
      %v4236 = vadd.f32 %v3930, %v4151
      %v4237 = vadd.f32 %v3931, %v4153
      %v4238 = vadd.f32 %v3932, %v4156
      %v4239 = vadd.f32 %v3933, %v4158
      %v4240 = vadd.f32 %v3934, %v4161
      %v4241 = vadd.f32 %v3935, %v4163
      %v4242 = vadd.f32 %v3936, %v4166
      %v4243 = vadd.f32 %v3937, %v4168
      %v4244 = vadd.f32 %v3938, %v4171
      %v4245 = vadd.f32 %v3939, %v4173
      %v4246 = vadd.f32 %v3940, %v4176
      %v4247 = vadd.f32 %v3941, %v4178
      %v4248 = vadd.f32 %v3942, %v4181
      %v4249 = vadd.f32 %v3943, %v4183
      %v4250 = vadd.f32 %v3944, %v4186
      %v4251 = vadd.f32 %v3945, %v4188
      %v4252 = vadd.f32 %v3946, %v4191
      %v4253 = vadd.f32 %v3947, %v4193
      %v4254 = vpack.c.bf16 %v3322, %v3322
      %s4255 = scalar_lea.vmem %s9, 128
      %v4256 = vld [vmem:[%s4255] sm:$0xf]
      %v4257 = vld [vmem:[%s4255 + $0x4] sm:$0xf]
      %v4258 = vld [vmem:[%s4255 + $0x8] sm:$0xf]
      %v4259 = vld [vmem:[%s4255 + $0xc] sm:$0xf]
      %v4260 = vld [vmem:[%s4255 + $0x10] sm:$0xf]
      %v4261 = vld [vmem:[%s4255 + $0x14] sm:$0xf]
      %v4262 = vld [vmem:[%s4255 + $0x18] sm:$0xf]
      %v4263 = vld [vmem:[%s4255 + $0x1c] sm:$0xf]
      %v4264 = vld [vmem:[%s4255 + $0x20] sm:$0xf]
      %v4265 = vld [vmem:[%s4255 + $0x24] sm:$0xf]
      %v4266 = vld [vmem:[%s4255 + $0x28] sm:$0xf]
      %v4267 = vld [vmem:[%s4255 + $0x2c] sm:$0xf]
      %v4268 = vld [vmem:[%s4255 + $0x30] sm:$0xf]
      %v4269 = vld [vmem:[%s4255 + $0x34] sm:$0xf]
      %v4270 = vld [vmem:[%s4255 + $0x38] sm:$0xf]
      %v4271 = vld [vmem:[%s4255 + $0x3c] sm:$0xf]
      %vm4272 = vsmask.f32 7424
      %v4274 = vshrl.u32 %v3948, 16
      %v4276 = vshll.u32 %v3948, 16
      %v4278 = vrot.slane %v4276, 1
      %v4279 = vor.u32 %v4274, %v4278
      %v4281 = vshll.u32 %v3949, 16
      %v4283 = vrot.slane %v4281, 1
      %v4284 = vsel %vm4272, %v4279, %v4283
      %v4285 = vshrl.u32 %v3949, 16
      %v4287 = vor.u32 %v4285, %v4283
      %v4289 = vshll.u32 %v3950, 16
      %v4291 = vrot.slane %v4289, 1
      %v4292 = vsel %vm4272, %v4287, %v4291
      %v4293 = vshrl.u32 %v3950, 16
      %v4295 = vor.u32 %v4293, %v4291
      %v4297 = vshll.u32 %v3951, 16
      %v4299 = vrot.slane %v4297, 1
      %v4300 = vsel %vm4272, %v4295, %v4299
      %v4301 = vshrl.u32 %v3951, 16
      %v4303 = vor.u32 %v4301, %v4299
      %v4305 = vshll.u32 %v3952, 16
      %v4307 = vrot.slane %v4305, 1
      %v4308 = vsel %vm4272, %v4303, %v4307
      %v4309 = vshrl.u32 %v3952, 16
      %v4311 = vor.u32 %v4309, %v4307
      %v4313 = vshll.u32 %v3953, 16
      %v4315 = vrot.slane %v4313, 1
      %v4316 = vsel %vm4272, %v4311, %v4315
      %v4317 = vshrl.u32 %v3953, 16
      %v4319 = vor.u32 %v4317, %v4315
      %v4321 = vshll.u32 %v3954, 16
      %v4323 = vrot.slane %v4321, 1
      %v4324 = vsel %vm4272, %v4319, %v4323
      %v4325 = vshrl.u32 %v3954, 16
      %v4327 = vor.u32 %v4325, %v4323
      %v4329 = vshll.u32 %v3955, 16
      %v4331 = vrot.slane %v4329, 1
      %v4332 = vsel %vm4272, %v4327, %v4331
      %v4333 = vshrl.u32 %v3955, 16
      %v4335 = vor.u32 %v4333, %v4331
      %v4337 = vshll.u32 %v3956, 16
      %v4339 = vrot.slane %v4337, 1
      %v4340 = vsel %vm4272, %v4335, %v4339
      %v4341 = vshrl.u32 %v3956, 16
      %v4343 = vor.u32 %v4341, %v4339
      %v4345 = vshll.u32 %v3957, 16
      %v4347 = vrot.slane %v4345, 1
      %v4348 = vsel %vm4272, %v4343, %v4347
      %v4349 = vshrl.u32 %v3957, 16
      %v4351 = vor.u32 %v4349, %v4347
      %v4353 = vshll.u32 %v3958, 16
      %v4355 = vrot.slane %v4353, 1
      %v4356 = vsel %vm4272, %v4351, %v4355
      %v4357 = vshrl.u32 %v3958, 16
      %v4359 = vor.u32 %v4357, %v4355
      %v4361 = vshll.u32 %v3959, 16
      %v4363 = vrot.slane %v4361, 1
      %v4364 = vsel %vm4272, %v4359, %v4363
      %v4365 = vshrl.u32 %v3959, 16
      %v4367 = vor.u32 %v4365, %v4363
      %v4369 = vshll.u32 %v3960, 16
      %v4371 = vrot.slane %v4369, 1
      %v4372 = vsel %vm4272, %v4367, %v4371
      %v4373 = vshrl.u32 %v3960, 16
      %v4375 = vor.u32 %v4373, %v4371
      %v4377 = vshll.u32 %v3961, 16
      %v4379 = vrot.slane %v4377, 1
      %v4380 = vsel %vm4272, %v4375, %v4379
      %v4381 = vshrl.u32 %v3961, 16
      %v4383 = vor.u32 %v4381, %v4379
      %v4385 = vshll.u32 %v3962, 16
      %v4387 = vrot.slane %v4385, 1
      %v4388 = vsel %vm4272, %v4383, %v4387
      %v4389 = vshrl.u32 %v3962, 16
      %v4391 = vor.u32 %v4389, %v4387
      %v4393 = vshll.u32 %v3963, 16
      %v4395 = vrot.slane %v4393, 1
      %v4396 = vsel %vm4272, %v4391, %v4395
      %v4397 = vshrl.u32 %v3963, 16
      %v4399 = vor.u32 %v4397, %v4395
      %v4401 = vshll.u32 %v3964, 16
      %v4403 = vrot.slane %v4401, 1
      %v4404 = vsel %vm4272, %v4399, %v4403
      %v4405 = vshrl.u32 %v3964, 16
      %v4407 = vor.u32 %v4405, %v4403
      %v4409 = vshll.u32 %v3965, 16
      %v4411 = vrot.slane %v4409, 1
      %v4412 = vsel %vm4272, %v4407, %v4411
      %v4413 = vshrl.u32 %v3965, 16
      %v4415 = vor.u32 %v4413, %v4411
      %v4417 = vshll.u32 %v3966, 16
      %v4419 = vrot.slane %v4417, 1
      %v4420 = vsel %vm4272, %v4415, %v4419
      %v4421 = vshrl.u32 %v3966, 16
      %v4423 = vor.u32 %v4421, %v4419
      %v4425 = vshll.u32 %v3967, 16
      %v4427 = vrot.slane %v4425, 1
      %v4428 = vsel %vm4272, %v4423, %v4427
      %v4429 = vshrl.u32 %v3967, 16
      %v4431 = vor.u32 %v4429, %v4427
      %v4433 = vshll.u32 %v3968, 16
      %v4435 = vrot.slane %v4433, 1
      %v4436 = vsel %vm4272, %v4431, %v4435
      %v4437 = vshrl.u32 %v3968, 16
      %v4439 = vor.u32 %v4437, %v4435
      %v4441 = vshll.u32 %v3969, 16
      %v4443 = vrot.slane %v4441, 1
      %v4444 = vsel %vm4272, %v4439, %v4443
      %v4445 = vshrl.u32 %v3969, 16
      %v4447 = vor.u32 %v4445, %v4443
      %v4449 = vshll.u32 %v3970, 16
      %v4451 = vrot.slane %v4449, 1
      %v4452 = vsel %vm4272, %v4447, %v4451
      %v4453 = vshrl.u32 %v3970, 16
      %v4455 = vor.u32 %v4453, %v4451
      %v4457 = vshll.u32 %v3971, 16
      %v4459 = vrot.slane %v4457, 1
      %v4460 = vsel %vm4272, %v4455, %v4459
      %v4461 = vshrl.u32 %v3971, 16
      %v4463 = vor.u32 %v4461, %v4459
      %v4465 = vshll.u32 %v3972, 16
      %v4467 = vrot.slane %v4465, 1
      %v4468 = vsel %vm4272, %v4463, %v4467
      %v4469 = vshrl.u32 %v3972, 16
      %v4471 = vor.u32 %v4469, %v4467
      %v4473 = vshll.u32 %v3973, 16
      %v4475 = vrot.slane %v4473, 1
      %v4476 = vsel %vm4272, %v4471, %v4475
      %v4477 = vshrl.u32 %v3973, 16
      %v4479 = vor.u32 %v4477, %v4475
      %v4481 = vshll.u32 %v3974, 16
      %v4483 = vrot.slane %v4481, 1
      %v4484 = vsel %vm4272, %v4479, %v4483
      %v4485 = vshrl.u32 %v3974, 16
      %v4487 = vor.u32 %v4485, %v4483
      %v4489 = vshll.u32 %v3975, 16
      %v4491 = vrot.slane %v4489, 1
      %v4492 = vsel %vm4272, %v4487, %v4491
      %v4493 = vshrl.u32 %v3975, 16
      %v4495 = vor.u32 %v4493, %v4491
      %v4497 = vshll.u32 %v3976, 16
      %v4499 = vrot.slane %v4497, 1
      %v4500 = vsel %vm4272, %v4495, %v4499
      %v4501 = vshrl.u32 %v3976, 16
      %v4503 = vor.u32 %v4501, %v4499
      %v4505 = vshll.u32 %v3977, 16
      %v4507 = vrot.slane %v4505, 1
      %v4508 = vsel %vm4272, %v4503, %v4507
      %v4509 = vshrl.u32 %v3977, 16
      %v4511 = vor.u32 %v4509, %v4507
      %v4513 = vshll.u32 %v4254, 16
      %v4515 = vrot.slane %v4513, 1
      %v4516 = vsel %vm4272, %v4511, %v4515
      %v4563 = vunpack.c.l.b16 %v4256
      %v4564 = vunpack.c.l.b16 %v4257
      %v4565 = vunpack.c.l.b16 %v4258
      %v4566 = vunpack.c.l.b16 %v4259
      %v4567 = vunpack.c.l.b16 %v4260
      %v4568 = vunpack.c.l.b16 %v4261
      %v4569 = vunpack.c.l.b16 %v4262
      %v4570 = vunpack.c.l.b16 %v4263
      %v4571 = vunpack.c.l.b16 %v4264
      %v4572 = vunpack.c.l.b16 %v4265
      %v4573 = vunpack.c.l.b16 %v4266
      %v4574 = vunpack.c.l.b16 %v4267
      %v4575 = vunpack.c.l.b16 %v4268
      %v4576 = vunpack.c.l.b16 %v4269
      %v4577 = vunpack.c.l.b16 %v4270
      %v4578 = vunpack.c.l.b16 %v4271
      %v4579 = vpack.c.b16 %v4564, %v4563
      %v4580 = vpack.c.b16 %v4566, %v4565
      %v4581 = vpack.c.b16 %v4568, %v4567
      %v4582 = vpack.c.b16 %v4570, %v4569
      %v4583 = vpack.c.b16 %v4572, %v4571
      %v4584 = vpack.c.b16 %v4574, %v4573
      %v4585 = vpack.c.b16 %v4576, %v4575
      %v4586 = vpack.c.b16 %v4578, %v4577
      %4595 = vmatpush.bf16.msra.mxu0 %v4586
      %4596 = vmatpush.bf16.msra.mxu0 %v4585
      %4597 = vmatpush.bf16.msra.mxu0 %v4584
      %4598 = vmatpush.bf16.msra.mxu0 %v4583
      %4599 = vmatpush.bf16.msra.mxu0 %v4582
      %4600 = vmatpush.bf16.msra.mxu0 %v4581
      %4601 = vmatpush.bf16.msra.mxu0 %v4580
      %4602 = vmatpush.bf16.msra.mxu0 %v4579
      %4603 = vmatmul.bf16.gmra.mxu0 %v4284
      %v4604 = vpop.f32.mrf.mxu0
      %v4605 = vpop.f32.mrf.mxu0
      %4606 = vmatmul.bf16.gmra.mxu0 %v4292
      %v4607 = vpop.f32.mrf.mxu0
      %v4608 = vadd.f32 0.0, %v4607
      %v4609 = vpop.f32.mrf.mxu0
      %v4610 = vadd.f32 0.0, %v4609
      %4611 = vmatmul.bf16.gmra.mxu0 %v4300
      %v4612 = vpop.f32.mrf.mxu0
      %v4613 = vadd.f32 0.0, %v4612
      %v4614 = vpop.f32.mrf.mxu0
      %v4615 = vadd.f32 0.0, %v4614
      %4616 = vmatmul.bf16.gmra.mxu0 %v4308
      %v4617 = vpop.f32.mrf.mxu0
      %v4618 = vadd.f32 0.0, %v4617
      %v4619 = vpop.f32.mrf.mxu0
      %v4620 = vadd.f32 0.0, %v4619
      %4621 = vmatmul.bf16.gmra.mxu0 %v4316
      %v4622 = vpop.f32.mrf.mxu0
      %v4623 = vadd.f32 0.0, %v4622
      %v4624 = vpop.f32.mrf.mxu0
      %v4625 = vadd.f32 0.0, %v4624
      %4626 = vmatmul.bf16.gmra.mxu0 %v4324
      %v4627 = vpop.f32.mrf.mxu0
      %v4628 = vadd.f32 0.0, %v4627
      %v4629 = vpop.f32.mrf.mxu0
      %v4630 = vadd.f32 0.0, %v4629
      %4631 = vmatmul.bf16.gmra.mxu0 %v4332
      %v4632 = vpop.f32.mrf.mxu0
      %v4633 = vadd.f32 0.0, %v4632
      %v4634 = vpop.f32.mrf.mxu0
      %v4635 = vadd.f32 0.0, %v4634
      %4636 = vmatmul.bf16.gmra.mxu0 %v4340
      %v4637 = vpop.f32.mrf.mxu0
      %v4638 = vadd.f32 0.0, %v4637
      %v4639 = vpop.f32.mrf.mxu0
      %v4640 = vadd.f32 0.0, %v4639
      %4641 = vmatmul.bf16.gmra.mxu0 %v4348
      %v4642 = vpop.f32.mrf.mxu0
      %v4643 = vadd.f32 0.0, %v4642
      %v4644 = vpop.f32.mrf.mxu0
      %v4645 = vadd.f32 0.0, %v4644
      %4646 = vmatmul.bf16.gmra.mxu0 %v4356
      %v4647 = vpop.f32.mrf.mxu0
      %v4648 = vadd.f32 0.0, %v4647
      %v4649 = vpop.f32.mrf.mxu0
      %v4650 = vadd.f32 0.0, %v4649
      %4651 = vmatmul.bf16.gmra.mxu0 %v4364
      %v4652 = vpop.f32.mrf.mxu0
      %v4653 = vadd.f32 0.0, %v4652
      %v4654 = vpop.f32.mrf.mxu0
      %v4655 = vadd.f32 0.0, %v4654
      %4656 = vmatmul.bf16.gmra.mxu0 %v4372
      %v4657 = vpop.f32.mrf.mxu0
      %v4658 = vadd.f32 0.0, %v4657
      %v4659 = vpop.f32.mrf.mxu0
      %v4660 = vadd.f32 0.0, %v4659
      %4661 = vmatmul.bf16.gmra.mxu0 %v4380
      %v4662 = vpop.f32.mrf.mxu0
      %v4663 = vadd.f32 0.0, %v4662
      %v4664 = vpop.f32.mrf.mxu0
      %v4665 = vadd.f32 0.0, %v4664
      %4666 = vmatmul.bf16.gmra.mxu0 %v4388
      %v4667 = vpop.f32.mrf.mxu0
      %v4668 = vadd.f32 0.0, %v4667
      %v4669 = vpop.f32.mrf.mxu0
      %v4670 = vadd.f32 0.0, %v4669
      %4671 = vmatmul.bf16.gmra.mxu0 %v4396
      %v4672 = vpop.f32.mrf.mxu0
      %v4673 = vadd.f32 0.0, %v4672
      %v4674 = vpop.f32.mrf.mxu0
      %v4675 = vadd.f32 0.0, %v4674
      %4676 = vmatmul.bf16.gmra.mxu0 %v4404
      %v4677 = vpop.f32.mrf.mxu0
      %v4678 = vadd.f32 0.0, %v4677
      %v4679 = vpop.f32.mrf.mxu0
      %v4680 = vadd.f32 0.0, %v4679
      %4681 = vmatmul.bf16.gmra.mxu0 %v4412
      %v4682 = vpop.f32.mrf.mxu0
      %v4683 = vadd.f32 0.0, %v4682
      %v4684 = vpop.f32.mrf.mxu0
      %v4685 = vadd.f32 0.0, %v4684
      %4686 = vmatmul.bf16.gmra.mxu0 %v4420
      %v4687 = vpop.f32.mrf.mxu0
      %v4688 = vadd.f32 0.0, %v4687
      %v4689 = vpop.f32.mrf.mxu0
      %v4690 = vadd.f32 0.0, %v4689
      %4691 = vmatmul.bf16.gmra.mxu0 %v4428
      %v4692 = vpop.f32.mrf.mxu0
      %v4693 = vadd.f32 0.0, %v4692
      %v4694 = vpop.f32.mrf.mxu0
      %v4695 = vadd.f32 0.0, %v4694
      %4696 = vmatmul.bf16.gmra.mxu0 %v4436
      %v4697 = vpop.f32.mrf.mxu0
      %v4698 = vadd.f32 0.0, %v4697
      %v4699 = vpop.f32.mrf.mxu0
      %v4700 = vadd.f32 0.0, %v4699
      %4701 = vmatmul.bf16.gmra.mxu0 %v4444
      %v4702 = vpop.f32.mrf.mxu0
      %v4703 = vadd.f32 0.0, %v4702
      %v4704 = vpop.f32.mrf.mxu0
      %v4705 = vadd.f32 0.0, %v4704
      %4706 = vmatmul.bf16.gmra.mxu0 %v4452
      %v4707 = vpop.f32.mrf.mxu0
      %v4708 = vadd.f32 0.0, %v4707
      %v4709 = vpop.f32.mrf.mxu0
      %v4710 = vadd.f32 0.0, %v4709
      %4711 = vmatmul.bf16.gmra.mxu0 %v4460
      %v4712 = vpop.f32.mrf.mxu0
      %v4713 = vadd.f32 0.0, %v4712
      %v4714 = vpop.f32.mrf.mxu0
      %v4715 = vadd.f32 0.0, %v4714
      %4716 = vmatmul.bf16.gmra.mxu0 %v4468
      %v4717 = vpop.f32.mrf.mxu0
      %v4718 = vadd.f32 0.0, %v4717
      %v4719 = vpop.f32.mrf.mxu0
      %v4720 = vadd.f32 0.0, %v4719
      %4721 = vmatmul.bf16.gmra.mxu0 %v4476
      %v4722 = vpop.f32.mrf.mxu0
      %v4723 = vadd.f32 0.0, %v4722
      %v4724 = vpop.f32.mrf.mxu0
      %v4725 = vadd.f32 0.0, %v4724
      %4726 = vmatmul.bf16.gmra.mxu0 %v4484
      %v4727 = vpop.f32.mrf.mxu0
      %v4728 = vadd.f32 0.0, %v4727
      %v4729 = vpop.f32.mrf.mxu0
      %v4730 = vadd.f32 0.0, %v4729
      %4731 = vmatmul.bf16.gmra.mxu0 %v4492
      %v4732 = vpop.f32.mrf.mxu0
      %v4733 = vadd.f32 0.0, %v4732
      %v4734 = vpop.f32.mrf.mxu0
      %v4735 = vadd.f32 0.0, %v4734
      %4736 = vmatmul.bf16.gmra.mxu0 %v4500
      %v4737 = vpop.f32.mrf.mxu0
      %v4738 = vadd.f32 0.0, %v4737
      %v4739 = vpop.f32.mrf.mxu0
      %v4740 = vadd.f32 0.0, %v4739
      %4741 = vmatmul.bf16.gmra.mxu0 %v4508
      %v4742 = vpop.f32.mrf.mxu0
      %v4743 = vadd.f32 0.0, %v4742
      %v4744 = vpop.f32.mrf.mxu0
      %v4745 = vadd.f32 0.0, %v4744
      %4746 = vmatmul.bf16.gmra.mxu0 %v4516
      %v4747 = vpop.f32.mrf.mxu0
      %v4748 = vpop.f32.mrf.mxu0
      %4749 = vdwg.mxu0
      %v4750 = vadd.f32 %v4198, %v4608
      %v4751 = vadd.f32 %v4199, %v4610
      %v4752 = vadd.f32 %v4200, %v4613
      %v4753 = vadd.f32 %v4201, %v4615
      %v4754 = vadd.f32 %v4202, %v4618
      %v4755 = vadd.f32 %v4203, %v4620
      %v4756 = vadd.f32 %v4204, %v4623
      %v4757 = vadd.f32 %v4205, %v4625
      %v4758 = vadd.f32 %v4206, %v4628
      %v4759 = vadd.f32 %v4207, %v4630
      %v4760 = vadd.f32 %v4208, %v4633
      %v4761 = vadd.f32 %v4209, %v4635
      %v4762 = vadd.f32 %v4210, %v4638
      %v4763 = vadd.f32 %v4211, %v4640
      %v4764 = vadd.f32 %v4212, %v4643
      %v4765 = vadd.f32 %v4213, %v4645
      %v4766 = vadd.f32 %v4214, %v4648
      %v4767 = vadd.f32 %v4215, %v4650
      %v4768 = vadd.f32 %v4216, %v4653
      %v4769 = vadd.f32 %v4217, %v4655
      %v4770 = vadd.f32 %v4218, %v4658
      %v4771 = vadd.f32 %v4219, %v4660
      %v4772 = vadd.f32 %v4220, %v4663
      %v4773 = vadd.f32 %v4221, %v4665
      %v4774 = vadd.f32 %v4222, %v4668
      %v4775 = vadd.f32 %v4223, %v4670
      %v4776 = vadd.f32 %v4224, %v4673
      %v4777 = vadd.f32 %v4225, %v4675
      %v4778 = vadd.f32 %v4226, %v4678
      %v4779 = vadd.f32 %v4227, %v4680
      %v4780 = vadd.f32 %v4228, %v4683
      %v4781 = vadd.f32 %v4229, %v4685
      %v4782 = vadd.f32 %v4230, %v4688
      %v4783 = vadd.f32 %v4231, %v4690
      %v4784 = vadd.f32 %v4232, %v4693
      %v4785 = vadd.f32 %v4233, %v4695
      %v4786 = vadd.f32 %v4234, %v4698
      %v4787 = vadd.f32 %v4235, %v4700
      %v4788 = vadd.f32 %v4236, %v4703
      %v4789 = vadd.f32 %v4237, %v4705
      %v4790 = vadd.f32 %v4238, %v4708
      %v4791 = vadd.f32 %v4239, %v4710
      %v4792 = vadd.f32 %v4240, %v4713
      %v4793 = vadd.f32 %v4241, %v4715
      %v4794 = vadd.f32 %v4242, %v4718
      %v4795 = vadd.f32 %v4243, %v4720
      %v4796 = vadd.f32 %v4244, %v4723
      %v4797 = vadd.f32 %v4245, %v4725
      %v4798 = vadd.f32 %v4246, %v4728
      %v4799 = vadd.f32 %v4247, %v4730
      %v4800 = vadd.f32 %v4248, %v4733
      %v4801 = vadd.f32 %v4249, %v4735
      %v4802 = vadd.f32 %v4250, %v4738
      %v4803 = vadd.f32 %v4251, %v4740
      %v4804 = vadd.f32 %v4252, %v4743
      %v4805 = vadd.f32 %v4253, %v4745
      %v4806 = vpack.c.bf16 %v3323, %v3322
      %v4807 = vpack.c.bf16 %v3324, %v3324
      %s4808 = scalar_lea.vmem %s9, 192
      %v4809 = vld [vmem:[%s4808] sm:$0xf]
      %v4810 = vld [vmem:[%s4808 + $0x4] sm:$0xf]
      %v4811 = vld [vmem:[%s4808 + $0x8] sm:$0xf]
      %v4812 = vld [vmem:[%s4808 + $0xc] sm:$0xf]
      %v4813 = vld [vmem:[%s4808 + $0x10] sm:$0xf]
      %v4814 = vld [vmem:[%s4808 + $0x14] sm:$0xf]
      %v4815 = vld [vmem:[%s4808 + $0x18] sm:$0xf]
      %v4816 = vld [vmem:[%s4808 + $0x1c] sm:$0xf]
      %v4817 = vld [vmem:[%s4808 + $0x20] sm:$0xf]
      %v4818 = vld [vmem:[%s4808 + $0x24] sm:$0xf]
      %v4819 = vld [vmem:[%s4808 + $0x28] sm:$0xf]
      %v4820 = vld [vmem:[%s4808 + $0x2c] sm:$0xf]
      %v4821 = vld [vmem:[%s4808 + $0x30] sm:$0xf]
      %v4822 = vld [vmem:[%s4808 + $0x34] sm:$0xf]
      %v4823 = vld [vmem:[%s4808 + $0x38] sm:$0xf]
      %v4824 = vld [vmem:[%s4808 + $0x3c] sm:$0xf]
      %v4825 = vrot.slane %v4285, 3
      %v4826 = vrot.slane %v4281, 4
      %v4827 = vor.u32 %v4825, %v4826
      %v4828 = vrot.slane %v4293, 3
      %v4829 = vrot.slane %v4289, 4
      %v4830 = vor.u32 %v4828, %v4829
      %v4831 = vsel %vm3380, %v4827, %v4830
      %v4832 = vrot.slane %v4301, 3
      %v4833 = vrot.slane %v4297, 4
      %v4834 = vor.u32 %v4832, %v4833
      %v4835 = vsel %vm3380, %v4830, %v4834
      %v4836 = vrot.slane %v4309, 3
      %v4837 = vrot.slane %v4305, 4
      %v4838 = vor.u32 %v4836, %v4837
      %v4839 = vsel %vm3380, %v4834, %v4838
      %v4840 = vrot.slane %v4317, 3
      %v4841 = vrot.slane %v4313, 4
      %v4842 = vor.u32 %v4840, %v4841
      %v4843 = vsel %vm3380, %v4838, %v4842
      %v4844 = vrot.slane %v4325, 3
      %v4845 = vrot.slane %v4321, 4
      %v4846 = vor.u32 %v4844, %v4845
      %v4847 = vsel %vm3380, %v4842, %v4846
      %v4848 = vrot.slane %v4333, 3
      %v4849 = vrot.slane %v4329, 4
      %v4850 = vor.u32 %v4848, %v4849
      %v4851 = vsel %vm3380, %v4846, %v4850
      %v4852 = vrot.slane %v4341, 3
      %v4853 = vrot.slane %v4337, 4
      %v4854 = vor.u32 %v4852, %v4853
      %v4855 = vsel %vm3380, %v4850, %v4854
      %v4856 = vrot.slane %v4349, 3
      %v4857 = vrot.slane %v4345, 4
      %v4858 = vor.u32 %v4856, %v4857
      %v4859 = vsel %vm3380, %v4854, %v4858
      %v4860 = vrot.slane %v4357, 3
      %v4861 = vrot.slane %v4353, 4
      %v4862 = vor.u32 %v4860, %v4861
      %v4863 = vsel %vm3380, %v4858, %v4862
      %v4864 = vrot.slane %v4365, 3
      %v4865 = vrot.slane %v4361, 4
      %v4866 = vor.u32 %v4864, %v4865
      %v4867 = vsel %vm3380, %v4862, %v4866
      %v4868 = vrot.slane %v4373, 3
      %v4869 = vrot.slane %v4369, 4
      %v4870 = vor.u32 %v4868, %v4869
      %v4871 = vsel %vm3380, %v4866, %v4870
      %v4872 = vrot.slane %v4381, 3
      %v4873 = vrot.slane %v4377, 4
      %v4874 = vor.u32 %v4872, %v4873
      %v4875 = vsel %vm3380, %v4870, %v4874
      %v4876 = vrot.slane %v4389, 3
      %v4877 = vrot.slane %v4385, 4
      %v4878 = vor.u32 %v4876, %v4877
      %v4879 = vsel %vm3380, %v4874, %v4878
      %v4880 = vrot.slane %v4397, 3
      %v4881 = vrot.slane %v4393, 4
      %v4882 = vor.u32 %v4880, %v4881
      %v4883 = vsel %vm3380, %v4878, %v4882
      %v4884 = vrot.slane %v4405, 3
      %v4885 = vrot.slane %v4401, 4
      %v4886 = vor.u32 %v4884, %v4885
      %v4887 = vsel %vm3380, %v4882, %v4886
      %v4888 = vrot.slane %v4413, 3
      %v4889 = vrot.slane %v4409, 4
      %v4890 = vor.u32 %v4888, %v4889
      %v4891 = vsel %vm3380, %v4886, %v4890
      %v4892 = vrot.slane %v4421, 3
      %v4893 = vrot.slane %v4417, 4
      %v4894 = vor.u32 %v4892, %v4893
      %v4895 = vsel %vm3380, %v4890, %v4894
      %v4896 = vrot.slane %v4429, 3
      %v4897 = vrot.slane %v4425, 4
      %v4898 = vor.u32 %v4896, %v4897
      %v4899 = vsel %vm3380, %v4894, %v4898
      %v4900 = vrot.slane %v4437, 3
      %v4901 = vrot.slane %v4433, 4
      %v4902 = vor.u32 %v4900, %v4901
      %v4903 = vsel %vm3380, %v4898, %v4902
      %v4904 = vrot.slane %v4445, 3
      %v4905 = vrot.slane %v4441, 4
      %v4906 = vor.u32 %v4904, %v4905
      %v4907 = vsel %vm3380, %v4902, %v4906
      %v4908 = vrot.slane %v4453, 3
      %v4909 = vrot.slane %v4449, 4
      %v4910 = vor.u32 %v4908, %v4909
      %v4911 = vsel %vm3380, %v4906, %v4910
      %v4912 = vrot.slane %v4461, 3
      %v4913 = vrot.slane %v4457, 4
      %v4914 = vor.u32 %v4912, %v4913
      %v4915 = vsel %vm3380, %v4910, %v4914
      %v4916 = vrot.slane %v4469, 3
      %v4917 = vrot.slane %v4465, 4
      %v4918 = vor.u32 %v4916, %v4917
      %v4919 = vsel %vm3380, %v4914, %v4918
      %v4920 = vrot.slane %v4477, 3
      %v4921 = vrot.slane %v4473, 4
      %v4922 = vor.u32 %v4920, %v4921
      %v4923 = vsel %vm3380, %v4918, %v4922
      %v4924 = vrot.slane %v4485, 3
      %v4925 = vrot.slane %v4481, 4
      %v4926 = vor.u32 %v4924, %v4925
      %v4927 = vsel %vm3380, %v4922, %v4926
      %v4928 = vrot.slane %v4493, 3
      %v4929 = vrot.slane %v4489, 4
      %v4930 = vor.u32 %v4928, %v4929
      %v4931 = vsel %vm3380, %v4926, %v4930
      %v4932 = vrot.slane %v4501, 3
      %v4933 = vrot.slane %v4497, 4
      %v4934 = vor.u32 %v4932, %v4933
      %v4935 = vsel %vm3380, %v4930, %v4934
      %v4936 = vrot.slane %v4509, 3
      %v4937 = vrot.slane %v4505, 4
      %v4938 = vor.u32 %v4936, %v4937
      %v4939 = vsel %vm3380, %v4934, %v4938
      %v4941 = vshrl.u32 %v4806, 16
      %v4943 = vrot.slane %v4941, 3
      %v4944 = vshll.u32 %v4806, 16
      %v4946 = vrot.slane %v4944, 4
      %v4947 = vor.u32 %v4943, %v4946
      %v4948 = vsel %vm3380, %v4938, %v4947
      %v4950 = vshrl.u32 %v4807, 16
      %v4952 = vrot.slane %v4950, 3
      %v4953 = vshll.u32 %v4807, 16
      %v4955 = vrot.slane %v4953, 4
      %v4956 = vor.u32 %v4952, %v4955
      %v4957 = vsel %vm3380, %v4947, %v4956
      %v5004 = vunpack.c.l.b16 %v4809
      %v5005 = vunpack.c.l.b16 %v4810
      %v5006 = vunpack.c.l.b16 %v4811
      %v5007 = vunpack.c.l.b16 %v4812
      %v5008 = vunpack.c.l.b16 %v4813
      %v5009 = vunpack.c.l.b16 %v4814
      %v5010 = vunpack.c.l.b16 %v4815
      %v5011 = vunpack.c.l.b16 %v4816
      %v5012 = vunpack.c.l.b16 %v4817
      %v5013 = vunpack.c.l.b16 %v4818
      %v5014 = vunpack.c.l.b16 %v4819
      %v5015 = vunpack.c.l.b16 %v4820
      %v5016 = vunpack.c.l.b16 %v4821
      %v5017 = vunpack.c.l.b16 %v4822
      %v5018 = vunpack.c.l.b16 %v4823
      %v5019 = vunpack.c.l.b16 %v4824
      %v5020 = vpack.c.b16 %v5005, %v5004
      %v5021 = vpack.c.b16 %v5007, %v5006
      %v5022 = vpack.c.b16 %v5009, %v5008
      %v5023 = vpack.c.b16 %v5011, %v5010
      %v5024 = vpack.c.b16 %v5013, %v5012
      %v5025 = vpack.c.b16 %v5015, %v5014
      %v5026 = vpack.c.b16 %v5017, %v5016
      %v5027 = vpack.c.b16 %v5019, %v5018
      %5036 = vmatpush.bf16.msra.mxu0 %v5027
      %5037 = vmatpush.bf16.msra.mxu0 %v5026
      %5038 = vmatpush.bf16.msra.mxu0 %v5025
      %5039 = vmatpush.bf16.msra.mxu0 %v5024
      %5040 = vmatpush.bf16.msra.mxu0 %v5023
      %5041 = vmatpush.bf16.msra.mxu0 %v5022
      %5042 = vmatpush.bf16.msra.mxu0 %v5021
      %5043 = vmatpush.bf16.msra.mxu0 %v5020
      %5044 = vmatmul.bf16.gmra.mxu0 %v4831
      %v5045 = vpop.f32.mrf.mxu0
      %v5046 = vpop.f32.mrf.mxu0
      %5047 = vmatmul.bf16.gmra.mxu0 %v4835
      %v5048 = vpop.f32.mrf.mxu0
      %v5049 = vadd.f32 0.0, %v5048
      %v5050 = vpop.f32.mrf.mxu0
      %v5051 = vadd.f32 0.0, %v5050
      %5052 = vmatmul.bf16.gmra.mxu0 %v4839
      %v5053 = vpop.f32.mrf.mxu0
      %v5054 = vadd.f32 0.0, %v5053
      %v5055 = vpop.f32.mrf.mxu0
      %v5056 = vadd.f32 0.0, %v5055
      %5057 = vmatmul.bf16.gmra.mxu0 %v4843
      %v5058 = vpop.f32.mrf.mxu0
      %v5059 = vadd.f32 0.0, %v5058
      %v5060 = vpop.f32.mrf.mxu0
      %v5061 = vadd.f32 0.0, %v5060
      %5062 = vmatmul.bf16.gmra.mxu0 %v4847
      %v5063 = vpop.f32.mrf.mxu0
      %v5064 = vadd.f32 0.0, %v5063
      %v5065 = vpop.f32.mrf.mxu0
      %v5066 = vadd.f32 0.0, %v5065
      %5067 = vmatmul.bf16.gmra.mxu0 %v4851
      %v5068 = vpop.f32.mrf.mxu0
      %v5069 = vadd.f32 0.0, %v5068
      %v5070 = vpop.f32.mrf.mxu0
      %v5071 = vadd.f32 0.0, %v5070
      %5072 = vmatmul.bf16.gmra.mxu0 %v4855
      %v5073 = vpop.f32.mrf.mxu0
      %v5074 = vadd.f32 0.0, %v5073
      %v5075 = vpop.f32.mrf.mxu0
      %v5076 = vadd.f32 0.0, %v5075
      %5077 = vmatmul.bf16.gmra.mxu0 %v4859
      %v5078 = vpop.f32.mrf.mxu0
      %v5079 = vadd.f32 0.0, %v5078
      %v5080 = vpop.f32.mrf.mxu0
      %v5081 = vadd.f32 0.0, %v5080
      %5082 = vmatmul.bf16.gmra.mxu0 %v4863
      %v5083 = vpop.f32.mrf.mxu0
      %v5084 = vadd.f32 0.0, %v5083
      %v5085 = vpop.f32.mrf.mxu0
      %v5086 = vadd.f32 0.0, %v5085
      %5087 = vmatmul.bf16.gmra.mxu0 %v4867
      %v5088 = vpop.f32.mrf.mxu0
      %v5089 = vadd.f32 0.0, %v5088
      %v5090 = vpop.f32.mrf.mxu0
      %v5091 = vadd.f32 0.0, %v5090
      %5092 = vmatmul.bf16.gmra.mxu0 %v4871
      %v5093 = vpop.f32.mrf.mxu0
      %v5094 = vadd.f32 0.0, %v5093
      %v5095 = vpop.f32.mrf.mxu0
      %v5096 = vadd.f32 0.0, %v5095
      %5097 = vmatmul.bf16.gmra.mxu0 %v4875
      %v5098 = vpop.f32.mrf.mxu0
      %v5099 = vadd.f32 0.0, %v5098
      %v5100 = vpop.f32.mrf.mxu0
      %v5101 = vadd.f32 0.0, %v5100
      %5102 = vmatmul.bf16.gmra.mxu0 %v4879
      %v5103 = vpop.f32.mrf.mxu0
      %v5104 = vadd.f32 0.0, %v5103
      %v5105 = vpop.f32.mrf.mxu0
      %v5106 = vadd.f32 0.0, %v5105
      %5107 = vmatmul.bf16.gmra.mxu0 %v4883
      %v5108 = vpop.f32.mrf.mxu0
      %v5109 = vadd.f32 0.0, %v5108
      %v5110 = vpop.f32.mrf.mxu0
      %v5111 = vadd.f32 0.0, %v5110
      %5112 = vmatmul.bf16.gmra.mxu0 %v4887
      %v5113 = vpop.f32.mrf.mxu0
      %v5114 = vadd.f32 0.0, %v5113
      %v5115 = vpop.f32.mrf.mxu0
      %v5116 = vadd.f32 0.0, %v5115
      %5117 = vmatmul.bf16.gmra.mxu0 %v4891
      %v5118 = vpop.f32.mrf.mxu0
      %v5119 = vadd.f32 0.0, %v5118
      %v5120 = vpop.f32.mrf.mxu0
      %v5121 = vadd.f32 0.0, %v5120
      %5122 = vmatmul.bf16.gmra.mxu0 %v4895
      %v5123 = vpop.f32.mrf.mxu0
      %v5124 = vadd.f32 0.0, %v5123
      %v5125 = vpop.f32.mrf.mxu0
      %v5126 = vadd.f32 0.0, %v5125
      %5127 = vmatmul.bf16.gmra.mxu0 %v4899
      %v5128 = vpop.f32.mrf.mxu0
      %v5129 = vadd.f32 0.0, %v5128
      %v5130 = vpop.f32.mrf.mxu0
      %v5131 = vadd.f32 0.0, %v5130
      %5132 = vmatmul.bf16.gmra.mxu0 %v4903
      %v5133 = vpop.f32.mrf.mxu0
      %v5134 = vadd.f32 0.0, %v5133
      %v5135 = vpop.f32.mrf.mxu0
      %v5136 = vadd.f32 0.0, %v5135
      %5137 = vmatmul.bf16.gmra.mxu0 %v4907
      %v5138 = vpop.f32.mrf.mxu0
      %v5139 = vadd.f32 0.0, %v5138
      %v5140 = vpop.f32.mrf.mxu0
      %v5141 = vadd.f32 0.0, %v5140
      %5142 = vmatmul.bf16.gmra.mxu0 %v4911
      %v5143 = vpop.f32.mrf.mxu0
      %v5144 = vadd.f32 0.0, %v5143
      %v5145 = vpop.f32.mrf.mxu0
      %v5146 = vadd.f32 0.0, %v5145
      %5147 = vmatmul.bf16.gmra.mxu0 %v4915
      %v5148 = vpop.f32.mrf.mxu0
      %v5149 = vadd.f32 0.0, %v5148
      %v5150 = vpop.f32.mrf.mxu0
      %v5151 = vadd.f32 0.0, %v5150
      %5152 = vmatmul.bf16.gmra.mxu0 %v4919
      %v5153 = vpop.f32.mrf.mxu0
      %v5154 = vadd.f32 0.0, %v5153
      %v5155 = vpop.f32.mrf.mxu0
      %v5156 = vadd.f32 0.0, %v5155
      %5157 = vmatmul.bf16.gmra.mxu0 %v4923
      %v5158 = vpop.f32.mrf.mxu0
      %v5159 = vadd.f32 0.0, %v5158
      %v5160 = vpop.f32.mrf.mxu0
      %v5161 = vadd.f32 0.0, %v5160
      %5162 = vmatmul.bf16.gmra.mxu0 %v4927
      %v5163 = vpop.f32.mrf.mxu0
      %v5164 = vadd.f32 0.0, %v5163
      %v5165 = vpop.f32.mrf.mxu0
      %v5166 = vadd.f32 0.0, %v5165
      %5167 = vmatmul.bf16.gmra.mxu0 %v4931
      %v5168 = vpop.f32.mrf.mxu0
      %v5169 = vadd.f32 0.0, %v5168
      %v5170 = vpop.f32.mrf.mxu0
      %v5171 = vadd.f32 0.0, %v5170
      %5172 = vmatmul.bf16.gmra.mxu0 %v4935
      %v5173 = vpop.f32.mrf.mxu0
      %v5174 = vadd.f32 0.0, %v5173
      %v5175 = vpop.f32.mrf.mxu0
      %v5176 = vadd.f32 0.0, %v5175
      %5177 = vmatmul.bf16.gmra.mxu0 %v4939
      %v5178 = vpop.f32.mrf.mxu0
      %v5179 = vadd.f32 0.0, %v5178
      %v5180 = vpop.f32.mrf.mxu0
      %v5181 = vadd.f32 0.0, %v5180
      %5182 = vmatmul.bf16.gmra.mxu0 %v4948
      %v5183 = vpop.f32.mrf.mxu0
      %v5184 = vadd.f32 0.0, %v5183
      %v5185 = vpop.f32.mrf.mxu0
      %v5186 = vadd.f32 0.0, %v5185
      %5187 = vmatmul.bf16.gmra.mxu0 %v4957
      %v5188 = vpop.f32.mrf.mxu0
      %v5189 = vpop.f32.mrf.mxu0
      %5190 = vdwg.mxu0
      %v5191 = vadd.f32 %v4750, %v5049
      %v5192 = vadd.f32 %v4751, %v5051
      %v5193 = vadd.f32 %v4752, %v5054
      %v5194 = vadd.f32 %v4753, %v5056
      %v5195 = vadd.f32 %v4754, %v5059
      %v5196 = vadd.f32 %v4755, %v5061
      %v5197 = vadd.f32 %v4756, %v5064
      %v5198 = vadd.f32 %v4757, %v5066
      %v5199 = vadd.f32 %v4758, %v5069
      %v5200 = vadd.f32 %v4759, %v5071
      %v5201 = vadd.f32 %v4760, %v5074
      %v5202 = vadd.f32 %v4761, %v5076
      %v5203 = vadd.f32 %v4762, %v5079
      %v5204 = vadd.f32 %v4763, %v5081
      %v5205 = vadd.f32 %v4764, %v5084
      %v5206 = vadd.f32 %v4765, %v5086
      %v5207 = vadd.f32 %v4766, %v5089
      %v5208 = vadd.f32 %v4767, %v5091
      %v5209 = vadd.f32 %v4768, %v5094
      %v5210 = vadd.f32 %v4769, %v5096
      %v5211 = vadd.f32 %v4770, %v5099
      %v5212 = vadd.f32 %v4771, %v5101
      %v5213 = vadd.f32 %v4772, %v5104
      %v5214 = vadd.f32 %v4773, %v5106
      %v5215 = vadd.f32 %v4774, %v5109
      %v5216 = vadd.f32 %v4775, %v5111
      %v5217 = vadd.f32 %v4776, %v5114
      %v5218 = vadd.f32 %v4777, %v5116
      %v5219 = vadd.f32 %v4778, %v5119
      %v5220 = vadd.f32 %v4779, %v5121
      %v5221 = vadd.f32 %v4780, %v5124
      %v5222 = vadd.f32 %v4781, %v5126
      %v5223 = vadd.f32 %v4782, %v5129
      %v5224 = vadd.f32 %v4783, %v5131
      %v5225 = vadd.f32 %v4784, %v5134
      %v5226 = vadd.f32 %v4785, %v5136
      %v5227 = vadd.f32 %v4786, %v5139
      %v5228 = vadd.f32 %v4787, %v5141
      %v5229 = vadd.f32 %v4788, %v5144
      %v5230 = vadd.f32 %v4789, %v5146
      %v5231 = vadd.f32 %v4790, %v5149
      %v5232 = vadd.f32 %v4791, %v5151
      %v5233 = vadd.f32 %v4792, %v5154
      %v5234 = vadd.f32 %v4793, %v5156
      %v5235 = vadd.f32 %v4794, %v5159
      %v5236 = vadd.f32 %v4795, %v5161
      %v5237 = vadd.f32 %v4796, %v5164
      %v5238 = vadd.f32 %v4797, %v5166
      %v5239 = vadd.f32 %v4798, %v5169
      %v5240 = vadd.f32 %v4799, %v5171
      %v5241 = vadd.f32 %v4800, %v5174
      %v5242 = vadd.f32 %v4801, %v5176
      %v5243 = vadd.f32 %v4802, %v5179
      %v5244 = vadd.f32 %v4803, %v5181
      %v5245 = vadd.f32 %v4804, %v5184
      %v5246 = vadd.f32 %v4805, %v5186
      %v5247 = vpack.c.bf16 %v3322, %v3321
      %v5248 = vpack.c.bf16 %v3324, %v3323
      %s5249 = scalar_lea.vmem %s9, 256
      %v5250 = vld [vmem:[%s5249] sm:$0xf]
      %v5251 = vld [vmem:[%s5249 + $0x4] sm:$0xf]
      %v5252 = vld [vmem:[%s5249 + $0x8] sm:$0xf]
      %v5253 = vld [vmem:[%s5249 + $0xc] sm:$0xf]
      %v5254 = vld [vmem:[%s5249 + $0x10] sm:$0xf]
      %v5255 = vld [vmem:[%s5249 + $0x14] sm:$0xf]
      %v5256 = vld [vmem:[%s5249 + $0x18] sm:$0xf]
      %v5257 = vld [vmem:[%s5249 + $0x1c] sm:$0xf]
      %v5258 = vld [vmem:[%s5249 + $0x20] sm:$0xf]
      %v5259 = vld [vmem:[%s5249 + $0x24] sm:$0xf]
      %v5260 = vld [vmem:[%s5249 + $0x28] sm:$0xf]
      %v5261 = vld [vmem:[%s5249 + $0x2c] sm:$0xf]
      %v5262 = vld [vmem:[%s5249 + $0x30] sm:$0xf]
      %v5263 = vld [vmem:[%s5249 + $0x34] sm:$0xf]
      %v5264 = vld [vmem:[%s5249 + $0x38] sm:$0xf]
      %v5265 = vld [vmem:[%s5249 + $0x3c] sm:$0xf]
      %v5282 = vunpack.c.l.b16 %v5250
      %v5283 = vunpack.c.l.b16 %v5251
      %v5284 = vunpack.c.l.b16 %v5252
      %v5285 = vunpack.c.l.b16 %v5253
      %v5286 = vunpack.c.l.b16 %v5254
      %v5287 = vunpack.c.l.b16 %v5255
      %v5288 = vunpack.c.l.b16 %v5256
      %v5289 = vunpack.c.l.b16 %v5257
      %v5290 = vunpack.c.l.b16 %v5258
      %v5291 = vunpack.c.l.b16 %v5259
      %v5292 = vunpack.c.l.b16 %v5260
      %v5293 = vunpack.c.l.b16 %v5261
      %v5294 = vunpack.c.l.b16 %v5262
      %v5295 = vunpack.c.l.b16 %v5263
      %v5296 = vunpack.c.l.b16 %v5264
      %v5297 = vunpack.c.l.b16 %v5265
      %v5298 = vpack.c.b16 %v5283, %v5282
      %v5299 = vpack.c.b16 %v5285, %v5284
      %v5300 = vpack.c.b16 %v5287, %v5286
      %v5301 = vpack.c.b16 %v5289, %v5288
      %v5302 = vpack.c.b16 %v5291, %v5290
      %v5303 = vpack.c.b16 %v5293, %v5292
      %v5304 = vpack.c.b16 %v5295, %v5294
      %v5305 = vpack.c.b16 %v5297, %v5296
      %5314 = vmatpush.bf16.msra.mxu0 %v5305
      %5315 = vmatpush.bf16.msra.mxu0 %v5304
      %5316 = vmatpush.bf16.msra.mxu0 %v5303
      %5317 = vmatpush.bf16.msra.mxu0 %v5302
      %5318 = vmatpush.bf16.msra.mxu0 %v5301
      %5319 = vmatpush.bf16.msra.mxu0 %v5300
      %5320 = vmatpush.bf16.msra.mxu0 %v5299
      %5321 = vmatpush.bf16.msra.mxu0 %v5298
      %5322 = vmatmul.bf16.gmra.mxu0 %v3335
      %v5323 = vpop.f32.mrf.mxu0
      %v5324 = vpop.f32.mrf.mxu0
      %5325 = vmatmul.bf16.gmra.mxu0 %v3336
      %v5326 = vpop.f32.mrf.mxu0
      %v5327 = vadd.f32 0.0, %v5326
      %v5328 = vpop.f32.mrf.mxu0
      %v5329 = vadd.f32 0.0, %v5328
      %5330 = vmatmul.bf16.gmra.mxu0 %v3337
      %v5331 = vpop.f32.mrf.mxu0
      %v5332 = vadd.f32 0.0, %v5331
      %v5333 = vpop.f32.mrf.mxu0
      %v5334 = vadd.f32 0.0, %v5333
      %5335 = vmatmul.bf16.gmra.mxu0 %v3338
      %v5336 = vpop.f32.mrf.mxu0
      %v5337 = vadd.f32 0.0, %v5336
      %v5338 = vpop.f32.mrf.mxu0
      %v5339 = vadd.f32 0.0, %v5338
      %5340 = vmatmul.bf16.gmra.mxu0 %v3339
      %v5341 = vpop.f32.mrf.mxu0
      %v5342 = vadd.f32 0.0, %v5341
      %v5343 = vpop.f32.mrf.mxu0
      %v5344 = vadd.f32 0.0, %v5343
      %5345 = vmatmul.bf16.gmra.mxu0 %v3340
      %v5346 = vpop.f32.mrf.mxu0
      %v5347 = vadd.f32 0.0, %v5346
      %v5348 = vpop.f32.mrf.mxu0
      %v5349 = vadd.f32 0.0, %v5348
      %5350 = vmatmul.bf16.gmra.mxu0 %v3341
      %v5351 = vpop.f32.mrf.mxu0
      %v5352 = vadd.f32 0.0, %v5351
      %v5353 = vpop.f32.mrf.mxu0
      %v5354 = vadd.f32 0.0, %v5353
      %5355 = vmatmul.bf16.gmra.mxu0 %v3342
      %v5356 = vpop.f32.mrf.mxu0
      %v5357 = vadd.f32 0.0, %v5356
      %v5358 = vpop.f32.mrf.mxu0
      %v5359 = vadd.f32 0.0, %v5358
      %5360 = vmatmul.bf16.gmra.mxu0 %v3343
      %v5361 = vpop.f32.mrf.mxu0
      %v5362 = vadd.f32 0.0, %v5361
      %v5363 = vpop.f32.mrf.mxu0
      %v5364 = vadd.f32 0.0, %v5363
      %5365 = vmatmul.bf16.gmra.mxu0 %v3344
      %v5366 = vpop.f32.mrf.mxu0
      %v5367 = vadd.f32 0.0, %v5366
      %v5368 = vpop.f32.mrf.mxu0
      %v5369 = vadd.f32 0.0, %v5368
      %5370 = vmatmul.bf16.gmra.mxu0 %v3345
      %v5371 = vpop.f32.mrf.mxu0
      %v5372 = vadd.f32 0.0, %v5371
      %v5373 = vpop.f32.mrf.mxu0
      %v5374 = vadd.f32 0.0, %v5373
      %5375 = vmatmul.bf16.gmra.mxu0 %v3346
      %v5376 = vpop.f32.mrf.mxu0
      %v5377 = vadd.f32 0.0, %v5376
      %v5378 = vpop.f32.mrf.mxu0
      %v5379 = vadd.f32 0.0, %v5378
      %5380 = vmatmul.bf16.gmra.mxu0 %v3347
      %v5381 = vpop.f32.mrf.mxu0
      %v5382 = vadd.f32 0.0, %v5381
      %v5383 = vpop.f32.mrf.mxu0
      %v5384 = vadd.f32 0.0, %v5383
      %5385 = vmatmul.bf16.gmra.mxu0 %v3348
      %v5386 = vpop.f32.mrf.mxu0
      %v5387 = vadd.f32 0.0, %v5386
      %v5388 = vpop.f32.mrf.mxu0
      %v5389 = vadd.f32 0.0, %v5388
      %5390 = vmatmul.bf16.gmra.mxu0 %v3349
      %v5391 = vpop.f32.mrf.mxu0
      %v5392 = vadd.f32 0.0, %v5391
      %v5393 = vpop.f32.mrf.mxu0
      %v5394 = vadd.f32 0.0, %v5393
      %5395 = vmatmul.bf16.gmra.mxu0 %v3350
      %v5396 = vpop.f32.mrf.mxu0
      %v5397 = vadd.f32 0.0, %v5396
      %v5398 = vpop.f32.mrf.mxu0
      %v5399 = vadd.f32 0.0, %v5398
      %5400 = vmatmul.bf16.gmra.mxu0 %v3351
      %v5401 = vpop.f32.mrf.mxu0
      %v5402 = vadd.f32 0.0, %v5401
      %v5403 = vpop.f32.mrf.mxu0
      %v5404 = vadd.f32 0.0, %v5403
      %5405 = vmatmul.bf16.gmra.mxu0 %v3352
      %v5406 = vpop.f32.mrf.mxu0
      %v5407 = vadd.f32 0.0, %v5406
      %v5408 = vpop.f32.mrf.mxu0
      %v5409 = vadd.f32 0.0, %v5408
      %5410 = vmatmul.bf16.gmra.mxu0 %v3353
      %v5411 = vpop.f32.mrf.mxu0
      %v5412 = vadd.f32 0.0, %v5411
      %v5413 = vpop.f32.mrf.mxu0
      %v5414 = vadd.f32 0.0, %v5413
      %5415 = vmatmul.bf16.gmra.mxu0 %v3354
      %v5416 = vpop.f32.mrf.mxu0
      %v5417 = vadd.f32 0.0, %v5416
      %v5418 = vpop.f32.mrf.mxu0
      %v5419 = vadd.f32 0.0, %v5418
      %5420 = vmatmul.bf16.gmra.mxu0 %v3355
      %v5421 = vpop.f32.mrf.mxu0
      %v5422 = vadd.f32 0.0, %v5421
      %v5423 = vpop.f32.mrf.mxu0
      %v5424 = vadd.f32 0.0, %v5423
      %5425 = vmatmul.bf16.gmra.mxu0 %v3356
      %v5426 = vpop.f32.mrf.mxu0
      %v5427 = vadd.f32 0.0, %v5426
      %v5428 = vpop.f32.mrf.mxu0
      %v5429 = vadd.f32 0.0, %v5428
      %5430 = vmatmul.bf16.gmra.mxu0 %v3357
      %v5431 = vpop.f32.mrf.mxu0
      %v5432 = vadd.f32 0.0, %v5431
      %v5433 = vpop.f32.mrf.mxu0
      %v5434 = vadd.f32 0.0, %v5433
      %5435 = vmatmul.bf16.gmra.mxu0 %v3358
      %v5436 = vpop.f32.mrf.mxu0
      %v5437 = vadd.f32 0.0, %v5436
      %v5438 = vpop.f32.mrf.mxu0
      %v5439 = vadd.f32 0.0, %v5438
      %5440 = vmatmul.bf16.gmra.mxu0 %v3359
      %v5441 = vpop.f32.mrf.mxu0
      %v5442 = vadd.f32 0.0, %v5441
      %v5443 = vpop.f32.mrf.mxu0
      %v5444 = vadd.f32 0.0, %v5443
      %5445 = vmatmul.bf16.gmra.mxu0 %v3360
      %v5446 = vpop.f32.mrf.mxu0
      %v5447 = vadd.f32 0.0, %v5446
      %v5448 = vpop.f32.mrf.mxu0
      %v5449 = vadd.f32 0.0, %v5448
      %5450 = vmatmul.bf16.gmra.mxu0 %v3361
      %v5451 = vpop.f32.mrf.mxu0
      %v5452 = vadd.f32 0.0, %v5451
      %v5453 = vpop.f32.mrf.mxu0
      %v5454 = vadd.f32 0.0, %v5453
      %5455 = vmatmul.bf16.gmra.mxu0 %v3362
      %v5456 = vpop.f32.mrf.mxu0
      %v5457 = vadd.f32 0.0, %v5456
      %v5458 = vpop.f32.mrf.mxu0
      %v5459 = vadd.f32 0.0, %v5458
      %5460 = vmatmul.bf16.gmra.mxu0 %v5247
      %v5461 = vpop.f32.mrf.mxu0
      %v5462 = vadd.f32 0.0, %v5461
      %v5463 = vpop.f32.mrf.mxu0
      %v5464 = vadd.f32 0.0, %v5463
      %5465 = vmatmul.bf16.gmra.mxu0 %v5248
      %v5466 = vpop.f32.mrf.mxu0
      %v5467 = vpop.f32.mrf.mxu0
      %5468 = vdwg.mxu0
      %v5469 = vadd.f32 %v5191, %v5327
      %v5470 = vadd.f32 %v5192, %v5329
      %v5471 = vadd.f32 %v5193, %v5332
      %v5472 = vadd.f32 %v5194, %v5334
      %v5473 = vadd.f32 %v5195, %v5337
      %v5474 = vadd.f32 %v5196, %v5339
      %v5475 = vadd.f32 %v5197, %v5342
      %v5476 = vadd.f32 %v5198, %v5344
      %v5477 = vadd.f32 %v5199, %v5347
      %v5478 = vadd.f32 %v5200, %v5349
      %v5479 = vadd.f32 %v5201, %v5352
      %v5480 = vadd.f32 %v5202, %v5354
      %v5481 = vadd.f32 %v5203, %v5357
      %v5482 = vadd.f32 %v5204, %v5359
      %v5483 = vadd.f32 %v5205, %v5362
      %v5484 = vadd.f32 %v5206, %v5364
      %v5485 = vadd.f32 %v5207, %v5367
      %v5486 = vadd.f32 %v5208, %v5369
      %v5487 = vadd.f32 %v5209, %v5372
      %v5488 = vadd.f32 %v5210, %v5374
      %v5489 = vadd.f32 %v5211, %v5377
      %v5490 = vadd.f32 %v5212, %v5379
      %v5491 = vadd.f32 %v5213, %v5382
      %v5492 = vadd.f32 %v5214, %v5384
      %v5493 = vadd.f32 %v5215, %v5387
      %v5494 = vadd.f32 %v5216, %v5389
      %v5495 = vadd.f32 %v5217, %v5392
      %v5496 = vadd.f32 %v5218, %v5394
      %v5497 = vadd.f32 %v5219, %v5397
      %v5498 = vadd.f32 %v5220, %v5399
      %v5499 = vadd.f32 %v5221, %v5402
      %v5500 = vadd.f32 %v5222, %v5404
      %v5501 = vadd.f32 %v5223, %v5407
      %v5502 = vadd.f32 %v5224, %v5409
      %v5503 = vadd.f32 %v5225, %v5412
      %v5504 = vadd.f32 %v5226, %v5414
      %v5505 = vadd.f32 %v5227, %v5417
      %v5506 = vadd.f32 %v5228, %v5419
      %v5507 = vadd.f32 %v5229, %v5422
      %v5508 = vadd.f32 %v5230, %v5424
      %v5509 = vadd.f32 %v5231, %v5427
      %v5510 = vadd.f32 %v5232, %v5429
      %v5511 = vadd.f32 %v5233, %v5432
      %v5512 = vadd.f32 %v5234, %v5434
      %v5513 = vadd.f32 %v5235, %v5437
      %v5514 = vadd.f32 %v5236, %v5439
      %v5515 = vadd.f32 %v5237, %v5442
      %v5516 = vadd.f32 %v5238, %v5444
      %v5517 = vadd.f32 %v5239, %v5447
      %v5518 = vadd.f32 %v5240, %v5449
      %v5519 = vadd.f32 %v5241, %v5452
      %v5520 = vadd.f32 %v5242, %v5454
      %v5521 = vadd.f32 %v5243, %v5457
      %v5522 = vadd.f32 %v5244, %v5459
      %v5523 = vadd.f32 %v5245, %v5462
      %v5524 = vadd.f32 %v5246, %v5464
      %v5525 = vpack.c.bf16 %v3325, %v3325
      %s5526 = scalar_lea.vmem %s9, 320
      %v5527 = vld [vmem:[%s5526] sm:$0xf]
      %v5528 = vld [vmem:[%s5526 + $0x4] sm:$0xf]
      %v5529 = vld [vmem:[%s5526 + $0x8] sm:$0xf]
      %v5530 = vld [vmem:[%s5526 + $0xc] sm:$0xf]
      %v5531 = vld [vmem:[%s5526 + $0x10] sm:$0xf]
      %v5532 = vld [vmem:[%s5526 + $0x14] sm:$0xf]
      %v5533 = vld [vmem:[%s5526 + $0x18] sm:$0xf]
      %v5534 = vld [vmem:[%s5526 + $0x1c] sm:$0xf]
      %v5535 = vld [vmem:[%s5526 + $0x20] sm:$0xf]
      %v5536 = vld [vmem:[%s5526 + $0x24] sm:$0xf]
      %v5537 = vld [vmem:[%s5526 + $0x28] sm:$0xf]
      %v5538 = vld [vmem:[%s5526 + $0x2c] sm:$0xf]
      %v5539 = vld [vmem:[%s5526 + $0x30] sm:$0xf]
      %v5540 = vld [vmem:[%s5526 + $0x34] sm:$0xf]
      %v5541 = vld [vmem:[%s5526 + $0x38] sm:$0xf]
      %v5542 = vld [vmem:[%s5526 + $0x3c] sm:$0xf]
      %v5543 = vrot.slane %v3402, 1
      %v5544 = vor.u32 %v3399, %v5543
      %v5545 = vrot.slane %v3411, 1
      %v5546 = vsel %vm4272, %v5544, %v5545
      %v5547 = vor.u32 %v3408, %v5545
      %v5548 = vrot.slane %v3420, 1
      %v5549 = vsel %vm4272, %v5547, %v5548
      %v5550 = vor.u32 %v3417, %v5548
      %v5551 = vrot.slane %v3429, 1
      %v5552 = vsel %vm4272, %v5550, %v5551
      %v5553 = vor.u32 %v3426, %v5551
      %v5554 = vrot.slane %v3438, 1
      %v5555 = vsel %vm4272, %v5553, %v5554
      %v5556 = vor.u32 %v3435, %v5554
      %v5557 = vrot.slane %v3447, 1
      %v5558 = vsel %vm4272, %v5556, %v5557
      %v5559 = vor.u32 %v3444, %v5557
      %v5560 = vrot.slane %v3456, 1
      %v5561 = vsel %vm4272, %v5559, %v5560
      %v5562 = vor.u32 %v3453, %v5560
      %v5563 = vrot.slane %v3465, 1
      %v5564 = vsel %vm4272, %v5562, %v5563
      %v5565 = vor.u32 %v3462, %v5563
      %v5566 = vrot.slane %v3474, 1
      %v5567 = vsel %vm4272, %v5565, %v5566
      %v5568 = vor.u32 %v3471, %v5566
      %v5569 = vrot.slane %v3483, 1
      %v5570 = vsel %vm4272, %v5568, %v5569
      %v5571 = vor.u32 %v3480, %v5569
      %v5572 = vrot.slane %v3492, 1
      %v5573 = vsel %vm4272, %v5571, %v5572
      %v5574 = vor.u32 %v3489, %v5572
      %v5575 = vrot.slane %v3501, 1
      %v5576 = vsel %vm4272, %v5574, %v5575
      %v5577 = vor.u32 %v3498, %v5575
      %v5578 = vrot.slane %v3510, 1
      %v5579 = vsel %vm4272, %v5577, %v5578
      %v5580 = vor.u32 %v3507, %v5578
      %v5581 = vrot.slane %v3519, 1
      %v5582 = vsel %vm4272, %v5580, %v5581
      %v5583 = vor.u32 %v3516, %v5581
      %v5584 = vrot.slane %v3528, 1
      %v5585 = vsel %vm4272, %v5583, %v5584
      %v5586 = vor.u32 %v3525, %v5584
      %v5587 = vrot.slane %v3537, 1
      %v5588 = vsel %vm4272, %v5586, %v5587
      %v5589 = vor.u32 %v3534, %v5587
      %v5590 = vrot.slane %v3546, 1
      %v5591 = vsel %vm4272, %v5589, %v5590
      %v5592 = vor.u32 %v3543, %v5590
      %v5593 = vrot.slane %v3555, 1
      %v5594 = vsel %vm4272, %v5592, %v5593
      %v5595 = vor.u32 %v3552, %v5593
      %v5596 = vrot.slane %v3564, 1
      %v5597 = vsel %vm4272, %v5595, %v5596
      %v5598 = vor.u32 %v3561, %v5596
      %v5599 = vrot.slane %v3573, 1
      %v5600 = vsel %vm4272, %v5598, %v5599
      %v5601 = vor.u32 %v3570, %v5599
      %v5602 = vrot.slane %v3582, 1
      %v5603 = vsel %vm4272, %v5601, %v5602
      %v5604 = vor.u32 %v3579, %v5602
      %v5605 = vrot.slane %v3591, 1
      %v5606 = vsel %vm4272, %v5604, %v5605
      %v5607 = vor.u32 %v3588, %v5605
      %v5608 = vrot.slane %v3600, 1
      %v5609 = vsel %vm4272, %v5607, %v5608
      %v5610 = vor.u32 %v3597, %v5608
      %v5611 = vrot.slane %v3609, 1
      %v5612 = vsel %vm4272, %v5610, %v5611
      %v5613 = vor.u32 %v3606, %v5611
      %v5614 = vrot.slane %v3618, 1
      %v5615 = vsel %vm4272, %v5613, %v5614
      %v5616 = vor.u32 %v3615, %v5614
      %v5617 = vrot.slane %v3627, 1
      %v5618 = vsel %vm4272, %v5616, %v5617
      %v5619 = vor.u32 %v3624, %v5617
      %v5620 = vrot.slane %v3636, 1
      %v5621 = vsel %vm4272, %v5619, %v5620
      %v5622 = vor.u32 %v3633, %v5620
      %v5623 = vrot.slane %v3645, 1
      %v5624 = vsel %vm4272, %v5622, %v5623
      %v5625 = vor.u32 %v3642, %v5623
      %v5627 = vshll.u32 %v5247, 16
      %v5629 = vrot.slane %v5627, 1
      %v5630 = vsel %vm4272, %v5625, %v5629
      %v5631 = vshrl.u32 %v5247, 16
      %v5633 = vor.u32 %v5631, %v5629
      %v5635 = vshll.u32 %v5248, 16
      %v5637 = vrot.slane %v5635, 1
      %v5638 = vsel %vm4272, %v5633, %v5637
      %v5639 = vshrl.u32 %v5248, 16
      %v5641 = vor.u32 %v5639, %v5637
      %v5643 = vshll.u32 %v5525, 16
      %v5645 = vrot.slane %v5643, 1
      %v5646 = vsel %vm4272, %v5641, %v5645
      %v5693 = vunpack.c.l.b16 %v5527
      %v5694 = vunpack.c.l.b16 %v5528
      %v5695 = vunpack.c.l.b16 %v5529
      %v5696 = vunpack.c.l.b16 %v5530
      %v5697 = vunpack.c.l.b16 %v5531
      %v5698 = vunpack.c.l.b16 %v5532
      %v5699 = vunpack.c.l.b16 %v5533
      %v5700 = vunpack.c.l.b16 %v5534
      %v5701 = vunpack.c.l.b16 %v5535
      %v5702 = vunpack.c.l.b16 %v5536
      %v5703 = vunpack.c.l.b16 %v5537
      %v5704 = vunpack.c.l.b16 %v5538
      %v5705 = vunpack.c.l.b16 %v5539
      %v5706 = vunpack.c.l.b16 %v5540
      %v5707 = vunpack.c.l.b16 %v5541
      %v5708 = vunpack.c.l.b16 %v5542
      %v5709 = vpack.c.b16 %v5694, %v5693
      %v5710 = vpack.c.b16 %v5696, %v5695
      %v5711 = vpack.c.b16 %v5698, %v5697
      %v5712 = vpack.c.b16 %v5700, %v5699
      %v5713 = vpack.c.b16 %v5702, %v5701
      %v5714 = vpack.c.b16 %v5704, %v5703
      %v5715 = vpack.c.b16 %v5706, %v5705
      %v5716 = vpack.c.b16 %v5708, %v5707
      %5725 = vmatpush.bf16.msra.mxu0 %v5716
      %5726 = vmatpush.bf16.msra.mxu0 %v5715
      %5727 = vmatpush.bf16.msra.mxu0 %v5714
      %5728 = vmatpush.bf16.msra.mxu0 %v5713
      %5729 = vmatpush.bf16.msra.mxu0 %v5712
      %5730 = vmatpush.bf16.msra.mxu0 %v5711
      %5731 = vmatpush.bf16.msra.mxu0 %v5710
      %5732 = vmatpush.bf16.msra.mxu0 %v5709
      %5733 = vmatmul.bf16.gmra.mxu0 %v5546
      %v5734 = vpop.f32.mrf.mxu0
      %v5735 = vpop.f32.mrf.mxu0
      %5736 = vmatmul.bf16.gmra.mxu0 %v5549
      %v5737 = vpop.f32.mrf.mxu0
      %v5738 = vadd.f32 0.0, %v5737
      %v5739 = vpop.f32.mrf.mxu0
      %v5740 = vadd.f32 0.0, %v5739
      %5741 = vmatmul.bf16.gmra.mxu0 %v5552
      %v5742 = vpop.f32.mrf.mxu0
      %v5743 = vadd.f32 0.0, %v5742
      %v5744 = vpop.f32.mrf.mxu0
      %v5745 = vadd.f32 0.0, %v5744
      %5746 = vmatmul.bf16.gmra.mxu0 %v5555
      %v5747 = vpop.f32.mrf.mxu0
      %v5748 = vadd.f32 0.0, %v5747
      %v5749 = vpop.f32.mrf.mxu0
      %v5750 = vadd.f32 0.0, %v5749
      %5751 = vmatmul.bf16.gmra.mxu0 %v5558
      %v5752 = vpop.f32.mrf.mxu0
      %v5753 = vadd.f32 0.0, %v5752
      %v5754 = vpop.f32.mrf.mxu0
      %v5755 = vadd.f32 0.0, %v5754
      %5756 = vmatmul.bf16.gmra.mxu0 %v5561
      %v5757 = vpop.f32.mrf.mxu0
      %v5758 = vadd.f32 0.0, %v5757
      %v5759 = vpop.f32.mrf.mxu0
      %v5760 = vadd.f32 0.0, %v5759
      %5761 = vmatmul.bf16.gmra.mxu0 %v5564
      %v5762 = vpop.f32.mrf.mxu0
      %v5763 = vadd.f32 0.0, %v5762
      %v5764 = vpop.f32.mrf.mxu0
      %v5765 = vadd.f32 0.0, %v5764
      %5766 = vmatmul.bf16.gmra.mxu0 %v5567
      %v5767 = vpop.f32.mrf.mxu0
      %v5768 = vadd.f32 0.0, %v5767
      %v5769 = vpop.f32.mrf.mxu0
      %v5770 = vadd.f32 0.0, %v5769
      %5771 = vmatmul.bf16.gmra.mxu0 %v5570
      %v5772 = vpop.f32.mrf.mxu0
      %v5773 = vadd.f32 0.0, %v5772
      %v5774 = vpop.f32.mrf.mxu0
      %v5775 = vadd.f32 0.0, %v5774
      %5776 = vmatmul.bf16.gmra.mxu0 %v5573
      %v5777 = vpop.f32.mrf.mxu0
      %v5778 = vadd.f32 0.0, %v5777
      %v5779 = vpop.f32.mrf.mxu0
      %v5780 = vadd.f32 0.0, %v5779
      %5781 = vmatmul.bf16.gmra.mxu0 %v5576
      %v5782 = vpop.f32.mrf.mxu0
      %v5783 = vadd.f32 0.0, %v5782
      %v5784 = vpop.f32.mrf.mxu0
      %v5785 = vadd.f32 0.0, %v5784
      %5786 = vmatmul.bf16.gmra.mxu0 %v5579
      %v5787 = vpop.f32.mrf.mxu0
      %v5788 = vadd.f32 0.0, %v5787
      %v5789 = vpop.f32.mrf.mxu0
      %v5790 = vadd.f32 0.0, %v5789
      %5791 = vmatmul.bf16.gmra.mxu0 %v5582
      %v5792 = vpop.f32.mrf.mxu0
      %v5793 = vadd.f32 0.0, %v5792
      %v5794 = vpop.f32.mrf.mxu0
      %v5795 = vadd.f32 0.0, %v5794
      %5796 = vmatmul.bf16.gmra.mxu0 %v5585
      %v5797 = vpop.f32.mrf.mxu0
      %v5798 = vadd.f32 0.0, %v5797
      %v5799 = vpop.f32.mrf.mxu0
      %v5800 = vadd.f32 0.0, %v5799
      %5801 = vmatmul.bf16.gmra.mxu0 %v5588
      %v5802 = vpop.f32.mrf.mxu0
      %v5803 = vadd.f32 0.0, %v5802
      %v5804 = vpop.f32.mrf.mxu0
      %v5805 = vadd.f32 0.0, %v5804
      %5806 = vmatmul.bf16.gmra.mxu0 %v5591
      %v5807 = vpop.f32.mrf.mxu0
      %v5808 = vadd.f32 0.0, %v5807
      %v5809 = vpop.f32.mrf.mxu0
      %v5810 = vadd.f32 0.0, %v5809
      %5811 = vmatmul.bf16.gmra.mxu0 %v5594
      %v5812 = vpop.f32.mrf.mxu0
      %v5813 = vadd.f32 0.0, %v5812
      %v5814 = vpop.f32.mrf.mxu0
      %v5815 = vadd.f32 0.0, %v5814
      %5816 = vmatmul.bf16.gmra.mxu0 %v5597
      %v5817 = vpop.f32.mrf.mxu0
      %v5818 = vadd.f32 0.0, %v5817
      %v5819 = vpop.f32.mrf.mxu0
      %v5820 = vadd.f32 0.0, %v5819
      %5821 = vmatmul.bf16.gmra.mxu0 %v5600
      %v5822 = vpop.f32.mrf.mxu0
      %v5823 = vadd.f32 0.0, %v5822
      %v5824 = vpop.f32.mrf.mxu0
      %v5825 = vadd.f32 0.0, %v5824
      %5826 = vmatmul.bf16.gmra.mxu0 %v5603
      %v5827 = vpop.f32.mrf.mxu0
      %v5828 = vadd.f32 0.0, %v5827
      %v5829 = vpop.f32.mrf.mxu0
      %v5830 = vadd.f32 0.0, %v5829
      %5831 = vmatmul.bf16.gmra.mxu0 %v5606
      %v5832 = vpop.f32.mrf.mxu0
      %v5833 = vadd.f32 0.0, %v5832
      %v5834 = vpop.f32.mrf.mxu0
      %v5835 = vadd.f32 0.0, %v5834
      %5836 = vmatmul.bf16.gmra.mxu0 %v5609
      %v5837 = vpop.f32.mrf.mxu0
      %v5838 = vadd.f32 0.0, %v5837
      %v5839 = vpop.f32.mrf.mxu0
      %v5840 = vadd.f32 0.0, %v5839
      %5841 = vmatmul.bf16.gmra.mxu0 %v5612
      %v5842 = vpop.f32.mrf.mxu0
      %v5843 = vadd.f32 0.0, %v5842
      %v5844 = vpop.f32.mrf.mxu0
      %v5845 = vadd.f32 0.0, %v5844
      %5846 = vmatmul.bf16.gmra.mxu0 %v5615
      %v5847 = vpop.f32.mrf.mxu0
      %v5848 = vadd.f32 0.0, %v5847
      %v5849 = vpop.f32.mrf.mxu0
      %v5850 = vadd.f32 0.0, %v5849
      %5851 = vmatmul.bf16.gmra.mxu0 %v5618
      %v5852 = vpop.f32.mrf.mxu0
      %v5853 = vadd.f32 0.0, %v5852
      %v5854 = vpop.f32.mrf.mxu0
      %v5855 = vadd.f32 0.0, %v5854
      %5856 = vmatmul.bf16.gmra.mxu0 %v5621
      %v5857 = vpop.f32.mrf.mxu0
      %v5858 = vadd.f32 0.0, %v5857
      %v5859 = vpop.f32.mrf.mxu0
      %v5860 = vadd.f32 0.0, %v5859
      %5861 = vmatmul.bf16.gmra.mxu0 %v5624
      %v5862 = vpop.f32.mrf.mxu0
      %v5863 = vadd.f32 0.0, %v5862
      %v5864 = vpop.f32.mrf.mxu0
      %v5865 = vadd.f32 0.0, %v5864
      %5866 = vmatmul.bf16.gmra.mxu0 %v5630
      %v5867 = vpop.f32.mrf.mxu0
      %v5868 = vadd.f32 0.0, %v5867
      %v5869 = vpop.f32.mrf.mxu0
      %v5870 = vadd.f32 0.0, %v5869
      %5871 = vmatmul.bf16.gmra.mxu0 %v5638
      %v5872 = vpop.f32.mrf.mxu0
      %v5873 = vadd.f32 0.0, %v5872
      %v5874 = vpop.f32.mrf.mxu0
      %v5875 = vadd.f32 0.0, %v5874
      %5876 = vmatmul.bf16.gmra.mxu0 %v5646
      %v5877 = vpop.f32.mrf.mxu0
      %v5878 = vpop.f32.mrf.mxu0
      %5879 = vdwg.mxu0
      %v5880 = vadd.f32 %v5469, %v5738
      %v5881 = vadd.f32 %v5470, %v5740
      %v5882 = vadd.f32 %v5471, %v5743
      %v5883 = vadd.f32 %v5472, %v5745
      %v5884 = vadd.f32 %v5473, %v5748
      %v5885 = vadd.f32 %v5474, %v5750
      %v5886 = vadd.f32 %v5475, %v5753
      %v5887 = vadd.f32 %v5476, %v5755
      %v5888 = vadd.f32 %v5477, %v5758
      %v5889 = vadd.f32 %v5478, %v5760
      %v5890 = vadd.f32 %v5479, %v5763
      %v5891 = vadd.f32 %v5480, %v5765
      %v5892 = vadd.f32 %v5481, %v5768
      %v5893 = vadd.f32 %v5482, %v5770
      %v5894 = vadd.f32 %v5483, %v5773
      %v5895 = vadd.f32 %v5484, %v5775
      %v5896 = vadd.f32 %v5485, %v5778
      %v5897 = vadd.f32 %v5486, %v5780
      %v5898 = vadd.f32 %v5487, %v5783
      %v5899 = vadd.f32 %v5488, %v5785
      %v5900 = vadd.f32 %v5489, %v5788
      %v5901 = vadd.f32 %v5490, %v5790
      %v5902 = vadd.f32 %v5491, %v5793
      %v5903 = vadd.f32 %v5492, %v5795
      %v5904 = vadd.f32 %v5493, %v5798
      %v5905 = vadd.f32 %v5494, %v5800
      %v5906 = vadd.f32 %v5495, %v5803
      %v5907 = vadd.f32 %v5496, %v5805
      %v5908 = vadd.f32 %v5497, %v5808
      %v5909 = vadd.f32 %v5498, %v5810
      %v5910 = vadd.f32 %v5499, %v5813
      %v5911 = vadd.f32 %v5500, %v5815
      %v5912 = vadd.f32 %v5501, %v5818
      %v5913 = vadd.f32 %v5502, %v5820
      %v5914 = vadd.f32 %v5503, %v5823
      %v5915 = vadd.f32 %v5504, %v5825
      %v5916 = vadd.f32 %v5505, %v5828
      %v5917 = vadd.f32 %v5506, %v5830
      %v5918 = vadd.f32 %v5507, %v5833
      %v5919 = vadd.f32 %v5508, %v5835
      %v5920 = vadd.f32 %v5509, %v5838
      %v5921 = vadd.f32 %v5510, %v5840
      %v5922 = vadd.f32 %v5511, %v5843
      %v5923 = vadd.f32 %v5512, %v5845
      %v5924 = vadd.f32 %v5513, %v5848
      %v5925 = vadd.f32 %v5514, %v5850
      %v5926 = vadd.f32 %v5515, %v5853
      %v5927 = vadd.f32 %v5516, %v5855
      %v5928 = vadd.f32 %v5517, %v5858
      %v5929 = vadd.f32 %v5518, %v5860
      %v5930 = vadd.f32 %v5519, %v5863
      %v5931 = vadd.f32 %v5520, %v5865
      %v5932 = vadd.f32 %v5521, %v5868
      %v5933 = vadd.f32 %v5522, %v5870
      %v5934 = vadd.f32 %v5523, %v5873
      %v5935 = vadd.f32 %v5524, %v5875
      %v5936 = vpack.c.bf16 %v3326, %v3325
      %v5937 = vpack.c.bf16 %v3327, %v3327
      %s5938 = scalar_lea.vmem %s9, 384
      %v5939 = vld [vmem:[%s5938] sm:$0xf]
      %v5940 = vld [vmem:[%s5938 + $0x4] sm:$0xf]
      %v5941 = vld [vmem:[%s5938 + $0x8] sm:$0xf]
      %v5942 = vld [vmem:[%s5938 + $0xc] sm:$0xf]
      %v5943 = vld [vmem:[%s5938 + $0x10] sm:$0xf]
      %v5944 = vld [vmem:[%s5938 + $0x14] sm:$0xf]
      %v5945 = vld [vmem:[%s5938 + $0x18] sm:$0xf]
      %v5946 = vld [vmem:[%s5938 + $0x1c] sm:$0xf]
      %v5947 = vld [vmem:[%s5938 + $0x20] sm:$0xf]
      %v5948 = vld [vmem:[%s5938 + $0x24] sm:$0xf]
      %v5949 = vld [vmem:[%s5938 + $0x28] sm:$0xf]
      %v5950 = vld [vmem:[%s5938 + $0x2c] sm:$0xf]
      %v5951 = vld [vmem:[%s5938 + $0x30] sm:$0xf]
      %v5952 = vld [vmem:[%s5938 + $0x34] sm:$0xf]
      %v5953 = vld [vmem:[%s5938 + $0x38] sm:$0xf]
      %v5954 = vld [vmem:[%s5938 + $0x3c] sm:$0xf]
      %v5955 = vrot.slane %v5631, 3
      %v5956 = vrot.slane %v5627, 4
      %v5957 = vor.u32 %v5955, %v5956
      %v5958 = vsel %vm3380, %v3648, %v5957
      %v5959 = vrot.slane %v5639, 3
      %v5960 = vrot.slane %v5635, 4
      %v5961 = vor.u32 %v5959, %v5960
      %v5962 = vsel %vm3380, %v5957, %v5961
      %v5964 = vshrl.u32 %v5936, 16
      %v5966 = vrot.slane %v5964, 3
      %v5967 = vshll.u32 %v5936, 16
      %v5969 = vrot.slane %v5967, 4
      %v5970 = vor.u32 %v5966, %v5969
      %v5971 = vsel %vm3380, %v5961, %v5970
      %v5973 = vshrl.u32 %v5937, 16
      %v5975 = vrot.slane %v5973, 3
      %v5976 = vshll.u32 %v5937, 16
      %v5978 = vrot.slane %v5976, 4
      %v5979 = vor.u32 %v5975, %v5978
      %v5980 = vsel %vm3380, %v5970, %v5979
      %v6001 = vunpack.c.l.b16 %v5939
      %v6002 = vunpack.c.l.b16 %v5940
      %v6003 = vunpack.c.l.b16 %v5941
      %v6004 = vunpack.c.l.b16 %v5942
      %v6005 = vunpack.c.l.b16 %v5943
      %v6006 = vunpack.c.l.b16 %v5944
      %v6007 = vunpack.c.l.b16 %v5945
      %v6008 = vunpack.c.l.b16 %v5946
      %v6009 = vunpack.c.l.b16 %v5947
      %v6010 = vunpack.c.l.b16 %v5948
      %v6011 = vunpack.c.l.b16 %v5949
      %v6012 = vunpack.c.l.b16 %v5950
      %v6013 = vunpack.c.l.b16 %v5951
      %v6014 = vunpack.c.l.b16 %v5952
      %v6015 = vunpack.c.l.b16 %v5953
      %v6016 = vunpack.c.l.b16 %v5954
      %v6017 = vpack.c.b16 %v6002, %v6001
      %v6018 = vpack.c.b16 %v6004, %v6003
      %v6019 = vpack.c.b16 %v6006, %v6005
      %v6020 = vpack.c.b16 %v6008, %v6007
      %v6021 = vpack.c.b16 %v6010, %v6009
      %v6022 = vpack.c.b16 %v6012, %v6011
      %v6023 = vpack.c.b16 %v6014, %v6013
      %v6024 = vpack.c.b16 %v6016, %v6015
      %6033 = vmatpush.bf16.msra.mxu0 %v6024
      %6034 = vmatpush.bf16.msra.mxu0 %v6023
      %6035 = vmatpush.bf16.msra.mxu0 %v6022
      %6036 = vmatpush.bf16.msra.mxu0 %v6021
      %6037 = vmatpush.bf16.msra.mxu0 %v6020
      %6038 = vmatpush.bf16.msra.mxu0 %v6019
      %6039 = vmatpush.bf16.msra.mxu0 %v6018
      %6040 = vmatpush.bf16.msra.mxu0 %v6017
      %6041 = vmatmul.bf16.gmra.mxu0 %v3424
      %v6042 = vpop.f32.mrf.mxu0
      %v6043 = vpop.f32.mrf.mxu0
      %6044 = vmatmul.bf16.gmra.mxu0 %v3433
      %v6045 = vpop.f32.mrf.mxu0
      %v6046 = vadd.f32 0.0, %v6045
      %v6047 = vpop.f32.mrf.mxu0
      %v6048 = vadd.f32 0.0, %v6047
      %6049 = vmatmul.bf16.gmra.mxu0 %v3442
      %v6050 = vpop.f32.mrf.mxu0
      %v6051 = vadd.f32 0.0, %v6050
      %v6052 = vpop.f32.mrf.mxu0
      %v6053 = vadd.f32 0.0, %v6052
      %6054 = vmatmul.bf16.gmra.mxu0 %v3451
      %v6055 = vpop.f32.mrf.mxu0
      %v6056 = vadd.f32 0.0, %v6055
      %v6057 = vpop.f32.mrf.mxu0
      %v6058 = vadd.f32 0.0, %v6057
      %6059 = vmatmul.bf16.gmra.mxu0 %v3460
      %v6060 = vpop.f32.mrf.mxu0
      %v6061 = vadd.f32 0.0, %v6060
      %v6062 = vpop.f32.mrf.mxu0
      %v6063 = vadd.f32 0.0, %v6062
      %6064 = vmatmul.bf16.gmra.mxu0 %v3469
      %v6065 = vpop.f32.mrf.mxu0
      %v6066 = vadd.f32 0.0, %v6065
      %v6067 = vpop.f32.mrf.mxu0
      %v6068 = vadd.f32 0.0, %v6067
      %6069 = vmatmul.bf16.gmra.mxu0 %v3478
      %v6070 = vpop.f32.mrf.mxu0
      %v6071 = vadd.f32 0.0, %v6070
      %v6072 = vpop.f32.mrf.mxu0
      %v6073 = vadd.f32 0.0, %v6072
      %6074 = vmatmul.bf16.gmra.mxu0 %v3487
      %v6075 = vpop.f32.mrf.mxu0
      %v6076 = vadd.f32 0.0, %v6075
      %v6077 = vpop.f32.mrf.mxu0
      %v6078 = vadd.f32 0.0, %v6077
      %6079 = vmatmul.bf16.gmra.mxu0 %v3496
      %v6080 = vpop.f32.mrf.mxu0
      %v6081 = vadd.f32 0.0, %v6080
      %v6082 = vpop.f32.mrf.mxu0
      %v6083 = vadd.f32 0.0, %v6082
      %6084 = vmatmul.bf16.gmra.mxu0 %v3505
      %v6085 = vpop.f32.mrf.mxu0
      %v6086 = vadd.f32 0.0, %v6085
      %v6087 = vpop.f32.mrf.mxu0
      %v6088 = vadd.f32 0.0, %v6087
      %6089 = vmatmul.bf16.gmra.mxu0 %v3514
      %v6090 = vpop.f32.mrf.mxu0
      %v6091 = vadd.f32 0.0, %v6090
      %v6092 = vpop.f32.mrf.mxu0
      %v6093 = vadd.f32 0.0, %v6092
      %6094 = vmatmul.bf16.gmra.mxu0 %v3523
      %v6095 = vpop.f32.mrf.mxu0
      %v6096 = vadd.f32 0.0, %v6095
      %v6097 = vpop.f32.mrf.mxu0
      %v6098 = vadd.f32 0.0, %v6097
      %6099 = vmatmul.bf16.gmra.mxu0 %v3532
      %v6100 = vpop.f32.mrf.mxu0
      %v6101 = vadd.f32 0.0, %v6100
      %v6102 = vpop.f32.mrf.mxu0
      %v6103 = vadd.f32 0.0, %v6102
      %6104 = vmatmul.bf16.gmra.mxu0 %v3541
      %v6105 = vpop.f32.mrf.mxu0
      %v6106 = vadd.f32 0.0, %v6105
      %v6107 = vpop.f32.mrf.mxu0
      %v6108 = vadd.f32 0.0, %v6107
      %6109 = vmatmul.bf16.gmra.mxu0 %v3550
      %v6110 = vpop.f32.mrf.mxu0
      %v6111 = vadd.f32 0.0, %v6110
      %v6112 = vpop.f32.mrf.mxu0
      %v6113 = vadd.f32 0.0, %v6112
      %6114 = vmatmul.bf16.gmra.mxu0 %v3559
      %v6115 = vpop.f32.mrf.mxu0
      %v6116 = vadd.f32 0.0, %v6115
      %v6117 = vpop.f32.mrf.mxu0
      %v6118 = vadd.f32 0.0, %v6117
      %6119 = vmatmul.bf16.gmra.mxu0 %v3568
      %v6120 = vpop.f32.mrf.mxu0
      %v6121 = vadd.f32 0.0, %v6120
      %v6122 = vpop.f32.mrf.mxu0
      %v6123 = vadd.f32 0.0, %v6122
      %6124 = vmatmul.bf16.gmra.mxu0 %v3577
      %v6125 = vpop.f32.mrf.mxu0
      %v6126 = vadd.f32 0.0, %v6125
      %v6127 = vpop.f32.mrf.mxu0
      %v6128 = vadd.f32 0.0, %v6127
      %6129 = vmatmul.bf16.gmra.mxu0 %v3586
      %v6130 = vpop.f32.mrf.mxu0
      %v6131 = vadd.f32 0.0, %v6130
      %v6132 = vpop.f32.mrf.mxu0
      %v6133 = vadd.f32 0.0, %v6132
      %6134 = vmatmul.bf16.gmra.mxu0 %v3595
      %v6135 = vpop.f32.mrf.mxu0
      %v6136 = vadd.f32 0.0, %v6135
      %v6137 = vpop.f32.mrf.mxu0
      %v6138 = vadd.f32 0.0, %v6137
      %6139 = vmatmul.bf16.gmra.mxu0 %v3604
      %v6140 = vpop.f32.mrf.mxu0
      %v6141 = vadd.f32 0.0, %v6140
      %v6142 = vpop.f32.mrf.mxu0
      %v6143 = vadd.f32 0.0, %v6142
      %6144 = vmatmul.bf16.gmra.mxu0 %v3613
      %v6145 = vpop.f32.mrf.mxu0
      %v6146 = vadd.f32 0.0, %v6145
      %v6147 = vpop.f32.mrf.mxu0
      %v6148 = vadd.f32 0.0, %v6147
      %6149 = vmatmul.bf16.gmra.mxu0 %v3622
      %v6150 = vpop.f32.mrf.mxu0
      %v6151 = vadd.f32 0.0, %v6150
      %v6152 = vpop.f32.mrf.mxu0
      %v6153 = vadd.f32 0.0, %v6152
      %6154 = vmatmul.bf16.gmra.mxu0 %v3631
      %v6155 = vpop.f32.mrf.mxu0
      %v6156 = vadd.f32 0.0, %v6155
      %v6157 = vpop.f32.mrf.mxu0
      %v6158 = vadd.f32 0.0, %v6157
      %6159 = vmatmul.bf16.gmra.mxu0 %v3640
      %v6160 = vpop.f32.mrf.mxu0
      %v6161 = vadd.f32 0.0, %v6160
      %v6162 = vpop.f32.mrf.mxu0
      %v6163 = vadd.f32 0.0, %v6162
      %6164 = vmatmul.bf16.gmra.mxu0 %v3649
      %v6165 = vpop.f32.mrf.mxu0
      %v6166 = vadd.f32 0.0, %v6165
      %v6167 = vpop.f32.mrf.mxu0
      %v6168 = vadd.f32 0.0, %v6167
      %6169 = vmatmul.bf16.gmra.mxu0 %v5958
      %v6170 = vpop.f32.mrf.mxu0
      %v6171 = vadd.f32 0.0, %v6170
      %v6172 = vpop.f32.mrf.mxu0
      %v6173 = vadd.f32 0.0, %v6172
      %6174 = vmatmul.bf16.gmra.mxu0 %v5962
      %v6175 = vpop.f32.mrf.mxu0
      %v6176 = vadd.f32 0.0, %v6175
      %v6177 = vpop.f32.mrf.mxu0
      %v6178 = vadd.f32 0.0, %v6177
      %6179 = vmatmul.bf16.gmra.mxu0 %v5971
      %v6180 = vpop.f32.mrf.mxu0
      %v6181 = vadd.f32 0.0, %v6180
      %v6182 = vpop.f32.mrf.mxu0
      %v6183 = vadd.f32 0.0, %v6182
      %6184 = vmatmul.bf16.gmra.mxu0 %v5980
      %v6185 = vpop.f32.mrf.mxu0
      %v6186 = vpop.f32.mrf.mxu0
      %6187 = vdwg.mxu0
      %v6188 = vadd.f32 %v5880, %v6046
      %v6189 = vadd.f32 %v5881, %v6048
      %v6190 = vadd.f32 %v5882, %v6051
      %v6191 = vadd.f32 %v5883, %v6053
      %v6192 = vadd.f32 %v5884, %v6056
      %v6193 = vadd.f32 %v5885, %v6058
      %v6194 = vadd.f32 %v5886, %v6061
      %v6195 = vadd.f32 %v5887, %v6063
      %v6196 = vadd.f32 %v5888, %v6066
      %v6197 = vadd.f32 %v5889, %v6068
      %v6198 = vadd.f32 %v5890, %v6071
      %v6199 = vadd.f32 %v5891, %v6073
      %v6200 = vadd.f32 %v5892, %v6076
      %v6201 = vadd.f32 %v5893, %v6078
      %v6202 = vadd.f32 %v5894, %v6081
      %v6203 = vadd.f32 %v5895, %v6083
      %v6204 = vadd.f32 %v5896, %v6086
      %v6205 = vadd.f32 %v5897, %v6088
      %v6206 = vadd.f32 %v5898, %v6091
      %v6207 = vadd.f32 %v5899, %v6093
      %v6208 = vadd.f32 %v5900, %v6096
      %v6209 = vadd.f32 %v5901, %v6098
      %v6210 = vadd.f32 %v5902, %v6101
      %v6211 = vadd.f32 %v5903, %v6103
      %v6212 = vadd.f32 %v5904, %v6106
      %v6213 = vadd.f32 %v5905, %v6108
      %v6214 = vadd.f32 %v5906, %v6111
      %v6215 = vadd.f32 %v5907, %v6113
      %v6216 = vadd.f32 %v5908, %v6116
      %v6217 = vadd.f32 %v5909, %v6118
      %v6218 = vadd.f32 %v5910, %v6121
      %v6219 = vadd.f32 %v5911, %v6123
      %v6220 = vadd.f32 %v5912, %v6126
      %v6221 = vadd.f32 %v5913, %v6128
      %v6222 = vadd.f32 %v5914, %v6131
      %v6223 = vadd.f32 %v5915, %v6133
      %v6224 = vadd.f32 %v5916, %v6136
      %v6225 = vadd.f32 %v5917, %v6138
      %v6226 = vadd.f32 %v5918, %v6141
      %v6227 = vadd.f32 %v5919, %v6143
      %v6228 = vadd.f32 %v5920, %v6146
      %v6229 = vadd.f32 %v5921, %v6148
      %v6230 = vadd.f32 %v5922, %v6151
      %v6231 = vadd.f32 %v5923, %v6153
      %v6232 = vadd.f32 %v5924, %v6156
      %v6233 = vadd.f32 %v5925, %v6158
      %v6234 = vadd.f32 %v5926, %v6161
      %v6235 = vadd.f32 %v5927, %v6163
      %v6236 = vadd.f32 %v5928, %v6166
      %v6237 = vadd.f32 %v5929, %v6168
      %v6238 = vadd.f32 %v5930, %v6171
      %v6239 = vadd.f32 %v5931, %v6173
      %v6240 = vadd.f32 %v5932, %v6176
      %v6241 = vadd.f32 %v5933, %v6178
      %v6242 = vadd.f32 %v5934, %v6181
      %v6243 = vadd.f32 %v5935, %v6183
      %v6244 = vpack.c.bf16 %v3325, %v3324
      %v6245 = vpack.c.bf16 %v3327, %v3326
      %s6246 = scalar_lea.vmem %s9, 448
      %v6247 = vld [vmem:[%s6246] sm:$0xf]
      %v6248 = vld [vmem:[%s6246 + $0x4] sm:$0xf]
      %v6249 = vld [vmem:[%s6246 + $0x8] sm:$0xf]
      %v6250 = vld [vmem:[%s6246 + $0xc] sm:$0xf]
      %v6251 = vld [vmem:[%s6246 + $0x10] sm:$0xf]
      %v6252 = vld [vmem:[%s6246 + $0x14] sm:$0xf]
      %v6253 = vld [vmem:[%s6246 + $0x18] sm:$0xf]
      %v6254 = vld [vmem:[%s6246 + $0x1c] sm:$0xf]
      %v6255 = vld [vmem:[%s6246 + $0x20] sm:$0xf]
      %v6256 = vld [vmem:[%s6246 + $0x24] sm:$0xf]
      %v6257 = vld [vmem:[%s6246 + $0x28] sm:$0xf]
      %v6258 = vld [vmem:[%s6246 + $0x2c] sm:$0xf]
      %v6259 = vld [vmem:[%s6246 + $0x30] sm:$0xf]
      %v6260 = vld [vmem:[%s6246 + $0x34] sm:$0xf]
      %v6261 = vld [vmem:[%s6246 + $0x38] sm:$0xf]
      %v6262 = vld [vmem:[%s6246 + $0x3c] sm:$0xf]
      %v6279 = vunpack.c.l.b16 %v6247
      %v6280 = vunpack.c.l.b16 %v6248
      %v6281 = vunpack.c.l.b16 %v6249
      %v6282 = vunpack.c.l.b16 %v6250
      %v6283 = vunpack.c.l.b16 %v6251
      %v6284 = vunpack.c.l.b16 %v6252
      %v6285 = vunpack.c.l.b16 %v6253
      %v6286 = vunpack.c.l.b16 %v6254
      %v6287 = vunpack.c.l.b16 %v6255
      %v6288 = vunpack.c.l.b16 %v6256
      %v6289 = vunpack.c.l.b16 %v6257
      %v6290 = vunpack.c.l.b16 %v6258
      %v6291 = vunpack.c.l.b16 %v6259
      %v6292 = vunpack.c.l.b16 %v6260
      %v6293 = vunpack.c.l.b16 %v6261
      %v6294 = vunpack.c.l.b16 %v6262
      %v6295 = vpack.c.b16 %v6280, %v6279
      %v6296 = vpack.c.b16 %v6282, %v6281
      %v6297 = vpack.c.b16 %v6284, %v6283
      %v6298 = vpack.c.b16 %v6286, %v6285
      %v6299 = vpack.c.b16 %v6288, %v6287
      %v6300 = vpack.c.b16 %v6290, %v6289
      %v6301 = vpack.c.b16 %v6292, %v6291
      %v6302 = vpack.c.b16 %v6294, %v6293
      %6311 = vmatpush.bf16.msra.mxu0 %v6302
      %6312 = vmatpush.bf16.msra.mxu0 %v6301
      %6313 = vmatpush.bf16.msra.mxu0 %v6300
      %6314 = vmatpush.bf16.msra.mxu0 %v6299
      %6315 = vmatpush.bf16.msra.mxu0 %v6298
      %6316 = vmatpush.bf16.msra.mxu0 %v6297
      %6317 = vmatpush.bf16.msra.mxu0 %v6296
      %6318 = vmatpush.bf16.msra.mxu0 %v6295
      %6319 = vmatmul.bf16.gmra.mxu0 %v3951
      %v6320 = vpop.f32.mrf.mxu0
      %v6321 = vpop.f32.mrf.mxu0
      %6322 = vmatmul.bf16.gmra.mxu0 %v3952
      %v6323 = vpop.f32.mrf.mxu0
      %v6324 = vadd.f32 0.0, %v6323
      %v6325 = vpop.f32.mrf.mxu0
      %v6326 = vadd.f32 0.0, %v6325
      %6327 = vmatmul.bf16.gmra.mxu0 %v3953
      %v6328 = vpop.f32.mrf.mxu0
      %v6329 = vadd.f32 0.0, %v6328
      %v6330 = vpop.f32.mrf.mxu0
      %v6331 = vadd.f32 0.0, %v6330
      %6332 = vmatmul.bf16.gmra.mxu0 %v3954
      %v6333 = vpop.f32.mrf.mxu0
      %v6334 = vadd.f32 0.0, %v6333
      %v6335 = vpop.f32.mrf.mxu0
      %v6336 = vadd.f32 0.0, %v6335
      %6337 = vmatmul.bf16.gmra.mxu0 %v3955
      %v6338 = vpop.f32.mrf.mxu0
      %v6339 = vadd.f32 0.0, %v6338
      %v6340 = vpop.f32.mrf.mxu0
      %v6341 = vadd.f32 0.0, %v6340
      %6342 = vmatmul.bf16.gmra.mxu0 %v3956
      %v6343 = vpop.f32.mrf.mxu0
      %v6344 = vadd.f32 0.0, %v6343
      %v6345 = vpop.f32.mrf.mxu0
      %v6346 = vadd.f32 0.0, %v6345
      %6347 = vmatmul.bf16.gmra.mxu0 %v3957
      %v6348 = vpop.f32.mrf.mxu0
      %v6349 = vadd.f32 0.0, %v6348
      %v6350 = vpop.f32.mrf.mxu0
      %v6351 = vadd.f32 0.0, %v6350
      %6352 = vmatmul.bf16.gmra.mxu0 %v3958
      %v6353 = vpop.f32.mrf.mxu0
      %v6354 = vadd.f32 0.0, %v6353
      %v6355 = vpop.f32.mrf.mxu0
      %v6356 = vadd.f32 0.0, %v6355
      %6357 = vmatmul.bf16.gmra.mxu0 %v3959
      %v6358 = vpop.f32.mrf.mxu0
      %v6359 = vadd.f32 0.0, %v6358
      %v6360 = vpop.f32.mrf.mxu0
      %v6361 = vadd.f32 0.0, %v6360
      %6362 = vmatmul.bf16.gmra.mxu0 %v3960
      %v6363 = vpop.f32.mrf.mxu0
      %v6364 = vadd.f32 0.0, %v6363
      %v6365 = vpop.f32.mrf.mxu0
      %v6366 = vadd.f32 0.0, %v6365
      %6367 = vmatmul.bf16.gmra.mxu0 %v3961
      %v6368 = vpop.f32.mrf.mxu0
      %v6369 = vadd.f32 0.0, %v6368
      %v6370 = vpop.f32.mrf.mxu0
      %v6371 = vadd.f32 0.0, %v6370
      %6372 = vmatmul.bf16.gmra.mxu0 %v3962
      %v6373 = vpop.f32.mrf.mxu0
      %v6374 = vadd.f32 0.0, %v6373
      %v6375 = vpop.f32.mrf.mxu0
      %v6376 = vadd.f32 0.0, %v6375
      %6377 = vmatmul.bf16.gmra.mxu0 %v3963
      %v6378 = vpop.f32.mrf.mxu0
      %v6379 = vadd.f32 0.0, %v6378
      %v6380 = vpop.f32.mrf.mxu0
      %v6381 = vadd.f32 0.0, %v6380
      %6382 = vmatmul.bf16.gmra.mxu0 %v3964
      %v6383 = vpop.f32.mrf.mxu0
      %v6384 = vadd.f32 0.0, %v6383
      %v6385 = vpop.f32.mrf.mxu0
      %v6386 = vadd.f32 0.0, %v6385
      %6387 = vmatmul.bf16.gmra.mxu0 %v3965
      %v6388 = vpop.f32.mrf.mxu0
      %v6389 = vadd.f32 0.0, %v6388
      %v6390 = vpop.f32.mrf.mxu0
      %v6391 = vadd.f32 0.0, %v6390
      %6392 = vmatmul.bf16.gmra.mxu0 %v3966
      %v6393 = vpop.f32.mrf.mxu0
      %v6394 = vadd.f32 0.0, %v6393
      %v6395 = vpop.f32.mrf.mxu0
      %v6396 = vadd.f32 0.0, %v6395
      %6397 = vmatmul.bf16.gmra.mxu0 %v3967
      %v6398 = vpop.f32.mrf.mxu0
      %v6399 = vadd.f32 0.0, %v6398
      %v6400 = vpop.f32.mrf.mxu0
      %v6401 = vadd.f32 0.0, %v6400
      %6402 = vmatmul.bf16.gmra.mxu0 %v3968
      %v6403 = vpop.f32.mrf.mxu0
      %v6404 = vadd.f32 0.0, %v6403
      %v6405 = vpop.f32.mrf.mxu0
      %v6406 = vadd.f32 0.0, %v6405
      %6407 = vmatmul.bf16.gmra.mxu0 %v3969
      %v6408 = vpop.f32.mrf.mxu0
      %v6409 = vadd.f32 0.0, %v6408
      %v6410 = vpop.f32.mrf.mxu0
      %v6411 = vadd.f32 0.0, %v6410
      %6412 = vmatmul.bf16.gmra.mxu0 %v3970
      %v6413 = vpop.f32.mrf.mxu0
      %v6414 = vadd.f32 0.0, %v6413
      %v6415 = vpop.f32.mrf.mxu0
      %v6416 = vadd.f32 0.0, %v6415
      %6417 = vmatmul.bf16.gmra.mxu0 %v3971
      %v6418 = vpop.f32.mrf.mxu0
      %v6419 = vadd.f32 0.0, %v6418
      %v6420 = vpop.f32.mrf.mxu0
      %v6421 = vadd.f32 0.0, %v6420
      %6422 = vmatmul.bf16.gmra.mxu0 %v3972
      %v6423 = vpop.f32.mrf.mxu0
      %v6424 = vadd.f32 0.0, %v6423
      %v6425 = vpop.f32.mrf.mxu0
      %v6426 = vadd.f32 0.0, %v6425
      %6427 = vmatmul.bf16.gmra.mxu0 %v3973
      %v6428 = vpop.f32.mrf.mxu0
      %v6429 = vadd.f32 0.0, %v6428
      %v6430 = vpop.f32.mrf.mxu0
      %v6431 = vadd.f32 0.0, %v6430
      %6432 = vmatmul.bf16.gmra.mxu0 %v3974
      %v6433 = vpop.f32.mrf.mxu0
      %v6434 = vadd.f32 0.0, %v6433
      %v6435 = vpop.f32.mrf.mxu0
      %v6436 = vadd.f32 0.0, %v6435
      %6437 = vmatmul.bf16.gmra.mxu0 %v3975
      %v6438 = vpop.f32.mrf.mxu0
      %v6439 = vadd.f32 0.0, %v6438
      %v6440 = vpop.f32.mrf.mxu0
      %v6441 = vadd.f32 0.0, %v6440
      %6442 = vmatmul.bf16.gmra.mxu0 %v3976
      %v6443 = vpop.f32.mrf.mxu0
      %v6444 = vadd.f32 0.0, %v6443
      %v6445 = vpop.f32.mrf.mxu0
      %v6446 = vadd.f32 0.0, %v6445
      %6447 = vmatmul.bf16.gmra.mxu0 %v3977
      %v6448 = vpop.f32.mrf.mxu0
      %v6449 = vadd.f32 0.0, %v6448
      %v6450 = vpop.f32.mrf.mxu0
      %v6451 = vadd.f32 0.0, %v6450
      %6452 = vmatmul.bf16.gmra.mxu0 %v4806
      %v6453 = vpop.f32.mrf.mxu0
      %v6454 = vadd.f32 0.0, %v6453
      %v6455 = vpop.f32.mrf.mxu0
      %v6456 = vadd.f32 0.0, %v6455
      %6457 = vmatmul.bf16.gmra.mxu0 %v6244
      %v6458 = vpop.f32.mrf.mxu0
      %v6459 = vadd.f32 0.0, %v6458
      %v6460 = vpop.f32.mrf.mxu0
      %v6461 = vadd.f32 0.0, %v6460
      %6462 = vmatmul.bf16.gmra.mxu0 %v6245
      %v6463 = vpop.f32.mrf.mxu0
      %v6464 = vpop.f32.mrf.mxu0
      %6465 = vdwg.mxu0
      %v6466 = vadd.f32 %v6188, %v6324
      %v6467 = vadd.f32 %v6189, %v6326
      %v6468 = vadd.f32 %v6190, %v6329
      %v6469 = vadd.f32 %v6191, %v6331
      %v6470 = vadd.f32 %v6192, %v6334
      %v6471 = vadd.f32 %v6193, %v6336
      %v6472 = vadd.f32 %v6194, %v6339
      %v6473 = vadd.f32 %v6195, %v6341
      %v6474 = vadd.f32 %v6196, %v6344
      %v6475 = vadd.f32 %v6197, %v6346
      %v6476 = vadd.f32 %v6198, %v6349
      %v6477 = vadd.f32 %v6199, %v6351
      %v6478 = vadd.f32 %v6200, %v6354
      %v6479 = vadd.f32 %v6201, %v6356
      %v6480 = vadd.f32 %v6202, %v6359
      %v6481 = vadd.f32 %v6203, %v6361
      %v6482 = vadd.f32 %v6204, %v6364
      %v6483 = vadd.f32 %v6205, %v6366
      %v6484 = vadd.f32 %v6206, %v6369
      %v6485 = vadd.f32 %v6207, %v6371
      %v6486 = vadd.f32 %v6208, %v6374
      %v6487 = vadd.f32 %v6209, %v6376
      %v6488 = vadd.f32 %v6210, %v6379
      %v6489 = vadd.f32 %v6211, %v6381
      %v6490 = vadd.f32 %v6212, %v6384
      %v6491 = vadd.f32 %v6213, %v6386
      %v6492 = vadd.f32 %v6214, %v6389
      %v6493 = vadd.f32 %v6215, %v6391
      %v6494 = vadd.f32 %v6216, %v6394
      %v6495 = vadd.f32 %v6217, %v6396
      %v6496 = vadd.f32 %v6218, %v6399
      %v6497 = vadd.f32 %v6219, %v6401
      %v6498 = vadd.f32 %v6220, %v6404
      %v6499 = vadd.f32 %v6221, %v6406
      %v6500 = vadd.f32 %v6222, %v6409
      %v6501 = vadd.f32 %v6223, %v6411
      %v6502 = vadd.f32 %v6224, %v6414
      %v6503 = vadd.f32 %v6225, %v6416
      %v6504 = vadd.f32 %v6226, %v6419
      %v6505 = vadd.f32 %v6227, %v6421
      %v6506 = vadd.f32 %v6228, %v6424
      %v6507 = vadd.f32 %v6229, %v6426
      %v6508 = vadd.f32 %v6230, %v6429
      %v6509 = vadd.f32 %v6231, %v6431
      %v6510 = vadd.f32 %v6232, %v6434
      %v6511 = vadd.f32 %v6233, %v6436
      %v6512 = vadd.f32 %v6234, %v6439
      %v6513 = vadd.f32 %v6235, %v6441
      %v6514 = vadd.f32 %v6236, %v6444
      %v6515 = vadd.f32 %v6237, %v6446
      %v6516 = vadd.f32 %v6238, %v6449
      %v6517 = vadd.f32 %v6239, %v6451
      %v6518 = vadd.f32 %v6240, %v6454
      %v6519 = vadd.f32 %v6241, %v6456
      %v6520 = vadd.f32 %v6242, %v6459
      %v6521 = vadd.f32 %v6243, %v6461
      %v6522 = vpack.c.bf16 %v3328, %v3328
      %s6523 = scalar_lea.vmem %s9, 512
      %v6524 = vld [vmem:[%s6523] sm:$0xf]
      %v6525 = vld [vmem:[%s6523 + $0x4] sm:$0xf]
      %v6526 = vld [vmem:[%s6523 + $0x8] sm:$0xf]
      %v6527 = vld [vmem:[%s6523 + $0xc] sm:$0xf]
      %v6528 = vld [vmem:[%s6523 + $0x10] sm:$0xf]
      %v6529 = vld [vmem:[%s6523 + $0x14] sm:$0xf]
      %v6530 = vld [vmem:[%s6523 + $0x18] sm:$0xf]
      %v6531 = vld [vmem:[%s6523 + $0x1c] sm:$0xf]
      %v6532 = vld [vmem:[%s6523 + $0x20] sm:$0xf]
      %v6533 = vld [vmem:[%s6523 + $0x24] sm:$0xf]
      %v6534 = vld [vmem:[%s6523 + $0x28] sm:$0xf]
      %v6535 = vld [vmem:[%s6523 + $0x2c] sm:$0xf]
      %v6536 = vld [vmem:[%s6523 + $0x30] sm:$0xf]
      %v6537 = vld [vmem:[%s6523 + $0x34] sm:$0xf]
      %v6538 = vld [vmem:[%s6523 + $0x38] sm:$0xf]
      %v6539 = vld [vmem:[%s6523 + $0x3c] sm:$0xf]
      %v6540 = vrot.slane %v4944, 1
      %v6541 = vsel %vm4272, %v4511, %v6540
      %v6542 = vor.u32 %v4941, %v6540
      %v6544 = vshll.u32 %v6244, 16
      %v6546 = vrot.slane %v6544, 1
      %v6547 = vsel %vm4272, %v6542, %v6546
      %v6548 = vshrl.u32 %v6244, 16
      %v6550 = vor.u32 %v6548, %v6546
      %v6552 = vshll.u32 %v6245, 16
      %v6554 = vrot.slane %v6552, 1
      %v6555 = vsel %vm4272, %v6550, %v6554
      %v6556 = vshrl.u32 %v6245, 16
      %v6558 = vor.u32 %v6556, %v6554
      %v6560 = vshll.u32 %v6522, 16
      %v6562 = vrot.slane %v6560, 1
      %v6563 = vsel %vm4272, %v6558, %v6562
      %v6584 = vunpack.c.l.b16 %v6524
      %v6585 = vunpack.c.l.b16 %v6525
      %v6586 = vunpack.c.l.b16 %v6526
      %v6587 = vunpack.c.l.b16 %v6527
      %v6588 = vunpack.c.l.b16 %v6528
      %v6589 = vunpack.c.l.b16 %v6529
      %v6590 = vunpack.c.l.b16 %v6530
      %v6591 = vunpack.c.l.b16 %v6531
      %v6592 = vunpack.c.l.b16 %v6532
      %v6593 = vunpack.c.l.b16 %v6533
      %v6594 = vunpack.c.l.b16 %v6534
      %v6595 = vunpack.c.l.b16 %v6535
      %v6596 = vunpack.c.l.b16 %v6536
      %v6597 = vunpack.c.l.b16 %v6537
      %v6598 = vunpack.c.l.b16 %v6538
      %v6599 = vunpack.c.l.b16 %v6539
      %v6600 = vpack.c.b16 %v6585, %v6584
      %v6601 = vpack.c.b16 %v6587, %v6586
      %v6602 = vpack.c.b16 %v6589, %v6588
      %v6603 = vpack.c.b16 %v6591, %v6590
      %v6604 = vpack.c.b16 %v6593, %v6592
      %v6605 = vpack.c.b16 %v6595, %v6594
      %v6606 = vpack.c.b16 %v6597, %v6596
      %v6607 = vpack.c.b16 %v6599, %v6598
      %6616 = vmatpush.bf16.msra.mxu0 %v6607
      %6617 = vmatpush.bf16.msra.mxu0 %v6606
      %6618 = vmatpush.bf16.msra.mxu0 %v6605
      %6619 = vmatpush.bf16.msra.mxu0 %v6604
      %6620 = vmatpush.bf16.msra.mxu0 %v6603
      %6621 = vmatpush.bf16.msra.mxu0 %v6602
      %6622 = vmatpush.bf16.msra.mxu0 %v6601
      %6623 = vmatpush.bf16.msra.mxu0 %v6600
      %6624 = vmatmul.bf16.gmra.mxu0 %v4308
      %v6625 = vpop.f32.mrf.mxu0
      %v6626 = vpop.f32.mrf.mxu0
      %6627 = vmatmul.bf16.gmra.mxu0 %v4316
      %v6628 = vpop.f32.mrf.mxu0
      %v6629 = vadd.f32 0.0, %v6628
      %v6630 = vpop.f32.mrf.mxu0
      %v6631 = vadd.f32 0.0, %v6630
      %6632 = vmatmul.bf16.gmra.mxu0 %v4324
      %v6633 = vpop.f32.mrf.mxu0
      %v6634 = vadd.f32 0.0, %v6633
      %v6635 = vpop.f32.mrf.mxu0
      %v6636 = vadd.f32 0.0, %v6635
      %6637 = vmatmul.bf16.gmra.mxu0 %v4332
      %v6638 = vpop.f32.mrf.mxu0
      %v6639 = vadd.f32 0.0, %v6638
      %v6640 = vpop.f32.mrf.mxu0
      %v6641 = vadd.f32 0.0, %v6640
      %6642 = vmatmul.bf16.gmra.mxu0 %v4340
      %v6643 = vpop.f32.mrf.mxu0
      %v6644 = vadd.f32 0.0, %v6643
      %v6645 = vpop.f32.mrf.mxu0
      %v6646 = vadd.f32 0.0, %v6645
      %6647 = vmatmul.bf16.gmra.mxu0 %v4348
      %v6648 = vpop.f32.mrf.mxu0
      %v6649 = vadd.f32 0.0, %v6648
      %v6650 = vpop.f32.mrf.mxu0
      %v6651 = vadd.f32 0.0, %v6650
      %6652 = vmatmul.bf16.gmra.mxu0 %v4356
      %v6653 = vpop.f32.mrf.mxu0
      %v6654 = vadd.f32 0.0, %v6653
      %v6655 = vpop.f32.mrf.mxu0
      %v6656 = vadd.f32 0.0, %v6655
      %6657 = vmatmul.bf16.gmra.mxu0 %v4364
      %v6658 = vpop.f32.mrf.mxu0
      %v6659 = vadd.f32 0.0, %v6658
      %v6660 = vpop.f32.mrf.mxu0
      %v6661 = vadd.f32 0.0, %v6660
      %6662 = vmatmul.bf16.gmra.mxu0 %v4372
      %v6663 = vpop.f32.mrf.mxu0
      %v6664 = vadd.f32 0.0, %v6663
      %v6665 = vpop.f32.mrf.mxu0
      %v6666 = vadd.f32 0.0, %v6665
      %6667 = vmatmul.bf16.gmra.mxu0 %v4380
      %v6668 = vpop.f32.mrf.mxu0
      %v6669 = vadd.f32 0.0, %v6668
      %v6670 = vpop.f32.mrf.mxu0
      %v6671 = vadd.f32 0.0, %v6670
      %6672 = vmatmul.bf16.gmra.mxu0 %v4388
      %v6673 = vpop.f32.mrf.mxu0
      %v6674 = vadd.f32 0.0, %v6673
      %v6675 = vpop.f32.mrf.mxu0
      %v6676 = vadd.f32 0.0, %v6675
      %6677 = vmatmul.bf16.gmra.mxu0 %v4396
      %v6678 = vpop.f32.mrf.mxu0
      %v6679 = vadd.f32 0.0, %v6678
      %v6680 = vpop.f32.mrf.mxu0
      %v6681 = vadd.f32 0.0, %v6680
      %6682 = vmatmul.bf16.gmra.mxu0 %v4404
      %v6683 = vpop.f32.mrf.mxu0
      %v6684 = vadd.f32 0.0, %v6683
      %v6685 = vpop.f32.mrf.mxu0
      %v6686 = vadd.f32 0.0, %v6685
      %6687 = vmatmul.bf16.gmra.mxu0 %v4412
      %v6688 = vpop.f32.mrf.mxu0
      %v6689 = vadd.f32 0.0, %v6688
      %v6690 = vpop.f32.mrf.mxu0
      %v6691 = vadd.f32 0.0, %v6690
      %6692 = vmatmul.bf16.gmra.mxu0 %v4420
      %v6693 = vpop.f32.mrf.mxu0
      %v6694 = vadd.f32 0.0, %v6693
      %v6695 = vpop.f32.mrf.mxu0
      %v6696 = vadd.f32 0.0, %v6695
      %6697 = vmatmul.bf16.gmra.mxu0 %v4428
      %v6698 = vpop.f32.mrf.mxu0
      %v6699 = vadd.f32 0.0, %v6698
      %v6700 = vpop.f32.mrf.mxu0
      %v6701 = vadd.f32 0.0, %v6700
      %6702 = vmatmul.bf16.gmra.mxu0 %v4436
      %v6703 = vpop.f32.mrf.mxu0
      %v6704 = vadd.f32 0.0, %v6703
      %v6705 = vpop.f32.mrf.mxu0
      %v6706 = vadd.f32 0.0, %v6705
      %6707 = vmatmul.bf16.gmra.mxu0 %v4444
      %v6708 = vpop.f32.mrf.mxu0
      %v6709 = vadd.f32 0.0, %v6708
      %v6710 = vpop.f32.mrf.mxu0
      %v6711 = vadd.f32 0.0, %v6710
      %6712 = vmatmul.bf16.gmra.mxu0 %v4452
      %v6713 = vpop.f32.mrf.mxu0
      %v6714 = vadd.f32 0.0, %v6713
      %v6715 = vpop.f32.mrf.mxu0
      %v6716 = vadd.f32 0.0, %v6715
      %6717 = vmatmul.bf16.gmra.mxu0 %v4460
      %v6718 = vpop.f32.mrf.mxu0
      %v6719 = vadd.f32 0.0, %v6718
      %v6720 = vpop.f32.mrf.mxu0
      %v6721 = vadd.f32 0.0, %v6720
      %6722 = vmatmul.bf16.gmra.mxu0 %v4468
      %v6723 = vpop.f32.mrf.mxu0
      %v6724 = vadd.f32 0.0, %v6723
      %v6725 = vpop.f32.mrf.mxu0
      %v6726 = vadd.f32 0.0, %v6725
      %6727 = vmatmul.bf16.gmra.mxu0 %v4476
      %v6728 = vpop.f32.mrf.mxu0
      %v6729 = vadd.f32 0.0, %v6728
      %v6730 = vpop.f32.mrf.mxu0
      %v6731 = vadd.f32 0.0, %v6730
      %6732 = vmatmul.bf16.gmra.mxu0 %v4484
      %v6733 = vpop.f32.mrf.mxu0
      %v6734 = vadd.f32 0.0, %v6733
      %v6735 = vpop.f32.mrf.mxu0
      %v6736 = vadd.f32 0.0, %v6735
      %6737 = vmatmul.bf16.gmra.mxu0 %v4492
      %v6738 = vpop.f32.mrf.mxu0
      %v6739 = vadd.f32 0.0, %v6738
      %v6740 = vpop.f32.mrf.mxu0
      %v6741 = vadd.f32 0.0, %v6740
      %6742 = vmatmul.bf16.gmra.mxu0 %v4500
      %v6743 = vpop.f32.mrf.mxu0
      %v6744 = vadd.f32 0.0, %v6743
      %v6745 = vpop.f32.mrf.mxu0
      %v6746 = vadd.f32 0.0, %v6745
      %6747 = vmatmul.bf16.gmra.mxu0 %v4508
      %v6748 = vpop.f32.mrf.mxu0
      %v6749 = vadd.f32 0.0, %v6748
      %v6750 = vpop.f32.mrf.mxu0
      %v6751 = vadd.f32 0.0, %v6750
      %6752 = vmatmul.bf16.gmra.mxu0 %v6541
      %v6753 = vpop.f32.mrf.mxu0
      %v6754 = vadd.f32 0.0, %v6753
      %v6755 = vpop.f32.mrf.mxu0
      %v6756 = vadd.f32 0.0, %v6755
      %6757 = vmatmul.bf16.gmra.mxu0 %v6547
      %v6758 = vpop.f32.mrf.mxu0
      %v6759 = vadd.f32 0.0, %v6758
      %v6760 = vpop.f32.mrf.mxu0
      %v6761 = vadd.f32 0.0, %v6760
      %6762 = vmatmul.bf16.gmra.mxu0 %v6555
      %v6763 = vpop.f32.mrf.mxu0
      %v6764 = vadd.f32 0.0, %v6763
      %v6765 = vpop.f32.mrf.mxu0
      %v6766 = vadd.f32 0.0, %v6765
      %6767 = vmatmul.bf16.gmra.mxu0 %v6563
      %v6768 = vpop.f32.mrf.mxu0
      %v6769 = vpop.f32.mrf.mxu0
      %6770 = vdwg.mxu0
      %v6771 = vadd.f32 %v6466, %v6629
      %v6772 = vadd.f32 %v6467, %v6631
      %v6773 = vadd.f32 %v6468, %v6634
      %v6774 = vadd.f32 %v6469, %v6636
      %v6775 = vadd.f32 %v6470, %v6639
      %v6776 = vadd.f32 %v6471, %v6641
      %v6777 = vadd.f32 %v6472, %v6644
      %v6778 = vadd.f32 %v6473, %v6646
      %v6779 = vadd.f32 %v6474, %v6649
      %v6780 = vadd.f32 %v6475, %v6651
      %v6781 = vadd.f32 %v6476, %v6654
      %v6782 = vadd.f32 %v6477, %v6656
      %v6783 = vadd.f32 %v6478, %v6659
      %v6784 = vadd.f32 %v6479, %v6661
      %v6785 = vadd.f32 %v6480, %v6664
      %v6786 = vadd.f32 %v6481, %v6666
      %v6787 = vadd.f32 %v6482, %v6669
      %v6788 = vadd.f32 %v6483, %v6671
      %v6789 = vadd.f32 %v6484, %v6674
      %v6790 = vadd.f32 %v6485, %v6676
      %v6791 = vadd.f32 %v6486, %v6679
      %v6792 = vadd.f32 %v6487, %v6681
      %v6793 = vadd.f32 %v6488, %v6684
      %v6794 = vadd.f32 %v6489, %v6686
      %v6795 = vadd.f32 %v6490, %v6689
      %v6796 = vadd.f32 %v6491, %v6691
      %v6797 = vadd.f32 %v6492, %v6694
      %v6798 = vadd.f32 %v6493, %v6696
      %v6799 = vadd.f32 %v6494, %v6699
      %v6800 = vadd.f32 %v6495, %v6701
      %v6801 = vadd.f32 %v6496, %v6704
      %v6802 = vadd.f32 %v6497, %v6706
      %v6803 = vadd.f32 %v6498, %v6709
      %v6804 = vadd.f32 %v6499, %v6711
      %v6805 = vadd.f32 %v6500, %v6714
      %v6806 = vadd.f32 %v6501, %v6716
      %v6807 = vadd.f32 %v6502, %v6719
      %v6808 = vadd.f32 %v6503, %v6721
      %v6809 = vadd.f32 %v6504, %v6724
      %v6810 = vadd.f32 %v6505, %v6726
      %v6811 = vadd.f32 %v6506, %v6729
      %v6812 = vadd.f32 %v6507, %v6731
      %v6813 = vadd.f32 %v6508, %v6734
      %v6814 = vadd.f32 %v6509, %v6736
      %v6815 = vadd.f32 %v6510, %v6739
      %v6816 = vadd.f32 %v6511, %v6741
      %v6817 = vadd.f32 %v6512, %v6744
      %v6818 = vadd.f32 %v6513, %v6746
      %v6819 = vadd.f32 %v6514, %v6749
      %v6820 = vadd.f32 %v6515, %v6751
      %v6821 = vadd.f32 %v6516, %v6754
      %v6822 = vadd.f32 %v6517, %v6756
      %v6823 = vadd.f32 %v6518, %v6759
      %v6824 = vadd.f32 %v6519, %v6761
      %v6825 = vadd.f32 %v6520, %v6764
      %v6826 = vadd.f32 %v6521, %v6766
      %v6827 = vmax.f32 %v6771, 0.0
      %v6828 = vmax.f32 %v6772, 0.0
      %v6829 = vmax.f32 %v6773, 0.0
      %v6830 = vmax.f32 %v6774, 0.0
      %v6831 = vmax.f32 %v6775, 0.0
      %v6832 = vmax.f32 %v6776, 0.0
      %v6833 = vmax.f32 %v6777, 0.0
      %v6834 = vmax.f32 %v6778, 0.0
      %v6835 = vmax.f32 %v6779, 0.0
      %v6836 = vmax.f32 %v6780, 0.0
      %v6837 = vmax.f32 %v6781, 0.0
      %v6838 = vmax.f32 %v6782, 0.0
      %v6839 = vmax.f32 %v6783, 0.0
      %v6840 = vmax.f32 %v6784, 0.0
      %v6841 = vmax.f32 %v6785, 0.0
      %v6842 = vmax.f32 %v6786, 0.0
      %v6843 = vmax.f32 %v6787, 0.0
      %v6844 = vmax.f32 %v6788, 0.0
      %v6845 = vmax.f32 %v6789, 0.0
      %v6846 = vmax.f32 %v6790, 0.0
      %v6847 = vmax.f32 %v6791, 0.0
      %v6848 = vmax.f32 %v6792, 0.0
      %v6849 = vmax.f32 %v6793, 0.0
      %v6850 = vmax.f32 %v6794, 0.0
      %v6851 = vmax.f32 %v6795, 0.0
      %v6852 = vmax.f32 %v6796, 0.0
      %v6853 = vmax.f32 %v6797, 0.0
      %v6854 = vmax.f32 %v6798, 0.0
      %v6855 = vmax.f32 %v6799, 0.0
      %v6856 = vmax.f32 %v6800, 0.0
      %v6857 = vmax.f32 %v6801, 0.0
      %v6858 = vmax.f32 %v6802, 0.0
      %v6859 = vmax.f32 %v6803, 0.0
      %v6860 = vmax.f32 %v6804, 0.0
      %v6861 = vmax.f32 %v6805, 0.0
      %v6862 = vmax.f32 %v6806, 0.0
      %v6863 = vmax.f32 %v6807, 0.0
      %v6864 = vmax.f32 %v6808, 0.0
      %v6865 = vmax.f32 %v6809, 0.0
      %v6866 = vmax.f32 %v6810, 0.0
      %v6867 = vmax.f32 %v6811, 0.0
      %v6868 = vmax.f32 %v6812, 0.0
      %v6869 = vmax.f32 %v6813, 0.0
      %v6870 = vmax.f32 %v6814, 0.0
      %v6871 = vmax.f32 %v6815, 0.0
      %v6872 = vmax.f32 %v6816, 0.0
      %v6873 = vmax.f32 %v6817, 0.0
      %v6874 = vmax.f32 %v6818, 0.0
      %v6875 = vmax.f32 %v6819, 0.0
      %v6876 = vmax.f32 %v6820, 0.0
      %v6877 = vmax.f32 %v6821, 0.0
      %v6878 = vmax.f32 %v6822, 0.0
      %v6879 = vmax.f32 %v6823, 0.0
      %v6880 = vmax.f32 %v6824, 0.0
      %v6881 = vmax.f32 %v6825, 0.0
      %v6882 = vmax.f32 %v6826, 0.0
      %v6883 = vld [vmem:[%s11] sm:$0xff]
      %v6884 = vld [vmem:[%s11 + $0x8] sm:$0xff]
      %v6885 = vld [vmem:[%s11 + $0x10] sm:$0xff]
      %v6886 = vld [vmem:[%s11 + $0x18] sm:$0xff]
      %v6887 = vld [vmem:[%s11 + $0x20] sm:$0xff]
      %v6888 = vld [vmem:[%s11 + $0x28] sm:$0xff]
      %v6889 = vld [vmem:[%s11 + $0x30] sm:$0xff]
      %v6890 = vld [vmem:[%s11 + $0x38] sm:$0xff]
      %v6891 = vld [vmem:[%s11 + $0x40] sm:$0xff]
      %v6892 = vld [vmem:[%s11 + $0x48] sm:$0xff]
      %v6893 = vld [vmem:[%s11 + $0x50] sm:$0xff]
      %v6894 = vld [vmem:[%s11 + $0x58] sm:$0xff]
      %v6895 = vld [vmem:[%s11 + $0x60] sm:$0xff]
      %v6896 = vld [vmem:[%s11 + $0x68] sm:$0xff]
      %v6897 = vld [vmem:[%s11 + $0x70] sm:$0xff]
      %v6898 = vld [vmem:[%s11 + $0x78] sm:$0xff]
      %v6899 = vld [vmem:[%s12] sm:$0x3]
      %v6901 = vperm.slane %v6899, 0
      %v6902 = vperm.slane %v6899, 1
      %v6921 = vunpack.c.l.b16 %v6883
      %v6922 = vunpack.c.h.b16 %v6883
      %v6923 = vunpack.c.l.b16 %v6884
      %v6924 = vunpack.c.h.b16 %v6884
      %v6925 = vunpack.c.l.b16 %v6885
      %v6926 = vunpack.c.h.b16 %v6885
      %v6927 = vunpack.c.l.b16 %v6886
      %v6928 = vunpack.c.h.b16 %v6886
      %v6929 = vunpack.c.l.b16 %v6887
      %v6930 = vunpack.c.h.b16 %v6887
      %v6931 = vunpack.c.l.b16 %v6888
      %v6932 = vunpack.c.h.b16 %v6888
      %v6933 = vunpack.c.l.b16 %v6889
      %v6934 = vunpack.c.h.b16 %v6889
      %v6935 = vunpack.c.l.b16 %v6890
      %v6936 = vunpack.c.h.b16 %v6890
      %v6937 = vunpack.c.l.b16 %v6891
      %v6938 = vunpack.c.h.b16 %v6891
      %v6939 = vunpack.c.l.b16 %v6892
      %v6940 = vunpack.c.h.b16 %v6892
      %v6941 = vunpack.c.l.b16 %v6893
      %v6942 = vunpack.c.h.b16 %v6893
      %v6943 = vunpack.c.l.b16 %v6894
      %v6944 = vunpack.c.h.b16 %v6894
      %v6945 = vunpack.c.l.b16 %v6895
      %v6946 = vunpack.c.h.b16 %v6895
      %v6947 = vunpack.c.l.b16 %v6896
      %v6948 = vunpack.c.h.b16 %v6896
      %v6949 = vunpack.c.l.b16 %v6897
      %v6950 = vunpack.c.h.b16 %v6897
      %v6951 = vunpack.c.l.b16 %v6898
      %v6952 = vunpack.c.h.b16 %v6898
      %v6953 = vpack.c.b16 %v6923, %v6921
      %v6954 = vpack.c.b16 %v6924, %v6922
      %v6955 = vpack.c.b16 %v6927, %v6925
      %v6956 = vpack.c.b16 %v6928, %v6926
      %v6957 = vpack.c.b16 %v6931, %v6929
      %v6958 = vpack.c.b16 %v6932, %v6930
      %v6959 = vpack.c.b16 %v6935, %v6933
      %v6960 = vpack.c.b16 %v6936, %v6934
      %v6961 = vpack.c.b16 %v6939, %v6937
      %v6962 = vpack.c.b16 %v6940, %v6938
      %v6963 = vpack.c.b16 %v6943, %v6941
      %v6964 = vpack.c.b16 %v6944, %v6942
      %v6965 = vpack.c.b16 %v6947, %v6945
      %v6966 = vpack.c.b16 %v6948, %v6946
      %v6967 = vpack.c.b16 %v6951, %v6949
      %v6968 = vpack.c.b16 %v6952, %v6950
      %6985 = vmatpush.bf16.msra.mxu0 %v6967
      %6986 = vmatpush.bf16.msra.mxu0 %v6965
      %6987 = vmatpush.bf16.msra.mxu0 %v6963
      %6988 = vmatpush.bf16.msra.mxu0 %v6961
      %6989 = vmatpush.bf16.msra.mxu0 %v6959
      %6990 = vmatpush.bf16.msra.mxu0 %v6957
      %6991 = vmatpush.bf16.msra.mxu0 %v6955
      %6992 = vmatpush.bf16.msra.mxu0 %v6953
      %6993 = vmatmul.bf16.gmra.mxu0 %v834
      %v6994 = vpop.f32.mrf.mxu0
      %v6995 = vadd.f32 %v6901, %v6994
      %v6996 = vpop.f32.mrf.mxu0
      %v6997 = vadd.f32 %v6901, %v6996
      %6998 = vmatmul.bf16.gmra.mxu0 %v835
      %v6999 = vpop.f32.mrf.mxu0
      %v7000 = vadd.f32 %v6901, %v6999
      %v7001 = vpop.f32.mrf.mxu0
      %v7002 = vadd.f32 %v6901, %v7001
      %7003 = vmatmul.bf16.gmra.mxu0 %v836
      %v7004 = vpop.f32.mrf.mxu0
      %v7005 = vadd.f32 %v6901, %v7004
      %v7006 = vpop.f32.mrf.mxu0
      %v7007 = vadd.f32 %v6901, %v7006
      %7008 = vmatmul.bf16.gmra.mxu0 %v837
      %v7009 = vpop.f32.mrf.mxu0
      %v7010 = vadd.f32 %v6901, %v7009
      %v7011 = vpop.f32.mrf.mxu0
      %v7012 = vadd.f32 %v6901, %v7011
      %7013 = vmatmul.bf16.gmra.mxu0 %v838
      %v7014 = vpop.f32.mrf.mxu0
      %v7015 = vadd.f32 %v6901, %v7014
      %v7016 = vpop.f32.mrf.mxu0
      %v7017 = vadd.f32 %v6901, %v7016
      %7018 = vmatmul.bf16.gmra.mxu0 %v839
      %v7019 = vpop.f32.mrf.mxu0
      %v7020 = vadd.f32 %v6901, %v7019
      %v7021 = vpop.f32.mrf.mxu0
      %v7022 = vadd.f32 %v6901, %v7021
      %7023 = vmatmul.bf16.gmra.mxu0 %v840
      %v7024 = vpop.f32.mrf.mxu0
      %v7025 = vadd.f32 %v6901, %v7024
      %v7026 = vpop.f32.mrf.mxu0
      %v7027 = vadd.f32 %v6901, %v7026
      %7028 = vmatmul.bf16.gmra.mxu0 %v841
      %v7029 = vpop.f32.mrf.mxu0
      %v7030 = vadd.f32 %v6901, %v7029
      %v7031 = vpop.f32.mrf.mxu0
      %v7032 = vadd.f32 %v6901, %v7031
      %7033 = vmatmul.bf16.gmra.mxu0 %v842
      %v7034 = vpop.f32.mrf.mxu0
      %v7035 = vadd.f32 %v6901, %v7034
      %v7036 = vpop.f32.mrf.mxu0
      %v7037 = vadd.f32 %v6901, %v7036
      %7038 = vmatmul.bf16.gmra.mxu0 %v843
      %v7039 = vpop.f32.mrf.mxu0
      %v7040 = vadd.f32 %v6901, %v7039
      %v7041 = vpop.f32.mrf.mxu0
      %v7042 = vadd.f32 %v6901, %v7041
      %7043 = vmatmul.bf16.gmra.mxu0 %v844
      %v7044 = vpop.f32.mrf.mxu0
      %v7045 = vadd.f32 %v6901, %v7044
      %v7046 = vpop.f32.mrf.mxu0
      %v7047 = vadd.f32 %v6901, %v7046
      %7048 = vmatmul.bf16.gmra.mxu0 %v845
      %v7049 = vpop.f32.mrf.mxu0
      %v7050 = vadd.f32 %v6901, %v7049
      %v7051 = vpop.f32.mrf.mxu0
      %v7052 = vadd.f32 %v6901, %v7051
      %7053 = vmatmul.bf16.gmra.mxu0 %v846
      %v7054 = vpop.f32.mrf.mxu0
      %v7055 = vadd.f32 %v6901, %v7054
      %v7056 = vpop.f32.mrf.mxu0
      %v7057 = vadd.f32 %v6901, %v7056
      %7058 = vmatmul.bf16.gmra.mxu0 %v847
      %v7059 = vpop.f32.mrf.mxu0
      %v7060 = vadd.f32 %v6901, %v7059
      %v7061 = vpop.f32.mrf.mxu0
      %v7062 = vadd.f32 %v6901, %v7061
      %7063 = vmatmul.bf16.gmra.mxu0 %v848
      %v7064 = vpop.f32.mrf.mxu0
      %v7065 = vadd.f32 %v6901, %v7064
      %v7066 = vpop.f32.mrf.mxu0
      %v7067 = vadd.f32 %v6901, %v7066
      %7068 = vmatmul.bf16.gmra.mxu0 %v849
      %v7069 = vpop.f32.mrf.mxu0
      %v7070 = vadd.f32 %v6901, %v7069
      %v7071 = vpop.f32.mrf.mxu0
      %v7072 = vadd.f32 %v6901, %v7071
      %7073 = vmatmul.bf16.gmra.mxu0 %v850
      %v7074 = vpop.f32.mrf.mxu0
      %v7075 = vadd.f32 %v6901, %v7074
      %v7076 = vpop.f32.mrf.mxu0
      %v7077 = vadd.f32 %v6901, %v7076
      %7078 = vmatmul.bf16.gmra.mxu0 %v851
      %v7079 = vpop.f32.mrf.mxu0
      %v7080 = vadd.f32 %v6901, %v7079
      %v7081 = vpop.f32.mrf.mxu0
      %v7082 = vadd.f32 %v6901, %v7081
      %7083 = vmatmul.bf16.gmra.mxu0 %v852
      %v7084 = vpop.f32.mrf.mxu0
      %v7085 = vadd.f32 %v6901, %v7084
      %v7086 = vpop.f32.mrf.mxu0
      %v7087 = vadd.f32 %v6901, %v7086
      %7088 = vmatmul.bf16.gmra.mxu0 %v853
      %v7089 = vpop.f32.mrf.mxu0
      %v7090 = vadd.f32 %v6901, %v7089
      %v7091 = vpop.f32.mrf.mxu0
      %v7092 = vadd.f32 %v6901, %v7091
      %7093 = vmatmul.bf16.gmra.mxu0 %v854
      %v7094 = vpop.f32.mrf.mxu0
      %v7095 = vadd.f32 %v6901, %v7094
      %v7096 = vpop.f32.mrf.mxu0
      %v7097 = vadd.f32 %v6901, %v7096
      %7098 = vmatmul.bf16.gmra.mxu0 %v855
      %v7099 = vpop.f32.mrf.mxu0
      %v7100 = vadd.f32 %v6901, %v7099
      %v7101 = vpop.f32.mrf.mxu0
      %v7102 = vadd.f32 %v6901, %v7101
      %7103 = vmatmul.bf16.gmra.mxu0 %v856
      %v7104 = vpop.f32.mrf.mxu0
      %v7105 = vadd.f32 %v6901, %v7104
      %v7106 = vpop.f32.mrf.mxu0
      %v7107 = vadd.f32 %v6901, %v7106
      %7108 = vmatmul.bf16.gmra.mxu0 %v857
      %v7109 = vpop.f32.mrf.mxu0
      %v7110 = vadd.f32 %v6901, %v7109
      %v7111 = vpop.f32.mrf.mxu0
      %v7112 = vadd.f32 %v6901, %v7111
      %7113 = vmatmul.bf16.gmra.mxu0 %v858
      %v7114 = vpop.f32.mrf.mxu0
      %v7115 = vadd.f32 %v6901, %v7114
      %v7116 = vpop.f32.mrf.mxu0
      %v7117 = vadd.f32 %v6901, %v7116
      %7118 = vmatmul.bf16.gmra.mxu0 %v859
      %v7119 = vpop.f32.mrf.mxu0
      %v7120 = vadd.f32 %v6901, %v7119
      %v7121 = vpop.f32.mrf.mxu0
      %v7122 = vadd.f32 %v6901, %v7121
      %7123 = vmatmul.bf16.gmra.mxu0 %v860
      %v7124 = vpop.f32.mrf.mxu0
      %v7125 = vadd.f32 %v6901, %v7124
      %v7126 = vpop.f32.mrf.mxu0
      %v7127 = vadd.f32 %v6901, %v7126
      %7128 = vmatmul.bf16.gmra.mxu0 %v861
      %v7129 = vpop.f32.mrf.mxu0
      %v7130 = vadd.f32 %v6901, %v7129
      %v7131 = vpop.f32.mrf.mxu0
      %v7132 = vadd.f32 %v6901, %v7131
      %7133 = vmatmul.bf16.gmra.mxu0 %v862
      %v7134 = vpop.f32.mrf.mxu0
      %v7135 = vadd.f32 %v6901, %v7134
      %v7136 = vpop.f32.mrf.mxu0
      %v7137 = vadd.f32 %v6901, %v7136
      %7138 = vmatmul.bf16.gmra.mxu0 %v863
      %v7139 = vpop.f32.mrf.mxu0
      %v7140 = vadd.f32 %v6901, %v7139
      %v7141 = vpop.f32.mrf.mxu0
      %v7142 = vadd.f32 %v6901, %v7141
      %7143 = vdwg.mxu0
      %7144 = vmatpush.bf16.msra.mxu0 %v6968
      %7145 = vmatpush.bf16.msra.mxu0 %v6966
      %7146 = vmatpush.bf16.msra.mxu0 %v6964
      %7147 = vmatpush.bf16.msra.mxu0 %v6962
      %7148 = vmatpush.bf16.msra.mxu0 %v6960
      %7149 = vmatpush.bf16.msra.mxu0 %v6958
      %7150 = vmatpush.bf16.msra.mxu0 %v6956
      %7151 = vmatpush.bf16.msra.mxu0 %v6954
      %7152 = vmatmul.bf16.gmra.mxu0 %v834
      %v7153 = vpop.f32.mrf.mxu0
      %v7154 = vadd.f32 %v6902, %v7153
      %v7155 = vpop.f32.mrf.mxu0
      %v7156 = vadd.f32 %v6902, %v7155
      %7157 = vmatmul.bf16.gmra.mxu0 %v835
      %v7158 = vpop.f32.mrf.mxu0
      %v7159 = vadd.f32 %v6902, %v7158
      %v7160 = vpop.f32.mrf.mxu0
      %v7161 = vadd.f32 %v6902, %v7160
      %7162 = vmatmul.bf16.gmra.mxu0 %v836
      %v7163 = vpop.f32.mrf.mxu0
      %v7164 = vadd.f32 %v6902, %v7163
      %v7165 = vpop.f32.mrf.mxu0
      %v7166 = vadd.f32 %v6902, %v7165
      %7167 = vmatmul.bf16.gmra.mxu0 %v837
      %v7168 = vpop.f32.mrf.mxu0
      %v7169 = vadd.f32 %v6902, %v7168
      %v7170 = vpop.f32.mrf.mxu0
      %v7171 = vadd.f32 %v6902, %v7170
      %7172 = vmatmul.bf16.gmra.mxu0 %v838
      %v7173 = vpop.f32.mrf.mxu0
      %v7174 = vadd.f32 %v6902, %v7173
      %v7175 = vpop.f32.mrf.mxu0
      %v7176 = vadd.f32 %v6902, %v7175
      %7177 = vmatmul.bf16.gmra.mxu0 %v839
      %v7178 = vpop.f32.mrf.mxu0
      %v7179 = vadd.f32 %v6902, %v7178
      %v7180 = vpop.f32.mrf.mxu0
      %v7181 = vadd.f32 %v6902, %v7180
      %7182 = vmatmul.bf16.gmra.mxu0 %v840
      %v7183 = vpop.f32.mrf.mxu0
      %v7184 = vadd.f32 %v6902, %v7183
      %v7185 = vpop.f32.mrf.mxu0
      %v7186 = vadd.f32 %v6902, %v7185
      %7187 = vmatmul.bf16.gmra.mxu0 %v841
      %v7188 = vpop.f32.mrf.mxu0
      %v7189 = vadd.f32 %v6902, %v7188
      %v7190 = vpop.f32.mrf.mxu0
      %v7191 = vadd.f32 %v6902, %v7190
      %7192 = vmatmul.bf16.gmra.mxu0 %v842
      %v7193 = vpop.f32.mrf.mxu0
      %v7194 = vadd.f32 %v6902, %v7193
      %v7195 = vpop.f32.mrf.mxu0
      %v7196 = vadd.f32 %v6902, %v7195
      %7197 = vmatmul.bf16.gmra.mxu0 %v843
      %v7198 = vpop.f32.mrf.mxu0
      %v7199 = vadd.f32 %v6902, %v7198
      %v7200 = vpop.f32.mrf.mxu0
      %v7201 = vadd.f32 %v6902, %v7200
      %7202 = vmatmul.bf16.gmra.mxu0 %v844
      %v7203 = vpop.f32.mrf.mxu0
      %v7204 = vadd.f32 %v6902, %v7203
      %v7205 = vpop.f32.mrf.mxu0
      %v7206 = vadd.f32 %v6902, %v7205
      %7207 = vmatmul.bf16.gmra.mxu0 %v845
      %v7208 = vpop.f32.mrf.mxu0
      %v7209 = vadd.f32 %v6902, %v7208
      %v7210 = vpop.f32.mrf.mxu0
      %v7211 = vadd.f32 %v6902, %v7210
      %7212 = vmatmul.bf16.gmra.mxu0 %v846
      %v7213 = vpop.f32.mrf.mxu0
      %v7214 = vadd.f32 %v6902, %v7213
      %v7215 = vpop.f32.mrf.mxu0
      %v7216 = vadd.f32 %v6902, %v7215
      %7217 = vmatmul.bf16.gmra.mxu0 %v847
      %v7218 = vpop.f32.mrf.mxu0
      %v7219 = vadd.f32 %v6902, %v7218
      %v7220 = vpop.f32.mrf.mxu0
      %v7221 = vadd.f32 %v6902, %v7220
      %7222 = vmatmul.bf16.gmra.mxu0 %v848
      %v7223 = vpop.f32.mrf.mxu0
      %v7224 = vadd.f32 %v6902, %v7223
      %v7225 = vpop.f32.mrf.mxu0
      %v7226 = vadd.f32 %v6902, %v7225
      %7227 = vmatmul.bf16.gmra.mxu0 %v849
      %v7228 = vpop.f32.mrf.mxu0
      %v7229 = vadd.f32 %v6902, %v7228
      %v7230 = vpop.f32.mrf.mxu0
      %v7231 = vadd.f32 %v6902, %v7230
      %7232 = vmatmul.bf16.gmra.mxu0 %v850
      %v7233 = vpop.f32.mrf.mxu0
      %v7234 = vadd.f32 %v6902, %v7233
      %v7235 = vpop.f32.mrf.mxu0
      %v7236 = vadd.f32 %v6902, %v7235
      %7237 = vmatmul.bf16.gmra.mxu0 %v851
      %v7238 = vpop.f32.mrf.mxu0
      %v7239 = vadd.f32 %v6902, %v7238
      %v7240 = vpop.f32.mrf.mxu0
      %v7241 = vadd.f32 %v6902, %v7240
      %7242 = vmatmul.bf16.gmra.mxu0 %v852
      %v7243 = vpop.f32.mrf.mxu0
      %v7244 = vadd.f32 %v6902, %v7243
      %v7245 = vpop.f32.mrf.mxu0
      %v7246 = vadd.f32 %v6902, %v7245
      %7247 = vmatmul.bf16.gmra.mxu0 %v853
      %v7248 = vpop.f32.mrf.mxu0
      %v7249 = vadd.f32 %v6902, %v7248
      %v7250 = vpop.f32.mrf.mxu0
      %v7251 = vadd.f32 %v6902, %v7250
      %7252 = vmatmul.bf16.gmra.mxu0 %v854
      %v7253 = vpop.f32.mrf.mxu0
      %v7254 = vadd.f32 %v6902, %v7253
      %v7255 = vpop.f32.mrf.mxu0
      %v7256 = vadd.f32 %v6902, %v7255
      %7257 = vmatmul.bf16.gmra.mxu0 %v855
      %v7258 = vpop.f32.mrf.mxu0
      %v7259 = vadd.f32 %v6902, %v7258
      %v7260 = vpop.f32.mrf.mxu0
      %v7261 = vadd.f32 %v6902, %v7260
      %7262 = vmatmul.bf16.gmra.mxu0 %v856
      %v7263 = vpop.f32.mrf.mxu0
      %v7264 = vadd.f32 %v6902, %v7263
      %v7265 = vpop.f32.mrf.mxu0
      %v7266 = vadd.f32 %v6902, %v7265
      %7267 = vmatmul.bf16.gmra.mxu0 %v857
      %v7268 = vpop.f32.mrf.mxu0
      %v7269 = vadd.f32 %v6902, %v7268
      %v7270 = vpop.f32.mrf.mxu0
      %v7271 = vadd.f32 %v6902, %v7270
      %7272 = vmatmul.bf16.gmra.mxu0 %v858
      %v7273 = vpop.f32.mrf.mxu0
      %v7274 = vadd.f32 %v6902, %v7273
      %v7275 = vpop.f32.mrf.mxu0
      %v7276 = vadd.f32 %v6902, %v7275
      %7277 = vmatmul.bf16.gmra.mxu0 %v859
      %v7278 = vpop.f32.mrf.mxu0
      %v7279 = vadd.f32 %v6902, %v7278
      %v7280 = vpop.f32.mrf.mxu0
      %v7281 = vadd.f32 %v6902, %v7280
      %7282 = vmatmul.bf16.gmra.mxu0 %v860
      %v7283 = vpop.f32.mrf.mxu0
      %v7284 = vadd.f32 %v6902, %v7283
      %v7285 = vpop.f32.mrf.mxu0
      %v7286 = vadd.f32 %v6902, %v7285
      %7287 = vmatmul.bf16.gmra.mxu0 %v861
      %v7288 = vpop.f32.mrf.mxu0
      %v7289 = vadd.f32 %v6902, %v7288
      %v7290 = vpop.f32.mrf.mxu0
      %v7291 = vadd.f32 %v6902, %v7290
      %7292 = vmatmul.bf16.gmra.mxu0 %v862
      %v7293 = vpop.f32.mrf.mxu0
      %v7294 = vadd.f32 %v6902, %v7293
      %v7295 = vpop.f32.mrf.mxu0
      %v7296 = vadd.f32 %v6902, %v7295
      %7297 = vmatmul.bf16.gmra.mxu0 %v863
      %v7298 = vpop.f32.mrf.mxu0
      %v7299 = vadd.f32 %v6902, %v7298
      %v7300 = vpop.f32.mrf.mxu0
      %v7301 = vadd.f32 %v6902, %v7300
      %7302 = vdwg.mxu0
      %vm7303 = vcmp.ge.f32.partialorder %v6995, 0.0
      %vm7304 = vcmp.ge.f32.partialorder %v7154, 0.0
      %vm7305 = vcmp.ge.f32.partialorder %v6997, 0.0
      %vm7306 = vcmp.ge.f32.partialorder %v7156, 0.0
      %vm7307 = vcmp.ge.f32.partialorder %v7000, 0.0
      %vm7308 = vcmp.ge.f32.partialorder %v7159, 0.0
      %vm7309 = vcmp.ge.f32.partialorder %v7002, 0.0
      %vm7310 = vcmp.ge.f32.partialorder %v7161, 0.0
      %vm7311 = vcmp.ge.f32.partialorder %v7005, 0.0
      %vm7312 = vcmp.ge.f32.partialorder %v7164, 0.0
      %vm7313 = vcmp.ge.f32.partialorder %v7007, 0.0
      %vm7314 = vcmp.ge.f32.partialorder %v7166, 0.0
      %vm7315 = vcmp.ge.f32.partialorder %v7010, 0.0
      %vm7316 = vcmp.ge.f32.partialorder %v7169, 0.0
      %vm7317 = vcmp.ge.f32.partialorder %v7012, 0.0
      %vm7318 = vcmp.ge.f32.partialorder %v7171, 0.0
      %vm7319 = vcmp.ge.f32.partialorder %v7015, 0.0
      %vm7320 = vcmp.ge.f32.partialorder %v7174, 0.0
      %vm7321 = vcmp.ge.f32.partialorder %v7017, 0.0
      %vm7322 = vcmp.ge.f32.partialorder %v7176, 0.0
      %vm7323 = vcmp.ge.f32.partialorder %v7020, 0.0
      %vm7324 = vcmp.ge.f32.partialorder %v7179, 0.0
      %vm7325 = vcmp.ge.f32.partialorder %v7022, 0.0
      %vm7326 = vcmp.ge.f32.partialorder %v7181, 0.0
      %vm7327 = vcmp.ge.f32.partialorder %v7025, 0.0
      %vm7328 = vcmp.ge.f32.partialorder %v7184, 0.0
      %vm7329 = vcmp.ge.f32.partialorder %v7027, 0.0
      %vm7330 = vcmp.ge.f32.partialorder %v7186, 0.0
      %vm7331 = vcmp.ge.f32.partialorder %v7030, 0.0
      %vm7332 = vcmp.ge.f32.partialorder %v7189, 0.0
      %vm7333 = vcmp.ge.f32.partialorder %v7032, 0.0
      %vm7334 = vcmp.ge.f32.partialorder %v7191, 0.0
      %vm7335 = vcmp.ge.f32.partialorder %v7035, 0.0
      %vm7336 = vcmp.ge.f32.partialorder %v7194, 0.0
      %vm7337 = vcmp.ge.f32.partialorder %v7037, 0.0
      %vm7338 = vcmp.ge.f32.partialorder %v7196, 0.0
      %vm7339 = vcmp.ge.f32.partialorder %v7040, 0.0
      %vm7340 = vcmp.ge.f32.partialorder %v7199, 0.0
      %vm7341 = vcmp.ge.f32.partialorder %v7042, 0.0
      %vm7342 = vcmp.ge.f32.partialorder %v7201, 0.0
      %vm7343 = vcmp.ge.f32.partialorder %v7045, 0.0
      %vm7344 = vcmp.ge.f32.partialorder %v7204, 0.0
      %vm7345 = vcmp.ge.f32.partialorder %v7047, 0.0
      %vm7346 = vcmp.ge.f32.partialorder %v7206, 0.0
      %vm7347 = vcmp.ge.f32.partialorder %v7050, 0.0
      %vm7348 = vcmp.ge.f32.partialorder %v7209, 0.0
      %vm7349 = vcmp.ge.f32.partialorder %v7052, 0.0
      %vm7350 = vcmp.ge.f32.partialorder %v7211, 0.0
      %vm7351 = vcmp.ge.f32.partialorder %v7055, 0.0
      %vm7352 = vcmp.ge.f32.partialorder %v7214, 0.0
      %vm7353 = vcmp.ge.f32.partialorder %v7057, 0.0
      %vm7354 = vcmp.ge.f32.partialorder %v7216, 0.0
      %vm7355 = vcmp.ge.f32.partialorder %v7060, 0.0
      %vm7356 = vcmp.ge.f32.partialorder %v7219, 0.0
      %vm7357 = vcmp.ge.f32.partialorder %v7062, 0.0
      %vm7358 = vcmp.ge.f32.partialorder %v7221, 0.0
      %vm7359 = vcmp.ge.f32.partialorder %v7065, 0.0
      %vm7360 = vcmp.ge.f32.partialorder %v7224, 0.0
      %vm7361 = vcmp.ge.f32.partialorder %v7067, 0.0
      %vm7362 = vcmp.ge.f32.partialorder %v7226, 0.0
      %vm7363 = vcmp.ge.f32.partialorder %v7070, 0.0
      %vm7364 = vcmp.ge.f32.partialorder %v7229, 0.0
      %vm7365 = vcmp.ge.f32.partialorder %v7072, 0.0
      %vm7366 = vcmp.ge.f32.partialorder %v7231, 0.0
      %vm7367 = vcmp.ge.f32.partialorder %v7075, 0.0
      %vm7368 = vcmp.ge.f32.partialorder %v7234, 0.0
      %vm7369 = vcmp.ge.f32.partialorder %v7077, 0.0
      %vm7370 = vcmp.ge.f32.partialorder %v7236, 0.0
      %vm7371 = vcmp.ge.f32.partialorder %v7080, 0.0
      %vm7372 = vcmp.ge.f32.partialorder %v7239, 0.0
      %vm7373 = vcmp.ge.f32.partialorder %v7082, 0.0
      %vm7374 = vcmp.ge.f32.partialorder %v7241, 0.0
      %vm7375 = vcmp.ge.f32.partialorder %v7085, 0.0
      %vm7376 = vcmp.ge.f32.partialorder %v7244, 0.0
      %vm7377 = vcmp.ge.f32.partialorder %v7087, 0.0
      %vm7378 = vcmp.ge.f32.partialorder %v7246, 0.0
      %vm7379 = vcmp.ge.f32.partialorder %v7090, 0.0
      %vm7380 = vcmp.ge.f32.partialorder %v7249, 0.0
      %vm7381 = vcmp.ge.f32.partialorder %v7092, 0.0
      %vm7382 = vcmp.ge.f32.partialorder %v7251, 0.0
      %vm7383 = vcmp.ge.f32.partialorder %v7095, 0.0
      %vm7384 = vcmp.ge.f32.partialorder %v7254, 0.0
      %vm7385 = vcmp.ge.f32.partialorder %v7097, 0.0
      %vm7386 = vcmp.ge.f32.partialorder %v7256, 0.0
      %vm7387 = vcmp.ge.f32.partialorder %v7100, 0.0
      %vm7388 = vcmp.ge.f32.partialorder %v7259, 0.0
      %vm7389 = vcmp.ge.f32.partialorder %v7102, 0.0
      %vm7390 = vcmp.ge.f32.partialorder %v7261, 0.0
      %vm7391 = vcmp.ge.f32.partialorder %v7105, 0.0
      %vm7392 = vcmp.ge.f32.partialorder %v7264, 0.0
      %vm7393 = vcmp.ge.f32.partialorder %v7107, 0.0
      %vm7394 = vcmp.ge.f32.partialorder %v7266, 0.0
      %vm7395 = vcmp.ge.f32.partialorder %v7110, 0.0
      %vm7396 = vcmp.ge.f32.partialorder %v7269, 0.0
      %vm7397 = vcmp.ge.f32.partialorder %v7112, 0.0
      %vm7398 = vcmp.ge.f32.partialorder %v7271, 0.0
      %vm7399 = vcmp.ge.f32.partialorder %v7115, 0.0
      %vm7400 = vcmp.ge.f32.partialorder %v7274, 0.0
      %vm7401 = vcmp.ge.f32.partialorder %v7117, 0.0
      %vm7402 = vcmp.ge.f32.partialorder %v7276, 0.0
      %vm7403 = vcmp.ge.f32.partialorder %v7120, 0.0
      %vm7404 = vcmp.ge.f32.partialorder %v7279, 0.0
      %vm7405 = vcmp.ge.f32.partialorder %v7122, 0.0
      %vm7406 = vcmp.ge.f32.partialorder %v7281, 0.0
      %vm7407 = vcmp.ge.f32.partialorder %v7125, 0.0
      %vm7408 = vcmp.ge.f32.partialorder %v7284, 0.0
      %vm7409 = vcmp.ge.f32.partialorder %v7127, 0.0
      %vm7410 = vcmp.ge.f32.partialorder %v7286, 0.0
      %vm7411 = vcmp.ge.f32.partialorder %v7130, 0.0
      %vm7412 = vcmp.ge.f32.partialorder %v7289, 0.0
      %vm7413 = vcmp.ge.f32.partialorder %v7132, 0.0
      %vm7414 = vcmp.ge.f32.partialorder %v7291, 0.0
      %vm7415 = vcmp.ge.f32.partialorder %v7135, 0.0
      %vm7416 = vcmp.ge.f32.partialorder %v7294, 0.0
      %vm7417 = vcmp.ge.f32.partialorder %v7137, 0.0
      %vm7418 = vcmp.ge.f32.partialorder %v7296, 0.0
      %vm7419 = vcmp.ge.f32.partialorder %v7140, 0.0
      %vm7420 = vcmp.ge.f32.partialorder %v7299, 0.0
      %vm7421 = vcmp.ge.f32.partialorder %v7142, 0.0
      %vm7422 = vcmp.ge.f32.partialorder %v7301, 0.0
      %v7423 = vmul.f32 %v6995, 0.1
      %v7424 = vmul.f32 %v7154, 0.1
      %v7425 = vmul.f32 %v6997, 0.1
      %v7426 = vmul.f32 %v7156, 0.1
      %v7427 = vmul.f32 %v7000, 0.1
      %v7428 = vmul.f32 %v7159, 0.1
      %v7429 = vmul.f32 %v7002, 0.1
      %v7430 = vmul.f32 %v7161, 0.1
      %v7431 = vmul.f32 %v7005, 0.1
      %v7432 = vmul.f32 %v7164, 0.1
      %v7433 = vmul.f32 %v7007, 0.1
      %v7434 = vmul.f32 %v7166, 0.1
      %v7435 = vmul.f32 %v7010, 0.1
      %v7436 = vmul.f32 %v7169, 0.1
      %v7437 = vmul.f32 %v7012, 0.1
      %v7438 = vmul.f32 %v7171, 0.1
      %v7439 = vmul.f32 %v7015, 0.1
      %v7440 = vmul.f32 %v7174, 0.1
      %v7441 = vmul.f32 %v7017, 0.1
      %v7442 = vmul.f32 %v7176, 0.1
      %v7443 = vmul.f32 %v7020, 0.1
      %v7444 = vmul.f32 %v7179, 0.1
      %v7445 = vmul.f32 %v7022, 0.1
      %v7446 = vmul.f32 %v7181, 0.1
      %v7447 = vmul.f32 %v7025, 0.1
      %v7448 = vmul.f32 %v7184, 0.1
      %v7449 = vmul.f32 %v7027, 0.1
      %v7450 = vmul.f32 %v7186, 0.1
      %v7451 = vmul.f32 %v7030, 0.1
      %v7452 = vmul.f32 %v7189, 0.1
      %v7453 = vmul.f32 %v7032, 0.1
      %v7454 = vmul.f32 %v7191, 0.1
      %v7455 = vmul.f32 %v7035, 0.1
      %v7456 = vmul.f32 %v7194, 0.1
      %v7457 = vmul.f32 %v7037, 0.1
      %v7458 = vmul.f32 %v7196, 0.1
      %v7459 = vmul.f32 %v7040, 0.1
      %v7460 = vmul.f32 %v7199, 0.1
      %v7461 = vmul.f32 %v7042, 0.1
      %v7462 = vmul.f32 %v7201, 0.1
      %v7463 = vmul.f32 %v7045, 0.1
      %v7464 = vmul.f32 %v7204, 0.1
      %v7465 = vmul.f32 %v7047, 0.1
      %v7466 = vmul.f32 %v7206, 0.1
      %v7467 = vmul.f32 %v7050, 0.1
      %v7468 = vmul.f32 %v7209, 0.1
      %v7469 = vmul.f32 %v7052, 0.1
      %v7470 = vmul.f32 %v7211, 0.1
      %v7471 = vmul.f32 %v7055, 0.1
      %v7472 = vmul.f32 %v7214, 0.1
      %v7473 = vmul.f32 %v7057, 0.1
      %v7474 = vmul.f32 %v7216, 0.1
      %v7475 = vmul.f32 %v7060, 0.1
      %v7476 = vmul.f32 %v7219, 0.1
      %v7477 = vmul.f32 %v7062, 0.1
      %v7478 = vmul.f32 %v7221, 0.1
      %v7479 = vmul.f32 %v7065, 0.1
      %v7480 = vmul.f32 %v7224, 0.1
      %v7481 = vmul.f32 %v7067, 0.1
      %v7482 = vmul.f32 %v7226, 0.1
      %v7483 = vmul.f32 %v7070, 0.1
      %v7484 = vmul.f32 %v7229, 0.1
      %v7485 = vmul.f32 %v7072, 0.1
      %v7486 = vmul.f32 %v7231, 0.1
      %v7487 = vmul.f32 %v7075, 0.1
      %v7488 = vmul.f32 %v7234, 0.1
      %v7489 = vmul.f32 %v7077, 0.1
      %v7490 = vmul.f32 %v7236, 0.1
      %v7491 = vmul.f32 %v7080, 0.1
      %v7492 = vmul.f32 %v7239, 0.1
      %v7493 = vmul.f32 %v7082, 0.1
      %v7494 = vmul.f32 %v7241, 0.1
      %v7495 = vmul.f32 %v7085, 0.1
      %v7496 = vmul.f32 %v7244, 0.1
      %v7497 = vmul.f32 %v7087, 0.1
      %v7498 = vmul.f32 %v7246, 0.1
      %v7499 = vmul.f32 %v7090, 0.1
      %v7500 = vmul.f32 %v7249, 0.1
      %v7501 = vmul.f32 %v7092, 0.1
      %v7502 = vmul.f32 %v7251, 0.1
      %v7503 = vmul.f32 %v7095, 0.1
      %v7504 = vmul.f32 %v7254, 0.1
      %v7505 = vmul.f32 %v7097, 0.1
      %v7506 = vmul.f32 %v7256, 0.1
      %v7507 = vmul.f32 %v7100, 0.1
      %v7508 = vmul.f32 %v7259, 0.1
      %v7509 = vmul.f32 %v7102, 0.1
      %v7510 = vmul.f32 %v7261, 0.1
      %v7511 = vmul.f32 %v7105, 0.1
      %v7512 = vmul.f32 %v7264, 0.1
      %v7513 = vmul.f32 %v7107, 0.1
      %v7514 = vmul.f32 %v7266, 0.1
      %v7515 = vmul.f32 %v7110, 0.1
      %v7516 = vmul.f32 %v7269, 0.1
      %v7517 = vmul.f32 %v7112, 0.1
      %v7518 = vmul.f32 %v7271, 0.1
      %v7519 = vmul.f32 %v7115, 0.1
      %v7520 = vmul.f32 %v7274, 0.1
      %v7521 = vmul.f32 %v7117, 0.1
      %v7522 = vmul.f32 %v7276, 0.1
      %v7523 = vmul.f32 %v7120, 0.1
      %v7524 = vmul.f32 %v7279, 0.1
      %v7525 = vmul.f32 %v7122, 0.1
      %v7526 = vmul.f32 %v7281, 0.1
      %v7527 = vmul.f32 %v7125, 0.1
      %v7528 = vmul.f32 %v7284, 0.1
      %v7529 = vmul.f32 %v7127, 0.1
      %v7530 = vmul.f32 %v7286, 0.1
      %v7531 = vmul.f32 %v7130, 0.1
      %v7532 = vmul.f32 %v7289, 0.1
      %v7533 = vmul.f32 %v7132, 0.1
      %v7534 = vmul.f32 %v7291, 0.1
      %v7535 = vmul.f32 %v7135, 0.1
      %v7536 = vmul.f32 %v7294, 0.1
      %v7537 = vmul.f32 %v7137, 0.1
      %v7538 = vmul.f32 %v7296, 0.1
      %v7539 = vmul.f32 %v7140, 0.1
      %v7540 = vmul.f32 %v7299, 0.1
      %v7541 = vmul.f32 %v7142, 0.1
      %v7542 = vmul.f32 %v7301, 0.1
      %v7543 = vsel %vm7303, %v6995, %v7423
      %v7544 = vsel %vm7304, %v7154, %v7424
      %v7545 = vsel %vm7305, %v6997, %v7425
      %v7546 = vsel %vm7306, %v7156, %v7426
      %v7547 = vsel %vm7307, %v7000, %v7427
      %v7548 = vsel %vm7308, %v7159, %v7428
      %v7549 = vsel %vm7309, %v7002, %v7429
      %v7550 = vsel %vm7310, %v7161, %v7430
      %v7551 = vsel %vm7311, %v7005, %v7431
      %v7552 = vsel %vm7312, %v7164, %v7432
      %v7553 = vsel %vm7313, %v7007, %v7433
      %v7554 = vsel %vm7314, %v7166, %v7434
      %v7555 = vsel %vm7315, %v7010, %v7435
      %v7556 = vsel %vm7316, %v7169, %v7436
      %v7557 = vsel %vm7317, %v7012, %v7437
      %v7558 = vsel %vm7318, %v7171, %v7438
      %v7559 = vsel %vm7319, %v7015, %v7439
      %v7560 = vsel %vm7320, %v7174, %v7440
      %v7561 = vsel %vm7321, %v7017, %v7441
      %v7562 = vsel %vm7322, %v7176, %v7442
      %v7563 = vsel %vm7323, %v7020, %v7443
      %v7564 = vsel %vm7324, %v7179, %v7444
      %v7565 = vsel %vm7325, %v7022, %v7445
      %v7566 = vsel %vm7326, %v7181, %v7446
      %v7567 = vsel %vm7327, %v7025, %v7447
      %v7568 = vsel %vm7328, %v7184, %v7448
      %v7569 = vsel %vm7329, %v7027, %v7449
      %v7570 = vsel %vm7330, %v7186, %v7450
      %v7571 = vsel %vm7331, %v7030, %v7451
      %v7572 = vsel %vm7332, %v7189, %v7452
      %v7573 = vsel %vm7333, %v7032, %v7453
      %v7574 = vsel %vm7334, %v7191, %v7454
      %v7575 = vsel %vm7335, %v7035, %v7455
      %v7576 = vsel %vm7336, %v7194, %v7456
      %v7577 = vsel %vm7337, %v7037, %v7457
      %v7578 = vsel %vm7338, %v7196, %v7458
      %v7579 = vsel %vm7339, %v7040, %v7459
      %v7580 = vsel %vm7340, %v7199, %v7460
      %v7581 = vsel %vm7341, %v7042, %v7461
      %v7582 = vsel %vm7342, %v7201, %v7462
      %v7583 = vsel %vm7343, %v7045, %v7463
      %v7584 = vsel %vm7344, %v7204, %v7464
      %v7585 = vsel %vm7345, %v7047, %v7465
      %v7586 = vsel %vm7346, %v7206, %v7466
      %v7587 = vsel %vm7347, %v7050, %v7467
      %v7588 = vsel %vm7348, %v7209, %v7468
      %v7589 = vsel %vm7349, %v7052, %v7469
      %v7590 = vsel %vm7350, %v7211, %v7470
      %v7591 = vsel %vm7351, %v7055, %v7471
      %v7592 = vsel %vm7352, %v7214, %v7472
      %v7593 = vsel %vm7353, %v7057, %v7473
      %v7594 = vsel %vm7354, %v7216, %v7474
      %v7595 = vsel %vm7355, %v7060, %v7475
      %v7596 = vsel %vm7356, %v7219, %v7476
      %v7597 = vsel %vm7357, %v7062, %v7477
      %v7598 = vsel %vm7358, %v7221, %v7478
      %v7599 = vsel %vm7359, %v7065, %v7479
      %v7600 = vsel %vm7360, %v7224, %v7480
      %v7601 = vsel %vm7361, %v7067, %v7481
      %v7602 = vsel %vm7362, %v7226, %v7482
      %v7603 = vsel %vm7363, %v7070, %v7483
      %v7604 = vsel %vm7364, %v7229, %v7484
      %v7605 = vsel %vm7365, %v7072, %v7485
      %v7606 = vsel %vm7366, %v7231, %v7486
      %v7607 = vsel %vm7367, %v7075, %v7487
      %v7608 = vsel %vm7368, %v7234, %v7488
      %v7609 = vsel %vm7369, %v7077, %v7489
      %v7610 = vsel %vm7370, %v7236, %v7490
      %v7611 = vsel %vm7371, %v7080, %v7491
      %v7612 = vsel %vm7372, %v7239, %v7492
      %v7613 = vsel %vm7373, %v7082, %v7493
      %v7614 = vsel %vm7374, %v7241, %v7494
      %v7615 = vsel %vm7375, %v7085, %v7495
      %v7616 = vsel %vm7376, %v7244, %v7496
      %v7617 = vsel %vm7377, %v7087, %v7497
      %v7618 = vsel %vm7378, %v7246, %v7498
      %v7619 = vsel %vm7379, %v7090, %v7499
      %v7620 = vsel %vm7380, %v7249, %v7500
      %v7621 = vsel %vm7381, %v7092, %v7501
      %v7622 = vsel %vm7382, %v7251, %v7502
      %v7623 = vsel %vm7383, %v7095, %v7503
      %v7624 = vsel %vm7384, %v7254, %v7504
      %v7625 = vsel %vm7385, %v7097, %v7505
      %v7626 = vsel %vm7386, %v7256, %v7506
      %v7627 = vsel %vm7387, %v7100, %v7507
      %v7628 = vsel %vm7388, %v7259, %v7508
      %v7629 = vsel %vm7389, %v7102, %v7509
      %v7630 = vsel %vm7390, %v7261, %v7510
      %v7631 = vsel %vm7391, %v7105, %v7511
      %v7632 = vsel %vm7392, %v7264, %v7512
      %v7633 = vsel %vm7393, %v7107, %v7513
      %v7634 = vsel %vm7394, %v7266, %v7514
      %v7635 = vsel %vm7395, %v7110, %v7515
      %v7636 = vsel %vm7396, %v7269, %v7516
      %v7637 = vsel %vm7397, %v7112, %v7517
      %v7638 = vsel %vm7398, %v7271, %v7518
      %v7639 = vsel %vm7399, %v7115, %v7519
      %v7640 = vsel %vm7400, %v7274, %v7520
      %v7641 = vsel %vm7401, %v7117, %v7521
      %v7642 = vsel %vm7402, %v7276, %v7522
      %v7643 = vsel %vm7403, %v7120, %v7523
      %v7644 = vsel %vm7404, %v7279, %v7524
      %v7645 = vsel %vm7405, %v7122, %v7525
      %v7646 = vsel %vm7406, %v7281, %v7526
      %v7647 = vsel %vm7407, %v7125, %v7527
      %v7648 = vsel %vm7408, %v7284, %v7528
      %v7649 = vsel %vm7409, %v7127, %v7529
      %v7650 = vsel %vm7410, %v7286, %v7530
      %v7651 = vsel %vm7411, %v7130, %v7531
      %v7652 = vsel %vm7412, %v7289, %v7532
      %v7653 = vsel %vm7413, %v7132, %v7533
      %v7654 = vsel %vm7414, %v7291, %v7534
      %v7655 = vsel %vm7415, %v7135, %v7535
      %v7656 = vsel %vm7416, %v7294, %v7536
      %v7657 = vsel %vm7417, %v7137, %v7537
      %v7658 = vsel %vm7418, %v7296, %v7538
      %v7659 = vsel %vm7419, %v7140, %v7539
      %v7660 = vsel %vm7420, %v7299, %v7540
      %v7661 = vsel %vm7421, %v7142, %v7541
      %v7662 = vsel %vm7422, %v7301, %v7542
      %v7663 = vpack.c.bf16 %v7544, %v7543
      %v7664 = vpack.c.bf16 %v7546, %v7545
      %v7665 = vpack.c.bf16 %v7548, %v7547
      %v7666 = vpack.c.bf16 %v7550, %v7549
      %v7667 = vpack.c.bf16 %v7552, %v7551
      %v7668 = vpack.c.bf16 %v7554, %v7553
      %v7669 = vpack.c.bf16 %v7556, %v7555
      %v7670 = vpack.c.bf16 %v7558, %v7557
      %v7671 = vpack.c.bf16 %v7560, %v7559
      %v7672 = vpack.c.bf16 %v7562, %v7561
      %v7673 = vpack.c.bf16 %v7564, %v7563
      %v7674 = vpack.c.bf16 %v7566, %v7565
      %v7675 = vpack.c.bf16 %v7568, %v7567
      %v7676 = vpack.c.bf16 %v7570, %v7569
      %v7677 = vpack.c.bf16 %v7572, %v7571
      %v7678 = vpack.c.bf16 %v7574, %v7573
      %v7679 = vpack.c.bf16 %v7576, %v7575
      %v7680 = vpack.c.bf16 %v7578, %v7577
      %v7681 = vpack.c.bf16 %v7580, %v7579
      %v7682 = vpack.c.bf16 %v7582, %v7581
      %v7683 = vpack.c.bf16 %v7584, %v7583
      %v7684 = vpack.c.bf16 %v7586, %v7585
      %v7685 = vpack.c.bf16 %v7588, %v7587
      %v7686 = vpack.c.bf16 %v7590, %v7589
      %v7687 = vpack.c.bf16 %v7592, %v7591
      %v7688 = vpack.c.bf16 %v7594, %v7593
      %v7689 = vpack.c.bf16 %v7596, %v7595
      %v7690 = vpack.c.bf16 %v7598, %v7597
      %v7691 = vpack.c.bf16 %v7600, %v7599
      %v7692 = vpack.c.bf16 %v7602, %v7601
      %v7693 = vpack.c.bf16 %v7604, %v7603
      %v7694 = vpack.c.bf16 %v7606, %v7605
      %v7695 = vpack.c.bf16 %v7608, %v7607
      %v7696 = vpack.c.bf16 %v7610, %v7609
      %v7697 = vpack.c.bf16 %v7612, %v7611
      %v7698 = vpack.c.bf16 %v7614, %v7613
      %v7699 = vpack.c.bf16 %v7616, %v7615
      %v7700 = vpack.c.bf16 %v7618, %v7617
      %v7701 = vpack.c.bf16 %v7620, %v7619
      %v7702 = vpack.c.bf16 %v7622, %v7621
      %v7703 = vpack.c.bf16 %v7624, %v7623
      %v7704 = vpack.c.bf16 %v7626, %v7625
      %v7705 = vpack.c.bf16 %v7628, %v7627
      %v7706 = vpack.c.bf16 %v7630, %v7629
      %v7707 = vpack.c.bf16 %v7632, %v7631
      %v7708 = vpack.c.bf16 %v7634, %v7633
      %v7709 = vpack.c.bf16 %v7636, %v7635
      %v7710 = vpack.c.bf16 %v7638, %v7637
      %v7711 = vpack.c.bf16 %v7640, %v7639
      %v7712 = vpack.c.bf16 %v7642, %v7641
      %v7713 = vpack.c.bf16 %v7644, %v7643
      %v7714 = vpack.c.bf16 %v7646, %v7645
      %v7715 = vpack.c.bf16 %v7648, %v7647
      %v7716 = vpack.c.bf16 %v7650, %v7649
      %v7717 = vpack.c.bf16 %v7652, %v7651
      %v7718 = vpack.c.bf16 %v7654, %v7653
      %v7719 = vpack.c.bf16 %v7656, %v7655
      %v7720 = vpack.c.bf16 %v7658, %v7657
      %v7721 = vpack.c.bf16 %v7660, %v7659
      %v7722 = vpack.c.bf16 %v7662, %v7661
      %v7723 = vld [vmem:[%s13] sm:$0xf]
      %v7724 = vld [vmem:[%s13 + $0x4] sm:$0xf]
      %v7725 = vld [vmem:[%s13 + $0x8] sm:$0xf]
      %v7726 = vld [vmem:[%s13 + $0xc] sm:$0xf]
      %v7727 = vld [vmem:[%s13 + $0x10] sm:$0xf]
      %v7728 = vld [vmem:[%s13 + $0x14] sm:$0xf]
      %v7729 = vld [vmem:[%s13 + $0x18] sm:$0xf]
      %v7730 = vld [vmem:[%s13 + $0x1c] sm:$0xf]
      %v7731 = vld [vmem:[%s13 + $0x20] sm:$0xf]
      %v7732 = vld [vmem:[%s13 + $0x24] sm:$0xf]
      %v7733 = vld [vmem:[%s13 + $0x28] sm:$0xf]
      %v7734 = vld [vmem:[%s13 + $0x2c] sm:$0xf]
      %v7735 = vld [vmem:[%s13 + $0x30] sm:$0xf]
      %v7736 = vld [vmem:[%s13 + $0x34] sm:$0xf]
      %v7737 = vld [vmem:[%s13 + $0x38] sm:$0xf]
      %v7738 = vld [vmem:[%s13 + $0x3c] sm:$0xf]
      %v7739 = vld [vmem:[%s14] sm:$0x1]
      %v7741 = vperm.slane %v7739, 0
      %v7803 = vunpack.c.l.b16 %v7663
      %v7804 = vunpack.c.l.b16 %v7664
      %v7805 = vunpack.c.l.b16 %v7665
      %v7806 = vunpack.c.l.b16 %v7666
      %v7807 = vunpack.c.l.b16 %v7667
      %v7808 = vunpack.c.l.b16 %v7668
      %v7809 = vunpack.c.l.b16 %v7669
      %v7810 = vunpack.c.l.b16 %v7670
      %v7811 = vunpack.c.l.b16 %v7671
      %v7812 = vunpack.c.l.b16 %v7672
      %v7813 = vunpack.c.l.b16 %v7673
      %v7814 = vunpack.c.l.b16 %v7674
      %v7815 = vunpack.c.l.b16 %v7675
      %v7816 = vunpack.c.l.b16 %v7676
      %v7817 = vunpack.c.l.b16 %v7677
      %v7818 = vunpack.c.l.b16 %v7678
      %v7819 = vunpack.c.l.b16 %v7679
      %v7820 = vunpack.c.l.b16 %v7680
      %v7821 = vunpack.c.l.b16 %v7681
      %v7822 = vunpack.c.l.b16 %v7682
      %v7823 = vunpack.c.l.b16 %v7683
      %v7824 = vunpack.c.l.b16 %v7684
      %v7825 = vunpack.c.l.b16 %v7685
      %v7826 = vunpack.c.l.b16 %v7686
      %v7827 = vunpack.c.l.b16 %v7687
      %v7828 = vunpack.c.l.b16 %v7688
      %v7829 = vunpack.c.l.b16 %v7689
      %v7830 = vunpack.c.l.b16 %v7690
      %v7831 = vunpack.c.l.b16 %v7691
      %v7832 = vunpack.c.l.b16 %v7692
      %v7833 = vunpack.c.l.b16 %v7693
      %v7834 = vunpack.c.l.b16 %v7694
      %v7835 = vunpack.c.l.b16 %v7695
      %v7836 = vunpack.c.l.b16 %v7696
      %v7837 = vunpack.c.l.b16 %v7697
      %v7838 = vunpack.c.l.b16 %v7698
      %v7839 = vunpack.c.l.b16 %v7699
      %v7840 = vunpack.c.l.b16 %v7700
      %v7841 = vunpack.c.l.b16 %v7701
      %v7842 = vunpack.c.l.b16 %v7702
      %v7843 = vunpack.c.l.b16 %v7703
      %v7844 = vunpack.c.l.b16 %v7704
      %v7845 = vunpack.c.l.b16 %v7705
      %v7846 = vunpack.c.l.b16 %v7706
      %v7847 = vunpack.c.l.b16 %v7707
      %v7848 = vunpack.c.l.b16 %v7708
      %v7849 = vunpack.c.l.b16 %v7709
      %v7850 = vunpack.c.l.b16 %v7710
      %v7851 = vunpack.c.l.b16 %v7711
      %v7852 = vunpack.c.l.b16 %v7712
      %v7853 = vunpack.c.l.b16 %v7713
      %v7854 = vunpack.c.l.b16 %v7714
      %v7855 = vunpack.c.l.b16 %v7715
      %v7856 = vunpack.c.l.b16 %v7716
      %v7857 = vunpack.c.l.b16 %v7717
      %v7858 = vunpack.c.l.b16 %v7718
      %v7859 = vunpack.c.l.b16 %v7719
      %v7860 = vunpack.c.l.b16 %v7720
      %v7861 = vunpack.c.l.b16 %v7721
      %v7862 = vunpack.c.l.b16 %v7722
      %v7863 = vpack.c.b16 %v7804, %v7803
      %v7864 = vpack.c.b16 %v7806, %v7805
      %v7865 = vpack.c.b16 %v7808, %v7807
      %v7866 = vpack.c.b16 %v7810, %v7809
      %v7867 = vpack.c.b16 %v7812, %v7811
      %v7868 = vpack.c.b16 %v7814, %v7813
      %v7869 = vpack.c.b16 %v7816, %v7815
      %v7870 = vpack.c.b16 %v7818, %v7817
      %v7871 = vpack.c.b16 %v7820, %v7819
      %v7872 = vpack.c.b16 %v7822, %v7821
      %v7873 = vpack.c.b16 %v7824, %v7823
      %v7874 = vpack.c.b16 %v7826, %v7825
      %v7875 = vpack.c.b16 %v7828, %v7827
      %v7876 = vpack.c.b16 %v7830, %v7829
      %v7877 = vpack.c.b16 %v7832, %v7831
      %v7878 = vpack.c.b16 %v7834, %v7833
      %v7879 = vpack.c.b16 %v7836, %v7835
      %v7880 = vpack.c.b16 %v7838, %v7837
      %v7881 = vpack.c.b16 %v7840, %v7839
      %v7882 = vpack.c.b16 %v7842, %v7841
      %v7883 = vpack.c.b16 %v7844, %v7843
      %v7884 = vpack.c.b16 %v7846, %v7845
      %v7885 = vpack.c.b16 %v7848, %v7847
      %v7886 = vpack.c.b16 %v7850, %v7849
      %v7887 = vpack.c.b16 %v7852, %v7851
      %v7888 = vpack.c.b16 %v7854, %v7853
      %v7889 = vpack.c.b16 %v7856, %v7855
      %v7890 = vpack.c.b16 %v7858, %v7857
      %v7891 = vpack.c.b16 %v7860, %v7859
      %v7892 = vpack.c.b16 %v7862, %v7861
      %v7939 = vunpack.c.l.b16 %v7723
      %v7940 = vunpack.c.l.b16 %v7724
      %v7941 = vunpack.c.l.b16 %v7725
      %v7942 = vunpack.c.l.b16 %v7726
      %v7943 = vunpack.c.l.b16 %v7727
      %v7944 = vunpack.c.l.b16 %v7728
      %v7945 = vunpack.c.l.b16 %v7729
      %v7946 = vunpack.c.l.b16 %v7730
      %v7947 = vunpack.c.l.b16 %v7731
      %v7948 = vunpack.c.l.b16 %v7732
      %v7949 = vunpack.c.l.b16 %v7733
      %v7950 = vunpack.c.l.b16 %v7734
      %v7951 = vunpack.c.l.b16 %v7735
      %v7952 = vunpack.c.l.b16 %v7736
      %v7953 = vunpack.c.l.b16 %v7737
      %v7954 = vunpack.c.l.b16 %v7738
      %v7955 = vpack.c.b16 %v7940, %v7939
      %v7956 = vpack.c.b16 %v7942, %v7941
      %v7957 = vpack.c.b16 %v7944, %v7943
      %v7958 = vpack.c.b16 %v7946, %v7945
      %v7959 = vpack.c.b16 %v7948, %v7947
      %v7960 = vpack.c.b16 %v7950, %v7949
      %v7961 = vpack.c.b16 %v7952, %v7951
      %v7962 = vpack.c.b16 %v7954, %v7953
      %7971 = vmatpush.bf16.msra.mxu0 %v7962
      %7972 = vmatpush.bf16.msra.mxu0 %v7961
      %7973 = vmatpush.bf16.msra.mxu0 %v7960
      %7974 = vmatpush.bf16.msra.mxu0 %v7959
      %7975 = vmatpush.bf16.msra.mxu0 %v7958
      %7976 = vmatpush.bf16.msra.mxu0 %v7957
      %7977 = vmatpush.bf16.msra.mxu0 %v7956
      %7978 = vmatpush.bf16.msra.mxu0 %v7955
      %7979 = vmatmul.bf16.gmra.mxu0 %v7863
      %v7980 = vpop.f32.mrf.mxu0
      %v7981 = vpop.f32.mrf.mxu0
      %7982 = vmatmul.bf16.gmra.mxu0 %v7864
      %v7983 = vpop.f32.mrf.mxu0
      %v7984 = vadd.f32 %v7741, %v7983
      %v7985 = vpop.f32.mrf.mxu0
      %v7986 = vadd.f32 %v7741, %v7985
      %7987 = vmatmul.bf16.gmra.mxu0 %v7865
      %v7988 = vpop.f32.mrf.mxu0
      %v7989 = vadd.f32 %v7741, %v7988
      %v7990 = vpop.f32.mrf.mxu0
      %v7991 = vadd.f32 %v7741, %v7990
      %7992 = vmatmul.bf16.gmra.mxu0 %v7866
      %v7993 = vpop.f32.mrf.mxu0
      %v7994 = vadd.f32 %v7741, %v7993
      %v7995 = vpop.f32.mrf.mxu0
      %v7996 = vadd.f32 %v7741, %v7995
      %7997 = vmatmul.bf16.gmra.mxu0 %v7867
      %v7998 = vpop.f32.mrf.mxu0
      %v7999 = vadd.f32 %v7741, %v7998
      %v8000 = vpop.f32.mrf.mxu0
      %v8001 = vadd.f32 %v7741, %v8000
      %8002 = vmatmul.bf16.gmra.mxu0 %v7868
      %v8003 = vpop.f32.mrf.mxu0
      %v8004 = vadd.f32 %v7741, %v8003
      %v8005 = vpop.f32.mrf.mxu0
      %v8006 = vadd.f32 %v7741, %v8005
      %8007 = vmatmul.bf16.gmra.mxu0 %v7869
      %v8008 = vpop.f32.mrf.mxu0
      %v8009 = vadd.f32 %v7741, %v8008
      %v8010 = vpop.f32.mrf.mxu0
      %v8011 = vadd.f32 %v7741, %v8010
      %8012 = vmatmul.bf16.gmra.mxu0 %v7870
      %v8013 = vpop.f32.mrf.mxu0
      %v8014 = vadd.f32 %v7741, %v8013
      %v8015 = vpop.f32.mrf.mxu0
      %v8016 = vadd.f32 %v7741, %v8015
      %8017 = vmatmul.bf16.gmra.mxu0 %v7871
      %v8018 = vpop.f32.mrf.mxu0
      %v8019 = vadd.f32 %v7741, %v8018
      %v8020 = vpop.f32.mrf.mxu0
      %v8021 = vadd.f32 %v7741, %v8020
      %8022 = vmatmul.bf16.gmra.mxu0 %v7872
      %v8023 = vpop.f32.mrf.mxu0
      %v8024 = vadd.f32 %v7741, %v8023
      %v8025 = vpop.f32.mrf.mxu0
      %v8026 = vadd.f32 %v7741, %v8025
      %8027 = vmatmul.bf16.gmra.mxu0 %v7873
      %v8028 = vpop.f32.mrf.mxu0
      %v8029 = vadd.f32 %v7741, %v8028
      %v8030 = vpop.f32.mrf.mxu0
      %v8031 = vadd.f32 %v7741, %v8030
      %8032 = vmatmul.bf16.gmra.mxu0 %v7874
      %v8033 = vpop.f32.mrf.mxu0
      %v8034 = vadd.f32 %v7741, %v8033
      %v8035 = vpop.f32.mrf.mxu0
      %v8036 = vadd.f32 %v7741, %v8035
      %8037 = vmatmul.bf16.gmra.mxu0 %v7875
      %v8038 = vpop.f32.mrf.mxu0
      %v8039 = vadd.f32 %v7741, %v8038
      %v8040 = vpop.f32.mrf.mxu0
      %v8041 = vadd.f32 %v7741, %v8040
      %8042 = vmatmul.bf16.gmra.mxu0 %v7876
      %v8043 = vpop.f32.mrf.mxu0
      %v8044 = vadd.f32 %v7741, %v8043
      %v8045 = vpop.f32.mrf.mxu0
      %v8046 = vadd.f32 %v7741, %v8045
      %8047 = vmatmul.bf16.gmra.mxu0 %v7877
      %v8048 = vpop.f32.mrf.mxu0
      %v8049 = vadd.f32 %v7741, %v8048
      %v8050 = vpop.f32.mrf.mxu0
      %v8051 = vadd.f32 %v7741, %v8050
      %8052 = vmatmul.bf16.gmra.mxu0 %v7878
      %v8053 = vpop.f32.mrf.mxu0
      %v8054 = vadd.f32 %v7741, %v8053
      %v8055 = vpop.f32.mrf.mxu0
      %v8056 = vadd.f32 %v7741, %v8055
      %8057 = vmatmul.bf16.gmra.mxu0 %v7879
      %v8058 = vpop.f32.mrf.mxu0
      %v8059 = vadd.f32 %v7741, %v8058
      %v8060 = vpop.f32.mrf.mxu0
      %v8061 = vadd.f32 %v7741, %v8060
      %8062 = vmatmul.bf16.gmra.mxu0 %v7880
      %v8063 = vpop.f32.mrf.mxu0
      %v8064 = vadd.f32 %v7741, %v8063
      %v8065 = vpop.f32.mrf.mxu0
      %v8066 = vadd.f32 %v7741, %v8065
      %8067 = vmatmul.bf16.gmra.mxu0 %v7881
      %v8068 = vpop.f32.mrf.mxu0
      %v8069 = vadd.f32 %v7741, %v8068
      %v8070 = vpop.f32.mrf.mxu0
      %v8071 = vadd.f32 %v7741, %v8070
      %8072 = vmatmul.bf16.gmra.mxu0 %v7882
      %v8073 = vpop.f32.mrf.mxu0
      %v8074 = vadd.f32 %v7741, %v8073
      %v8075 = vpop.f32.mrf.mxu0
      %v8076 = vadd.f32 %v7741, %v8075
      %8077 = vmatmul.bf16.gmra.mxu0 %v7883
      %v8078 = vpop.f32.mrf.mxu0
      %v8079 = vadd.f32 %v7741, %v8078
      %v8080 = vpop.f32.mrf.mxu0
      %v8081 = vadd.f32 %v7741, %v8080
      %8082 = vmatmul.bf16.gmra.mxu0 %v7884
      %v8083 = vpop.f32.mrf.mxu0
      %v8084 = vadd.f32 %v7741, %v8083
      %v8085 = vpop.f32.mrf.mxu0
      %v8086 = vadd.f32 %v7741, %v8085
      %8087 = vmatmul.bf16.gmra.mxu0 %v7885
      %v8088 = vpop.f32.mrf.mxu0
      %v8089 = vadd.f32 %v7741, %v8088
      %v8090 = vpop.f32.mrf.mxu0
      %v8091 = vadd.f32 %v7741, %v8090
      %8092 = vmatmul.bf16.gmra.mxu0 %v7886
      %v8093 = vpop.f32.mrf.mxu0
      %v8094 = vadd.f32 %v7741, %v8093
      %v8095 = vpop.f32.mrf.mxu0
      %v8096 = vadd.f32 %v7741, %v8095
      %8097 = vmatmul.bf16.gmra.mxu0 %v7887
      %v8098 = vpop.f32.mrf.mxu0
      %v8099 = vadd.f32 %v7741, %v8098
      %v8100 = vpop.f32.mrf.mxu0
      %v8101 = vadd.f32 %v7741, %v8100
      %8102 = vmatmul.bf16.gmra.mxu0 %v7888
      %v8103 = vpop.f32.mrf.mxu0
      %v8104 = vadd.f32 %v7741, %v8103
      %v8105 = vpop.f32.mrf.mxu0
      %v8106 = vadd.f32 %v7741, %v8105
      %8107 = vmatmul.bf16.gmra.mxu0 %v7889
      %v8108 = vpop.f32.mrf.mxu0
      %v8109 = vadd.f32 %v7741, %v8108
      %v8110 = vpop.f32.mrf.mxu0
      %v8111 = vadd.f32 %v7741, %v8110
      %8112 = vmatmul.bf16.gmra.mxu0 %v7890
      %v8113 = vpop.f32.mrf.mxu0
      %v8114 = vadd.f32 %v7741, %v8113
      %v8115 = vpop.f32.mrf.mxu0
      %v8116 = vadd.f32 %v7741, %v8115
      %8117 = vmatmul.bf16.gmra.mxu0 %v7891
      %v8118 = vpop.f32.mrf.mxu0
      %v8119 = vadd.f32 %v7741, %v8118
      %v8120 = vpop.f32.mrf.mxu0
      %v8121 = vadd.f32 %v7741, %v8120
      %8122 = vmatmul.bf16.gmra.mxu0 %v7892
      %v8123 = vpop.f32.mrf.mxu0
      %v8124 = vpop.f32.mrf.mxu0
      %8125 = vdwg.mxu0
      %v8126 = vld [vmem:[%s15] sm:$0xf]
      %v8127 = vld [vmem:[%s15 + $0x4] sm:$0xf]
      %v8128 = vld [vmem:[%s15 + $0x8] sm:$0xf]
      %v8129 = vld [vmem:[%s15 + $0xc] sm:$0xf]
      %v8130 = vld [vmem:[%s15 + $0x10] sm:$0xf]
      %v8131 = vld [vmem:[%s15 + $0x14] sm:$0xf]
      %v8132 = vld [vmem:[%s15 + $0x18] sm:$0xf]
      %v8133 = vld [vmem:[%s15 + $0x1c] sm:$0xf]
      %v8134 = vld [vmem:[%s15 + $0x20] sm:$0xf]
      %v8135 = vld [vmem:[%s15 + $0x24] sm:$0xf]
      %v8136 = vld [vmem:[%s15 + $0x28] sm:$0xf]
      %v8137 = vld [vmem:[%s15 + $0x2c] sm:$0xf]
      %v8138 = vld [vmem:[%s15 + $0x30] sm:$0xf]
      %v8139 = vld [vmem:[%s15 + $0x34] sm:$0xf]
      %v8140 = vld [vmem:[%s15 + $0x38] sm:$0xf]
      %v8141 = vld [vmem:[%s15 + $0x3c] sm:$0xf]
      %v8142 = vld [vmem:[%s16] sm:$0x1]
      %v8144 = vperm.slane %v8142, 0
      %v8146 = vunpack.c.h.b16 %v7663
      %v8147 = vunpack.c.h.b16 %v7664
      %v8148 = vunpack.c.h.b16 %v7665
      %v8149 = vunpack.c.h.b16 %v7666
      %v8150 = vunpack.c.h.b16 %v7667
      %v8151 = vunpack.c.h.b16 %v7668
      %v8152 = vunpack.c.h.b16 %v7669
      %v8153 = vunpack.c.h.b16 %v7670
      %v8154 = vunpack.c.h.b16 %v7671
      %v8155 = vunpack.c.h.b16 %v7672
      %v8156 = vunpack.c.h.b16 %v7673
      %v8157 = vunpack.c.h.b16 %v7674
      %v8158 = vunpack.c.h.b16 %v7675
      %v8159 = vunpack.c.h.b16 %v7676
      %v8160 = vunpack.c.h.b16 %v7677
      %v8161 = vunpack.c.h.b16 %v7678
      %v8162 = vunpack.c.h.b16 %v7679
      %v8163 = vunpack.c.h.b16 %v7680
      %v8164 = vunpack.c.h.b16 %v7681
      %v8165 = vunpack.c.h.b16 %v7682
      %v8166 = vunpack.c.h.b16 %v7683
      %v8167 = vunpack.c.h.b16 %v7684
      %v8168 = vunpack.c.h.b16 %v7685
      %v8169 = vunpack.c.h.b16 %v7686
      %v8170 = vunpack.c.h.b16 %v7687
      %v8171 = vunpack.c.h.b16 %v7688
      %v8172 = vunpack.c.h.b16 %v7689
      %v8173 = vunpack.c.h.b16 %v7690
      %v8174 = vunpack.c.h.b16 %v7691
      %v8175 = vunpack.c.h.b16 %v7692
      %v8176 = vunpack.c.h.b16 %v7693
      %v8177 = vunpack.c.h.b16 %v7694
      %v8178 = vunpack.c.h.b16 %v7695
      %v8179 = vunpack.c.h.b16 %v7696
      %v8180 = vunpack.c.h.b16 %v7697
      %v8181 = vunpack.c.h.b16 %v7698
      %v8182 = vunpack.c.h.b16 %v7699
      %v8183 = vunpack.c.h.b16 %v7700
      %v8184 = vunpack.c.h.b16 %v7701
      %v8185 = vunpack.c.h.b16 %v7702
      %v8186 = vunpack.c.h.b16 %v7703
      %v8187 = vunpack.c.h.b16 %v7704
      %v8188 = vunpack.c.h.b16 %v7705
      %v8189 = vunpack.c.h.b16 %v7706
      %v8190 = vunpack.c.h.b16 %v7707
      %v8191 = vunpack.c.h.b16 %v7708
      %v8192 = vunpack.c.h.b16 %v7709
      %v8193 = vunpack.c.h.b16 %v7710
      %v8194 = vunpack.c.h.b16 %v7711
      %v8195 = vunpack.c.h.b16 %v7712
      %v8196 = vunpack.c.h.b16 %v7713
      %v8197 = vunpack.c.h.b16 %v7714
      %v8198 = vunpack.c.h.b16 %v7715
      %v8199 = vunpack.c.h.b16 %v7716
      %v8200 = vunpack.c.h.b16 %v7717
      %v8201 = vunpack.c.h.b16 %v7718
      %v8202 = vunpack.c.h.b16 %v7719
      %v8203 = vunpack.c.h.b16 %v7720
      %v8204 = vunpack.c.h.b16 %v7721
      %v8205 = vunpack.c.h.b16 %v7722
      %v8206 = vpack.c.b16 %v8147, %v8146
      %v8207 = vpack.c.b16 %v8149, %v8148
      %v8208 = vpack.c.b16 %v8151, %v8150
      %v8209 = vpack.c.b16 %v8153, %v8152
      %v8210 = vpack.c.b16 %v8155, %v8154
      %v8211 = vpack.c.b16 %v8157, %v8156
      %v8212 = vpack.c.b16 %v8159, %v8158
      %v8213 = vpack.c.b16 %v8161, %v8160
      %v8214 = vpack.c.b16 %v8163, %v8162
      %v8215 = vpack.c.b16 %v8165, %v8164
      %v8216 = vpack.c.b16 %v8167, %v8166
      %v8217 = vpack.c.b16 %v8169, %v8168
      %v8218 = vpack.c.b16 %v8171, %v8170
      %v8219 = vpack.c.b16 %v8173, %v8172
      %v8220 = vpack.c.b16 %v8175, %v8174
      %v8221 = vpack.c.b16 %v8177, %v8176
      %v8222 = vpack.c.b16 %v8179, %v8178
      %v8223 = vpack.c.b16 %v8181, %v8180
      %v8224 = vpack.c.b16 %v8183, %v8182
      %v8225 = vpack.c.b16 %v8185, %v8184
      %v8226 = vpack.c.b16 %v8187, %v8186
      %v8227 = vpack.c.b16 %v8189, %v8188
      %v8228 = vpack.c.b16 %v8191, %v8190
      %v8229 = vpack.c.b16 %v8193, %v8192
      %v8230 = vpack.c.b16 %v8195, %v8194
      %v8231 = vpack.c.b16 %v8197, %v8196
      %v8232 = vpack.c.b16 %v8199, %v8198
      %v8233 = vpack.c.b16 %v8201, %v8200
      %v8234 = vpack.c.b16 %v8203, %v8202
      %v8235 = vpack.c.b16 %v8205, %v8204
      %v8282 = vunpack.c.l.b16 %v8126
      %v8283 = vunpack.c.l.b16 %v8127
      %v8284 = vunpack.c.l.b16 %v8128
      %v8285 = vunpack.c.l.b16 %v8129
      %v8286 = vunpack.c.l.b16 %v8130
      %v8287 = vunpack.c.l.b16 %v8131
      %v8288 = vunpack.c.l.b16 %v8132
      %v8289 = vunpack.c.l.b16 %v8133
      %v8290 = vunpack.c.l.b16 %v8134
      %v8291 = vunpack.c.l.b16 %v8135
      %v8292 = vunpack.c.l.b16 %v8136
      %v8293 = vunpack.c.l.b16 %v8137
      %v8294 = vunpack.c.l.b16 %v8138
      %v8295 = vunpack.c.l.b16 %v8139
      %v8296 = vunpack.c.l.b16 %v8140
      %v8297 = vunpack.c.l.b16 %v8141
      %v8298 = vpack.c.b16 %v8283, %v8282
      %v8299 = vpack.c.b16 %v8285, %v8284
      %v8300 = vpack.c.b16 %v8287, %v8286
      %v8301 = vpack.c.b16 %v8289, %v8288
      %v8302 = vpack.c.b16 %v8291, %v8290
      %v8303 = vpack.c.b16 %v8293, %v8292
      %v8304 = vpack.c.b16 %v8295, %v8294
      %v8305 = vpack.c.b16 %v8297, %v8296
      %8314 = vmatpush.bf16.msra.mxu0 %v8305
      %8315 = vmatpush.bf16.msra.mxu0 %v8304
      %8316 = vmatpush.bf16.msra.mxu0 %v8303
      %8317 = vmatpush.bf16.msra.mxu0 %v8302
      %8318 = vmatpush.bf16.msra.mxu0 %v8301
      %8319 = vmatpush.bf16.msra.mxu0 %v8300
      %8320 = vmatpush.bf16.msra.mxu0 %v8299
      %8321 = vmatpush.bf16.msra.mxu0 %v8298
      %8322 = vmatmul.bf16.gmra.mxu0 %v8206
      %v8323 = vpop.f32.mrf.mxu0
      %v8324 = vpop.f32.mrf.mxu0
      %8325 = vmatmul.bf16.gmra.mxu0 %v8207
      %v8326 = vpop.f32.mrf.mxu0
      %v8327 = vadd.f32 %v8144, %v8326
      %v8328 = vpop.f32.mrf.mxu0
      %v8329 = vadd.f32 %v8144, %v8328
      %8330 = vmatmul.bf16.gmra.mxu0 %v8208
      %v8331 = vpop.f32.mrf.mxu0
      %v8332 = vadd.f32 %v8144, %v8331
      %v8333 = vpop.f32.mrf.mxu0
      %v8334 = vadd.f32 %v8144, %v8333
      %8335 = vmatmul.bf16.gmra.mxu0 %v8209
      %v8336 = vpop.f32.mrf.mxu0
      %v8337 = vadd.f32 %v8144, %v8336
      %v8338 = vpop.f32.mrf.mxu0
      %v8339 = vadd.f32 %v8144, %v8338
      %8340 = vmatmul.bf16.gmra.mxu0 %v8210
      %v8341 = vpop.f32.mrf.mxu0
      %v8342 = vadd.f32 %v8144, %v8341
      %v8343 = vpop.f32.mrf.mxu0
      %v8344 = vadd.f32 %v8144, %v8343
      %8345 = vmatmul.bf16.gmra.mxu0 %v8211
      %v8346 = vpop.f32.mrf.mxu0
      %v8347 = vadd.f32 %v8144, %v8346
      %v8348 = vpop.f32.mrf.mxu0
      %v8349 = vadd.f32 %v8144, %v8348
      %8350 = vmatmul.bf16.gmra.mxu0 %v8212
      %v8351 = vpop.f32.mrf.mxu0
      %v8352 = vadd.f32 %v8144, %v8351
      %v8353 = vpop.f32.mrf.mxu0
      %v8354 = vadd.f32 %v8144, %v8353
      %8355 = vmatmul.bf16.gmra.mxu0 %v8213
      %v8356 = vpop.f32.mrf.mxu0
      %v8357 = vadd.f32 %v8144, %v8356
      %v8358 = vpop.f32.mrf.mxu0
      %v8359 = vadd.f32 %v8144, %v8358
      %8360 = vmatmul.bf16.gmra.mxu0 %v8214
      %v8361 = vpop.f32.mrf.mxu0
      %v8362 = vadd.f32 %v8144, %v8361
      %v8363 = vpop.f32.mrf.mxu0
      %v8364 = vadd.f32 %v8144, %v8363
      %8365 = vmatmul.bf16.gmra.mxu0 %v8215
      %v8366 = vpop.f32.mrf.mxu0
      %v8367 = vadd.f32 %v8144, %v8366
      %v8368 = vpop.f32.mrf.mxu0
      %v8369 = vadd.f32 %v8144, %v8368
      %8370 = vmatmul.bf16.gmra.mxu0 %v8216
      %v8371 = vpop.f32.mrf.mxu0
      %v8372 = vadd.f32 %v8144, %v8371
      %v8373 = vpop.f32.mrf.mxu0
      %v8374 = vadd.f32 %v8144, %v8373
      %8375 = vmatmul.bf16.gmra.mxu0 %v8217
      %v8376 = vpop.f32.mrf.mxu0
      %v8377 = vadd.f32 %v8144, %v8376
      %v8378 = vpop.f32.mrf.mxu0
      %v8379 = vadd.f32 %v8144, %v8378
      %8380 = vmatmul.bf16.gmra.mxu0 %v8218
      %v8381 = vpop.f32.mrf.mxu0
      %v8382 = vadd.f32 %v8144, %v8381
      %v8383 = vpop.f32.mrf.mxu0
      %v8384 = vadd.f32 %v8144, %v8383
      %8385 = vmatmul.bf16.gmra.mxu0 %v8219
      %v8386 = vpop.f32.mrf.mxu0
      %v8387 = vadd.f32 %v8144, %v8386
      %v8388 = vpop.f32.mrf.mxu0
      %v8389 = vadd.f32 %v8144, %v8388
      %8390 = vmatmul.bf16.gmra.mxu0 %v8220
      %v8391 = vpop.f32.mrf.mxu0
      %v8392 = vadd.f32 %v8144, %v8391
      %v8393 = vpop.f32.mrf.mxu0
      %v8394 = vadd.f32 %v8144, %v8393
      %8395 = vmatmul.bf16.gmra.mxu0 %v8221
      %v8396 = vpop.f32.mrf.mxu0
      %v8397 = vadd.f32 %v8144, %v8396
      %v8398 = vpop.f32.mrf.mxu0
      %v8399 = vadd.f32 %v8144, %v8398
      %8400 = vmatmul.bf16.gmra.mxu0 %v8222
      %v8401 = vpop.f32.mrf.mxu0
      %v8402 = vadd.f32 %v8144, %v8401
      %v8403 = vpop.f32.mrf.mxu0
      %v8404 = vadd.f32 %v8144, %v8403
      %8405 = vmatmul.bf16.gmra.mxu0 %v8223
      %v8406 = vpop.f32.mrf.mxu0
      %v8407 = vadd.f32 %v8144, %v8406
      %v8408 = vpop.f32.mrf.mxu0
      %v8409 = vadd.f32 %v8144, %v8408
      %8410 = vmatmul.bf16.gmra.mxu0 %v8224
      %v8411 = vpop.f32.mrf.mxu0
      %v8412 = vadd.f32 %v8144, %v8411
      %v8413 = vpop.f32.mrf.mxu0
      %v8414 = vadd.f32 %v8144, %v8413
      %8415 = vmatmul.bf16.gmra.mxu0 %v8225
      %v8416 = vpop.f32.mrf.mxu0
      %v8417 = vadd.f32 %v8144, %v8416
      %v8418 = vpop.f32.mrf.mxu0
      %v8419 = vadd.f32 %v8144, %v8418
      %8420 = vmatmul.bf16.gmra.mxu0 %v8226
      %v8421 = vpop.f32.mrf.mxu0
      %v8422 = vadd.f32 %v8144, %v8421
      %v8423 = vpop.f32.mrf.mxu0
      %v8424 = vadd.f32 %v8144, %v8423
      %8425 = vmatmul.bf16.gmra.mxu0 %v8227
      %v8426 = vpop.f32.mrf.mxu0
      %v8427 = vadd.f32 %v8144, %v8426
      %v8428 = vpop.f32.mrf.mxu0
      %v8429 = vadd.f32 %v8144, %v8428
      %8430 = vmatmul.bf16.gmra.mxu0 %v8228
      %v8431 = vpop.f32.mrf.mxu0
      %v8432 = vadd.f32 %v8144, %v8431
      %v8433 = vpop.f32.mrf.mxu0
      %v8434 = vadd.f32 %v8144, %v8433
      %8435 = vmatmul.bf16.gmra.mxu0 %v8229
      %v8436 = vpop.f32.mrf.mxu0
      %v8437 = vadd.f32 %v8144, %v8436
      %v8438 = vpop.f32.mrf.mxu0
      %v8439 = vadd.f32 %v8144, %v8438
      %8440 = vmatmul.bf16.gmra.mxu0 %v8230
      %v8441 = vpop.f32.mrf.mxu0
      %v8442 = vadd.f32 %v8144, %v8441
      %v8443 = vpop.f32.mrf.mxu0
      %v8444 = vadd.f32 %v8144, %v8443
      %8445 = vmatmul.bf16.gmra.mxu0 %v8231
      %v8446 = vpop.f32.mrf.mxu0
      %v8447 = vadd.f32 %v8144, %v8446
      %v8448 = vpop.f32.mrf.mxu0
      %v8449 = vadd.f32 %v8144, %v8448
      %8450 = vmatmul.bf16.gmra.mxu0 %v8232
      %v8451 = vpop.f32.mrf.mxu0
      %v8452 = vadd.f32 %v8144, %v8451
      %v8453 = vpop.f32.mrf.mxu0
      %v8454 = vadd.f32 %v8144, %v8453
      %8455 = vmatmul.bf16.gmra.mxu0 %v8233
      %v8456 = vpop.f32.mrf.mxu0
      %v8457 = vadd.f32 %v8144, %v8456
      %v8458 = vpop.f32.mrf.mxu0
      %v8459 = vadd.f32 %v8144, %v8458
      %8460 = vmatmul.bf16.gmra.mxu0 %v8234
      %v8461 = vpop.f32.mrf.mxu0
      %v8462 = vadd.f32 %v8144, %v8461
      %v8463 = vpop.f32.mrf.mxu0
      %v8464 = vadd.f32 %v8144, %v8463
      %8465 = vmatmul.bf16.gmra.mxu0 %v8235
      %v8466 = vpop.f32.mrf.mxu0
      %v8467 = vpop.f32.mrf.mxu0
      %8468 = vdwg.mxu0
      %v8469 = vadd.f32 %v7984, 1.0
      %v8470 = vadd.f32 %v7986, 1.0
      %v8471 = vadd.f32 %v7989, 1.0
      %v8472 = vadd.f32 %v7991, 1.0
      %v8473 = vadd.f32 %v7994, 1.0
      %v8474 = vadd.f32 %v7996, 1.0
      %v8475 = vadd.f32 %v7999, 1.0
      %v8476 = vadd.f32 %v8001, 1.0
      %v8477 = vadd.f32 %v8004, 1.0
      %v8478 = vadd.f32 %v8006, 1.0
      %v8479 = vadd.f32 %v8009, 1.0
      %v8480 = vadd.f32 %v8011, 1.0
      %v8481 = vadd.f32 %v8014, 1.0
      %v8482 = vadd.f32 %v8016, 1.0
      %v8483 = vadd.f32 %v8019, 1.0
      %v8484 = vadd.f32 %v8021, 1.0
      %v8485 = vadd.f32 %v8024, 1.0
      %v8486 = vadd.f32 %v8026, 1.0
      %v8487 = vadd.f32 %v8029, 1.0
      %v8488 = vadd.f32 %v8031, 1.0
      %v8489 = vadd.f32 %v8034, 1.0
      %v8490 = vadd.f32 %v8036, 1.0
      %v8491 = vadd.f32 %v8039, 1.0
      %v8492 = vadd.f32 %v8041, 1.0
      %v8493 = vadd.f32 %v8044, 1.0
      %v8494 = vadd.f32 %v8046, 1.0
      %v8495 = vadd.f32 %v8049, 1.0
      %v8496 = vadd.f32 %v8051, 1.0
      %v8497 = vadd.f32 %v8054, 1.0
      %v8498 = vadd.f32 %v8056, 1.0
      %v8499 = vadd.f32 %v8059, 1.0
      %v8500 = vadd.f32 %v8061, 1.0
      %v8501 = vadd.f32 %v8064, 1.0
      %v8502 = vadd.f32 %v8066, 1.0
      %v8503 = vadd.f32 %v8069, 1.0
      %v8504 = vadd.f32 %v8071, 1.0
      %v8505 = vadd.f32 %v8074, 1.0
      %v8506 = vadd.f32 %v8076, 1.0
      %v8507 = vadd.f32 %v8079, 1.0
      %v8508 = vadd.f32 %v8081, 1.0
      %v8509 = vadd.f32 %v8084, 1.0
      %v8510 = vadd.f32 %v8086, 1.0
      %v8511 = vadd.f32 %v8089, 1.0
      %v8512 = vadd.f32 %v8091, 1.0
      %v8513 = vadd.f32 %v8094, 1.0
      %v8514 = vadd.f32 %v8096, 1.0
      %v8515 = vadd.f32 %v8099, 1.0
      %v8516 = vadd.f32 %v8101, 1.0
      %v8517 = vadd.f32 %v8104, 1.0
      %v8518 = vadd.f32 %v8106, 1.0
      %v8519 = vadd.f32 %v8109, 1.0
      %v8520 = vadd.f32 %v8111, 1.0
      %v8521 = vadd.f32 %v8114, 1.0
      %v8522 = vadd.f32 %v8116, 1.0
      %v8523 = vadd.f32 %v8119, 1.0
      %v8524 = vadd.f32 %v8121, 1.0
      %v8525 = vmul.f32 %v6827, %v8469
      %v8526 = vmul.f32 %v6828, %v8470
      %v8527 = vmul.f32 %v6829, %v8471
      %v8528 = vmul.f32 %v6830, %v8472
      %v8529 = vmul.f32 %v6831, %v8473
      %v8530 = vmul.f32 %v6832, %v8474
      %v8531 = vmul.f32 %v6833, %v8475
      %v8532 = vmul.f32 %v6834, %v8476
      %v8533 = vmul.f32 %v6835, %v8477
      %v8534 = vmul.f32 %v6836, %v8478
      %v8535 = vmul.f32 %v6837, %v8479
      %v8536 = vmul.f32 %v6838, %v8480
      %v8537 = vmul.f32 %v6839, %v8481
      %v8538 = vmul.f32 %v6840, %v8482
      %v8539 = vmul.f32 %v6841, %v8483
      %v8540 = vmul.f32 %v6842, %v8484
      %v8541 = vmul.f32 %v6843, %v8485
      %v8542 = vmul.f32 %v6844, %v8486
      %v8543 = vmul.f32 %v6845, %v8487
      %v8544 = vmul.f32 %v6846, %v8488
      %v8545 = vmul.f32 %v6847, %v8489
      %v8546 = vmul.f32 %v6848, %v8490
      %v8547 = vmul.f32 %v6849, %v8491
      %v8548 = vmul.f32 %v6850, %v8492
      %v8549 = vmul.f32 %v6851, %v8493
      %v8550 = vmul.f32 %v6852, %v8494
      %v8551 = vmul.f32 %v6853, %v8495
      %v8552 = vmul.f32 %v6854, %v8496
      %v8553 = vmul.f32 %v6855, %v8497
      %v8554 = vmul.f32 %v6856, %v8498
      %v8555 = vmul.f32 %v6857, %v8499
      %v8556 = vmul.f32 %v6858, %v8500
      %v8557 = vmul.f32 %v6859, %v8501
      %v8558 = vmul.f32 %v6860, %v8502
      %v8559 = vmul.f32 %v6861, %v8503
      %v8560 = vmul.f32 %v6862, %v8504
      %v8561 = vmul.f32 %v6863, %v8505
      %v8562 = vmul.f32 %v6864, %v8506
      %v8563 = vmul.f32 %v6865, %v8507
      %v8564 = vmul.f32 %v6866, %v8508
      %v8565 = vmul.f32 %v6867, %v8509
      %v8566 = vmul.f32 %v6868, %v8510
      %v8567 = vmul.f32 %v6869, %v8511
      %v8568 = vmul.f32 %v6870, %v8512
      %v8569 = vmul.f32 %v6871, %v8513
      %v8570 = vmul.f32 %v6872, %v8514
      %v8571 = vmul.f32 %v6873, %v8515
      %v8572 = vmul.f32 %v6874, %v8516
      %v8573 = vmul.f32 %v6875, %v8517
      %v8574 = vmul.f32 %v6876, %v8518
      %v8575 = vmul.f32 %v6877, %v8519
      %v8576 = vmul.f32 %v6878, %v8520
      %v8577 = vmul.f32 %v6879, %v8521
      %v8578 = vmul.f32 %v6880, %v8522
      %v8579 = vmul.f32 %v6881, %v8523
      %v8580 = vmul.f32 %v6882, %v8524
      %v8581 = vadd.f32 %v8525, %v8327
      %v8582 = vadd.f32 %v8526, %v8329
      %v8583 = vadd.f32 %v8527, %v8332
      %v8584 = vadd.f32 %v8528, %v8334
      %v8585 = vadd.f32 %v8529, %v8337
      %v8586 = vadd.f32 %v8530, %v8339
      %v8587 = vadd.f32 %v8531, %v8342
      %v8588 = vadd.f32 %v8532, %v8344
      %v8589 = vadd.f32 %v8533, %v8347
      %v8590 = vadd.f32 %v8534, %v8349
      %v8591 = vadd.f32 %v8535, %v8352
      %v8592 = vadd.f32 %v8536, %v8354
      %v8593 = vadd.f32 %v8537, %v8357
      %v8594 = vadd.f32 %v8538, %v8359
      %v8595 = vadd.f32 %v8539, %v8362
      %v8596 = vadd.f32 %v8540, %v8364
      %v8597 = vadd.f32 %v8541, %v8367
      %v8598 = vadd.f32 %v8542, %v8369
      %v8599 = vadd.f32 %v8543, %v8372
      %v8600 = vadd.f32 %v8544, %v8374
      %v8601 = vadd.f32 %v8545, %v8377
      %v8602 = vadd.f32 %v8546, %v8379
      %v8603 = vadd.f32 %v8547, %v8382
      %v8604 = vadd.f32 %v8548, %v8384
      %v8605 = vadd.f32 %v8549, %v8387
      %v8606 = vadd.f32 %v8550, %v8389
      %v8607 = vadd.f32 %v8551, %v8392
      %v8608 = vadd.f32 %v8552, %v8394
      %v8609 = vadd.f32 %v8553, %v8397
      %v8610 = vadd.f32 %v8554, %v8399
      %v8611 = vadd.f32 %v8555, %v8402
      %v8612 = vadd.f32 %v8556, %v8404
      %v8613 = vadd.f32 %v8557, %v8407
      %v8614 = vadd.f32 %v8558, %v8409
      %v8615 = vadd.f32 %v8559, %v8412
      %v8616 = vadd.f32 %v8560, %v8414
      %v8617 = vadd.f32 %v8561, %v8417
      %v8618 = vadd.f32 %v8562, %v8419
      %v8619 = vadd.f32 %v8563, %v8422
      %v8620 = vadd.f32 %v8564, %v8424
      %v8621 = vadd.f32 %v8565, %v8427
      %v8622 = vadd.f32 %v8566, %v8429
      %v8623 = vadd.f32 %v8567, %v8432
      %v8624 = vadd.f32 %v8568, %v8434
      %v8625 = vadd.f32 %v8569, %v8437
      %v8626 = vadd.f32 %v8570, %v8439
      %v8627 = vadd.f32 %v8571, %v8442
      %v8628 = vadd.f32 %v8572, %v8444
      %v8629 = vadd.f32 %v8573, %v8447
      %v8630 = vadd.f32 %v8574, %v8449
      %v8631 = vadd.f32 %v8575, %v8452
      %v8632 = vadd.f32 %v8576, %v8454
      %v8633 = vadd.f32 %v8577, %v8457
      %v8634 = vadd.f32 %v8578, %v8459
      %v8635 = vadd.f32 %v8579, %v8462
      %v8636 = vadd.f32 %v8580, %v8464
      %v8637 = vmul.f32 %v8581, %v2954
      %v8638 = vmul.f32 %v8582, %v2959
      %v8639 = vmul.f32 %v8583, %v2964
      %v8640 = vmul.f32 %v8584, %v2969
      %v8641 = vmul.f32 %v8585, %v2974
      %v8642 = vmul.f32 %v8586, %v2979
      %v8643 = vmul.f32 %v8587, %v2984
      %v8644 = vmul.f32 %v8588, %v2989
      %v8645 = vmul.f32 %v8589, %v2994
      %v8646 = vmul.f32 %v8590, %v2999
      %v8647 = vmul.f32 %v8591, %v3004
      %v8648 = vmul.f32 %v8592, %v3009
      %v8649 = vmul.f32 %v8593, %v3014
      %v8650 = vmul.f32 %v8594, %v3019
      %v8651 = vmul.f32 %v8595, %v3024
      %v8652 = vmul.f32 %v8596, %v3029
      %v8653 = vmul.f32 %v8597, %v3034
      %v8654 = vmul.f32 %v8598, %v3039
      %v8655 = vmul.f32 %v8599, %v3044
      %v8656 = vmul.f32 %v8600, %v3049
      %v8657 = vmul.f32 %v8601, %v3054
      %v8658 = vmul.f32 %v8602, %v3059
      %v8659 = vmul.f32 %v8603, %v3064
      %v8660 = vmul.f32 %v8604, %v3069
      %v8661 = vmul.f32 %v8605, %v3074
      %v8662 = vmul.f32 %v8606, %v3079
      %v8663 = vmul.f32 %v8607, %v3084
      %v8664 = vmul.f32 %v8608, %v3089
      %v8665 = vmul.f32 %v8609, %v3094
      %v8666 = vmul.f32 %v8610, %v3099
      %v8667 = vmul.f32 %v8611, %v3104
      %v8668 = vmul.f32 %v8612, %v3109
      %v8669 = vmul.f32 %v8613, %v3114
      %v8670 = vmul.f32 %v8614, %v3119
      %v8671 = vmul.f32 %v8615, %v3124
      %v8672 = vmul.f32 %v8616, %v3129
      %v8673 = vmul.f32 %v8617, %v3134
      %v8674 = vmul.f32 %v8618, %v3139
      %v8675 = vmul.f32 %v8619, %v3144
      %v8676 = vmul.f32 %v8620, %v3149
      %v8677 = vmul.f32 %v8621, %v3154
      %v8678 = vmul.f32 %v8622, %v3159
      %v8679 = vmul.f32 %v8623, %v3164
      %v8680 = vmul.f32 %v8624, %v3169
      %v8681 = vmul.f32 %v8625, %v3174
      %v8682 = vmul.f32 %v8626, %v3179
      %v8683 = vmul.f32 %v8627, %v3184
      %v8684 = vmul.f32 %v8628, %v3189
      %v8685 = vmul.f32 %v8629, %v3194
      %v8686 = vmul.f32 %v8630, %v3199
      %v8687 = vmul.f32 %v8631, %v3204
      %v8688 = vmul.f32 %v8632, %v3209
      %v8689 = vmul.f32 %v8633, %v3214
      %v8690 = vmul.f32 %v8634, %v3219
      %v8691 = vmul.f32 %v8635, %v3224
      %v8692 = vmul.f32 %v8636, %v3229
      %v8693 = vld [vmem:[%s18] sm:$0x1]
      %v8695 = vperm.slane %v8693, 0
      %v8697 = vpack.c.bf16 %v8638, %v8637
      %v8698 = vpack.c.bf16 %v8640, %v8639
      %v8699 = vpack.c.bf16 %v8642, %v8641
      %v8700 = vpack.c.bf16 %v8644, %v8643
      %v8701 = vpack.c.bf16 %v8646, %v8645
      %v8702 = vpack.c.bf16 %v8648, %v8647
      %v8703 = vpack.c.bf16 %v8650, %v8649
      %v8704 = vpack.c.bf16 %v8652, %v8651
      %v8705 = vpack.c.bf16 %v8654, %v8653
      %v8706 = vpack.c.bf16 %v8656, %v8655
      %v8707 = vpack.c.bf16 %v8658, %v8657
      %v8708 = vpack.c.bf16 %v8660, %v8659
      %v8709 = vpack.c.bf16 %v8662, %v8661
      %v8710 = vpack.c.bf16 %v8664, %v8663
      %v8711 = vpack.c.bf16 %v8666, %v8665
      %v8712 = vpack.c.bf16 %v8668, %v8667
      %v8713 = vpack.c.bf16 %v8670, %v8669
      %v8714 = vpack.c.bf16 %v8672, %v8671
      %v8715 = vpack.c.bf16 %v8674, %v8673
      %v8716 = vpack.c.bf16 %v8676, %v8675
      %v8717 = vpack.c.bf16 %v8678, %v8677
      %v8718 = vpack.c.bf16 %v8680, %v8679
      %v8719 = vpack.c.bf16 %v8682, %v8681
      %v8720 = vpack.c.bf16 %v8684, %v8683
      %v8721 = vpack.c.bf16 %v8685, %v8685
      %v8722 = vld [vmem:[%s17] sm:$0xf]
      %v8723 = vld [vmem:[%s17 + $0x4] sm:$0xf]
      %v8724 = vld [vmem:[%s17 + $0x8] sm:$0xf]
      %v8725 = vld [vmem:[%s17 + $0xc] sm:$0xf]
      %v8726 = vld [vmem:[%s17 + $0x10] sm:$0xf]
      %v8727 = vld [vmem:[%s17 + $0x14] sm:$0xf]
      %v8728 = vld [vmem:[%s17 + $0x18] sm:$0xf]
      %v8729 = vld [vmem:[%s17 + $0x1c] sm:$0xf]
      %v8730 = vld [vmem:[%s17 + $0x20] sm:$0xf]
      %v8731 = vld [vmem:[%s17 + $0x24] sm:$0xf]
      %v8732 = vld [vmem:[%s17 + $0x28] sm:$0xf]
      %v8733 = vld [vmem:[%s17 + $0x2c] sm:$0xf]
      %v8734 = vld [vmem:[%s17 + $0x30] sm:$0xf]
      %v8735 = vld [vmem:[%s17 + $0x34] sm:$0xf]
      %v8736 = vld [vmem:[%s17 + $0x38] sm:$0xf]
      %v8737 = vld [vmem:[%s17 + $0x3c] sm:$0xf]
      %v8739 = vshrl.u32 %v8697, 16
      %v8741 = vrot.slane %v8739, 3
      %v8742 = vshll.u32 %v8697, 16
      %v8744 = vrot.slane %v8742, 4
      %v8745 = vor.u32 %v8741, %v8744
      %v8747 = vshrl.u32 %v8698, 16
      %v8749 = vrot.slane %v8747, 3
      %v8750 = vshll.u32 %v8698, 16
      %v8752 = vrot.slane %v8750, 4
      %v8753 = vor.u32 %v8749, %v8752
      %v8754 = vsel %vm3380, %v8745, %v8753
      %v8756 = vshrl.u32 %v8699, 16
      %v8758 = vrot.slane %v8756, 3
      %v8759 = vshll.u32 %v8699, 16
      %v8761 = vrot.slane %v8759, 4
      %v8762 = vor.u32 %v8758, %v8761
      %v8763 = vsel %vm3380, %v8753, %v8762
      %v8765 = vshrl.u32 %v8700, 16
      %v8767 = vrot.slane %v8765, 3
      %v8768 = vshll.u32 %v8700, 16
      %v8770 = vrot.slane %v8768, 4
      %v8771 = vor.u32 %v8767, %v8770
      %v8772 = vsel %vm3380, %v8762, %v8771
      %v8774 = vshrl.u32 %v8701, 16
      %v8776 = vrot.slane %v8774, 3
      %v8777 = vshll.u32 %v8701, 16
      %v8779 = vrot.slane %v8777, 4
      %v8780 = vor.u32 %v8776, %v8779
      %v8781 = vsel %vm3380, %v8771, %v8780
      %v8783 = vshrl.u32 %v8702, 16
      %v8785 = vrot.slane %v8783, 3
      %v8786 = vshll.u32 %v8702, 16
      %v8788 = vrot.slane %v8786, 4
      %v8789 = vor.u32 %v8785, %v8788
      %v8790 = vsel %vm3380, %v8780, %v8789
      %v8792 = vshrl.u32 %v8703, 16
      %v8794 = vrot.slane %v8792, 3
      %v8795 = vshll.u32 %v8703, 16
      %v8797 = vrot.slane %v8795, 4
      %v8798 = vor.u32 %v8794, %v8797
      %v8799 = vsel %vm3380, %v8789, %v8798
      %v8801 = vshrl.u32 %v8704, 16
      %v8803 = vrot.slane %v8801, 3
      %v8804 = vshll.u32 %v8704, 16
      %v8806 = vrot.slane %v8804, 4
      %v8807 = vor.u32 %v8803, %v8806
      %v8808 = vsel %vm3380, %v8798, %v8807
      %v8810 = vshrl.u32 %v8705, 16
      %v8812 = vrot.slane %v8810, 3
      %v8813 = vshll.u32 %v8705, 16
      %v8815 = vrot.slane %v8813, 4
      %v8816 = vor.u32 %v8812, %v8815
      %v8817 = vsel %vm3380, %v8807, %v8816
      %v8819 = vshrl.u32 %v8706, 16
      %v8821 = vrot.slane %v8819, 3
      %v8822 = vshll.u32 %v8706, 16
      %v8824 = vrot.slane %v8822, 4
      %v8825 = vor.u32 %v8821, %v8824
      %v8826 = vsel %vm3380, %v8816, %v8825
      %v8828 = vshrl.u32 %v8707, 16
      %v8830 = vrot.slane %v8828, 3
      %v8831 = vshll.u32 %v8707, 16
      %v8833 = vrot.slane %v8831, 4
      %v8834 = vor.u32 %v8830, %v8833
      %v8835 = vsel %vm3380, %v8825, %v8834
      %v8837 = vshrl.u32 %v8708, 16
      %v8839 = vrot.slane %v8837, 3
      %v8840 = vshll.u32 %v8708, 16
      %v8842 = vrot.slane %v8840, 4
      %v8843 = vor.u32 %v8839, %v8842
      %v8844 = vsel %vm3380, %v8834, %v8843
      %v8846 = vshrl.u32 %v8709, 16
      %v8848 = vrot.slane %v8846, 3
      %v8849 = vshll.u32 %v8709, 16
      %v8851 = vrot.slane %v8849, 4
      %v8852 = vor.u32 %v8848, %v8851
      %v8853 = vsel %vm3380, %v8843, %v8852
      %v8855 = vshrl.u32 %v8710, 16
      %v8857 = vrot.slane %v8855, 3
      %v8858 = vshll.u32 %v8710, 16
      %v8860 = vrot.slane %v8858, 4
      %v8861 = vor.u32 %v8857, %v8860
      %v8862 = vsel %vm3380, %v8852, %v8861
      %v8864 = vshrl.u32 %v8711, 16
      %v8866 = vrot.slane %v8864, 3
      %v8867 = vshll.u32 %v8711, 16
      %v8869 = vrot.slane %v8867, 4
      %v8870 = vor.u32 %v8866, %v8869
      %v8871 = vsel %vm3380, %v8861, %v8870
      %v8873 = vshrl.u32 %v8712, 16
      %v8875 = vrot.slane %v8873, 3
      %v8876 = vshll.u32 %v8712, 16
      %v8878 = vrot.slane %v8876, 4
      %v8879 = vor.u32 %v8875, %v8878
      %v8880 = vsel %vm3380, %v8870, %v8879
      %v8882 = vshrl.u32 %v8713, 16
      %v8884 = vrot.slane %v8882, 3
      %v8885 = vshll.u32 %v8713, 16
      %v8887 = vrot.slane %v8885, 4
      %v8888 = vor.u32 %v8884, %v8887
      %v8889 = vsel %vm3380, %v8879, %v8888
      %v8891 = vshrl.u32 %v8714, 16
      %v8893 = vrot.slane %v8891, 3
      %v8894 = vshll.u32 %v8714, 16
      %v8896 = vrot.slane %v8894, 4
      %v8897 = vor.u32 %v8893, %v8896
      %v8898 = vsel %vm3380, %v8888, %v8897
      %v8900 = vshrl.u32 %v8715, 16
      %v8902 = vrot.slane %v8900, 3
      %v8903 = vshll.u32 %v8715, 16
      %v8905 = vrot.slane %v8903, 4
      %v8906 = vor.u32 %v8902, %v8905
      %v8907 = vsel %vm3380, %v8897, %v8906
      %v8909 = vshrl.u32 %v8716, 16
      %v8911 = vrot.slane %v8909, 3
      %v8912 = vshll.u32 %v8716, 16
      %v8914 = vrot.slane %v8912, 4
      %v8915 = vor.u32 %v8911, %v8914
      %v8916 = vsel %vm3380, %v8906, %v8915
      %v8918 = vshrl.u32 %v8717, 16
      %v8920 = vrot.slane %v8918, 3
      %v8921 = vshll.u32 %v8717, 16
      %v8923 = vrot.slane %v8921, 4
      %v8924 = vor.u32 %v8920, %v8923
      %v8925 = vsel %vm3380, %v8915, %v8924
      %v8927 = vshrl.u32 %v8718, 16
      %v8929 = vrot.slane %v8927, 3
      %v8930 = vshll.u32 %v8718, 16
      %v8932 = vrot.slane %v8930, 4
      %v8933 = vor.u32 %v8929, %v8932
      %v8934 = vsel %vm3380, %v8924, %v8933
      %v8936 = vshrl.u32 %v8719, 16
      %v8938 = vrot.slane %v8936, 3
      %v8939 = vshll.u32 %v8719, 16
      %v8941 = vrot.slane %v8939, 4
      %v8942 = vor.u32 %v8938, %v8941
      %v8943 = vsel %vm3380, %v8933, %v8942
      %v8945 = vshrl.u32 %v8720, 16
      %v8947 = vrot.slane %v8945, 3
      %v8948 = vshll.u32 %v8720, 16
      %v8950 = vrot.slane %v8948, 4
      %v8951 = vor.u32 %v8947, %v8950
      %v8952 = vsel %vm3380, %v8942, %v8951
      %v8954 = vshrl.u32 %v8721, 16
      %v8956 = vrot.slane %v8954, 3
      %v8957 = vshll.u32 %v8721, 16
      %v8959 = vrot.slane %v8957, 4
      %v8960 = vor.u32 %v8956, %v8959
      %v8961 = vsel %vm3380, %v8951, %v8960
      %v9002 = vunpack.c.l.b16 %v8722
      %v9003 = vunpack.c.l.b16 %v8723
      %v9004 = vunpack.c.l.b16 %v8724
      %v9005 = vunpack.c.l.b16 %v8725
      %v9006 = vunpack.c.l.b16 %v8726
      %v9007 = vunpack.c.l.b16 %v8727
      %v9008 = vunpack.c.l.b16 %v8728
      %v9009 = vunpack.c.l.b16 %v8729
      %v9010 = vunpack.c.l.b16 %v8730
      %v9011 = vunpack.c.l.b16 %v8731
      %v9012 = vunpack.c.l.b16 %v8732
      %v9013 = vunpack.c.l.b16 %v8733
      %v9014 = vunpack.c.l.b16 %v8734
      %v9015 = vunpack.c.l.b16 %v8735
      %v9016 = vunpack.c.l.b16 %v8736
      %v9017 = vunpack.c.l.b16 %v8737
      %v9018 = vpack.c.b16 %v9003, %v9002
      %v9019 = vpack.c.b16 %v9005, %v9004
      %v9020 = vpack.c.b16 %v9007, %v9006
      %v9021 = vpack.c.b16 %v9009, %v9008
      %v9022 = vpack.c.b16 %v9011, %v9010
      %v9023 = vpack.c.b16 %v9013, %v9012
      %v9024 = vpack.c.b16 %v9015, %v9014
      %v9025 = vpack.c.b16 %v9017, %v9016
      %9034 = vmatpush.bf16.msra.mxu0 %v9025
      %9035 = vmatpush.bf16.msra.mxu0 %v9024
      %9036 = vmatpush.bf16.msra.mxu0 %v9023
      %9037 = vmatpush.bf16.msra.mxu0 %v9022
      %9038 = vmatpush.bf16.msra.mxu0 %v9021
      %9039 = vmatpush.bf16.msra.mxu0 %v9020
      %9040 = vmatpush.bf16.msra.mxu0 %v9019
      %9041 = vmatpush.bf16.msra.mxu0 %v9018
      %9042 = vmatmul.bf16.gmra.mxu0 %v8754
      %v9043 = vpop.f32.mrf.mxu0
      %v9044 = vadd.f32 0.0, %v9043
      %v9045 = vpop.f32.mrf.mxu0
      %v9046 = vadd.f32 0.0, %v9045
      %9047 = vmatmul.bf16.gmra.mxu0 %v8763
      %v9048 = vpop.f32.mrf.mxu0
      %v9049 = vadd.f32 0.0, %v9048
      %v9050 = vpop.f32.mrf.mxu0
      %v9051 = vadd.f32 0.0, %v9050
      %9052 = vmatmul.bf16.gmra.mxu0 %v8772
      %v9053 = vpop.f32.mrf.mxu0
      %v9054 = vadd.f32 0.0, %v9053
      %v9055 = vpop.f32.mrf.mxu0
      %v9056 = vadd.f32 0.0, %v9055
      %9057 = vmatmul.bf16.gmra.mxu0 %v8781
      %v9058 = vpop.f32.mrf.mxu0
      %v9059 = vadd.f32 0.0, %v9058
      %v9060 = vpop.f32.mrf.mxu0
      %v9061 = vadd.f32 0.0, %v9060
      %9062 = vmatmul.bf16.gmra.mxu0 %v8790
      %v9063 = vpop.f32.mrf.mxu0
      %v9064 = vadd.f32 0.0, %v9063
      %v9065 = vpop.f32.mrf.mxu0
      %v9066 = vadd.f32 0.0, %v9065
      %9067 = vmatmul.bf16.gmra.mxu0 %v8799
      %v9068 = vpop.f32.mrf.mxu0
      %v9069 = vadd.f32 0.0, %v9068
      %v9070 = vpop.f32.mrf.mxu0
      %v9071 = vadd.f32 0.0, %v9070
      %9072 = vmatmul.bf16.gmra.mxu0 %v8808
      %v9073 = vpop.f32.mrf.mxu0
      %v9074 = vadd.f32 0.0, %v9073
      %v9075 = vpop.f32.mrf.mxu0
      %v9076 = vadd.f32 0.0, %v9075
      %9077 = vmatmul.bf16.gmra.mxu0 %v8817
      %v9078 = vpop.f32.mrf.mxu0
      %v9079 = vadd.f32 0.0, %v9078
      %v9080 = vpop.f32.mrf.mxu0
      %v9081 = vadd.f32 0.0, %v9080
      %9082 = vmatmul.bf16.gmra.mxu0 %v8826
      %v9083 = vpop.f32.mrf.mxu0
      %v9084 = vadd.f32 0.0, %v9083
      %v9085 = vpop.f32.mrf.mxu0
      %v9086 = vadd.f32 0.0, %v9085
      %9087 = vmatmul.bf16.gmra.mxu0 %v8835
      %v9088 = vpop.f32.mrf.mxu0
      %v9089 = vadd.f32 0.0, %v9088
      %v9090 = vpop.f32.mrf.mxu0
      %v9091 = vadd.f32 0.0, %v9090
      %9092 = vmatmul.bf16.gmra.mxu0 %v8844
      %v9093 = vpop.f32.mrf.mxu0
      %v9094 = vadd.f32 0.0, %v9093
      %v9095 = vpop.f32.mrf.mxu0
      %v9096 = vadd.f32 0.0, %v9095
      %9097 = vmatmul.bf16.gmra.mxu0 %v8853
      %v9098 = vpop.f32.mrf.mxu0
      %v9099 = vadd.f32 0.0, %v9098
      %v9100 = vpop.f32.mrf.mxu0
      %v9101 = vadd.f32 0.0, %v9100
      %9102 = vmatmul.bf16.gmra.mxu0 %v8862
      %v9103 = vpop.f32.mrf.mxu0
      %v9104 = vadd.f32 0.0, %v9103
      %v9105 = vpop.f32.mrf.mxu0
      %v9106 = vadd.f32 0.0, %v9105
      %9107 = vmatmul.bf16.gmra.mxu0 %v8871
      %v9108 = vpop.f32.mrf.mxu0
      %v9109 = vadd.f32 0.0, %v9108
      %v9110 = vpop.f32.mrf.mxu0
      %v9111 = vadd.f32 0.0, %v9110
      %9112 = vmatmul.bf16.gmra.mxu0 %v8880
      %v9113 = vpop.f32.mrf.mxu0
      %v9114 = vadd.f32 0.0, %v9113
      %v9115 = vpop.f32.mrf.mxu0
      %v9116 = vadd.f32 0.0, %v9115
      %9117 = vmatmul.bf16.gmra.mxu0 %v8889
      %v9118 = vpop.f32.mrf.mxu0
      %v9119 = vadd.f32 0.0, %v9118
      %v9120 = vpop.f32.mrf.mxu0
      %v9121 = vadd.f32 0.0, %v9120
      %9122 = vmatmul.bf16.gmra.mxu0 %v8898
      %v9123 = vpop.f32.mrf.mxu0
      %v9124 = vadd.f32 0.0, %v9123
      %v9125 = vpop.f32.mrf.mxu0
      %v9126 = vadd.f32 0.0, %v9125
      %9127 = vmatmul.bf16.gmra.mxu0 %v8907
      %v9128 = vpop.f32.mrf.mxu0
      %v9129 = vadd.f32 0.0, %v9128
      %v9130 = vpop.f32.mrf.mxu0
      %v9131 = vadd.f32 0.0, %v9130
      %9132 = vmatmul.bf16.gmra.mxu0 %v8916
      %v9133 = vpop.f32.mrf.mxu0
      %v9134 = vadd.f32 0.0, %v9133
      %v9135 = vpop.f32.mrf.mxu0
      %v9136 = vadd.f32 0.0, %v9135
      %9137 = vmatmul.bf16.gmra.mxu0 %v8925
      %v9138 = vpop.f32.mrf.mxu0
      %v9139 = vadd.f32 0.0, %v9138
      %v9140 = vpop.f32.mrf.mxu0
      %v9141 = vadd.f32 0.0, %v9140
      %9142 = vmatmul.bf16.gmra.mxu0 %v8934
      %v9143 = vpop.f32.mrf.mxu0
      %v9144 = vadd.f32 0.0, %v9143
      %v9145 = vpop.f32.mrf.mxu0
      %v9146 = vadd.f32 0.0, %v9145
      %9147 = vmatmul.bf16.gmra.mxu0 %v8943
      %v9148 = vpop.f32.mrf.mxu0
      %v9149 = vadd.f32 0.0, %v9148
      %v9150 = vpop.f32.mrf.mxu0
      %v9151 = vadd.f32 0.0, %v9150
      %9152 = vmatmul.bf16.gmra.mxu0 %v8952
      %v9153 = vpop.f32.mrf.mxu0
      %v9154 = vadd.f32 0.0, %v9153
      %v9155 = vpop.f32.mrf.mxu0
      %v9156 = vadd.f32 0.0, %v9155
      %9157 = vmatmul.bf16.gmra.mxu0 %v8961
      %v9158 = vpop.f32.mrf.mxu0
      %v9159 = vadd.f32 0.0, %v9158
      %v9160 = vpop.f32.mrf.mxu0
      %v9161 = vadd.f32 0.0, %v9160
      %9162 = vdwg.mxu0
      %v9163 = vadd.f32 %v8695, %v9044
      %v9164 = vadd.f32 %v8695, %v9046
      %v9165 = vadd.f32 %v8695, %v9049
      %v9166 = vadd.f32 %v8695, %v9051
      %v9167 = vadd.f32 %v8695, %v9054
      %v9168 = vadd.f32 %v8695, %v9056
      %v9169 = vadd.f32 %v8695, %v9059
      %v9170 = vadd.f32 %v8695, %v9061
      %v9171 = vadd.f32 %v8695, %v9064
      %v9172 = vadd.f32 %v8695, %v9066
      %v9173 = vadd.f32 %v8695, %v9069
      %v9174 = vadd.f32 %v8695, %v9071
      %v9175 = vadd.f32 %v8695, %v9074
      %v9176 = vadd.f32 %v8695, %v9076
      %v9177 = vadd.f32 %v8695, %v9079
      %v9178 = vadd.f32 %v8695, %v9081
      %v9179 = vadd.f32 %v8695, %v9084
      %v9180 = vadd.f32 %v8695, %v9086
      %v9181 = vadd.f32 %v8695, %v9089
      %v9182 = vadd.f32 %v8695, %v9091
      %v9183 = vadd.f32 %v8695, %v9094
      %v9184 = vadd.f32 %v8695, %v9096
      %v9185 = vadd.f32 %v8695, %v9099
      %v9186 = vadd.f32 %v8695, %v9101
      %v9187 = vadd.f32 %v8695, %v9104
      %v9188 = vadd.f32 %v8695, %v9106
      %v9189 = vadd.f32 %v8695, %v9109
      %v9190 = vadd.f32 %v8695, %v9111
      %v9191 = vadd.f32 %v8695, %v9114
      %v9192 = vadd.f32 %v8695, %v9116
      %v9193 = vadd.f32 %v8695, %v9119
      %v9194 = vadd.f32 %v8695, %v9121
      %v9195 = vadd.f32 %v8695, %v9124
      %v9196 = vadd.f32 %v8695, %v9126
      %v9197 = vadd.f32 %v8695, %v9129
      %v9198 = vadd.f32 %v8695, %v9131
      %v9199 = vadd.f32 %v8695, %v9134
      %v9200 = vadd.f32 %v8695, %v9136
      %v9201 = vadd.f32 %v8695, %v9139
      %v9202 = vadd.f32 %v8695, %v9141
      %v9203 = vadd.f32 %v8695, %v9144
      %v9204 = vadd.f32 %v8695, %v9146
      %v9205 = vadd.f32 %v8695, %v9149
      %v9206 = vadd.f32 %v8695, %v9151
      %v9207 = vadd.f32 %v8695, %v9154
      %v9208 = vadd.f32 %v8695, %v9156
      %v9209 = vadd.f32 %v8695, %v9159
      %v9210 = vadd.f32 %v8695, %v9161
      %v9211 = vpack.c.bf16 %v8639, %v8638
      %v9212 = vpack.c.bf16 %v8641, %v8640
      %v9213 = vpack.c.bf16 %v8643, %v8642
      %v9214 = vpack.c.bf16 %v8645, %v8644
      %v9215 = vpack.c.bf16 %v8647, %v8646
      %v9216 = vpack.c.bf16 %v8649, %v8648
      %v9217 = vpack.c.bf16 %v8651, %v8650
      %v9218 = vpack.c.bf16 %v8653, %v8652
      %v9219 = vpack.c.bf16 %v8655, %v8654
      %v9220 = vpack.c.bf16 %v8657, %v8656
      %v9221 = vpack.c.bf16 %v8659, %v8658
      %v9222 = vpack.c.bf16 %v8661, %v8660
      %v9223 = vpack.c.bf16 %v8663, %v8662
      %v9224 = vpack.c.bf16 %v8665, %v8664
      %v9225 = vpack.c.bf16 %v8667, %v8666
      %v9226 = vpack.c.bf16 %v8669, %v8668
      %v9227 = vpack.c.bf16 %v8671, %v8670
      %v9228 = vpack.c.bf16 %v8673, %v8672
      %v9229 = vpack.c.bf16 %v8675, %v8674
      %v9230 = vpack.c.bf16 %v8677, %v8676
      %v9231 = vpack.c.bf16 %v8679, %v8678
      %v9232 = vpack.c.bf16 %v8681, %v8680
      %v9233 = vpack.c.bf16 %v8683, %v8682
      %v9234 = vpack.c.bf16 %v8685, %v8684
      %s9235 = scalar_lea.vmem %s17, 64
      %v9236 = vld [vmem:[%s9235] sm:$0xf]
      %v9237 = vld [vmem:[%s9235 + $0x4] sm:$0xf]
      %v9238 = vld [vmem:[%s9235 + $0x8] sm:$0xf]
      %v9239 = vld [vmem:[%s9235 + $0xc] sm:$0xf]
      %v9240 = vld [vmem:[%s9235 + $0x10] sm:$0xf]
      %v9241 = vld [vmem:[%s9235 + $0x14] sm:$0xf]
      %v9242 = vld [vmem:[%s9235 + $0x18] sm:$0xf]
      %v9243 = vld [vmem:[%s9235 + $0x1c] sm:$0xf]
      %v9244 = vld [vmem:[%s9235 + $0x20] sm:$0xf]
      %v9245 = vld [vmem:[%s9235 + $0x24] sm:$0xf]
      %v9246 = vld [vmem:[%s9235 + $0x28] sm:$0xf]
      %v9247 = vld [vmem:[%s9235 + $0x2c] sm:$0xf]
      %v9248 = vld [vmem:[%s9235 + $0x30] sm:$0xf]
      %v9249 = vld [vmem:[%s9235 + $0x34] sm:$0xf]
      %v9250 = vld [vmem:[%s9235 + $0x38] sm:$0xf]
      %v9251 = vld [vmem:[%s9235 + $0x3c] sm:$0xf]
      %v9268 = vunpack.c.l.b16 %v9236
      %v9269 = vunpack.c.l.b16 %v9237
      %v9270 = vunpack.c.l.b16 %v9238
      %v9271 = vunpack.c.l.b16 %v9239
      %v9272 = vunpack.c.l.b16 %v9240
      %v9273 = vunpack.c.l.b16 %v9241
      %v9274 = vunpack.c.l.b16 %v9242
      %v9275 = vunpack.c.l.b16 %v9243
      %v9276 = vunpack.c.l.b16 %v9244
      %v9277 = vunpack.c.l.b16 %v9245
      %v9278 = vunpack.c.l.b16 %v9246
      %v9279 = vunpack.c.l.b16 %v9247
      %v9280 = vunpack.c.l.b16 %v9248
      %v9281 = vunpack.c.l.b16 %v9249
      %v9282 = vunpack.c.l.b16 %v9250
      %v9283 = vunpack.c.l.b16 %v9251
      %v9284 = vpack.c.b16 %v9269, %v9268
      %v9285 = vpack.c.b16 %v9271, %v9270
      %v9286 = vpack.c.b16 %v9273, %v9272
      %v9287 = vpack.c.b16 %v9275, %v9274
      %v9288 = vpack.c.b16 %v9277, %v9276
      %v9289 = vpack.c.b16 %v9279, %v9278
      %v9290 = vpack.c.b16 %v9281, %v9280
      %v9291 = vpack.c.b16 %v9283, %v9282
      %9300 = vmatpush.bf16.msra.mxu0 %v9291
      %9301 = vmatpush.bf16.msra.mxu0 %v9290
      %9302 = vmatpush.bf16.msra.mxu0 %v9289
      %9303 = vmatpush.bf16.msra.mxu0 %v9288
      %9304 = vmatpush.bf16.msra.mxu0 %v9287
      %9305 = vmatpush.bf16.msra.mxu0 %v9286
      %9306 = vmatpush.bf16.msra.mxu0 %v9285
      %9307 = vmatpush.bf16.msra.mxu0 %v9284
      %9308 = vmatmul.bf16.gmra.mxu0 %v9211
      %v9309 = vpop.f32.mrf.mxu0
      %v9310 = vadd.f32 0.0, %v9309
      %v9311 = vpop.f32.mrf.mxu0
      %v9312 = vadd.f32 0.0, %v9311
      %9313 = vmatmul.bf16.gmra.mxu0 %v9212
      %v9314 = vpop.f32.mrf.mxu0
      %v9315 = vadd.f32 0.0, %v9314
      %v9316 = vpop.f32.mrf.mxu0
      %v9317 = vadd.f32 0.0, %v9316
      %9318 = vmatmul.bf16.gmra.mxu0 %v9213
      %v9319 = vpop.f32.mrf.mxu0
      %v9320 = vadd.f32 0.0, %v9319
      %v9321 = vpop.f32.mrf.mxu0
      %v9322 = vadd.f32 0.0, %v9321
      %9323 = vmatmul.bf16.gmra.mxu0 %v9214
      %v9324 = vpop.f32.mrf.mxu0
      %v9325 = vadd.f32 0.0, %v9324
      %v9326 = vpop.f32.mrf.mxu0
      %v9327 = vadd.f32 0.0, %v9326
      %9328 = vmatmul.bf16.gmra.mxu0 %v9215
      %v9329 = vpop.f32.mrf.mxu0
      %v9330 = vadd.f32 0.0, %v9329
      %v9331 = vpop.f32.mrf.mxu0
      %v9332 = vadd.f32 0.0, %v9331
      %9333 = vmatmul.bf16.gmra.mxu0 %v9216
      %v9334 = vpop.f32.mrf.mxu0
      %v9335 = vadd.f32 0.0, %v9334
      %v9336 = vpop.f32.mrf.mxu0
      %v9337 = vadd.f32 0.0, %v9336
      %9338 = vmatmul.bf16.gmra.mxu0 %v9217
      %v9339 = vpop.f32.mrf.mxu0
      %v9340 = vadd.f32 0.0, %v9339
      %v9341 = vpop.f32.mrf.mxu0
      %v9342 = vadd.f32 0.0, %v9341
      %9343 = vmatmul.bf16.gmra.mxu0 %v9218
      %v9344 = vpop.f32.mrf.mxu0
      %v9345 = vadd.f32 0.0, %v9344
      %v9346 = vpop.f32.mrf.mxu0
      %v9347 = vadd.f32 0.0, %v9346
      %9348 = vmatmul.bf16.gmra.mxu0 %v9219
      %v9349 = vpop.f32.mrf.mxu0
      %v9350 = vadd.f32 0.0, %v9349
      %v9351 = vpop.f32.mrf.mxu0
      %v9352 = vadd.f32 0.0, %v9351
      %9353 = vmatmul.bf16.gmra.mxu0 %v9220
      %v9354 = vpop.f32.mrf.mxu0
      %v9355 = vadd.f32 0.0, %v9354
      %v9356 = vpop.f32.mrf.mxu0
      %v9357 = vadd.f32 0.0, %v9356
      %9358 = vmatmul.bf16.gmra.mxu0 %v9221
      %v9359 = vpop.f32.mrf.mxu0
      %v9360 = vadd.f32 0.0, %v9359
      %v9361 = vpop.f32.mrf.mxu0
      %v9362 = vadd.f32 0.0, %v9361
      %9363 = vmatmul.bf16.gmra.mxu0 %v9222
      %v9364 = vpop.f32.mrf.mxu0
      %v9365 = vadd.f32 0.0, %v9364
      %v9366 = vpop.f32.mrf.mxu0
      %v9367 = vadd.f32 0.0, %v9366
      %9368 = vmatmul.bf16.gmra.mxu0 %v9223
      %v9369 = vpop.f32.mrf.mxu0
      %v9370 = vadd.f32 0.0, %v9369
      %v9371 = vpop.f32.mrf.mxu0
      %v9372 = vadd.f32 0.0, %v9371
      %9373 = vmatmul.bf16.gmra.mxu0 %v9224
      %v9374 = vpop.f32.mrf.mxu0
      %v9375 = vadd.f32 0.0, %v9374
      %v9376 = vpop.f32.mrf.mxu0
      %v9377 = vadd.f32 0.0, %v9376
      %9378 = vmatmul.bf16.gmra.mxu0 %v9225
      %v9379 = vpop.f32.mrf.mxu0
      %v9380 = vadd.f32 0.0, %v9379
      %v9381 = vpop.f32.mrf.mxu0
      %v9382 = vadd.f32 0.0, %v9381
      %9383 = vmatmul.bf16.gmra.mxu0 %v9226
      %v9384 = vpop.f32.mrf.mxu0
      %v9385 = vadd.f32 0.0, %v9384
      %v9386 = vpop.f32.mrf.mxu0
      %v9387 = vadd.f32 0.0, %v9386
      %9388 = vmatmul.bf16.gmra.mxu0 %v9227
      %v9389 = vpop.f32.mrf.mxu0
      %v9390 = vadd.f32 0.0, %v9389
      %v9391 = vpop.f32.mrf.mxu0
      %v9392 = vadd.f32 0.0, %v9391
      %9393 = vmatmul.bf16.gmra.mxu0 %v9228
      %v9394 = vpop.f32.mrf.mxu0
      %v9395 = vadd.f32 0.0, %v9394
      %v9396 = vpop.f32.mrf.mxu0
      %v9397 = vadd.f32 0.0, %v9396
      %9398 = vmatmul.bf16.gmra.mxu0 %v9229
      %v9399 = vpop.f32.mrf.mxu0
      %v9400 = vadd.f32 0.0, %v9399
      %v9401 = vpop.f32.mrf.mxu0
      %v9402 = vadd.f32 0.0, %v9401
      %9403 = vmatmul.bf16.gmra.mxu0 %v9230
      %v9404 = vpop.f32.mrf.mxu0
      %v9405 = vadd.f32 0.0, %v9404
      %v9406 = vpop.f32.mrf.mxu0
      %v9407 = vadd.f32 0.0, %v9406
      %9408 = vmatmul.bf16.gmra.mxu0 %v9231
      %v9409 = vpop.f32.mrf.mxu0
      %v9410 = vadd.f32 0.0, %v9409
      %v9411 = vpop.f32.mrf.mxu0
      %v9412 = vadd.f32 0.0, %v9411
      %9413 = vmatmul.bf16.gmra.mxu0 %v9232
      %v9414 = vpop.f32.mrf.mxu0
      %v9415 = vadd.f32 0.0, %v9414
      %v9416 = vpop.f32.mrf.mxu0
      %v9417 = vadd.f32 0.0, %v9416
      %9418 = vmatmul.bf16.gmra.mxu0 %v9233
      %v9419 = vpop.f32.mrf.mxu0
      %v9420 = vadd.f32 0.0, %v9419
      %v9421 = vpop.f32.mrf.mxu0
      %v9422 = vadd.f32 0.0, %v9421
      %9423 = vmatmul.bf16.gmra.mxu0 %v9234
      %v9424 = vpop.f32.mrf.mxu0
      %v9425 = vadd.f32 0.0, %v9424
      %v9426 = vpop.f32.mrf.mxu0
      %v9427 = vadd.f32 0.0, %v9426
      %9428 = vdwg.mxu0
      %v9429 = vadd.f32 %v9163, %v9310
      %v9430 = vadd.f32 %v9164, %v9312
      %v9431 = vadd.f32 %v9165, %v9315
      %v9432 = vadd.f32 %v9166, %v9317
      %v9433 = vadd.f32 %v9167, %v9320
      %v9434 = vadd.f32 %v9168, %v9322
      %v9435 = vadd.f32 %v9169, %v9325
      %v9436 = vadd.f32 %v9170, %v9327
      %v9437 = vadd.f32 %v9171, %v9330
      %v9438 = vadd.f32 %v9172, %v9332
      %v9439 = vadd.f32 %v9173, %v9335
      %v9440 = vadd.f32 %v9174, %v9337
      %v9441 = vadd.f32 %v9175, %v9340
      %v9442 = vadd.f32 %v9176, %v9342
      %v9443 = vadd.f32 %v9177, %v9345
      %v9444 = vadd.f32 %v9178, %v9347
      %v9445 = vadd.f32 %v9179, %v9350
      %v9446 = vadd.f32 %v9180, %v9352
      %v9447 = vadd.f32 %v9181, %v9355
      %v9448 = vadd.f32 %v9182, %v9357
      %v9449 = vadd.f32 %v9183, %v9360
      %v9450 = vadd.f32 %v9184, %v9362
      %v9451 = vadd.f32 %v9185, %v9365
      %v9452 = vadd.f32 %v9186, %v9367
      %v9453 = vadd.f32 %v9187, %v9370
      %v9454 = vadd.f32 %v9188, %v9372
      %v9455 = vadd.f32 %v9189, %v9375
      %v9456 = vadd.f32 %v9190, %v9377
      %v9457 = vadd.f32 %v9191, %v9380
      %v9458 = vadd.f32 %v9192, %v9382
      %v9459 = vadd.f32 %v9193, %v9385
      %v9460 = vadd.f32 %v9194, %v9387
      %v9461 = vadd.f32 %v9195, %v9390
      %v9462 = vadd.f32 %v9196, %v9392
      %v9463 = vadd.f32 %v9197, %v9395
      %v9464 = vadd.f32 %v9198, %v9397
      %v9465 = vadd.f32 %v9199, %v9400
      %v9466 = vadd.f32 %v9200, %v9402
      %v9467 = vadd.f32 %v9201, %v9405
      %v9468 = vadd.f32 %v9202, %v9407
      %v9469 = vadd.f32 %v9203, %v9410
      %v9470 = vadd.f32 %v9204, %v9412
      %v9471 = vadd.f32 %v9205, %v9415
      %v9472 = vadd.f32 %v9206, %v9417
      %v9473 = vadd.f32 %v9207, %v9420
      %v9474 = vadd.f32 %v9208, %v9422
      %v9475 = vadd.f32 %v9209, %v9425
      %v9476 = vadd.f32 %v9210, %v9427
      %v9477 = vpack.c.bf16 %v8686, %v8686
      %s9478 = scalar_lea.vmem %s17, 128
      %v9479 = vld [vmem:[%s9478] sm:$0xf]
      %v9480 = vld [vmem:[%s9478 + $0x4] sm:$0xf]
      %v9481 = vld [vmem:[%s9478 + $0x8] sm:$0xf]
      %v9482 = vld [vmem:[%s9478 + $0xc] sm:$0xf]
      %v9483 = vld [vmem:[%s9478 + $0x10] sm:$0xf]
      %v9484 = vld [vmem:[%s9478 + $0x14] sm:$0xf]
      %v9485 = vld [vmem:[%s9478 + $0x18] sm:$0xf]
      %v9486 = vld [vmem:[%s9478 + $0x1c] sm:$0xf]
      %v9487 = vld [vmem:[%s9478 + $0x20] sm:$0xf]
      %v9488 = vld [vmem:[%s9478 + $0x24] sm:$0xf]
      %v9489 = vld [vmem:[%s9478 + $0x28] sm:$0xf]
      %v9490 = vld [vmem:[%s9478 + $0x2c] sm:$0xf]
      %v9491 = vld [vmem:[%s9478 + $0x30] sm:$0xf]
      %v9492 = vld [vmem:[%s9478 + $0x34] sm:$0xf]
      %v9493 = vld [vmem:[%s9478 + $0x38] sm:$0xf]
      %v9494 = vld [vmem:[%s9478 + $0x3c] sm:$0xf]
      %v9496 = vshrl.u32 %v9211, 16
      %v9498 = vshll.u32 %v9211, 16
      %v9500 = vrot.slane %v9498, 1
      %v9501 = vor.u32 %v9496, %v9500
      %v9503 = vshll.u32 %v9212, 16
      %v9505 = vrot.slane %v9503, 1
      %v9506 = vsel %vm4272, %v9501, %v9505
      %v9507 = vshrl.u32 %v9212, 16
      %v9509 = vor.u32 %v9507, %v9505
      %v9511 = vshll.u32 %v9213, 16
      %v9513 = vrot.slane %v9511, 1
      %v9514 = vsel %vm4272, %v9509, %v9513
      %v9515 = vshrl.u32 %v9213, 16
      %v9517 = vor.u32 %v9515, %v9513
      %v9519 = vshll.u32 %v9214, 16
      %v9521 = vrot.slane %v9519, 1
      %v9522 = vsel %vm4272, %v9517, %v9521
      %v9523 = vshrl.u32 %v9214, 16
      %v9525 = vor.u32 %v9523, %v9521
      %v9527 = vshll.u32 %v9215, 16
      %v9529 = vrot.slane %v9527, 1
      %v9530 = vsel %vm4272, %v9525, %v9529
      %v9531 = vshrl.u32 %v9215, 16
      %v9533 = vor.u32 %v9531, %v9529
      %v9535 = vshll.u32 %v9216, 16
      %v9537 = vrot.slane %v9535, 1
      %v9538 = vsel %vm4272, %v9533, %v9537
      %v9539 = vshrl.u32 %v9216, 16
      %v9541 = vor.u32 %v9539, %v9537
      %v9543 = vshll.u32 %v9217, 16
      %v9545 = vrot.slane %v9543, 1
      %v9546 = vsel %vm4272, %v9541, %v9545
      %v9547 = vshrl.u32 %v9217, 16
      %v9549 = vor.u32 %v9547, %v9545
      %v9551 = vshll.u32 %v9218, 16
      %v9553 = vrot.slane %v9551, 1
      %v9554 = vsel %vm4272, %v9549, %v9553
      %v9555 = vshrl.u32 %v9218, 16
      %v9557 = vor.u32 %v9555, %v9553
      %v9559 = vshll.u32 %v9219, 16
      %v9561 = vrot.slane %v9559, 1
      %v9562 = vsel %vm4272, %v9557, %v9561
      %v9563 = vshrl.u32 %v9219, 16
      %v9565 = vor.u32 %v9563, %v9561
      %v9567 = vshll.u32 %v9220, 16
      %v9569 = vrot.slane %v9567, 1
      %v9570 = vsel %vm4272, %v9565, %v9569
      %v9571 = vshrl.u32 %v9220, 16
      %v9573 = vor.u32 %v9571, %v9569
      %v9575 = vshll.u32 %v9221, 16
      %v9577 = vrot.slane %v9575, 1
      %v9578 = vsel %vm4272, %v9573, %v9577
      %v9579 = vshrl.u32 %v9221, 16
      %v9581 = vor.u32 %v9579, %v9577
      %v9583 = vshll.u32 %v9222, 16
      %v9585 = vrot.slane %v9583, 1
      %v9586 = vsel %vm4272, %v9581, %v9585
      %v9587 = vshrl.u32 %v9222, 16
      %v9589 = vor.u32 %v9587, %v9585
      %v9591 = vshll.u32 %v9223, 16
      %v9593 = vrot.slane %v9591, 1
      %v9594 = vsel %vm4272, %v9589, %v9593
      %v9595 = vshrl.u32 %v9223, 16
      %v9597 = vor.u32 %v9595, %v9593
      %v9599 = vshll.u32 %v9224, 16
      %v9601 = vrot.slane %v9599, 1
      %v9602 = vsel %vm4272, %v9597, %v9601
      %v9603 = vshrl.u32 %v9224, 16
      %v9605 = vor.u32 %v9603, %v9601
      %v9607 = vshll.u32 %v9225, 16
      %v9609 = vrot.slane %v9607, 1
      %v9610 = vsel %vm4272, %v9605, %v9609
      %v9611 = vshrl.u32 %v9225, 16
      %v9613 = vor.u32 %v9611, %v9609
      %v9615 = vshll.u32 %v9226, 16
      %v9617 = vrot.slane %v9615, 1
      %v9618 = vsel %vm4272, %v9613, %v9617
      %v9619 = vshrl.u32 %v9226, 16
      %v9621 = vor.u32 %v9619, %v9617
      %v9623 = vshll.u32 %v9227, 16
      %v9625 = vrot.slane %v9623, 1
      %v9626 = vsel %vm4272, %v9621, %v9625
      %v9627 = vshrl.u32 %v9227, 16
      %v9629 = vor.u32 %v9627, %v9625
      %v9631 = vshll.u32 %v9228, 16
      %v9633 = vrot.slane %v9631, 1
      %v9634 = vsel %vm4272, %v9629, %v9633
      %v9635 = vshrl.u32 %v9228, 16
      %v9637 = vor.u32 %v9635, %v9633
      %v9639 = vshll.u32 %v9229, 16
      %v9641 = vrot.slane %v9639, 1
      %v9642 = vsel %vm4272, %v9637, %v9641
      %v9643 = vshrl.u32 %v9229, 16
      %v9645 = vor.u32 %v9643, %v9641
      %v9647 = vshll.u32 %v9230, 16
      %v9649 = vrot.slane %v9647, 1
      %v9650 = vsel %vm4272, %v9645, %v9649
      %v9651 = vshrl.u32 %v9230, 16
      %v9653 = vor.u32 %v9651, %v9649
      %v9655 = vshll.u32 %v9231, 16
      %v9657 = vrot.slane %v9655, 1
      %v9658 = vsel %vm4272, %v9653, %v9657
      %v9659 = vshrl.u32 %v9231, 16
      %v9661 = vor.u32 %v9659, %v9657
      %v9663 = vshll.u32 %v9232, 16
      %v9665 = vrot.slane %v9663, 1
      %v9666 = vsel %vm4272, %v9661, %v9665
      %v9667 = vshrl.u32 %v9232, 16
      %v9669 = vor.u32 %v9667, %v9665
      %v9671 = vshll.u32 %v9233, 16
      %v9673 = vrot.slane %v9671, 1
      %v9674 = vsel %vm4272, %v9669, %v9673
      %v9675 = vshrl.u32 %v9233, 16
      %v9677 = vor.u32 %v9675, %v9673
      %v9679 = vshll.u32 %v9234, 16
      %v9681 = vrot.slane %v9679, 1
      %v9682 = vsel %vm4272, %v9677, %v9681
      %v9683 = vshrl.u32 %v9234, 16
      %v9685 = vor.u32 %v9683, %v9681
      %v9687 = vshll.u32 %v9477, 16
      %v9689 = vrot.slane %v9687, 1
      %v9690 = vsel %vm4272, %v9685, %v9689
      %v9731 = vunpack.c.l.b16 %v9479
      %v9732 = vunpack.c.l.b16 %v9480
      %v9733 = vunpack.c.l.b16 %v9481
      %v9734 = vunpack.c.l.b16 %v9482
      %v9735 = vunpack.c.l.b16 %v9483
      %v9736 = vunpack.c.l.b16 %v9484
      %v9737 = vunpack.c.l.b16 %v9485
      %v9738 = vunpack.c.l.b16 %v9486
      %v9739 = vunpack.c.l.b16 %v9487
      %v9740 = vunpack.c.l.b16 %v9488
      %v9741 = vunpack.c.l.b16 %v9489
      %v9742 = vunpack.c.l.b16 %v9490
      %v9743 = vunpack.c.l.b16 %v9491
      %v9744 = vunpack.c.l.b16 %v9492
      %v9745 = vunpack.c.l.b16 %v9493
      %v9746 = vunpack.c.l.b16 %v9494
      %v9747 = vpack.c.b16 %v9732, %v9731
      %v9748 = vpack.c.b16 %v9734, %v9733
      %v9749 = vpack.c.b16 %v9736, %v9735
      %v9750 = vpack.c.b16 %v9738, %v9737
      %v9751 = vpack.c.b16 %v9740, %v9739
      %v9752 = vpack.c.b16 %v9742, %v9741
      %v9753 = vpack.c.b16 %v9744, %v9743
      %v9754 = vpack.c.b16 %v9746, %v9745
      %9763 = vmatpush.bf16.msra.mxu0 %v9754
      %9764 = vmatpush.bf16.msra.mxu0 %v9753
      %9765 = vmatpush.bf16.msra.mxu0 %v9752
      %9766 = vmatpush.bf16.msra.mxu0 %v9751
      %9767 = vmatpush.bf16.msra.mxu0 %v9750
      %9768 = vmatpush.bf16.msra.mxu0 %v9749
      %9769 = vmatpush.bf16.msra.mxu0 %v9748
      %9770 = vmatpush.bf16.msra.mxu0 %v9747
      %9771 = vmatmul.bf16.gmra.mxu0 %v9506
      %v9772 = vpop.f32.mrf.mxu0
      %v9773 = vadd.f32 0.0, %v9772
      %v9774 = vpop.f32.mrf.mxu0
      %v9775 = vadd.f32 0.0, %v9774
      %9776 = vmatmul.bf16.gmra.mxu0 %v9514
      %v9777 = vpop.f32.mrf.mxu0
      %v9778 = vadd.f32 0.0, %v9777
      %v9779 = vpop.f32.mrf.mxu0
      %v9780 = vadd.f32 0.0, %v9779
      %9781 = vmatmul.bf16.gmra.mxu0 %v9522
      %v9782 = vpop.f32.mrf.mxu0
      %v9783 = vadd.f32 0.0, %v9782
      %v9784 = vpop.f32.mrf.mxu0
      %v9785 = vadd.f32 0.0, %v9784
      %9786 = vmatmul.bf16.gmra.mxu0 %v9530
      %v9787 = vpop.f32.mrf.mxu0
      %v9788 = vadd.f32 0.0, %v9787
      %v9789 = vpop.f32.mrf.mxu0
      %v9790 = vadd.f32 0.0, %v9789
      %9791 = vmatmul.bf16.gmra.mxu0 %v9538
      %v9792 = vpop.f32.mrf.mxu0
      %v9793 = vadd.f32 0.0, %v9792
      %v9794 = vpop.f32.mrf.mxu0
      %v9795 = vadd.f32 0.0, %v9794
      %9796 = vmatmul.bf16.gmra.mxu0 %v9546
      %v9797 = vpop.f32.mrf.mxu0
      %v9798 = vadd.f32 0.0, %v9797
      %v9799 = vpop.f32.mrf.mxu0
      %v9800 = vadd.f32 0.0, %v9799
      %9801 = vmatmul.bf16.gmra.mxu0 %v9554
      %v9802 = vpop.f32.mrf.mxu0
      %v9803 = vadd.f32 0.0, %v9802
      %v9804 = vpop.f32.mrf.mxu0
      %v9805 = vadd.f32 0.0, %v9804
      %9806 = vmatmul.bf16.gmra.mxu0 %v9562
      %v9807 = vpop.f32.mrf.mxu0
      %v9808 = vadd.f32 0.0, %v9807
      %v9809 = vpop.f32.mrf.mxu0
      %v9810 = vadd.f32 0.0, %v9809
      %9811 = vmatmul.bf16.gmra.mxu0 %v9570
      %v9812 = vpop.f32.mrf.mxu0
      %v9813 = vadd.f32 0.0, %v9812
      %v9814 = vpop.f32.mrf.mxu0
      %v9815 = vadd.f32 0.0, %v9814
      %9816 = vmatmul.bf16.gmra.mxu0 %v9578
      %v9817 = vpop.f32.mrf.mxu0
      %v9818 = vadd.f32 0.0, %v9817
      %v9819 = vpop.f32.mrf.mxu0
      %v9820 = vadd.f32 0.0, %v9819
      %9821 = vmatmul.bf16.gmra.mxu0 %v9586
      %v9822 = vpop.f32.mrf.mxu0
      %v9823 = vadd.f32 0.0, %v9822
      %v9824 = vpop.f32.mrf.mxu0
      %v9825 = vadd.f32 0.0, %v9824
      %9826 = vmatmul.bf16.gmra.mxu0 %v9594
      %v9827 = vpop.f32.mrf.mxu0
      %v9828 = vadd.f32 0.0, %v9827
      %v9829 = vpop.f32.mrf.mxu0
      %v9830 = vadd.f32 0.0, %v9829
      %9831 = vmatmul.bf16.gmra.mxu0 %v9602
      %v9832 = vpop.f32.mrf.mxu0
      %v9833 = vadd.f32 0.0, %v9832
      %v9834 = vpop.f32.mrf.mxu0
      %v9835 = vadd.f32 0.0, %v9834
      %9836 = vmatmul.bf16.gmra.mxu0 %v9610
      %v9837 = vpop.f32.mrf.mxu0
      %v9838 = vadd.f32 0.0, %v9837
      %v9839 = vpop.f32.mrf.mxu0
      %v9840 = vadd.f32 0.0, %v9839
      %9841 = vmatmul.bf16.gmra.mxu0 %v9618
      %v9842 = vpop.f32.mrf.mxu0
      %v9843 = vadd.f32 0.0, %v9842
      %v9844 = vpop.f32.mrf.mxu0
      %v9845 = vadd.f32 0.0, %v9844
      %9846 = vmatmul.bf16.gmra.mxu0 %v9626
      %v9847 = vpop.f32.mrf.mxu0
      %v9848 = vadd.f32 0.0, %v9847
      %v9849 = vpop.f32.mrf.mxu0
      %v9850 = vadd.f32 0.0, %v9849
      %9851 = vmatmul.bf16.gmra.mxu0 %v9634
      %v9852 = vpop.f32.mrf.mxu0
      %v9853 = vadd.f32 0.0, %v9852
      %v9854 = vpop.f32.mrf.mxu0
      %v9855 = vadd.f32 0.0, %v9854
      %9856 = vmatmul.bf16.gmra.mxu0 %v9642
      %v9857 = vpop.f32.mrf.mxu0
      %v9858 = vadd.f32 0.0, %v9857
      %v9859 = vpop.f32.mrf.mxu0
      %v9860 = vadd.f32 0.0, %v9859
      %9861 = vmatmul.bf16.gmra.mxu0 %v9650
      %v9862 = vpop.f32.mrf.mxu0
      %v9863 = vadd.f32 0.0, %v9862
      %v9864 = vpop.f32.mrf.mxu0
      %v9865 = vadd.f32 0.0, %v9864
      %9866 = vmatmul.bf16.gmra.mxu0 %v9658
      %v9867 = vpop.f32.mrf.mxu0
      %v9868 = vadd.f32 0.0, %v9867
      %v9869 = vpop.f32.mrf.mxu0
      %v9870 = vadd.f32 0.0, %v9869
      %9871 = vmatmul.bf16.gmra.mxu0 %v9666
      %v9872 = vpop.f32.mrf.mxu0
      %v9873 = vadd.f32 0.0, %v9872
      %v9874 = vpop.f32.mrf.mxu0
      %v9875 = vadd.f32 0.0, %v9874
      %9876 = vmatmul.bf16.gmra.mxu0 %v9674
      %v9877 = vpop.f32.mrf.mxu0
      %v9878 = vadd.f32 0.0, %v9877
      %v9879 = vpop.f32.mrf.mxu0
      %v9880 = vadd.f32 0.0, %v9879
      %9881 = vmatmul.bf16.gmra.mxu0 %v9682
      %v9882 = vpop.f32.mrf.mxu0
      %v9883 = vadd.f32 0.0, %v9882
      %v9884 = vpop.f32.mrf.mxu0
      %v9885 = vadd.f32 0.0, %v9884
      %9886 = vmatmul.bf16.gmra.mxu0 %v9690
      %v9887 = vpop.f32.mrf.mxu0
      %v9888 = vadd.f32 0.0, %v9887
      %v9889 = vpop.f32.mrf.mxu0
      %v9890 = vadd.f32 0.0, %v9889
      %9891 = vdwg.mxu0
      %v9892 = vadd.f32 %v9429, %v9773
      %v9893 = vadd.f32 %v9430, %v9775
      %v9894 = vadd.f32 %v9431, %v9778
      %v9895 = vadd.f32 %v9432, %v9780
      %v9896 = vadd.f32 %v9433, %v9783
      %v9897 = vadd.f32 %v9434, %v9785
      %v9898 = vadd.f32 %v9435, %v9788
      %v9899 = vadd.f32 %v9436, %v9790
      %v9900 = vadd.f32 %v9437, %v9793
      %v9901 = vadd.f32 %v9438, %v9795
      %v9902 = vadd.f32 %v9439, %v9798
      %v9903 = vadd.f32 %v9440, %v9800
      %v9904 = vadd.f32 %v9441, %v9803
      %v9905 = vadd.f32 %v9442, %v9805
      %v9906 = vadd.f32 %v9443, %v9808
      %v9907 = vadd.f32 %v9444, %v9810
      %v9908 = vadd.f32 %v9445, %v9813
      %v9909 = vadd.f32 %v9446, %v9815
      %v9910 = vadd.f32 %v9447, %v9818
      %v9911 = vadd.f32 %v9448, %v9820
      %v9912 = vadd.f32 %v9449, %v9823
      %v9913 = vadd.f32 %v9450, %v9825
      %v9914 = vadd.f32 %v9451, %v9828
      %v9915 = vadd.f32 %v9452, %v9830
      %v9916 = vadd.f32 %v9453, %v9833
      %v9917 = vadd.f32 %v9454, %v9835
      %v9918 = vadd.f32 %v9455, %v9838
      %v9919 = vadd.f32 %v9456, %v9840
      %v9920 = vadd.f32 %v9457, %v9843
      %v9921 = vadd.f32 %v9458, %v9845
      %v9922 = vadd.f32 %v9459, %v9848
      %v9923 = vadd.f32 %v9460, %v9850
      %v9924 = vadd.f32 %v9461, %v9853
      %v9925 = vadd.f32 %v9462, %v9855
      %v9926 = vadd.f32 %v9463, %v9858
      %v9927 = vadd.f32 %v9464, %v9860
      %v9928 = vadd.f32 %v9465, %v9863
      %v9929 = vadd.f32 %v9466, %v9865
      %v9930 = vadd.f32 %v9467, %v9868
      %v9931 = vadd.f32 %v9468, %v9870
      %v9932 = vadd.f32 %v9469, %v9873
      %v9933 = vadd.f32 %v9470, %v9875
      %v9934 = vadd.f32 %v9471, %v9878
      %v9935 = vadd.f32 %v9472, %v9880
      %v9936 = vadd.f32 %v9473, %v9883
      %v9937 = vadd.f32 %v9474, %v9885
      %v9938 = vadd.f32 %v9475, %v9888
      %v9939 = vadd.f32 %v9476, %v9890
      %v9940 = vpack.c.bf16 %v8687, %v8686
      %v9941 = vpack.c.bf16 %v8688, %v8688
      %s9942 = scalar_lea.vmem %s17, 192
      %v9943 = vld [vmem:[%s9942] sm:$0xf]
      %v9944 = vld [vmem:[%s9942 + $0x4] sm:$0xf]
      %v9945 = vld [vmem:[%s9942 + $0x8] sm:$0xf]
      %v9946 = vld [vmem:[%s9942 + $0xc] sm:$0xf]
      %v9947 = vld [vmem:[%s9942 + $0x10] sm:$0xf]
      %v9948 = vld [vmem:[%s9942 + $0x14] sm:$0xf]
      %v9949 = vld [vmem:[%s9942 + $0x18] sm:$0xf]
      %v9950 = vld [vmem:[%s9942 + $0x1c] sm:$0xf]
      %v9951 = vld [vmem:[%s9942 + $0x20] sm:$0xf]
      %v9952 = vld [vmem:[%s9942 + $0x24] sm:$0xf]
      %v9953 = vld [vmem:[%s9942 + $0x28] sm:$0xf]
      %v9954 = vld [vmem:[%s9942 + $0x2c] sm:$0xf]
      %v9955 = vld [vmem:[%s9942 + $0x30] sm:$0xf]
      %v9956 = vld [vmem:[%s9942 + $0x34] sm:$0xf]
      %v9957 = vld [vmem:[%s9942 + $0x38] sm:$0xf]
      %v9958 = vld [vmem:[%s9942 + $0x3c] sm:$0xf]
      %v9959 = vrot.slane %v9507, 3
      %v9960 = vrot.slane %v9503, 4
      %v9961 = vor.u32 %v9959, %v9960
      %v9962 = vrot.slane %v9515, 3
      %v9963 = vrot.slane %v9511, 4
      %v9964 = vor.u32 %v9962, %v9963
      %v9965 = vsel %vm3380, %v9961, %v9964
      %v9966 = vrot.slane %v9523, 3
      %v9967 = vrot.slane %v9519, 4
      %v9968 = vor.u32 %v9966, %v9967
      %v9969 = vsel %vm3380, %v9964, %v9968
      %v9970 = vrot.slane %v9531, 3
      %v9971 = vrot.slane %v9527, 4
      %v9972 = vor.u32 %v9970, %v9971
      %v9973 = vsel %vm3380, %v9968, %v9972
      %v9974 = vrot.slane %v9539, 3
      %v9975 = vrot.slane %v9535, 4
      %v9976 = vor.u32 %v9974, %v9975
      %v9977 = vsel %vm3380, %v9972, %v9976
      %v9978 = vrot.slane %v9547, 3
      %v9979 = vrot.slane %v9543, 4
      %v9980 = vor.u32 %v9978, %v9979
      %v9981 = vsel %vm3380, %v9976, %v9980
      %v9982 = vrot.slane %v9555, 3
      %v9983 = vrot.slane %v9551, 4
      %v9984 = vor.u32 %v9982, %v9983
      %v9985 = vsel %vm3380, %v9980, %v9984
      %v9986 = vrot.slane %v9563, 3
      %v9987 = vrot.slane %v9559, 4
      %v9988 = vor.u32 %v9986, %v9987
      %v9989 = vsel %vm3380, %v9984, %v9988
      %v9990 = vrot.slane %v9571, 3
      %v9991 = vrot.slane %v9567, 4
      %v9992 = vor.u32 %v9990, %v9991
      %v9993 = vsel %vm3380, %v9988, %v9992
      %v9994 = vrot.slane %v9579, 3
      %v9995 = vrot.slane %v9575, 4
      %v9996 = vor.u32 %v9994, %v9995
      %v9997 = vsel %vm3380, %v9992, %v9996
      %v9998 = vrot.slane %v9587, 3
      %v9999 = vrot.slane %v9583, 4
      %v10000 = vor.u32 %v9998, %v9999
      %v10001 = vsel %vm3380, %v9996, %v10000
      %v10002 = vrot.slane %v9595, 3
      %v10003 = vrot.slane %v9591, 4
      %v10004 = vor.u32 %v10002, %v10003
      %v10005 = vsel %vm3380, %v10000, %v10004
      %v10006 = vrot.slane %v9603, 3
      %v10007 = vrot.slane %v9599, 4
      %v10008 = vor.u32 %v10006, %v10007
      %v10009 = vsel %vm3380, %v10004, %v10008
      %v10010 = vrot.slane %v9611, 3
      %v10011 = vrot.slane %v9607, 4
      %v10012 = vor.u32 %v10010, %v10011
      %v10013 = vsel %vm3380, %v10008, %v10012
      %v10014 = vrot.slane %v9619, 3
      %v10015 = vrot.slane %v9615, 4
      %v10016 = vor.u32 %v10014, %v10015
      %v10017 = vsel %vm3380, %v10012, %v10016
      %v10018 = vrot.slane %v9627, 3
      %v10019 = vrot.slane %v9623, 4
      %v10020 = vor.u32 %v10018, %v10019
      %v10021 = vsel %vm3380, %v10016, %v10020
      %v10022 = vrot.slane %v9635, 3
      %v10023 = vrot.slane %v9631, 4
      %v10024 = vor.u32 %v10022, %v10023
      %v10025 = vsel %vm3380, %v10020, %v10024
      %v10026 = vrot.slane %v9643, 3
      %v10027 = vrot.slane %v9639, 4
      %v10028 = vor.u32 %v10026, %v10027
      %v10029 = vsel %vm3380, %v10024, %v10028
      %v10030 = vrot.slane %v9651, 3
      %v10031 = vrot.slane %v9647, 4
      %v10032 = vor.u32 %v10030, %v10031
      %v10033 = vsel %vm3380, %v10028, %v10032
      %v10034 = vrot.slane %v9659, 3
      %v10035 = vrot.slane %v9655, 4
      %v10036 = vor.u32 %v10034, %v10035
      %v10037 = vsel %vm3380, %v10032, %v10036
      %v10038 = vrot.slane %v9667, 3
      %v10039 = vrot.slane %v9663, 4
      %v10040 = vor.u32 %v10038, %v10039
      %v10041 = vsel %vm3380, %v10036, %v10040
      %v10042 = vrot.slane %v9675, 3
      %v10043 = vrot.slane %v9671, 4
      %v10044 = vor.u32 %v10042, %v10043
      %v10045 = vsel %vm3380, %v10040, %v10044
      %v10046 = vrot.slane %v9683, 3
      %v10047 = vrot.slane %v9679, 4
      %v10048 = vor.u32 %v10046, %v10047
      %v10049 = vsel %vm3380, %v10044, %v10048
      %v10051 = vshrl.u32 %v9940, 16
      %v10053 = vrot.slane %v10051, 3
      %v10054 = vshll.u32 %v9940, 16
      %v10056 = vrot.slane %v10054, 4
      %v10057 = vor.u32 %v10053, %v10056
      %v10058 = vsel %vm3380, %v10048, %v10057
      %v10060 = vshrl.u32 %v9941, 16
      %v10062 = vrot.slane %v10060, 3
      %v10063 = vshll.u32 %v9941, 16
      %v10065 = vrot.slane %v10063, 4
      %v10066 = vor.u32 %v10062, %v10065
      %v10067 = vsel %vm3380, %v10057, %v10066
      %v10108 = vunpack.c.l.b16 %v9943
      %v10109 = vunpack.c.l.b16 %v9944
      %v10110 = vunpack.c.l.b16 %v9945
      %v10111 = vunpack.c.l.b16 %v9946
      %v10112 = vunpack.c.l.b16 %v9947
      %v10113 = vunpack.c.l.b16 %v9948
      %v10114 = vunpack.c.l.b16 %v9949
      %v10115 = vunpack.c.l.b16 %v9950
      %v10116 = vunpack.c.l.b16 %v9951
      %v10117 = vunpack.c.l.b16 %v9952
      %v10118 = vunpack.c.l.b16 %v9953
      %v10119 = vunpack.c.l.b16 %v9954
      %v10120 = vunpack.c.l.b16 %v9955
      %v10121 = vunpack.c.l.b16 %v9956
      %v10122 = vunpack.c.l.b16 %v9957
      %v10123 = vunpack.c.l.b16 %v9958
      %v10124 = vpack.c.b16 %v10109, %v10108
      %v10125 = vpack.c.b16 %v10111, %v10110
      %v10126 = vpack.c.b16 %v10113, %v10112
      %v10127 = vpack.c.b16 %v10115, %v10114
      %v10128 = vpack.c.b16 %v10117, %v10116
      %v10129 = vpack.c.b16 %v10119, %v10118
      %v10130 = vpack.c.b16 %v10121, %v10120
      %v10131 = vpack.c.b16 %v10123, %v10122
      %10140 = vmatpush.bf16.msra.mxu0 %v10131
      %10141 = vmatpush.bf16.msra.mxu0 %v10130
      %10142 = vmatpush.bf16.msra.mxu0 %v10129
      %10143 = vmatpush.bf16.msra.mxu0 %v10128
      %10144 = vmatpush.bf16.msra.mxu0 %v10127
      %10145 = vmatpush.bf16.msra.mxu0 %v10126
      %10146 = vmatpush.bf16.msra.mxu0 %v10125
      %10147 = vmatpush.bf16.msra.mxu0 %v10124
      %10148 = vmatmul.bf16.gmra.mxu0 %v9965
      %v10149 = vpop.f32.mrf.mxu0
      %v10150 = vadd.f32 0.0, %v10149
      %v10151 = vpop.f32.mrf.mxu0
      %v10152 = vadd.f32 0.0, %v10151
      %10153 = vmatmul.bf16.gmra.mxu0 %v9969
      %v10154 = vpop.f32.mrf.mxu0
      %v10155 = vadd.f32 0.0, %v10154
      %v10156 = vpop.f32.mrf.mxu0
      %v10157 = vadd.f32 0.0, %v10156
      %10158 = vmatmul.bf16.gmra.mxu0 %v9973
      %v10159 = vpop.f32.mrf.mxu0
      %v10160 = vadd.f32 0.0, %v10159
      %v10161 = vpop.f32.mrf.mxu0
      %v10162 = vadd.f32 0.0, %v10161
      %10163 = vmatmul.bf16.gmra.mxu0 %v9977
      %v10164 = vpop.f32.mrf.mxu0
      %v10165 = vadd.f32 0.0, %v10164
      %v10166 = vpop.f32.mrf.mxu0
      %v10167 = vadd.f32 0.0, %v10166
      %10168 = vmatmul.bf16.gmra.mxu0 %v9981
      %v10169 = vpop.f32.mrf.mxu0
      %v10170 = vadd.f32 0.0, %v10169
      %v10171 = vpop.f32.mrf.mxu0
      %v10172 = vadd.f32 0.0, %v10171
      %10173 = vmatmul.bf16.gmra.mxu0 %v9985
      %v10174 = vpop.f32.mrf.mxu0
      %v10175 = vadd.f32 0.0, %v10174
      %v10176 = vpop.f32.mrf.mxu0
      %v10177 = vadd.f32 0.0, %v10176
      %10178 = vmatmul.bf16.gmra.mxu0 %v9989
      %v10179 = vpop.f32.mrf.mxu0
      %v10180 = vadd.f32 0.0, %v10179
      %v10181 = vpop.f32.mrf.mxu0
      %v10182 = vadd.f32 0.0, %v10181
      %10183 = vmatmul.bf16.gmra.mxu0 %v9993
      %v10184 = vpop.f32.mrf.mxu0
      %v10185 = vadd.f32 0.0, %v10184
      %v10186 = vpop.f32.mrf.mxu0
      %v10187 = vadd.f32 0.0, %v10186
      %10188 = vmatmul.bf16.gmra.mxu0 %v9997
      %v10189 = vpop.f32.mrf.mxu0
      %v10190 = vadd.f32 0.0, %v10189
      %v10191 = vpop.f32.mrf.mxu0
      %v10192 = vadd.f32 0.0, %v10191
      %10193 = vmatmul.bf16.gmra.mxu0 %v10001
      %v10194 = vpop.f32.mrf.mxu0
      %v10195 = vadd.f32 0.0, %v10194
      %v10196 = vpop.f32.mrf.mxu0
      %v10197 = vadd.f32 0.0, %v10196
      %10198 = vmatmul.bf16.gmra.mxu0 %v10005
      %v10199 = vpop.f32.mrf.mxu0
      %v10200 = vadd.f32 0.0, %v10199
      %v10201 = vpop.f32.mrf.mxu0
      %v10202 = vadd.f32 0.0, %v10201
      %10203 = vmatmul.bf16.gmra.mxu0 %v10009
      %v10204 = vpop.f32.mrf.mxu0
      %v10205 = vadd.f32 0.0, %v10204
      %v10206 = vpop.f32.mrf.mxu0
      %v10207 = vadd.f32 0.0, %v10206
      %10208 = vmatmul.bf16.gmra.mxu0 %v10013
      %v10209 = vpop.f32.mrf.mxu0
      %v10210 = vadd.f32 0.0, %v10209
      %v10211 = vpop.f32.mrf.mxu0
      %v10212 = vadd.f32 0.0, %v10211
      %10213 = vmatmul.bf16.gmra.mxu0 %v10017
      %v10214 = vpop.f32.mrf.mxu0
      %v10215 = vadd.f32 0.0, %v10214
      %v10216 = vpop.f32.mrf.mxu0
      %v10217 = vadd.f32 0.0, %v10216
      %10218 = vmatmul.bf16.gmra.mxu0 %v10021
      %v10219 = vpop.f32.mrf.mxu0
      %v10220 = vadd.f32 0.0, %v10219
      %v10221 = vpop.f32.mrf.mxu0
      %v10222 = vadd.f32 0.0, %v10221
      %10223 = vmatmul.bf16.gmra.mxu0 %v10025
      %v10224 = vpop.f32.mrf.mxu0
      %v10225 = vadd.f32 0.0, %v10224
      %v10226 = vpop.f32.mrf.mxu0
      %v10227 = vadd.f32 0.0, %v10226
      %10228 = vmatmul.bf16.gmra.mxu0 %v10029
      %v10229 = vpop.f32.mrf.mxu0
      %v10230 = vadd.f32 0.0, %v10229
      %v10231 = vpop.f32.mrf.mxu0
      %v10232 = vadd.f32 0.0, %v10231
      %10233 = vmatmul.bf16.gmra.mxu0 %v10033
      %v10234 = vpop.f32.mrf.mxu0
      %v10235 = vadd.f32 0.0, %v10234
      %v10236 = vpop.f32.mrf.mxu0
      %v10237 = vadd.f32 0.0, %v10236
      %10238 = vmatmul.bf16.gmra.mxu0 %v10037
      %v10239 = vpop.f32.mrf.mxu0
      %v10240 = vadd.f32 0.0, %v10239
      %v10241 = vpop.f32.mrf.mxu0
      %v10242 = vadd.f32 0.0, %v10241
      %10243 = vmatmul.bf16.gmra.mxu0 %v10041
      %v10244 = vpop.f32.mrf.mxu0
      %v10245 = vadd.f32 0.0, %v10244
      %v10246 = vpop.f32.mrf.mxu0
      %v10247 = vadd.f32 0.0, %v10246
      %10248 = vmatmul.bf16.gmra.mxu0 %v10045
      %v10249 = vpop.f32.mrf.mxu0
      %v10250 = vadd.f32 0.0, %v10249
      %v10251 = vpop.f32.mrf.mxu0
      %v10252 = vadd.f32 0.0, %v10251
      %10253 = vmatmul.bf16.gmra.mxu0 %v10049
      %v10254 = vpop.f32.mrf.mxu0
      %v10255 = vadd.f32 0.0, %v10254
      %v10256 = vpop.f32.mrf.mxu0
      %v10257 = vadd.f32 0.0, %v10256
      %10258 = vmatmul.bf16.gmra.mxu0 %v10058
      %v10259 = vpop.f32.mrf.mxu0
      %v10260 = vadd.f32 0.0, %v10259
      %v10261 = vpop.f32.mrf.mxu0
      %v10262 = vadd.f32 0.0, %v10261
      %10263 = vmatmul.bf16.gmra.mxu0 %v10067
      %v10264 = vpop.f32.mrf.mxu0
      %v10265 = vadd.f32 0.0, %v10264
      %v10266 = vpop.f32.mrf.mxu0
      %v10267 = vadd.f32 0.0, %v10266
      %10268 = vdwg.mxu0
      %v10269 = vadd.f32 %v9892, %v10150
      %v10270 = vadd.f32 %v9893, %v10152
      %v10271 = vadd.f32 %v9894, %v10155
      %v10272 = vadd.f32 %v9895, %v10157
      %v10273 = vadd.f32 %v9896, %v10160
      %v10274 = vadd.f32 %v9897, %v10162
      %v10275 = vadd.f32 %v9898, %v10165
      %v10276 = vadd.f32 %v9899, %v10167
      %v10277 = vadd.f32 %v9900, %v10170
      %v10278 = vadd.f32 %v9901, %v10172
      %v10279 = vadd.f32 %v9902, %v10175
      %v10280 = vadd.f32 %v9903, %v10177
      %v10281 = vadd.f32 %v9904, %v10180
      %v10282 = vadd.f32 %v9905, %v10182
      %v10283 = vadd.f32 %v9906, %v10185
      %v10284 = vadd.f32 %v9907, %v10187
      %v10285 = vadd.f32 %v9908, %v10190
      %v10286 = vadd.f32 %v9909, %v10192
      %v10287 = vadd.f32 %v9910, %v10195
      %v10288 = vadd.f32 %v9911, %v10197
      %v10289 = vadd.f32 %v9912, %v10200
      %v10290 = vadd.f32 %v9913, %v10202
      %v10291 = vadd.f32 %v9914, %v10205
      %v10292 = vadd.f32 %v9915, %v10207
      %v10293 = vadd.f32 %v9916, %v10210
      %v10294 = vadd.f32 %v9917, %v10212
      %v10295 = vadd.f32 %v9918, %v10215
      %v10296 = vadd.f32 %v9919, %v10217
      %v10297 = vadd.f32 %v9920, %v10220
      %v10298 = vadd.f32 %v9921, %v10222
      %v10299 = vadd.f32 %v9922, %v10225
      %v10300 = vadd.f32 %v9923, %v10227
      %v10301 = vadd.f32 %v9924, %v10230
      %v10302 = vadd.f32 %v9925, %v10232
      %v10303 = vadd.f32 %v9926, %v10235
      %v10304 = vadd.f32 %v9927, %v10237
      %v10305 = vadd.f32 %v9928, %v10240
      %v10306 = vadd.f32 %v9929, %v10242
      %v10307 = vadd.f32 %v9930, %v10245
      %v10308 = vadd.f32 %v9931, %v10247
      %v10309 = vadd.f32 %v9932, %v10250
      %v10310 = vadd.f32 %v9933, %v10252
      %v10311 = vadd.f32 %v9934, %v10255
      %v10312 = vadd.f32 %v9935, %v10257
      %v10313 = vadd.f32 %v9936, %v10260
      %v10314 = vadd.f32 %v9937, %v10262
      %v10315 = vadd.f32 %v9938, %v10265
      %v10316 = vadd.f32 %v9939, %v10267
      %v10317 = vpack.c.bf16 %v8686, %v8685
      %v10318 = vpack.c.bf16 %v8688, %v8687
      %s10319 = scalar_lea.vmem %s17, 256
      %v10320 = vld [vmem:[%s10319] sm:$0xf]
      %v10321 = vld [vmem:[%s10319 + $0x4] sm:$0xf]
      %v10322 = vld [vmem:[%s10319 + $0x8] sm:$0xf]
      %v10323 = vld [vmem:[%s10319 + $0xc] sm:$0xf]
      %v10324 = vld [vmem:[%s10319 + $0x10] sm:$0xf]
      %v10325 = vld [vmem:[%s10319 + $0x14] sm:$0xf]
      %v10326 = vld [vmem:[%s10319 + $0x18] sm:$0xf]
      %v10327 = vld [vmem:[%s10319 + $0x1c] sm:$0xf]
      %v10328 = vld [vmem:[%s10319 + $0x20] sm:$0xf]
      %v10329 = vld [vmem:[%s10319 + $0x24] sm:$0xf]
      %v10330 = vld [vmem:[%s10319 + $0x28] sm:$0xf]
      %v10331 = vld [vmem:[%s10319 + $0x2c] sm:$0xf]
      %v10332 = vld [vmem:[%s10319 + $0x30] sm:$0xf]
      %v10333 = vld [vmem:[%s10319 + $0x34] sm:$0xf]
      %v10334 = vld [vmem:[%s10319 + $0x38] sm:$0xf]
      %v10335 = vld [vmem:[%s10319 + $0x3c] sm:$0xf]
      %v10352 = vunpack.c.l.b16 %v10320
      %v10353 = vunpack.c.l.b16 %v10321
      %v10354 = vunpack.c.l.b16 %v10322
      %v10355 = vunpack.c.l.b16 %v10323
      %v10356 = vunpack.c.l.b16 %v10324
      %v10357 = vunpack.c.l.b16 %v10325
      %v10358 = vunpack.c.l.b16 %v10326
      %v10359 = vunpack.c.l.b16 %v10327
      %v10360 = vunpack.c.l.b16 %v10328
      %v10361 = vunpack.c.l.b16 %v10329
      %v10362 = vunpack.c.l.b16 %v10330
      %v10363 = vunpack.c.l.b16 %v10331
      %v10364 = vunpack.c.l.b16 %v10332
      %v10365 = vunpack.c.l.b16 %v10333
      %v10366 = vunpack.c.l.b16 %v10334
      %v10367 = vunpack.c.l.b16 %v10335
      %v10368 = vpack.c.b16 %v10353, %v10352
      %v10369 = vpack.c.b16 %v10355, %v10354
      %v10370 = vpack.c.b16 %v10357, %v10356
      %v10371 = vpack.c.b16 %v10359, %v10358
      %v10372 = vpack.c.b16 %v10361, %v10360
      %v10373 = vpack.c.b16 %v10363, %v10362
      %v10374 = vpack.c.b16 %v10365, %v10364
      %v10375 = vpack.c.b16 %v10367, %v10366
      %10384 = vmatpush.bf16.msra.mxu0 %v10375
      %10385 = vmatpush.bf16.msra.mxu0 %v10374
      %10386 = vmatpush.bf16.msra.mxu0 %v10373
      %10387 = vmatpush.bf16.msra.mxu0 %v10372
      %10388 = vmatpush.bf16.msra.mxu0 %v10371
      %10389 = vmatpush.bf16.msra.mxu0 %v10370
      %10390 = vmatpush.bf16.msra.mxu0 %v10369
      %10391 = vmatpush.bf16.msra.mxu0 %v10368
      %10392 = vmatmul.bf16.gmra.mxu0 %v8699
      %v10393 = vpop.f32.mrf.mxu0
      %v10394 = vadd.f32 0.0, %v10393
      %v10395 = vpop.f32.mrf.mxu0
      %v10396 = vadd.f32 0.0, %v10395
      %10397 = vmatmul.bf16.gmra.mxu0 %v8700
      %v10398 = vpop.f32.mrf.mxu0
      %v10399 = vadd.f32 0.0, %v10398
      %v10400 = vpop.f32.mrf.mxu0
      %v10401 = vadd.f32 0.0, %v10400
      %10402 = vmatmul.bf16.gmra.mxu0 %v8701
      %v10403 = vpop.f32.mrf.mxu0
      %v10404 = vadd.f32 0.0, %v10403
      %v10405 = vpop.f32.mrf.mxu0
      %v10406 = vadd.f32 0.0, %v10405
      %10407 = vmatmul.bf16.gmra.mxu0 %v8702
      %v10408 = vpop.f32.mrf.mxu0
      %v10409 = vadd.f32 0.0, %v10408
      %v10410 = vpop.f32.mrf.mxu0
      %v10411 = vadd.f32 0.0, %v10410
      %10412 = vmatmul.bf16.gmra.mxu0 %v8703
      %v10413 = vpop.f32.mrf.mxu0
      %v10414 = vadd.f32 0.0, %v10413
      %v10415 = vpop.f32.mrf.mxu0
      %v10416 = vadd.f32 0.0, %v10415
      %10417 = vmatmul.bf16.gmra.mxu0 %v8704
      %v10418 = vpop.f32.mrf.mxu0
      %v10419 = vadd.f32 0.0, %v10418
      %v10420 = vpop.f32.mrf.mxu0
      %v10421 = vadd.f32 0.0, %v10420
      %10422 = vmatmul.bf16.gmra.mxu0 %v8705
      %v10423 = vpop.f32.mrf.mxu0
      %v10424 = vadd.f32 0.0, %v10423
      %v10425 = vpop.f32.mrf.mxu0
      %v10426 = vadd.f32 0.0, %v10425
      %10427 = vmatmul.bf16.gmra.mxu0 %v8706
      %v10428 = vpop.f32.mrf.mxu0
      %v10429 = vadd.f32 0.0, %v10428
      %v10430 = vpop.f32.mrf.mxu0
      %v10431 = vadd.f32 0.0, %v10430
      %10432 = vmatmul.bf16.gmra.mxu0 %v8707
      %v10433 = vpop.f32.mrf.mxu0
      %v10434 = vadd.f32 0.0, %v10433
      %v10435 = vpop.f32.mrf.mxu0
      %v10436 = vadd.f32 0.0, %v10435
      %10437 = vmatmul.bf16.gmra.mxu0 %v8708
      %v10438 = vpop.f32.mrf.mxu0
      %v10439 = vadd.f32 0.0, %v10438
      %v10440 = vpop.f32.mrf.mxu0
      %v10441 = vadd.f32 0.0, %v10440
      %10442 = vmatmul.bf16.gmra.mxu0 %v8709
      %v10443 = vpop.f32.mrf.mxu0
      %v10444 = vadd.f32 0.0, %v10443
      %v10445 = vpop.f32.mrf.mxu0
      %v10446 = vadd.f32 0.0, %v10445
      %10447 = vmatmul.bf16.gmra.mxu0 %v8710
      %v10448 = vpop.f32.mrf.mxu0
      %v10449 = vadd.f32 0.0, %v10448
      %v10450 = vpop.f32.mrf.mxu0
      %v10451 = vadd.f32 0.0, %v10450
      %10452 = vmatmul.bf16.gmra.mxu0 %v8711
      %v10453 = vpop.f32.mrf.mxu0
      %v10454 = vadd.f32 0.0, %v10453
      %v10455 = vpop.f32.mrf.mxu0
      %v10456 = vadd.f32 0.0, %v10455
      %10457 = vmatmul.bf16.gmra.mxu0 %v8712
      %v10458 = vpop.f32.mrf.mxu0
      %v10459 = vadd.f32 0.0, %v10458
      %v10460 = vpop.f32.mrf.mxu0
      %v10461 = vadd.f32 0.0, %v10460
      %10462 = vmatmul.bf16.gmra.mxu0 %v8713
      %v10463 = vpop.f32.mrf.mxu0
      %v10464 = vadd.f32 0.0, %v10463
      %v10465 = vpop.f32.mrf.mxu0
      %v10466 = vadd.f32 0.0, %v10465
      %10467 = vmatmul.bf16.gmra.mxu0 %v8714
      %v10468 = vpop.f32.mrf.mxu0
      %v10469 = vadd.f32 0.0, %v10468
      %v10470 = vpop.f32.mrf.mxu0
      %v10471 = vadd.f32 0.0, %v10470
      %10472 = vmatmul.bf16.gmra.mxu0 %v8715
      %v10473 = vpop.f32.mrf.mxu0
      %v10474 = vadd.f32 0.0, %v10473
      %v10475 = vpop.f32.mrf.mxu0
      %v10476 = vadd.f32 0.0, %v10475
      %10477 = vmatmul.bf16.gmra.mxu0 %v8716
      %v10478 = vpop.f32.mrf.mxu0
      %v10479 = vadd.f32 0.0, %v10478
      %v10480 = vpop.f32.mrf.mxu0
      %v10481 = vadd.f32 0.0, %v10480
      %10482 = vmatmul.bf16.gmra.mxu0 %v8717
      %v10483 = vpop.f32.mrf.mxu0
      %v10484 = vadd.f32 0.0, %v10483
      %v10485 = vpop.f32.mrf.mxu0
      %v10486 = vadd.f32 0.0, %v10485
      %10487 = vmatmul.bf16.gmra.mxu0 %v8718
      %v10488 = vpop.f32.mrf.mxu0
      %v10489 = vadd.f32 0.0, %v10488
      %v10490 = vpop.f32.mrf.mxu0
      %v10491 = vadd.f32 0.0, %v10490
      %10492 = vmatmul.bf16.gmra.mxu0 %v8719
      %v10493 = vpop.f32.mrf.mxu0
      %v10494 = vadd.f32 0.0, %v10493
      %v10495 = vpop.f32.mrf.mxu0
      %v10496 = vadd.f32 0.0, %v10495
      %10497 = vmatmul.bf16.gmra.mxu0 %v8720
      %v10498 = vpop.f32.mrf.mxu0
      %v10499 = vadd.f32 0.0, %v10498
      %v10500 = vpop.f32.mrf.mxu0
      %v10501 = vadd.f32 0.0, %v10500
      %10502 = vmatmul.bf16.gmra.mxu0 %v10317
      %v10503 = vpop.f32.mrf.mxu0
      %v10504 = vadd.f32 0.0, %v10503
      %v10505 = vpop.f32.mrf.mxu0
      %v10506 = vadd.f32 0.0, %v10505
      %10507 = vmatmul.bf16.gmra.mxu0 %v10318
      %v10508 = vpop.f32.mrf.mxu0
      %v10509 = vadd.f32 0.0, %v10508
      %v10510 = vpop.f32.mrf.mxu0
      %v10511 = vadd.f32 0.0, %v10510
      %10512 = vdwg.mxu0
      %v10513 = vadd.f32 %v10269, %v10394
      %v10514 = vadd.f32 %v10270, %v10396
      %v10515 = vadd.f32 %v10271, %v10399
      %v10516 = vadd.f32 %v10272, %v10401
      %v10517 = vadd.f32 %v10273, %v10404
      %v10518 = vadd.f32 %v10274, %v10406
      %v10519 = vadd.f32 %v10275, %v10409
      %v10520 = vadd.f32 %v10276, %v10411
      %v10521 = vadd.f32 %v10277, %v10414
      %v10522 = vadd.f32 %v10278, %v10416
      %v10523 = vadd.f32 %v10279, %v10419
      %v10524 = vadd.f32 %v10280, %v10421
      %v10525 = vadd.f32 %v10281, %v10424
      %v10526 = vadd.f32 %v10282, %v10426
      %v10527 = vadd.f32 %v10283, %v10429
      %v10528 = vadd.f32 %v10284, %v10431
      %v10529 = vadd.f32 %v10285, %v10434
      %v10530 = vadd.f32 %v10286, %v10436
      %v10531 = vadd.f32 %v10287, %v10439
      %v10532 = vadd.f32 %v10288, %v10441
      %v10533 = vadd.f32 %v10289, %v10444
      %v10534 = vadd.f32 %v10290, %v10446
      %v10535 = vadd.f32 %v10291, %v10449
      %v10536 = vadd.f32 %v10292, %v10451
      %v10537 = vadd.f32 %v10293, %v10454
      %v10538 = vadd.f32 %v10294, %v10456
      %v10539 = vadd.f32 %v10295, %v10459
      %v10540 = vadd.f32 %v10296, %v10461
      %v10541 = vadd.f32 %v10297, %v10464
      %v10542 = vadd.f32 %v10298, %v10466
      %v10543 = vadd.f32 %v10299, %v10469
      %v10544 = vadd.f32 %v10300, %v10471
      %v10545 = vadd.f32 %v10301, %v10474
      %v10546 = vadd.f32 %v10302, %v10476
      %v10547 = vadd.f32 %v10303, %v10479
      %v10548 = vadd.f32 %v10304, %v10481
      %v10549 = vadd.f32 %v10305, %v10484
      %v10550 = vadd.f32 %v10306, %v10486
      %v10551 = vadd.f32 %v10307, %v10489
      %v10552 = vadd.f32 %v10308, %v10491
      %v10553 = vadd.f32 %v10309, %v10494
      %v10554 = vadd.f32 %v10310, %v10496
      %v10555 = vadd.f32 %v10311, %v10499
      %v10556 = vadd.f32 %v10312, %v10501
      %v10557 = vadd.f32 %v10313, %v10504
      %v10558 = vadd.f32 %v10314, %v10506
      %v10559 = vadd.f32 %v10315, %v10509
      %v10560 = vadd.f32 %v10316, %v10511
      %v10561 = vpack.c.bf16 %v8689, %v8689
      %s10562 = scalar_lea.vmem %s17, 320
      %v10563 = vld [vmem:[%s10562] sm:$0xf]
      %v10564 = vld [vmem:[%s10562 + $0x4] sm:$0xf]
      %v10565 = vld [vmem:[%s10562 + $0x8] sm:$0xf]
      %v10566 = vld [vmem:[%s10562 + $0xc] sm:$0xf]
      %v10567 = vld [vmem:[%s10562 + $0x10] sm:$0xf]
      %v10568 = vld [vmem:[%s10562 + $0x14] sm:$0xf]
      %v10569 = vld [vmem:[%s10562 + $0x18] sm:$0xf]
      %v10570 = vld [vmem:[%s10562 + $0x1c] sm:$0xf]
      %v10571 = vld [vmem:[%s10562 + $0x20] sm:$0xf]
      %v10572 = vld [vmem:[%s10562 + $0x24] sm:$0xf]
      %v10573 = vld [vmem:[%s10562 + $0x28] sm:$0xf]
      %v10574 = vld [vmem:[%s10562 + $0x2c] sm:$0xf]
      %v10575 = vld [vmem:[%s10562 + $0x30] sm:$0xf]
      %v10576 = vld [vmem:[%s10562 + $0x34] sm:$0xf]
      %v10577 = vld [vmem:[%s10562 + $0x38] sm:$0xf]
      %v10578 = vld [vmem:[%s10562 + $0x3c] sm:$0xf]
      %v10579 = vrot.slane %v8759, 1
      %v10580 = vor.u32 %v8756, %v10579
      %v10581 = vrot.slane %v8768, 1
      %v10582 = vsel %vm4272, %v10580, %v10581
      %v10583 = vor.u32 %v8765, %v10581
      %v10584 = vrot.slane %v8777, 1
      %v10585 = vsel %vm4272, %v10583, %v10584
      %v10586 = vor.u32 %v8774, %v10584
      %v10587 = vrot.slane %v8786, 1
      %v10588 = vsel %vm4272, %v10586, %v10587
      %v10589 = vor.u32 %v8783, %v10587
      %v10590 = vrot.slane %v8795, 1
      %v10591 = vsel %vm4272, %v10589, %v10590
      %v10592 = vor.u32 %v8792, %v10590
      %v10593 = vrot.slane %v8804, 1
      %v10594 = vsel %vm4272, %v10592, %v10593
      %v10595 = vor.u32 %v8801, %v10593
      %v10596 = vrot.slane %v8813, 1
      %v10597 = vsel %vm4272, %v10595, %v10596
      %v10598 = vor.u32 %v8810, %v10596
      %v10599 = vrot.slane %v8822, 1
      %v10600 = vsel %vm4272, %v10598, %v10599
      %v10601 = vor.u32 %v8819, %v10599
      %v10602 = vrot.slane %v8831, 1
      %v10603 = vsel %vm4272, %v10601, %v10602
      %v10604 = vor.u32 %v8828, %v10602
      %v10605 = vrot.slane %v8840, 1
      %v10606 = vsel %vm4272, %v10604, %v10605
      %v10607 = vor.u32 %v8837, %v10605
      %v10608 = vrot.slane %v8849, 1
      %v10609 = vsel %vm4272, %v10607, %v10608
      %v10610 = vor.u32 %v8846, %v10608
      %v10611 = vrot.slane %v8858, 1
      %v10612 = vsel %vm4272, %v10610, %v10611
      %v10613 = vor.u32 %v8855, %v10611
      %v10614 = vrot.slane %v8867, 1
      %v10615 = vsel %vm4272, %v10613, %v10614
      %v10616 = vor.u32 %v8864, %v10614
      %v10617 = vrot.slane %v8876, 1
      %v10618 = vsel %vm4272, %v10616, %v10617
      %v10619 = vor.u32 %v8873, %v10617
      %v10620 = vrot.slane %v8885, 1
      %v10621 = vsel %vm4272, %v10619, %v10620
      %v10622 = vor.u32 %v8882, %v10620
      %v10623 = vrot.slane %v8894, 1
      %v10624 = vsel %vm4272, %v10622, %v10623
      %v10625 = vor.u32 %v8891, %v10623
      %v10626 = vrot.slane %v8903, 1
      %v10627 = vsel %vm4272, %v10625, %v10626
      %v10628 = vor.u32 %v8900, %v10626
      %v10629 = vrot.slane %v8912, 1
      %v10630 = vsel %vm4272, %v10628, %v10629
      %v10631 = vor.u32 %v8909, %v10629
      %v10632 = vrot.slane %v8921, 1
      %v10633 = vsel %vm4272, %v10631, %v10632
      %v10634 = vor.u32 %v8918, %v10632
      %v10635 = vrot.slane %v8930, 1
      %v10636 = vsel %vm4272, %v10634, %v10635
      %v10637 = vor.u32 %v8927, %v10635
      %v10638 = vrot.slane %v8939, 1
      %v10639 = vsel %vm4272, %v10637, %v10638
      %v10640 = vor.u32 %v8936, %v10638
      %v10641 = vrot.slane %v8948, 1
      %v10642 = vsel %vm4272, %v10640, %v10641
      %v10643 = vor.u32 %v8945, %v10641
      %v10645 = vshll.u32 %v10317, 16
      %v10647 = vrot.slane %v10645, 1
      %v10648 = vsel %vm4272, %v10643, %v10647
      %v10649 = vshrl.u32 %v10317, 16
      %v10651 = vor.u32 %v10649, %v10647
      %v10653 = vshll.u32 %v10318, 16
      %v10655 = vrot.slane %v10653, 1
      %v10656 = vsel %vm4272, %v10651, %v10655
      %v10657 = vshrl.u32 %v10318, 16
      %v10659 = vor.u32 %v10657, %v10655
      %v10661 = vshll.u32 %v10561, 16
      %v10663 = vrot.slane %v10661, 1
      %v10664 = vsel %vm4272, %v10659, %v10663
      %v10705 = vunpack.c.l.b16 %v10563
      %v10706 = vunpack.c.l.b16 %v10564
      %v10707 = vunpack.c.l.b16 %v10565
      %v10708 = vunpack.c.l.b16 %v10566
      %v10709 = vunpack.c.l.b16 %v10567
      %v10710 = vunpack.c.l.b16 %v10568
      %v10711 = vunpack.c.l.b16 %v10569
      %v10712 = vunpack.c.l.b16 %v10570
      %v10713 = vunpack.c.l.b16 %v10571
      %v10714 = vunpack.c.l.b16 %v10572
      %v10715 = vunpack.c.l.b16 %v10573
      %v10716 = vunpack.c.l.b16 %v10574
      %v10717 = vunpack.c.l.b16 %v10575
      %v10718 = vunpack.c.l.b16 %v10576
      %v10719 = vunpack.c.l.b16 %v10577
      %v10720 = vunpack.c.l.b16 %v10578
      %v10721 = vpack.c.b16 %v10706, %v10705
      %v10722 = vpack.c.b16 %v10708, %v10707
      %v10723 = vpack.c.b16 %v10710, %v10709
      %v10724 = vpack.c.b16 %v10712, %v10711
      %v10725 = vpack.c.b16 %v10714, %v10713
      %v10726 = vpack.c.b16 %v10716, %v10715
      %v10727 = vpack.c.b16 %v10718, %v10717
      %v10728 = vpack.c.b16 %v10720, %v10719
      %10737 = vmatpush.bf16.msra.mxu0 %v10728
      %10738 = vmatpush.bf16.msra.mxu0 %v10727
      %10739 = vmatpush.bf16.msra.mxu0 %v10726
      %10740 = vmatpush.bf16.msra.mxu0 %v10725
      %10741 = vmatpush.bf16.msra.mxu0 %v10724
      %10742 = vmatpush.bf16.msra.mxu0 %v10723
      %10743 = vmatpush.bf16.msra.mxu0 %v10722
      %10744 = vmatpush.bf16.msra.mxu0 %v10721
      %10745 = vmatmul.bf16.gmra.mxu0 %v10582
      %v10746 = vpop.f32.mrf.mxu0
      %v10747 = vadd.f32 0.0, %v10746
      %v10748 = vpop.f32.mrf.mxu0
      %v10749 = vadd.f32 0.0, %v10748
      %10750 = vmatmul.bf16.gmra.mxu0 %v10585
      %v10751 = vpop.f32.mrf.mxu0
      %v10752 = vadd.f32 0.0, %v10751
      %v10753 = vpop.f32.mrf.mxu0
      %v10754 = vadd.f32 0.0, %v10753
      %10755 = vmatmul.bf16.gmra.mxu0 %v10588
      %v10756 = vpop.f32.mrf.mxu0
      %v10757 = vadd.f32 0.0, %v10756
      %v10758 = vpop.f32.mrf.mxu0
      %v10759 = vadd.f32 0.0, %v10758
      %10760 = vmatmul.bf16.gmra.mxu0 %v10591
      %v10761 = vpop.f32.mrf.mxu0
      %v10762 = vadd.f32 0.0, %v10761
      %v10763 = vpop.f32.mrf.mxu0
      %v10764 = vadd.f32 0.0, %v10763
      %10765 = vmatmul.bf16.gmra.mxu0 %v10594
      %v10766 = vpop.f32.mrf.mxu0
      %v10767 = vadd.f32 0.0, %v10766
      %v10768 = vpop.f32.mrf.mxu0
      %v10769 = vadd.f32 0.0, %v10768
      %10770 = vmatmul.bf16.gmra.mxu0 %v10597
      %v10771 = vpop.f32.mrf.mxu0
      %v10772 = vadd.f32 0.0, %v10771
      %v10773 = vpop.f32.mrf.mxu0
      %v10774 = vadd.f32 0.0, %v10773
      %10775 = vmatmul.bf16.gmra.mxu0 %v10600
      %v10776 = vpop.f32.mrf.mxu0
      %v10777 = vadd.f32 0.0, %v10776
      %v10778 = vpop.f32.mrf.mxu0
      %v10779 = vadd.f32 0.0, %v10778
      %10780 = vmatmul.bf16.gmra.mxu0 %v10603
      %v10781 = vpop.f32.mrf.mxu0
      %v10782 = vadd.f32 0.0, %v10781
      %v10783 = vpop.f32.mrf.mxu0
      %v10784 = vadd.f32 0.0, %v10783
      %10785 = vmatmul.bf16.gmra.mxu0 %v10606
      %v10786 = vpop.f32.mrf.mxu0
      %v10787 = vadd.f32 0.0, %v10786
      %v10788 = vpop.f32.mrf.mxu0
      %v10789 = vadd.f32 0.0, %v10788
      %10790 = vmatmul.bf16.gmra.mxu0 %v10609
      %v10791 = vpop.f32.mrf.mxu0
      %v10792 = vadd.f32 0.0, %v10791
      %v10793 = vpop.f32.mrf.mxu0
      %v10794 = vadd.f32 0.0, %v10793
      %10795 = vmatmul.bf16.gmra.mxu0 %v10612
      %v10796 = vpop.f32.mrf.mxu0
      %v10797 = vadd.f32 0.0, %v10796
      %v10798 = vpop.f32.mrf.mxu0
      %v10799 = vadd.f32 0.0, %v10798
      %10800 = vmatmul.bf16.gmra.mxu0 %v10615
      %v10801 = vpop.f32.mrf.mxu0
      %v10802 = vadd.f32 0.0, %v10801
      %v10803 = vpop.f32.mrf.mxu0
      %v10804 = vadd.f32 0.0, %v10803
      %10805 = vmatmul.bf16.gmra.mxu0 %v10618
      %v10806 = vpop.f32.mrf.mxu0
      %v10807 = vadd.f32 0.0, %v10806
      %v10808 = vpop.f32.mrf.mxu0
      %v10809 = vadd.f32 0.0, %v10808
      %10810 = vmatmul.bf16.gmra.mxu0 %v10621
      %v10811 = vpop.f32.mrf.mxu0
      %v10812 = vadd.f32 0.0, %v10811
      %v10813 = vpop.f32.mrf.mxu0
      %v10814 = vadd.f32 0.0, %v10813
      %10815 = vmatmul.bf16.gmra.mxu0 %v10624
      %v10816 = vpop.f32.mrf.mxu0
      %v10817 = vadd.f32 0.0, %v10816
      %v10818 = vpop.f32.mrf.mxu0
      %v10819 = vadd.f32 0.0, %v10818
      %10820 = vmatmul.bf16.gmra.mxu0 %v10627
      %v10821 = vpop.f32.mrf.mxu0
      %v10822 = vadd.f32 0.0, %v10821
      %v10823 = vpop.f32.mrf.mxu0
      %v10824 = vadd.f32 0.0, %v10823
      %10825 = vmatmul.bf16.gmra.mxu0 %v10630
      %v10826 = vpop.f32.mrf.mxu0
      %v10827 = vadd.f32 0.0, %v10826
      %v10828 = vpop.f32.mrf.mxu0
      %v10829 = vadd.f32 0.0, %v10828
      %10830 = vmatmul.bf16.gmra.mxu0 %v10633
      %v10831 = vpop.f32.mrf.mxu0
      %v10832 = vadd.f32 0.0, %v10831
      %v10833 = vpop.f32.mrf.mxu0
      %v10834 = vadd.f32 0.0, %v10833
      %10835 = vmatmul.bf16.gmra.mxu0 %v10636
      %v10836 = vpop.f32.mrf.mxu0
      %v10837 = vadd.f32 0.0, %v10836
      %v10838 = vpop.f32.mrf.mxu0
      %v10839 = vadd.f32 0.0, %v10838
      %10840 = vmatmul.bf16.gmra.mxu0 %v10639
      %v10841 = vpop.f32.mrf.mxu0
      %v10842 = vadd.f32 0.0, %v10841
      %v10843 = vpop.f32.mrf.mxu0
      %v10844 = vadd.f32 0.0, %v10843
      %10845 = vmatmul.bf16.gmra.mxu0 %v10642
      %v10846 = vpop.f32.mrf.mxu0
      %v10847 = vadd.f32 0.0, %v10846
      %v10848 = vpop.f32.mrf.mxu0
      %v10849 = vadd.f32 0.0, %v10848
      %10850 = vmatmul.bf16.gmra.mxu0 %v10648
      %v10851 = vpop.f32.mrf.mxu0
      %v10852 = vadd.f32 0.0, %v10851
      %v10853 = vpop.f32.mrf.mxu0
      %v10854 = vadd.f32 0.0, %v10853
      %10855 = vmatmul.bf16.gmra.mxu0 %v10656
      %v10856 = vpop.f32.mrf.mxu0
      %v10857 = vadd.f32 0.0, %v10856
      %v10858 = vpop.f32.mrf.mxu0
      %v10859 = vadd.f32 0.0, %v10858
      %10860 = vmatmul.bf16.gmra.mxu0 %v10664
      %v10861 = vpop.f32.mrf.mxu0
      %v10862 = vadd.f32 0.0, %v10861
      %v10863 = vpop.f32.mrf.mxu0
      %v10864 = vadd.f32 0.0, %v10863
      %10865 = vdwg.mxu0
      %v10866 = vadd.f32 %v10513, %v10747
      %v10867 = vadd.f32 %v10514, %v10749
      %v10868 = vadd.f32 %v10515, %v10752
      %v10869 = vadd.f32 %v10516, %v10754
      %v10870 = vadd.f32 %v10517, %v10757
      %v10871 = vadd.f32 %v10518, %v10759
      %v10872 = vadd.f32 %v10519, %v10762
      %v10873 = vadd.f32 %v10520, %v10764
      %v10874 = vadd.f32 %v10521, %v10767
      %v10875 = vadd.f32 %v10522, %v10769
      %v10876 = vadd.f32 %v10523, %v10772
      %v10877 = vadd.f32 %v10524, %v10774
      %v10878 = vadd.f32 %v10525, %v10777
      %v10879 = vadd.f32 %v10526, %v10779
      %v10880 = vadd.f32 %v10527, %v10782
      %v10881 = vadd.f32 %v10528, %v10784
      %v10882 = vadd.f32 %v10529, %v10787
      %v10883 = vadd.f32 %v10530, %v10789
      %v10884 = vadd.f32 %v10531, %v10792
      %v10885 = vadd.f32 %v10532, %v10794
      %v10886 = vadd.f32 %v10533, %v10797
      %v10887 = vadd.f32 %v10534, %v10799
      %v10888 = vadd.f32 %v10535, %v10802
      %v10889 = vadd.f32 %v10536, %v10804
      %v10890 = vadd.f32 %v10537, %v10807
      %v10891 = vadd.f32 %v10538, %v10809
      %v10892 = vadd.f32 %v10539, %v10812
      %v10893 = vadd.f32 %v10540, %v10814
      %v10894 = vadd.f32 %v10541, %v10817
      %v10895 = vadd.f32 %v10542, %v10819
      %v10896 = vadd.f32 %v10543, %v10822
      %v10897 = vadd.f32 %v10544, %v10824
      %v10898 = vadd.f32 %v10545, %v10827
      %v10899 = vadd.f32 %v10546, %v10829
      %v10900 = vadd.f32 %v10547, %v10832
      %v10901 = vadd.f32 %v10548, %v10834
      %v10902 = vadd.f32 %v10549, %v10837
      %v10903 = vadd.f32 %v10550, %v10839
      %v10904 = vadd.f32 %v10551, %v10842
      %v10905 = vadd.f32 %v10552, %v10844
      %v10906 = vadd.f32 %v10553, %v10847
      %v10907 = vadd.f32 %v10554, %v10849
      %v10908 = vadd.f32 %v10555, %v10852
      %v10909 = vadd.f32 %v10556, %v10854
      %v10910 = vadd.f32 %v10557, %v10857
      %v10911 = vadd.f32 %v10558, %v10859
      %v10912 = vadd.f32 %v10559, %v10862
      %v10913 = vadd.f32 %v10560, %v10864
      %v10914 = vpack.c.bf16 %v8690, %v8689
      %v10915 = vpack.c.bf16 %v8691, %v8691
      %s10916 = scalar_lea.vmem %s17, 384
      %v10917 = vld [vmem:[%s10916] sm:$0xf]
      %v10918 = vld [vmem:[%s10916 + $0x4] sm:$0xf]
      %v10919 = vld [vmem:[%s10916 + $0x8] sm:$0xf]
      %v10920 = vld [vmem:[%s10916 + $0xc] sm:$0xf]
      %v10921 = vld [vmem:[%s10916 + $0x10] sm:$0xf]
      %v10922 = vld [vmem:[%s10916 + $0x14] sm:$0xf]
      %v10923 = vld [vmem:[%s10916 + $0x18] sm:$0xf]
      %v10924 = vld [vmem:[%s10916 + $0x1c] sm:$0xf]
      %v10925 = vld [vmem:[%s10916 + $0x20] sm:$0xf]
      %v10926 = vld [vmem:[%s10916 + $0x24] sm:$0xf]
      %v10927 = vld [vmem:[%s10916 + $0x28] sm:$0xf]
      %v10928 = vld [vmem:[%s10916 + $0x2c] sm:$0xf]
      %v10929 = vld [vmem:[%s10916 + $0x30] sm:$0xf]
      %v10930 = vld [vmem:[%s10916 + $0x34] sm:$0xf]
      %v10931 = vld [vmem:[%s10916 + $0x38] sm:$0xf]
      %v10932 = vld [vmem:[%s10916 + $0x3c] sm:$0xf]
      %v10933 = vrot.slane %v10649, 3
      %v10934 = vrot.slane %v10645, 4
      %v10935 = vor.u32 %v10933, %v10934
      %v10936 = vsel %vm3380, %v8951, %v10935
      %v10937 = vrot.slane %v10657, 3
      %v10938 = vrot.slane %v10653, 4
      %v10939 = vor.u32 %v10937, %v10938
      %v10940 = vsel %vm3380, %v10935, %v10939
      %v10942 = vshrl.u32 %v10914, 16
      %v10944 = vrot.slane %v10942, 3
      %v10945 = vshll.u32 %v10914, 16
      %v10947 = vrot.slane %v10945, 4
      %v10948 = vor.u32 %v10944, %v10947
      %v10949 = vsel %vm3380, %v10939, %v10948
      %v10951 = vshrl.u32 %v10915, 16
      %v10953 = vrot.slane %v10951, 3
      %v10954 = vshll.u32 %v10915, 16
      %v10956 = vrot.slane %v10954, 4
      %v10957 = vor.u32 %v10953, %v10956
      %v10958 = vsel %vm3380, %v10948, %v10957
      %v10979 = vunpack.c.l.b16 %v10917
      %v10980 = vunpack.c.l.b16 %v10918
      %v10981 = vunpack.c.l.b16 %v10919
      %v10982 = vunpack.c.l.b16 %v10920
      %v10983 = vunpack.c.l.b16 %v10921
      %v10984 = vunpack.c.l.b16 %v10922
      %v10985 = vunpack.c.l.b16 %v10923
      %v10986 = vunpack.c.l.b16 %v10924
      %v10987 = vunpack.c.l.b16 %v10925
      %v10988 = vunpack.c.l.b16 %v10926
      %v10989 = vunpack.c.l.b16 %v10927
      %v10990 = vunpack.c.l.b16 %v10928
      %v10991 = vunpack.c.l.b16 %v10929
      %v10992 = vunpack.c.l.b16 %v10930
      %v10993 = vunpack.c.l.b16 %v10931
      %v10994 = vunpack.c.l.b16 %v10932
      %v10995 = vpack.c.b16 %v10980, %v10979
      %v10996 = vpack.c.b16 %v10982, %v10981
      %v10997 = vpack.c.b16 %v10984, %v10983
      %v10998 = vpack.c.b16 %v10986, %v10985
      %v10999 = vpack.c.b16 %v10988, %v10987
      %v11000 = vpack.c.b16 %v10990, %v10989
      %v11001 = vpack.c.b16 %v10992, %v10991
      %v11002 = vpack.c.b16 %v10994, %v10993
      %11011 = vmatpush.bf16.msra.mxu0 %v11002
      %11012 = vmatpush.bf16.msra.mxu0 %v11001
      %11013 = vmatpush.bf16.msra.mxu0 %v11000
      %11014 = vmatpush.bf16.msra.mxu0 %v10999
      %11015 = vmatpush.bf16.msra.mxu0 %v10998
      %11016 = vmatpush.bf16.msra.mxu0 %v10997
      %11017 = vmatpush.bf16.msra.mxu0 %v10996
      %11018 = vmatpush.bf16.msra.mxu0 %v10995
      %11019 = vmatmul.bf16.gmra.mxu0 %v8781
      %v11020 = vpop.f32.mrf.mxu0
      %v11021 = vadd.f32 0.0, %v11020
      %v11022 = vpop.f32.mrf.mxu0
      %v11023 = vadd.f32 0.0, %v11022
      %11024 = vmatmul.bf16.gmra.mxu0 %v8790
      %v11025 = vpop.f32.mrf.mxu0
      %v11026 = vadd.f32 0.0, %v11025
      %v11027 = vpop.f32.mrf.mxu0
      %v11028 = vadd.f32 0.0, %v11027
      %11029 = vmatmul.bf16.gmra.mxu0 %v8799
      %v11030 = vpop.f32.mrf.mxu0
      %v11031 = vadd.f32 0.0, %v11030
      %v11032 = vpop.f32.mrf.mxu0
      %v11033 = vadd.f32 0.0, %v11032
      %11034 = vmatmul.bf16.gmra.mxu0 %v8808
      %v11035 = vpop.f32.mrf.mxu0
      %v11036 = vadd.f32 0.0, %v11035
      %v11037 = vpop.f32.mrf.mxu0
      %v11038 = vadd.f32 0.0, %v11037
      %11039 = vmatmul.bf16.gmra.mxu0 %v8817
      %v11040 = vpop.f32.mrf.mxu0
      %v11041 = vadd.f32 0.0, %v11040
      %v11042 = vpop.f32.mrf.mxu0
      %v11043 = vadd.f32 0.0, %v11042
      %11044 = vmatmul.bf16.gmra.mxu0 %v8826
      %v11045 = vpop.f32.mrf.mxu0
      %v11046 = vadd.f32 0.0, %v11045
      %v11047 = vpop.f32.mrf.mxu0
      %v11048 = vadd.f32 0.0, %v11047
      %11049 = vmatmul.bf16.gmra.mxu0 %v8835
      %v11050 = vpop.f32.mrf.mxu0
      %v11051 = vadd.f32 0.0, %v11050
      %v11052 = vpop.f32.mrf.mxu0
      %v11053 = vadd.f32 0.0, %v11052
      %11054 = vmatmul.bf16.gmra.mxu0 %v8844
      %v11055 = vpop.f32.mrf.mxu0
      %v11056 = vadd.f32 0.0, %v11055
      %v11057 = vpop.f32.mrf.mxu0
      %v11058 = vadd.f32 0.0, %v11057
      %11059 = vmatmul.bf16.gmra.mxu0 %v8853
      %v11060 = vpop.f32.mrf.mxu0
      %v11061 = vadd.f32 0.0, %v11060
      %v11062 = vpop.f32.mrf.mxu0
      %v11063 = vadd.f32 0.0, %v11062
      %11064 = vmatmul.bf16.gmra.mxu0 %v8862
      %v11065 = vpop.f32.mrf.mxu0
      %v11066 = vadd.f32 0.0, %v11065
      %v11067 = vpop.f32.mrf.mxu0
      %v11068 = vadd.f32 0.0, %v11067
      %11069 = vmatmul.bf16.gmra.mxu0 %v8871
      %v11070 = vpop.f32.mrf.mxu0
      %v11071 = vadd.f32 0.0, %v11070
      %v11072 = vpop.f32.mrf.mxu0
      %v11073 = vadd.f32 0.0, %v11072
      %11074 = vmatmul.bf16.gmra.mxu0 %v8880
      %v11075 = vpop.f32.mrf.mxu0
      %v11076 = vadd.f32 0.0, %v11075
      %v11077 = vpop.f32.mrf.mxu0
      %v11078 = vadd.f32 0.0, %v11077
      %11079 = vmatmul.bf16.gmra.mxu0 %v8889
      %v11080 = vpop.f32.mrf.mxu0
      %v11081 = vadd.f32 0.0, %v11080
      %v11082 = vpop.f32.mrf.mxu0
      %v11083 = vadd.f32 0.0, %v11082
      %11084 = vmatmul.bf16.gmra.mxu0 %v8898
      %v11085 = vpop.f32.mrf.mxu0
      %v11086 = vadd.f32 0.0, %v11085
      %v11087 = vpop.f32.mrf.mxu0
      %v11088 = vadd.f32 0.0, %v11087
      %11089 = vmatmul.bf16.gmra.mxu0 %v8907
      %v11090 = vpop.f32.mrf.mxu0
      %v11091 = vadd.f32 0.0, %v11090
      %v11092 = vpop.f32.mrf.mxu0
      %v11093 = vadd.f32 0.0, %v11092
      %11094 = vmatmul.bf16.gmra.mxu0 %v8916
      %v11095 = vpop.f32.mrf.mxu0
      %v11096 = vadd.f32 0.0, %v11095
      %v11097 = vpop.f32.mrf.mxu0
      %v11098 = vadd.f32 0.0, %v11097
      %11099 = vmatmul.bf16.gmra.mxu0 %v8925
      %v11100 = vpop.f32.mrf.mxu0
      %v11101 = vadd.f32 0.0, %v11100
      %v11102 = vpop.f32.mrf.mxu0
      %v11103 = vadd.f32 0.0, %v11102
      %11104 = vmatmul.bf16.gmra.mxu0 %v8934
      %v11105 = vpop.f32.mrf.mxu0
      %v11106 = vadd.f32 0.0, %v11105
      %v11107 = vpop.f32.mrf.mxu0
      %v11108 = vadd.f32 0.0, %v11107
      %11109 = vmatmul.bf16.gmra.mxu0 %v8943
      %v11110 = vpop.f32.mrf.mxu0
      %v11111 = vadd.f32 0.0, %v11110
      %v11112 = vpop.f32.mrf.mxu0
      %v11113 = vadd.f32 0.0, %v11112
      %11114 = vmatmul.bf16.gmra.mxu0 %v8952
      %v11115 = vpop.f32.mrf.mxu0
      %v11116 = vadd.f32 0.0, %v11115
      %v11117 = vpop.f32.mrf.mxu0
      %v11118 = vadd.f32 0.0, %v11117
      %11119 = vmatmul.bf16.gmra.mxu0 %v10936
      %v11120 = vpop.f32.mrf.mxu0
      %v11121 = vadd.f32 0.0, %v11120
      %v11122 = vpop.f32.mrf.mxu0
      %v11123 = vadd.f32 0.0, %v11122
      %11124 = vmatmul.bf16.gmra.mxu0 %v10940
      %v11125 = vpop.f32.mrf.mxu0
      %v11126 = vadd.f32 0.0, %v11125
      %v11127 = vpop.f32.mrf.mxu0
      %v11128 = vadd.f32 0.0, %v11127
      %11129 = vmatmul.bf16.gmra.mxu0 %v10949
      %v11130 = vpop.f32.mrf.mxu0
      %v11131 = vadd.f32 0.0, %v11130
      %v11132 = vpop.f32.mrf.mxu0
      %v11133 = vadd.f32 0.0, %v11132
      %11134 = vmatmul.bf16.gmra.mxu0 %v10958
      %v11135 = vpop.f32.mrf.mxu0
      %v11136 = vadd.f32 0.0, %v11135
      %v11137 = vpop.f32.mrf.mxu0
      %v11138 = vadd.f32 0.0, %v11137
      %11139 = vdwg.mxu0
      %v11140 = vadd.f32 %v10866, %v11021
      %v11141 = vadd.f32 %v10867, %v11023
      %v11142 = vadd.f32 %v10868, %v11026
      %v11143 = vadd.f32 %v10869, %v11028
      %v11144 = vadd.f32 %v10870, %v11031
      %v11145 = vadd.f32 %v10871, %v11033
      %v11146 = vadd.f32 %v10872, %v11036
      %v11147 = vadd.f32 %v10873, %v11038
      %v11148 = vadd.f32 %v10874, %v11041
      %v11149 = vadd.f32 %v10875, %v11043
      %v11150 = vadd.f32 %v10876, %v11046
      %v11151 = vadd.f32 %v10877, %v11048
      %v11152 = vadd.f32 %v10878, %v11051
      %v11153 = vadd.f32 %v10879, %v11053
      %v11154 = vadd.f32 %v10880, %v11056
      %v11155 = vadd.f32 %v10881, %v11058
      %v11156 = vadd.f32 %v10882, %v11061
      %v11157 = vadd.f32 %v10883, %v11063
      %v11158 = vadd.f32 %v10884, %v11066
      %v11159 = vadd.f32 %v10885, %v11068
      %v11160 = vadd.f32 %v10886, %v11071
      %v11161 = vadd.f32 %v10887, %v11073
      %v11162 = vadd.f32 %v10888, %v11076
      %v11163 = vadd.f32 %v10889, %v11078
      %v11164 = vadd.f32 %v10890, %v11081
      %v11165 = vadd.f32 %v10891, %v11083
      %v11166 = vadd.f32 %v10892, %v11086
      %v11167 = vadd.f32 %v10893, %v11088
      %v11168 = vadd.f32 %v10894, %v11091
      %v11169 = vadd.f32 %v10895, %v11093
      %v11170 = vadd.f32 %v10896, %v11096
      %v11171 = vadd.f32 %v10897, %v11098
      %v11172 = vadd.f32 %v10898, %v11101
      %v11173 = vadd.f32 %v10899, %v11103
      %v11174 = vadd.f32 %v10900, %v11106
      %v11175 = vadd.f32 %v10901, %v11108
      %v11176 = vadd.f32 %v10902, %v11111
      %v11177 = vadd.f32 %v10903, %v11113
      %v11178 = vadd.f32 %v10904, %v11116
      %v11179 = vadd.f32 %v10905, %v11118
      %v11180 = vadd.f32 %v10906, %v11121
      %v11181 = vadd.f32 %v10907, %v11123
      %v11182 = vadd.f32 %v10908, %v11126
      %v11183 = vadd.f32 %v10909, %v11128
      %v11184 = vadd.f32 %v10910, %v11131
      %v11185 = vadd.f32 %v10911, %v11133
      %v11186 = vadd.f32 %v10912, %v11136
      %v11187 = vadd.f32 %v10913, %v11138
      %v11188 = vpack.c.bf16 %v8689, %v8688
      %v11189 = vpack.c.bf16 %v8691, %v8690
      %s11190 = scalar_lea.vmem %s17, 448
      %v11191 = vld [vmem:[%s11190] sm:$0xf]
      %v11192 = vld [vmem:[%s11190 + $0x4] sm:$0xf]
      %v11193 = vld [vmem:[%s11190 + $0x8] sm:$0xf]
      %v11194 = vld [vmem:[%s11190 + $0xc] sm:$0xf]
      %v11195 = vld [vmem:[%s11190 + $0x10] sm:$0xf]
      %v11196 = vld [vmem:[%s11190 + $0x14] sm:$0xf]
      %v11197 = vld [vmem:[%s11190 + $0x18] sm:$0xf]
      %v11198 = vld [vmem:[%s11190 + $0x1c] sm:$0xf]
      %v11199 = vld [vmem:[%s11190 + $0x20] sm:$0xf]
      %v11200 = vld [vmem:[%s11190 + $0x24] sm:$0xf]
      %v11201 = vld [vmem:[%s11190 + $0x28] sm:$0xf]
      %v11202 = vld [vmem:[%s11190 + $0x2c] sm:$0xf]
      %v11203 = vld [vmem:[%s11190 + $0x30] sm:$0xf]
      %v11204 = vld [vmem:[%s11190 + $0x34] sm:$0xf]
      %v11205 = vld [vmem:[%s11190 + $0x38] sm:$0xf]
      %v11206 = vld [vmem:[%s11190 + $0x3c] sm:$0xf]
      %v11223 = vunpack.c.l.b16 %v11191
      %v11224 = vunpack.c.l.b16 %v11192
      %v11225 = vunpack.c.l.b16 %v11193
      %v11226 = vunpack.c.l.b16 %v11194
      %v11227 = vunpack.c.l.b16 %v11195
      %v11228 = vunpack.c.l.b16 %v11196
      %v11229 = vunpack.c.l.b16 %v11197
      %v11230 = vunpack.c.l.b16 %v11198
      %v11231 = vunpack.c.l.b16 %v11199
      %v11232 = vunpack.c.l.b16 %v11200
      %v11233 = vunpack.c.l.b16 %v11201
      %v11234 = vunpack.c.l.b16 %v11202
      %v11235 = vunpack.c.l.b16 %v11203
      %v11236 = vunpack.c.l.b16 %v11204
      %v11237 = vunpack.c.l.b16 %v11205
      %v11238 = vunpack.c.l.b16 %v11206
      %v11239 = vpack.c.b16 %v11224, %v11223
      %v11240 = vpack.c.b16 %v11226, %v11225
      %v11241 = vpack.c.b16 %v11228, %v11227
      %v11242 = vpack.c.b16 %v11230, %v11229
      %v11243 = vpack.c.b16 %v11232, %v11231
      %v11244 = vpack.c.b16 %v11234, %v11233
      %v11245 = vpack.c.b16 %v11236, %v11235
      %v11246 = vpack.c.b16 %v11238, %v11237
      %11255 = vmatpush.bf16.msra.mxu0 %v11246
      %11256 = vmatpush.bf16.msra.mxu0 %v11245
      %11257 = vmatpush.bf16.msra.mxu0 %v11244
      %11258 = vmatpush.bf16.msra.mxu0 %v11243
      %11259 = vmatpush.bf16.msra.mxu0 %v11242
      %11260 = vmatpush.bf16.msra.mxu0 %v11241
      %11261 = vmatpush.bf16.msra.mxu0 %v11240
      %11262 = vmatpush.bf16.msra.mxu0 %v11239
      %11263 = vmatmul.bf16.gmra.mxu0 %v9214
      %v11264 = vpop.f32.mrf.mxu0
      %v11265 = vadd.f32 0.0, %v11264
      %v11266 = vpop.f32.mrf.mxu0
      %v11267 = vadd.f32 0.0, %v11266
      %11268 = vmatmul.bf16.gmra.mxu0 %v9215
      %v11269 = vpop.f32.mrf.mxu0
      %v11270 = vadd.f32 0.0, %v11269
      %v11271 = vpop.f32.mrf.mxu0
      %v11272 = vadd.f32 0.0, %v11271
      %11273 = vmatmul.bf16.gmra.mxu0 %v9216
      %v11274 = vpop.f32.mrf.mxu0
      %v11275 = vadd.f32 0.0, %v11274
      %v11276 = vpop.f32.mrf.mxu0
      %v11277 = vadd.f32 0.0, %v11276
      %11278 = vmatmul.bf16.gmra.mxu0 %v9217
      %v11279 = vpop.f32.mrf.mxu0
      %v11280 = vadd.f32 0.0, %v11279
      %v11281 = vpop.f32.mrf.mxu0
      %v11282 = vadd.f32 0.0, %v11281
      %11283 = vmatmul.bf16.gmra.mxu0 %v9218
      %v11284 = vpop.f32.mrf.mxu0
      %v11285 = vadd.f32 0.0, %v11284
      %v11286 = vpop.f32.mrf.mxu0
      %v11287 = vadd.f32 0.0, %v11286
      %11288 = vmatmul.bf16.gmra.mxu0 %v9219
      %v11289 = vpop.f32.mrf.mxu0
      %v11290 = vadd.f32 0.0, %v11289
      %v11291 = vpop.f32.mrf.mxu0
      %v11292 = vadd.f32 0.0, %v11291
      %11293 = vmatmul.bf16.gmra.mxu0 %v9220
      %v11294 = vpop.f32.mrf.mxu0
      %v11295 = vadd.f32 0.0, %v11294
      %v11296 = vpop.f32.mrf.mxu0
      %v11297 = vadd.f32 0.0, %v11296
      %11298 = vmatmul.bf16.gmra.mxu0 %v9221
      %v11299 = vpop.f32.mrf.mxu0
      %v11300 = vadd.f32 0.0, %v11299
      %v11301 = vpop.f32.mrf.mxu0
      %v11302 = vadd.f32 0.0, %v11301
      %11303 = vmatmul.bf16.gmra.mxu0 %v9222
      %v11304 = vpop.f32.mrf.mxu0
      %v11305 = vadd.f32 0.0, %v11304
      %v11306 = vpop.f32.mrf.mxu0
      %v11307 = vadd.f32 0.0, %v11306
      %11308 = vmatmul.bf16.gmra.mxu0 %v9223
      %v11309 = vpop.f32.mrf.mxu0
      %v11310 = vadd.f32 0.0, %v11309
      %v11311 = vpop.f32.mrf.mxu0
      %v11312 = vadd.f32 0.0, %v11311
      %11313 = vmatmul.bf16.gmra.mxu0 %v9224
      %v11314 = vpop.f32.mrf.mxu0
      %v11315 = vadd.f32 0.0, %v11314
      %v11316 = vpop.f32.mrf.mxu0
      %v11317 = vadd.f32 0.0, %v11316
      %11318 = vmatmul.bf16.gmra.mxu0 %v9225
      %v11319 = vpop.f32.mrf.mxu0
      %v11320 = vadd.f32 0.0, %v11319
      %v11321 = vpop.f32.mrf.mxu0
      %v11322 = vadd.f32 0.0, %v11321
      %11323 = vmatmul.bf16.gmra.mxu0 %v9226
      %v11324 = vpop.f32.mrf.mxu0
      %v11325 = vadd.f32 0.0, %v11324
      %v11326 = vpop.f32.mrf.mxu0
      %v11327 = vadd.f32 0.0, %v11326
      %11328 = vmatmul.bf16.gmra.mxu0 %v9227
      %v11329 = vpop.f32.mrf.mxu0
      %v11330 = vadd.f32 0.0, %v11329
      %v11331 = vpop.f32.mrf.mxu0
      %v11332 = vadd.f32 0.0, %v11331
      %11333 = vmatmul.bf16.gmra.mxu0 %v9228
      %v11334 = vpop.f32.mrf.mxu0
      %v11335 = vadd.f32 0.0, %v11334
      %v11336 = vpop.f32.mrf.mxu0
      %v11337 = vadd.f32 0.0, %v11336
      %11338 = vmatmul.bf16.gmra.mxu0 %v9229
      %v11339 = vpop.f32.mrf.mxu0
      %v11340 = vadd.f32 0.0, %v11339
      %v11341 = vpop.f32.mrf.mxu0
      %v11342 = vadd.f32 0.0, %v11341
      %11343 = vmatmul.bf16.gmra.mxu0 %v9230
      %v11344 = vpop.f32.mrf.mxu0
      %v11345 = vadd.f32 0.0, %v11344
      %v11346 = vpop.f32.mrf.mxu0
      %v11347 = vadd.f32 0.0, %v11346
      %11348 = vmatmul.bf16.gmra.mxu0 %v9231
      %v11349 = vpop.f32.mrf.mxu0
      %v11350 = vadd.f32 0.0, %v11349
      %v11351 = vpop.f32.mrf.mxu0
      %v11352 = vadd.f32 0.0, %v11351
      %11353 = vmatmul.bf16.gmra.mxu0 %v9232
      %v11354 = vpop.f32.mrf.mxu0
      %v11355 = vadd.f32 0.0, %v11354
      %v11356 = vpop.f32.mrf.mxu0
      %v11357 = vadd.f32 0.0, %v11356
      %11358 = vmatmul.bf16.gmra.mxu0 %v9233
      %v11359 = vpop.f32.mrf.mxu0
      %v11360 = vadd.f32 0.0, %v11359
      %v11361 = vpop.f32.mrf.mxu0
      %v11362 = vadd.f32 0.0, %v11361
      %11363 = vmatmul.bf16.gmra.mxu0 %v9234
      %v11364 = vpop.f32.mrf.mxu0
      %v11365 = vadd.f32 0.0, %v11364
      %v11366 = vpop.f32.mrf.mxu0
      %v11367 = vadd.f32 0.0, %v11366
      %11368 = vmatmul.bf16.gmra.mxu0 %v9940
      %v11369 = vpop.f32.mrf.mxu0
      %v11370 = vadd.f32 0.0, %v11369
      %v11371 = vpop.f32.mrf.mxu0
      %v11372 = vadd.f32 0.0, %v11371
      %11373 = vmatmul.bf16.gmra.mxu0 %v11188
      %v11374 = vpop.f32.mrf.mxu0
      %v11375 = vadd.f32 0.0, %v11374
      %v11376 = vpop.f32.mrf.mxu0
      %v11377 = vadd.f32 0.0, %v11376
      %11378 = vmatmul.bf16.gmra.mxu0 %v11189
      %v11379 = vpop.f32.mrf.mxu0
      %v11380 = vadd.f32 0.0, %v11379
      %v11381 = vpop.f32.mrf.mxu0
      %v11382 = vadd.f32 0.0, %v11381
      %11383 = vdwg.mxu0
      %v11384 = vadd.f32 %v11140, %v11265
      %v11385 = vadd.f32 %v11141, %v11267
      %v11386 = vadd.f32 %v11142, %v11270
      %v11387 = vadd.f32 %v11143, %v11272
      %v11388 = vadd.f32 %v11144, %v11275
      %v11389 = vadd.f32 %v11145, %v11277
      %v11390 = vadd.f32 %v11146, %v11280
      %v11391 = vadd.f32 %v11147, %v11282
      %v11392 = vadd.f32 %v11148, %v11285
      %v11393 = vadd.f32 %v11149, %v11287
      %v11394 = vadd.f32 %v11150, %v11290
      %v11395 = vadd.f32 %v11151, %v11292
      %v11396 = vadd.f32 %v11152, %v11295
      %v11397 = vadd.f32 %v11153, %v11297
      %v11398 = vadd.f32 %v11154, %v11300
      %v11399 = vadd.f32 %v11155, %v11302
      %v11400 = vadd.f32 %v11156, %v11305
      %v11401 = vadd.f32 %v11157, %v11307
      %v11402 = vadd.f32 %v11158, %v11310
      %v11403 = vadd.f32 %v11159, %v11312
      %v11404 = vadd.f32 %v11160, %v11315
      %v11405 = vadd.f32 %v11161, %v11317
      %v11406 = vadd.f32 %v11162, %v11320
      %v11407 = vadd.f32 %v11163, %v11322
      %v11408 = vadd.f32 %v11164, %v11325
      %v11409 = vadd.f32 %v11165, %v11327
      %v11410 = vadd.f32 %v11166, %v11330
      %v11411 = vadd.f32 %v11167, %v11332
      %v11412 = vadd.f32 %v11168, %v11335
      %v11413 = vadd.f32 %v11169, %v11337
      %v11414 = vadd.f32 %v11170, %v11340
      %v11415 = vadd.f32 %v11171, %v11342
      %v11416 = vadd.f32 %v11172, %v11345
      %v11417 = vadd.f32 %v11173, %v11347
      %v11418 = vadd.f32 %v11174, %v11350
      %v11419 = vadd.f32 %v11175, %v11352
      %v11420 = vadd.f32 %v11176, %v11355
      %v11421 = vadd.f32 %v11177, %v11357
      %v11422 = vadd.f32 %v11178, %v11360
      %v11423 = vadd.f32 %v11179, %v11362
      %v11424 = vadd.f32 %v11180, %v11365
      %v11425 = vadd.f32 %v11181, %v11367
      %v11426 = vadd.f32 %v11182, %v11370
      %v11427 = vadd.f32 %v11183, %v11372
      %v11428 = vadd.f32 %v11184, %v11375
      %v11429 = vadd.f32 %v11185, %v11377
      %v11430 = vadd.f32 %v11186, %v11380
      %v11431 = vadd.f32 %v11187, %v11382
      %v11432 = vpack.c.bf16 %v8692, %v8692
      %s11433 = scalar_lea.vmem %s17, 512
      %v11434 = vld [vmem:[%s11433] sm:$0xf]
      %v11435 = vld [vmem:[%s11433 + $0x4] sm:$0xf]
      %v11436 = vld [vmem:[%s11433 + $0x8] sm:$0xf]
      %v11437 = vld [vmem:[%s11433 + $0xc] sm:$0xf]
      %v11438 = vld [vmem:[%s11433 + $0x10] sm:$0xf]
      %v11439 = vld [vmem:[%s11433 + $0x14] sm:$0xf]
      %v11440 = vld [vmem:[%s11433 + $0x18] sm:$0xf]
      %v11441 = vld [vmem:[%s11433 + $0x1c] sm:$0xf]
      %v11442 = vld [vmem:[%s11433 + $0x20] sm:$0xf]
      %v11443 = vld [vmem:[%s11433 + $0x24] sm:$0xf]
      %v11444 = vld [vmem:[%s11433 + $0x28] sm:$0xf]
      %v11445 = vld [vmem:[%s11433 + $0x2c] sm:$0xf]
      %v11446 = vld [vmem:[%s11433 + $0x30] sm:$0xf]
      %v11447 = vld [vmem:[%s11433 + $0x34] sm:$0xf]
      %v11448 = vld [vmem:[%s11433 + $0x38] sm:$0xf]
      %v11449 = vld [vmem:[%s11433 + $0x3c] sm:$0xf]
      %v11450 = vrot.slane %v10054, 1
      %v11451 = vsel %vm4272, %v9685, %v11450
      %v11452 = vor.u32 %v10051, %v11450
      %v11454 = vshll.u32 %v11188, 16
      %v11456 = vrot.slane %v11454, 1
      %v11457 = vsel %vm4272, %v11452, %v11456
      %v11458 = vshrl.u32 %v11188, 16
      %v11460 = vor.u32 %v11458, %v11456
      %v11462 = vshll.u32 %v11189, 16
      %v11464 = vrot.slane %v11462, 1
      %v11465 = vsel %vm4272, %v11460, %v11464
      %v11466 = vshrl.u32 %v11189, 16
      %v11468 = vor.u32 %v11466, %v11464
      %v11470 = vshll.u32 %v11432, 16
      %v11472 = vrot.slane %v11470, 1
      %v11473 = vsel %vm4272, %v11468, %v11472
      %v11494 = vunpack.c.l.b16 %v11434
      %v11495 = vunpack.c.l.b16 %v11435
      %v11496 = vunpack.c.l.b16 %v11436
      %v11497 = vunpack.c.l.b16 %v11437
      %v11498 = vunpack.c.l.b16 %v11438
      %v11499 = vunpack.c.l.b16 %v11439
      %v11500 = vunpack.c.l.b16 %v11440
      %v11501 = vunpack.c.l.b16 %v11441
      %v11502 = vunpack.c.l.b16 %v11442
      %v11503 = vunpack.c.l.b16 %v11443
      %v11504 = vunpack.c.l.b16 %v11444
      %v11505 = vunpack.c.l.b16 %v11445
      %v11506 = vunpack.c.l.b16 %v11446
      %v11507 = vunpack.c.l.b16 %v11447
      %v11508 = vunpack.c.l.b16 %v11448
      %v11509 = vunpack.c.l.b16 %v11449
      %v11510 = vpack.c.b16 %v11495, %v11494
      %v11511 = vpack.c.b16 %v11497, %v11496
      %v11512 = vpack.c.b16 %v11499, %v11498
      %v11513 = vpack.c.b16 %v11501, %v11500
      %v11514 = vpack.c.b16 %v11503, %v11502
      %v11515 = vpack.c.b16 %v11505, %v11504
      %v11516 = vpack.c.b16 %v11507, %v11506
      %v11517 = vpack.c.b16 %v11509, %v11508
      %11526 = vmatpush.bf16.msra.mxu0 %v11517
      %11527 = vmatpush.bf16.msra.mxu0 %v11516
      %11528 = vmatpush.bf16.msra.mxu0 %v11515
      %11529 = vmatpush.bf16.msra.mxu0 %v11514
      %11530 = vmatpush.bf16.msra.mxu0 %v11513
      %11531 = vmatpush.bf16.msra.mxu0 %v11512
      %11532 = vmatpush.bf16.msra.mxu0 %v11511
      %11533 = vmatpush.bf16.msra.mxu0 %v11510
      %11534 = vmatmul.bf16.gmra.mxu0 %v9530
      %v11535 = vpop.f32.mrf.mxu0
      %v11536 = vadd.f32 0.0, %v11535
      %v11537 = vpop.f32.mrf.mxu0
      %v11538 = vadd.f32 0.0, %v11537
      %11539 = vmatmul.bf16.gmra.mxu0 %v9538
      %v11540 = vpop.f32.mrf.mxu0
      %v11541 = vadd.f32 0.0, %v11540
      %v11542 = vpop.f32.mrf.mxu0
      %v11543 = vadd.f32 0.0, %v11542
      %11544 = vmatmul.bf16.gmra.mxu0 %v9546
      %v11545 = vpop.f32.mrf.mxu0
      %v11546 = vadd.f32 0.0, %v11545
      %v11547 = vpop.f32.mrf.mxu0
      %v11548 = vadd.f32 0.0, %v11547
      %11549 = vmatmul.bf16.gmra.mxu0 %v9554
      %v11550 = vpop.f32.mrf.mxu0
      %v11551 = vadd.f32 0.0, %v11550
      %v11552 = vpop.f32.mrf.mxu0
      %v11553 = vadd.f32 0.0, %v11552
      %11554 = vmatmul.bf16.gmra.mxu0 %v9562
      %v11555 = vpop.f32.mrf.mxu0
      %v11556 = vadd.f32 0.0, %v11555
      %v11557 = vpop.f32.mrf.mxu0
      %v11558 = vadd.f32 0.0, %v11557
      %11559 = vmatmul.bf16.gmra.mxu0 %v9570
      %v11560 = vpop.f32.mrf.mxu0
      %v11561 = vadd.f32 0.0, %v11560
      %v11562 = vpop.f32.mrf.mxu0
      %v11563 = vadd.f32 0.0, %v11562
      %11564 = vmatmul.bf16.gmra.mxu0 %v9578
      %v11565 = vpop.f32.mrf.mxu0
      %v11566 = vadd.f32 0.0, %v11565
      %v11567 = vpop.f32.mrf.mxu0
      %v11568 = vadd.f32 0.0, %v11567
      %11569 = vmatmul.bf16.gmra.mxu0 %v9586
      %v11570 = vpop.f32.mrf.mxu0
      %v11571 = vadd.f32 0.0, %v11570
      %v11572 = vpop.f32.mrf.mxu0
      %v11573 = vadd.f32 0.0, %v11572
      %11574 = vmatmul.bf16.gmra.mxu0 %v9594
      %v11575 = vpop.f32.mrf.mxu0
      %v11576 = vadd.f32 0.0, %v11575
      %v11577 = vpop.f32.mrf.mxu0
      %v11578 = vadd.f32 0.0, %v11577
      %11579 = vmatmul.bf16.gmra.mxu0 %v9602
      %v11580 = vpop.f32.mrf.mxu0
      %v11581 = vadd.f32 0.0, %v11580
      %v11582 = vpop.f32.mrf.mxu0
      %v11583 = vadd.f32 0.0, %v11582
      %11584 = vmatmul.bf16.gmra.mxu0 %v9610
      %v11585 = vpop.f32.mrf.mxu0
      %v11586 = vadd.f32 0.0, %v11585
      %v11587 = vpop.f32.mrf.mxu0
      %v11588 = vadd.f32 0.0, %v11587
      %11589 = vmatmul.bf16.gmra.mxu0 %v9618
      %v11590 = vpop.f32.mrf.mxu0
      %v11591 = vadd.f32 0.0, %v11590
      %v11592 = vpop.f32.mrf.mxu0
      %v11593 = vadd.f32 0.0, %v11592
      %11594 = vmatmul.bf16.gmra.mxu0 %v9626
      %v11595 = vpop.f32.mrf.mxu0
      %v11596 = vadd.f32 0.0, %v11595
      %v11597 = vpop.f32.mrf.mxu0
      %v11598 = vadd.f32 0.0, %v11597
      %11599 = vmatmul.bf16.gmra.mxu0 %v9634
      %v11600 = vpop.f32.mrf.mxu0
      %v11601 = vadd.f32 0.0, %v11600
      %v11602 = vpop.f32.mrf.mxu0
      %v11603 = vadd.f32 0.0, %v11602
      %11604 = vmatmul.bf16.gmra.mxu0 %v9642
      %v11605 = vpop.f32.mrf.mxu0
      %v11606 = vadd.f32 0.0, %v11605
      %v11607 = vpop.f32.mrf.mxu0
      %v11608 = vadd.f32 0.0, %v11607
      %11609 = vmatmul.bf16.gmra.mxu0 %v9650
      %v11610 = vpop.f32.mrf.mxu0
      %v11611 = vadd.f32 0.0, %v11610
      %v11612 = vpop.f32.mrf.mxu0
      %v11613 = vadd.f32 0.0, %v11612
      %11614 = vmatmul.bf16.gmra.mxu0 %v9658
      %v11615 = vpop.f32.mrf.mxu0
      %v11616 = vadd.f32 0.0, %v11615
      %v11617 = vpop.f32.mrf.mxu0
      %v11618 = vadd.f32 0.0, %v11617
      %11619 = vmatmul.bf16.gmra.mxu0 %v9666
      %v11620 = vpop.f32.mrf.mxu0
      %v11621 = vadd.f32 0.0, %v11620
      %v11622 = vpop.f32.mrf.mxu0
      %v11623 = vadd.f32 0.0, %v11622
      %11624 = vmatmul.bf16.gmra.mxu0 %v9674
      %v11625 = vpop.f32.mrf.mxu0
      %v11626 = vadd.f32 0.0, %v11625
      %v11627 = vpop.f32.mrf.mxu0
      %v11628 = vadd.f32 0.0, %v11627
      %11629 = vmatmul.bf16.gmra.mxu0 %v9682
      %v11630 = vpop.f32.mrf.mxu0
      %v11631 = vadd.f32 0.0, %v11630
      %v11632 = vpop.f32.mrf.mxu0
      %v11633 = vadd.f32 0.0, %v11632
      %11634 = vmatmul.bf16.gmra.mxu0 %v11451
      %v11635 = vpop.f32.mrf.mxu0
      %v11636 = vadd.f32 0.0, %v11635
      %v11637 = vpop.f32.mrf.mxu0
      %v11638 = vadd.f32 0.0, %v11637
      %11639 = vmatmul.bf16.gmra.mxu0 %v11457
      %v11640 = vpop.f32.mrf.mxu0
      %v11641 = vadd.f32 0.0, %v11640
      %v11642 = vpop.f32.mrf.mxu0
      %v11643 = vadd.f32 0.0, %v11642
      %11644 = vmatmul.bf16.gmra.mxu0 %v11465
      %v11645 = vpop.f32.mrf.mxu0
      %v11646 = vadd.f32 0.0, %v11645
      %v11647 = vpop.f32.mrf.mxu0
      %v11648 = vadd.f32 0.0, %v11647
      %11649 = vmatmul.bf16.gmra.mxu0 %v11473
      %v11650 = vpop.f32.mrf.mxu0
      %v11651 = vadd.f32 0.0, %v11650
      %v11652 = vpop.f32.mrf.mxu0
      %v11653 = vadd.f32 0.0, %v11652
      %11654 = vdwg.mxu0
      %v11655 = vadd.f32 %v11384, %v11536
      %v11656 = vadd.f32 %v11385, %v11538
      %v11657 = vadd.f32 %v11386, %v11541
      %v11658 = vadd.f32 %v11387, %v11543
      %v11659 = vadd.f32 %v11388, %v11546
      %v11660 = vadd.f32 %v11389, %v11548
      %v11661 = vadd.f32 %v11390, %v11551
      %v11662 = vadd.f32 %v11391, %v11553
      %v11663 = vadd.f32 %v11392, %v11556
      %v11664 = vadd.f32 %v11393, %v11558
      %v11665 = vadd.f32 %v11394, %v11561
      %v11666 = vadd.f32 %v11395, %v11563
      %v11667 = vadd.f32 %v11396, %v11566
      %v11668 = vadd.f32 %v11397, %v11568
      %v11669 = vadd.f32 %v11398, %v11571
      %v11670 = vadd.f32 %v11399, %v11573
      %v11671 = vadd.f32 %v11400, %v11576
      %v11672 = vadd.f32 %v11401, %v11578
      %v11673 = vadd.f32 %v11402, %v11581
      %v11674 = vadd.f32 %v11403, %v11583
      %v11675 = vadd.f32 %v11404, %v11586
      %v11676 = vadd.f32 %v11405, %v11588
      %v11677 = vadd.f32 %v11406, %v11591
      %v11678 = vadd.f32 %v11407, %v11593
      %v11679 = vadd.f32 %v11408, %v11596
      %v11680 = vadd.f32 %v11409, %v11598
      %v11681 = vadd.f32 %v11410, %v11601
      %v11682 = vadd.f32 %v11411, %v11603
      %v11683 = vadd.f32 %v11412, %v11606
      %v11684 = vadd.f32 %v11413, %v11608
      %v11685 = vadd.f32 %v11414, %v11611
      %v11686 = vadd.f32 %v11415, %v11613
      %v11687 = vadd.f32 %v11416, %v11616
      %v11688 = vadd.f32 %v11417, %v11618
      %v11689 = vadd.f32 %v11418, %v11621
      %v11690 = vadd.f32 %v11419, %v11623
      %v11691 = vadd.f32 %v11420, %v11626
      %v11692 = vadd.f32 %v11421, %v11628
      %v11693 = vadd.f32 %v11422, %v11631
      %v11694 = vadd.f32 %v11423, %v11633
      %v11695 = vadd.f32 %v11424, %v11636
      %v11696 = vadd.f32 %v11425, %v11638
      %v11697 = vadd.f32 %v11426, %v11641
      %v11698 = vadd.f32 %v11427, %v11643
      %v11699 = vadd.f32 %v11428, %v11646
      %v11700 = vadd.f32 %v11429, %v11648
      %v11701 = vadd.f32 %v11430, %v11651
      %v11702 = vadd.f32 %v11431, %v11653
      %v11703 = vadd.f32 %v633, %v11655
      %v11704 = vadd.f32 %v634, %v11656
      %v11705 = vadd.f32 %v635, %v11657
      %v11706 = vadd.f32 %v636, %v11658
      %v11707 = vadd.f32 %v637, %v11659
      %v11708 = vadd.f32 %v638, %v11660
      %v11709 = vadd.f32 %v639, %v11661
      %v11710 = vadd.f32 %v640, %v11662
      %v11711 = vadd.f32 %v641, %v11663
      %v11712 = vadd.f32 %v642, %v11664
      %v11713 = vadd.f32 %v643, %v11665
      %v11714 = vadd.f32 %v644, %v11666
      %v11715 = vadd.f32 %v645, %v11667
      %v11716 = vadd.f32 %v646, %v11668
      %v11717 = vadd.f32 %v647, %v11669
      %v11718 = vadd.f32 %v648, %v11670
      %v11719 = vadd.f32 %v649, %v11671
      %v11720 = vadd.f32 %v650, %v11672
      %v11721 = vadd.f32 %v651, %v11673
      %v11722 = vadd.f32 %v652, %v11674
      %v11723 = vadd.f32 %v653, %v11675
      %v11724 = vadd.f32 %v654, %v11676
      %v11725 = vadd.f32 %v655, %v11677
      %v11726 = vadd.f32 %v656, %v11678
      %v11727 = vadd.f32 %v657, %v11679
      %v11728 = vadd.f32 %v658, %v11680
      %v11729 = vadd.f32 %v659, %v11681
      %v11730 = vadd.f32 %v660, %v11682
      %v11731 = vadd.f32 %v661, %v11683
      %v11732 = vadd.f32 %v662, %v11684
      %v11733 = vadd.f32 %v663, %v11685
      %v11734 = vadd.f32 %v664, %v11686
      %v11735 = vadd.f32 %v665, %v11687
      %v11736 = vadd.f32 %v666, %v11688
      %v11737 = vadd.f32 %v667, %v11689
      %v11738 = vadd.f32 %v668, %v11690
      %v11739 = vadd.f32 %v669, %v11691
      %v11740 = vadd.f32 %v670, %v11692
      %v11741 = vadd.f32 %v671, %v11693
      %v11742 = vadd.f32 %v672, %v11694
      %v11743 = vadd.f32 %v673, %v11695
      %v11744 = vadd.f32 %v674, %v11696
      %v11745 = vadd.f32 %v675, %v11697
      %v11746 = vadd.f32 %v676, %v11698
      %v11747 = vadd.f32 %v677, %v11699
      %v11748 = vadd.f32 %v678, %v11700
      %v11749 = vadd.f32 %v679, %v11701
      %v11750 = vadd.f32 %v680, %v11702
      %v11751 = vmul.f32 %v11703, %v2974
      %v11752 = vmul.f32 %v11704, %v2979
      %v11753 = vmul.f32 %v11705, %v2984
      %v11754 = vmul.f32 %v11706, %v2989
      %v11755 = vmul.f32 %v11707, %v2994
      %v11756 = vmul.f32 %v11708, %v2999
      %v11757 = vmul.f32 %v11709, %v3004
      %v11758 = vmul.f32 %v11710, %v3009
      %v11759 = vmul.f32 %v11711, %v3014
      %v11760 = vmul.f32 %v11712, %v3019
      %v11761 = vmul.f32 %v11713, %v3024
      %v11762 = vmul.f32 %v11714, %v3029
      %v11763 = vmul.f32 %v11715, %v3034
      %v11764 = vmul.f32 %v11716, %v3039
      %v11765 = vmul.f32 %v11717, %v3044
      %v11766 = vmul.f32 %v11718, %v3049
      %v11767 = vmul.f32 %v11719, %v3054
      %v11768 = vmul.f32 %v11720, %v3059
      %v11769 = vmul.f32 %v11721, %v3064
      %v11770 = vmul.f32 %v11722, %v3069
      %v11771 = vmul.f32 %v11723, %v3074
      %v11772 = vmul.f32 %v11724, %v3079
      %v11773 = vmul.f32 %v11725, %v3084
      %v11774 = vmul.f32 %v11726, %v3089
      %v11775 = vmul.f32 %v11727, %v3094
      %v11776 = vmul.f32 %v11728, %v3099
      %v11777 = vmul.f32 %v11729, %v3104
      %v11778 = vmul.f32 %v11730, %v3109
      %v11779 = vmul.f32 %v11731, %v3114
      %v11780 = vmul.f32 %v11732, %v3119
      %v11781 = vmul.f32 %v11733, %v3124
      %v11782 = vmul.f32 %v11734, %v3129
      %v11783 = vmul.f32 %v11735, %v3134
      %v11784 = vmul.f32 %v11736, %v3139
      %v11785 = vmul.f32 %v11737, %v3144
      %v11786 = vmul.f32 %v11738, %v3149
      %v11787 = vmul.f32 %v11739, %v3154
      %v11788 = vmul.f32 %v11740, %v3159
      %v11789 = vmul.f32 %v11741, %v3164
      %v11790 = vmul.f32 %v11742, %v3169
      %v11791 = vmul.f32 %v11743, %v3174
      %v11792 = vmul.f32 %v11744, %v3179
      %v11793 = vmul.f32 %v11745, %v3184
      %v11794 = vmul.f32 %v11746, %v3189
      %v11795 = vmul.f32 %v11747, %v3194
      %v11796 = vmul.f32 %v11748, %v3199
      %v11797 = vmul.f32 %v11749, %v3204
      %v11798 = vmul.f32 %v11750, %v3209
      %11799 = vst [vmem:[%s622] sm:$0xff] 0.0
      %11800 = vst [vmem:[%s622 + $0x8] sm:$0xff] 0.0
      %11801 = vst [vmem:[%s622 + $0x10] sm:$0xff] 0.0
      %11802 = vst [vmem:[%s622 + $0x18] sm:$0xff] 0.0
      %11803 = vst [vmem:[%s622 + $0x20] sm:$0xff] 0.0
      %11804 = vst [vmem:[%s622 + $0x28] sm:$0xff] 0.0
      %11805 = vst [vmem:[%s622 + $0x30] sm:$0xff] 0.0
      %11806 = vst [vmem:[%s622 + $0x38] sm:$0xff] 0.0
      %11807 = vst [vmem:[%s622 + $0x40] sm:$0xff] 0.0
      %11808 = vst [vmem:[%s622 + $0x48] sm:$0xff] 0.0
      %11809 = vst [vmem:[%s622 + $0x50] sm:$0xff] 0.0
      %11810 = vst [vmem:[%s622 + $0x58] sm:$0xff] 0.0
      %11811 = vst [vmem:[%s622 + $0x60] sm:$0xff] %v11751
      %11812 = vst [vmem:[%s622 + $0x68] sm:$0xff] %v11752
      %11813 = vst [vmem:[%s622 + $0x70] sm:$0xff] %v11753
      %11814 = vst [vmem:[%s622 + $0x78] sm:$0xff] %v11754
      %11815 = vst [vmem:[%s622 + $0x80] sm:$0xff] %v11755
      %11816 = vst [vmem:[%s622 + $0x88] sm:$0xff] %v11756
      %11817 = vst [vmem:[%s622 + $0x90] sm:$0xff] %v11757
      %11818 = vst [vmem:[%s622 + $0x98] sm:$0xff] %v11758
      %11819 = vst [vmem:[%s622 + $0xa0] sm:$0xff] %v11759
      %11820 = vst [vmem:[%s622 + $0xa8] sm:$0xff] %v11760
      %11821 = vst [vmem:[%s622 + $0xb0] sm:$0xff] %v11761
      %11822 = vst [vmem:[%s622 + $0xb8] sm:$0xff] %v11762
      %11823 = vst [vmem:[%s622 + $0xc0] sm:$0xff] %v11763
      %11824 = vst [vmem:[%s622 + $0xc8] sm:$0xff] %v11764
      %11825 = vst [vmem:[%s622 + $0xd0] sm:$0xff] %v11765
      %11826 = vst [vmem:[%s622 + $0xd8] sm:$0xff] %v11766
      %11827 = vst [vmem:[%s622 + $0xe0] sm:$0xff] %v11767
      %11828 = vst [vmem:[%s622 + $0xe8] sm:$0xff] %v11768
      %11829 = vst [vmem:[%s622 + $0xf0] sm:$0xff] %v11769
      %11830 = vst [vmem:[%s622 + $0xf8] sm:$0xff] %v11770
      %11831 = vst [vmem:[%s622 + $0x100] sm:$0xff] %v11771
      %11832 = vst [vmem:[%s622 + $0x108] sm:$0xff] %v11772
      %11833 = vst [vmem:[%s622 + $0x110] sm:$0xff] %v11773
      %11834 = vst [vmem:[%s622 + $0x118] sm:$0xff] %v11774
      %11835 = vst [vmem:[%s622 + $0x120] sm:$0xff] %v11775
      %11836 = vst [vmem:[%s622 + $0x128] sm:$0xff] %v11776
      %11837 = vst [vmem:[%s622 + $0x130] sm:$0xff] %v11777
      %11838 = vst [vmem:[%s622 + $0x138] sm:$0xff] %v11778
      %11839 = vst [vmem:[%s622 + $0x140] sm:$0xff] %v11779
      %11840 = vst [vmem:[%s622 + $0x148] sm:$0xff] %v11780
      %11841 = vst [vmem:[%s622 + $0x150] sm:$0xff] %v11781
      %11842 = vst [vmem:[%s622 + $0x158] sm:$0xff] %v11782
      %11843 = vst [vmem:[%s622 + $0x160] sm:$0xff] %v11783
      %11844 = vst [vmem:[%s622 + $0x168] sm:$0xff] %v11784
      %11845 = vst [vmem:[%s622 + $0x170] sm:$0xff] %v11785
      %11846 = vst [vmem:[%s622 + $0x178] sm:$0xff] %v11786
      %11847 = vst [vmem:[%s622 + $0x180] sm:$0xff] %v11787
      %11848 = vst [vmem:[%s622 + $0x188] sm:$0xff] %v11788
      %11849 = vst [vmem:[%s622 + $0x190] sm:$0xff] %v11789
      %11850 = vst [vmem:[%s622 + $0x198] sm:$0xff] %v11790
      %11851 = vst [vmem:[%s622 + $0x1a0] sm:$0xff] %v11791
      %11852 = vst [vmem:[%s622 + $0x1a8] sm:$0xff] %v11792
      %11853 = vst [vmem:[%s622 + $0x1b0] sm:$0xff] %v11793
      %11854 = vst [vmem:[%s622 + $0x1b8] sm:$0xff] %v11794
      %11855 = vst [vmem:[%s622 + $0x1c0] sm:$0xff] %v11795
      %11856 = vst [vmem:[%s622 + $0x1c8] sm:$0xff] %v11796
      %11857 = vst [vmem:[%s622 + $0x1d0] sm:$0xff] %v11797
      %11858 = vst [vmem:[%s622 + $0x1d8] sm:$0xff] %v11798
      %11859 = vst [vmem:[%s622 + $0x1e0] sm:$0xff] 0.0
      %11860 = vst [vmem:[%s622 + $0x1e8] sm:$0xff] 0.0
      %11861 = vst [vmem:[%s622 + $0x1f0] sm:$0xff] 0.0
      %11862 = vst [vmem:[%s622 + $0x1f8] sm:$0xff] 0.0
      %11863 = vst [vmem:[%s622 + $0x200] sm:$0xff] 0.0
      %11864 = vst [vmem:[%s622 + $0x208] sm:$0xff] 0.0
      %11865 = vst [vmem:[%s622 + $0x210] sm:$0xff] 0.0
      %11866 = vst [vmem:[%s622 + $0x218] sm:$0xff] 0.0
      %11867 = vst [vmem:[%s622 + $0x220] sm:$0xff] 0.0
      %11868 = vst [vmem:[%s622 + $0x228] sm:$0xff] 0.0
      %11869 = vst [vmem:[%s622 + $0x230] sm:$0xff] 0.0
      %11870 = vst [vmem:[%s622 + $0x238] sm:$0xff] 0.0
      %p11871 = scmp.lt.s32.totalorder %s30, 1
      %s11872 = scalar_select %p11871, %s30, 1
      %s11873 = smul.addr %s11872, 72
      %s11874 = smul.addr %s11873, 8
      %s11875 = scalar_lea.vmem %s19, %s11874
      // Predicated region
      $region97: #{side_embeded_feature_extract_block.7} parent=95 // pred_check
        %p11876 = pneg %p457
      $region98: #{side_embeded_feature_extract_block.7} parent=95 // pred_check_branch
        %11878 = sbr.rel (%p11876) target = $region100
      $region99: #{side_embeded_feature_extract_block.7} parent=95 // pred_region
        _
      $region100: #{side_embeded_feature_extract_block.7} parent=95 // pred_fallthru
        _
    $region96: #{side_embeded_feature_extract_block.7} parent=5 // pred_fallthru
      _
    %p11879 = scmp.le.s32.totalorder 2, %s25
    // Predicated region
    $region101: #{side_embeded_feature_extract_block.7} parent=5 // pred_check
      %p11880 = pneg %p11879
    $region102: #{side_embeded_feature_extract_block.7} parent=5 // pred_check_branch
      %11882 = sbr.rel (%p11880) target = $region104
    $region103: #{side_embeded_feature_extract_block.7} parent=5 // pred_region
      %s11883 = ssub.s32 %s25, 2
      // Predicated region
      $region105: #{side_embeded_feature_extract_block.7} parent=103 // pred_check
        %p11884 = pneg %p463
      $region106: #{side_embeded_feature_extract_block.7} parent=103 // pred_check_branch
        %11886 = sbr.rel (%p11884) target = $region108
      $region107: #{side_embeded_feature_extract_block.7} parent=103 // pred_region
        %p11887 = scmp.lt.s32.totalorder %s31, 1
        %s11888 = scalar_select %p11887, %s31, 1
        %s11889 = smul.addr %s11888, 72
        %s11890 = smul.addr %s11889, 8
        %s11891 = scalar_lea.vmem %s19, %s11890
      $region108: #{side_embeded_feature_extract_block.7} parent=103 // pred_fallthru
        _
    $region104: #{side_embeded_feature_extract_block.7} parent=5 // pred_fallthru
      _
  $region6: #{side_embeded_feature_extract_block.7} parent=0 // loop_footer
    %s29 = sadd.s32 1, %s25
  $region7: #{side_embeded_feature_extract_block.7} parent=0 // loop_footer_branch
    %24 = sbr.rel target = $region3
  $region8: #{side_embeded_feature_extract_block.7} parent=0 // loop_exit
    _

</llo_original>
